<compile_context>
chip_gen: v7x
topology: tpu7x:2x2x1
jax: 0.10.0
libtpu: 0.0.40
codegen_flags: <defaults>
</compile_context>

<pallas_src>
import math

import jax
import jax.numpy as jnp
from jax.experimental import pallas as pl
from jax.experimental.pallas import tpu as pltpu

jax.config.update("jax_default_matmul_precision", "highest")

NUM_HEADS = 4
EPS = 1e-6
NEG_INF = -1e30


# ---------------------------------------------------------------------------
# Fused Block kernel (one grid step == one batch element)
# ---------------------------------------------------------------------------
def block_kernel(x_ref, n1w_ref, n2w_ref, wqkv_ref, bqkv_ref, wp_ref,
                 w13_ref, w2_ref, cos_ref, sina_ref, sinb_ref, o_ref):
    S, D = x_ref.shape
    H = NUM_HEADS
    Dh = D // H
    half = Dh // 2
    HID = w2_ref.shape[0]

    x = x_ref[...]

    # ---------------- RMSNorm 1 ----------------
    xn = x * jax.lax.rsqrt(jnp.mean(x * x, axis=-1, keepdims=True) + EPS) * n1w_ref[...]

    # ---------------- fused QKV projection (scale pre-folded into Wq/bq) -----
    qkv = jnp.dot(xn, wqkv_ref[...], preferred_element_type=jnp.float32) + bqkv_ref[...]
    q = qkv[:, :D]
    k = qkv[:, D:2 * D]
    v = qkv[:, 2 * D:]

    # ---------------- RoPE on full (S, D) lane-dense slabs -------------------
    # Per-head lane layout (from offline column permutation) is [a_0..a_{half-1}
    # | b_0..b_{half-1}].  rot_a = a*cos - b*sin ; rot_b = b*cos + a*sin.
    # The partner half is fetched with static lane rotations; wrong-half
    # garbage is zeroed by the masked sin tables (sin_a=[-sin|0], sin_b=[0|+sin]).
    cos = cos_ref[...]
    sa = sina_ref[...]
    sb = sinb_ref[...]

    def rope(t):
        return (t * cos
                + jnp.roll(t, -half, axis=-1) * sa
                + jnp.roll(t, half, axis=-1) * sb)

    qr = rope(q)
    kr = rope(k)

    # ---------------- causal attention, per head (static unroll, H=4) --------
    row = jax.lax.broadcasted_iota(jnp.int32, (S, S), 0)
    col = jax.lax.broadcasted_iota(jnp.int32, (S, S), 1)
    causal_bias = jnp.where(col <= row, 0.0, NEG_INF)   # built once, added per head

    outs = []
    for h in range(H):
        sl = slice(h * Dh, (h + 1) * Dh)
        qh, kh, vh = qr[:, sl], kr[:, sl], v[:, sl]
        # single K = Dh contraction (merged RoPE halves)
        scores = jnp.dot(qh, kh.T, preferred_element_type=jnp.float32) + causal_bias
        m = jnp.max(scores, axis=-1, keepdims=True)
        p = jnp.exp(scores - m)
        denom = jnp.sum(p, axis=-1, keepdims=True)
        inv = pl.reciprocal(denom, approx=True)      # EUP slot
        inv = inv * (2.0 - denom * inv)              # one Newton step -> ~f32 exact
        outs.append(jnp.dot(p, vh, preferred_element_type=jnp.float32) * inv)
    attn = jnp.concatenate(outs, axis=-1)            # (S, D) lane-dense slab

    # ---------------- output projection (no bias) + residual -----------------
    x = x + jnp.dot(attn, wp_ref[...], preferred_element_type=jnp.float32)

    # ---------------- RMSNorm 2 + SwiGLU (W1|W3 fused) + residual ------------
    xn2 = x * jax.lax.rsqrt(jnp.mean(x * x, axis=-1, keepdims=True) + EPS) * n2w_ref[...]
    u = jnp.dot(xn2, w13_ref[...], preferred_element_type=jnp.float32)   # (S, 2*HID)
    u1 = u[:, :HID]
    u3 = u[:, HID:]
    g = u1 * (1.0 / (1.0 + jnp.exp(-u1))) * u3        # SiLU(u1) * u3  (EUP exp)
    x = x + jnp.dot(g, w2_ref[...], preferred_element_type=jnp.float32)

    o_ref[...] = x.astype(o_ref.dtype)


# ---------------------------------------------------------------------------
# Wrapper: one pallas_call for the whole block, grid=(B,)
# ---------------------------------------------------------------------------
def block_forward(x, kp):
    B, S, D = x.shape
    HID = kp["w2_t"].shape[0]
    c0 = lambda b: (0, 0)
    return pl.pallas_call(
        block_kernel,
        out_shape=jax.ShapeDtypeStruct((B, S, D), x.dtype),
        grid=(B,),
        in_specs=[
            pl.BlockSpec((None, S, D), lambda b: (b, 0, 0)),   # x (per batch)
            pl.BlockSpec((1, D), c0),                          # norm1 weight
            pl.BlockSpec((1, D), c0),                          # norm2 weight
            pl.BlockSpec((D, 3 * D), c0),                      # Wqkv (fused)
            pl.BlockSpec((1, 3 * D), c0),                      # bqkv (fused)
            pl.BlockSpec((D, D), c0),                          # Wproj
            pl.BlockSpec((D, 2 * HID), c0),                    # W1|W3 (fused)
            pl.BlockSpec((HID, D), c0),                        # W2
            pl.BlockSpec((S, D), c0),                          # cos table
            pl.BlockSpec((S, D), c0),                          # -sin (a-lanes)
            pl.BlockSpec((S, D), c0),                          # +sin (b-lanes)
        ],
        out_specs=pl.BlockSpec((None, S, D), lambda b: (b, 0, 0)),
        compiler_params=pltpu.CompilerParams(
            dimension_semantics=("parallel",)),
    )(x, kp["norm1_w"], kp["norm2_w"], kp["wqkv_t"], kp["bqkv"], kp["wp_t"],
      kp["w13_t"], kp["w2_t"], kp["cos_full"], kp["sin_a"], kp["sin_b"])


# ---------------------------------------------------------------------------
# Offline (one-time) parameter / table preparation
# ---------------------------------------------------------------------------
def prepare_kernel_params(params, cos, sin):
    D = params["wq_t"].shape[0]
    H = NUM_HEADS
    Dh = D // H
    half = Dh // 2
    scale = 1.0 / math.sqrt(Dh)

    # Per-head column permutation: [even components | odd components] so the
    # RoPE halves are lane-contiguous inside each head's Dh-lane group.
    j = jnp.arange(half)
    perm_head = jnp.concatenate([2 * j, 2 * j + 1])                       # (Dh,)
    perm = (jnp.arange(H)[:, None] * Dh + perm_head[None, :]).reshape(-1)  # (D,)

    wq = params["wq_t"][:, perm] * scale      # fold 1/sqrt(Dh) into Wq, bq
    bq = params["bq"][perm] * scale
    wk = params["wk_t"][:, perm]
    bk = params["bk"][perm]
    wv = params["wv_t"]
    bv = params["bv"]

    zeros = jnp.zeros_like(sin)
    cos_full = jnp.tile(cos, (1, 2 * H))                                   # [c|c] per head
    sin_a = jnp.tile(jnp.concatenate([-sin, zeros], axis=-1), (1, H))      # [-s|0]
    sin_b = jnp.tile(jnp.concatenate([zeros, sin], axis=-1), (1, H))       # [0|+s]

    return {
        "norm1_w": params["norm1_w"].reshape(1, D),
        "norm2_w": params["norm2_w"].reshape(1, D),
        "wqkv_t": jnp.concatenate([wq, wk, wv], axis=1),
        "bqkv": jnp.concatenate([bq, bk, bv]).reshape(1, 3 * D),
        "wp_t": params["wp_t"],
        "w13_t": jnp.concatenate([params["w1_t"], params["w3_t"]], axis=1),
        "w2_t": params["w2_t"],
        "cos_full": cos_full,
        "sin_a": sin_a,
        "sin_b": sin_b,
    }


# ---------------------------------------------------------------------------
# Pure-JAX reference (mirrors Block.forward semantics with original params)
# ---------------------------------------------------------------------------
def reference_block(x, params, cos, sin):
    B, S, D = x.shape
    H, Dh = NUM_HEADS, D // NUM_HEADS

    def rms(t, w):
        return t * jax.lax.rsqrt(jnp.mean(t * t, axis=-1, keepdims=True) + EPS) * w

    # --- attention branch
    xn = rms(x, params["norm1_w"])
    q = xn @ params["wq_t"] + params["bq"]
    k = xn @ params["wk_t"] + params["bk"]
    v = xn @ params["wv_t"] + params["bv"]
    q = q.reshape(B, S, H, Dh)
    k = k.reshape(B, S, H, Dh)
    v = v.reshape(B, S, H, Dh)

    def rope(t):
        tr = t.reshape(B, S, H, Dh // 2, 2)
        a, b = tr[..., 0], tr[..., 1]
        c = cos[None, :, None, :]
        s = sin[None, :, None, :]
        return jnp.stack([a * c - b * s, a * s + b * c], axis=-1).reshape(B, S, H, Dh)

    q, k = rope(q), rope(k)
    q, k, v = (t.transpose(0, 2, 1, 3) for t in (q, k, v))
    scores = jnp.einsum("bhqd,bhkd->bhqk", q, k) / math.sqrt(Dh)
    causal = jnp.tril(jnp.ones((S, S), dtype=bool))
    scores = jnp.where(causal[None, None], scores, -jnp.inf)
    p = jax.nn.softmax(scores, axis=-1)
    attn = jnp.einsum("bhqk,bhkd->bhqd", p, v).transpose(0, 2, 1, 3).reshape(B, S, D)
    x = x + attn @ params["wp_t"]          # proj: no bias

    # --- feed-forward branch (SwiGLU)
    xn2 = rms(x, params["norm2_w"])
    u1 = xn2 @ params["w1_t"]
    u3 = xn2 @ params["w3_t"]
    g = u1 * jax.nn.sigmoid(u1) * u3
    x = x + g @ params["w2_t"]
    return x


# ---------------------------------------------------------------------------
if __name__ == "__main__":
    B, S, D, H, HID = 2, 16, 128, NUM_HEADS, 256
    Dh = D // H

    key = jax.random.PRNGKey(0)
    ks = jax.random.split(key, 13)
    x = jax.random.normal(ks[0], (B, S, D), jnp.float32)

    def w(kk, shape):
        return 0.02 * jax.random.normal(kk, shape, jnp.float32)

    params = {
        "wq_t": w(ks[1], (D, D)), "bq": w(ks[2], (D,)),
        "wk_t": w(ks[3], (D, D)), "bk": w(ks[4], (D,)),
        "wv_t": w(ks[5], (D, D)), "bv": w(ks[6], (D,)),
        "wp_t": w(ks[7], (D, D)),
        "w1_t": w(ks[8], (D, HID)),
        "w3_t": w(ks[9], (D, HID)),
        "w2_t": w(ks[10], (HID, D)),
        "norm1_w": 1.0 + 0.05 * jax.random.normal(ks[11], (D,), jnp.float32),
        "norm2_w": 1.0 + 0.05 * jax.random.normal(ks[12], (D,), jnp.float32),
    }

    # freqs_cis equivalent: cos/sin tables for complex-pair RoPE
    inv_freq = 1.0 / (10000.0 ** (jnp.arange(0, Dh, 2, dtype=jnp.float32) / Dh))
    t = jnp.arange(S, dtype=jnp.float32)
    angles = jnp.outer(t, inv_freq)          # (S, Dh//2)
    cos, sin = jnp.cos(angles), jnp.sin(angles)

    kp = prepare_kernel_params(params, cos, sin)

    out = block_forward(x, kp)
    out = jax.block_until_ready(out)

    ref = reference_block(x, params, cos, sin)
    assert out.shape == (B, S, D)
    max_err = float(jnp.max(jnp.abs(out - ref)))
    assert jnp.allclose(out, ref, rtol=1e-4, atol=1e-4), max_err

    print("KERNEL_OK")
</pallas_src>

<mosaic_0001>
module attributes {stable_mosaic.version = 11 : i64} {
  func.func @block_kernel(%arg0: i32, %arg1: memref<1x16x128xf32, #tpu.memory_space<vmem>>, %arg2: memref<1x128xf32, #tpu.memory_space<vmem>>, %arg3: memref<1x128xf32, #tpu.memory_space<vmem>>, %arg4: memref<128x384xf32, #tpu.memory_space<vmem>>, %arg5: memref<1x384xf32, #tpu.memory_space<vmem>>, %arg6: memref<128x128xf32, #tpu.memory_space<vmem>>, %arg7: memref<128x512xf32, #tpu.memory_space<vmem>>, %arg8: memref<256x128xf32, #tpu.memory_space<vmem>>, %arg9: memref<16x128xf32, #tpu.memory_space<vmem>>, %arg10: memref<16x128xf32, #tpu.memory_space<vmem>>, %arg11: memref<16x128xf32, #tpu.memory_space<vmem>>, %arg12: memref<1x16x128xf32, #tpu.memory_space<vmem>>) attributes {dimension_semantics = [#tpu.dimension_semantics<parallel>], iteration_bounds = array<i64: 2>, scalar_prefetch = 0 : i64, scratch_operands = 0 : i64, tpu.core_type = #tpu.core_type<tc>, window_params = [{transform_indices = @transform_0, window_bounds = array<i64: 1, 16, 128>}, {pipeline_mode = #tpu.pipeline_mode<synchronous>, transform_indices = @transform_1, window_bounds = array<i64: 1, 128>}, {pipeline_mode = #tpu.pipeline_mode<synchronous>, transform_indices = @transform_2, window_bounds = array<i64: 1, 128>}, {pipeline_mode = #tpu.pipeline_mode<synchronous>, transform_indices = @transform_3, window_bounds = array<i64: 128, 384>}, {pipeline_mode = #tpu.pipeline_mode<synchronous>, transform_indices = @transform_4, window_bounds = array<i64: 1, 384>}, {pipeline_mode = #tpu.pipeline_mode<synchronous>, transform_indices = @transform_5, window_bounds = array<i64: 128, 128>}, {pipeline_mode = #tpu.pipeline_mode<synchronous>, transform_indices = @transform_6, window_bounds = array<i64: 128, 512>}, {pipeline_mode = #tpu.pipeline_mode<synchronous>, transform_indices = @transform_7, window_bounds = array<i64: 256, 128>}, {pipeline_mode = #tpu.pipeline_mode<synchronous>, transform_indices = @transform_8, window_bounds = array<i64: 16, 128>}, {pipeline_mode = #tpu.pipeline_mode<synchronous>, transform_indices = @transform_9, window_bounds = array<i64: 16, 128>}, {pipeline_mode = #tpu.pipeline_mode<synchronous>, transform_indices = @transform_10, window_bounds = array<i64: 16, 128>}, {transform_indices = @transform_11, window_bounds = array<i64: 1, 16, 128>}]} {
    %c0 = arith.constant 0 : index
    %c0_0 = arith.constant 0 : index
    %c0_1 = arith.constant 0 : index
    %0 = vector.load %arg1[%c0, %c0_0, %c0_1] : memref<1x16x128xf32, #tpu.memory_space<vmem>>, vector<1x16x128xf32>
    %1 = vector.shape_cast %0 : vector<1x16x128xf32> to vector<16x128xf32>
    %2 = arith.mulf %1, %1 : vector<16x128xf32>
    %cst = arith.constant dense<0.000000e+00> : vector<16xf32>
    %3 = vector.multi_reduction <add>, %2, %cst [1] : vector<16x128xf32> to vector<16xf32>
    %4 = vector.shape_cast %3 : vector<16xf32> to vector<16x1xf32>
    %cst_2 = arith.constant 1.280000e+02 : f32
    %5 = vector.broadcast %cst_2 : f32 to vector<16x1xf32>
    %6 = arith.divf %4, %5 : vector<16x1xf32>
    %cst_3 = arith.constant 9.99999997E-7 : f32
    %7 = vector.broadcast %cst_3 : f32 to vector<16x1xf32>
    %8 = arith.addf %6, %7 : vector<16x1xf32>
    %9 = math.rsqrt %8 : vector<16x1xf32>
    %10 = vector.broadcast %9 : vector<16x1xf32> to vector<16x128xf32>
    %11 = arith.mulf %1, %10 : vector<16x128xf32>
    %c0_4 = arith.constant 0 : index
    %c0_5 = arith.constant 0 : index
    %12 = vector.load %arg2[%c0_4, %c0_5] : memref<1x128xf32, #tpu.memory_space<vmem>>, vector<1x128xf32>
    %13 = vector.broadcast %12 : vector<1x128xf32> to vector<16x128xf32>
    %14 = arith.mulf %11, %13 : vector<16x128xf32>
    %c0_6 = arith.constant 0 : index
    %c0_7 = arith.constant 0 : index
    %15 = vector.load %arg4[%c0_6, %c0_7] : memref<128x384xf32, #tpu.memory_space<vmem>>, vector<128x384xf32>
    %cst_8 = arith.constant dense<0.000000e+00> : vector<16x384xf32>
    %16 = tpu.matmul %14, %15, %cst_8 {dimension_numbers = #tpu.dot_dimension_numbers<[1], [0], [0], [1], [0, 0, 1, 1], [], []>, precision = #tpu.contract_precision<fp32>} : vector<16x128xf32>, vector<128x384xf32>, vector<16x384xf32> -> vector<16x384xf32>
    %c0_9 = arith.constant 0 : index
    %c0_10 = arith.constant 0 : index
    %17 = vector.load %arg5[%c0_9, %c0_10] : memref<1x384xf32, #tpu.memory_space<vmem>>, vector<1x384xf32>
    %18 = vector.broadcast %17 : vector<1x384xf32> to vector<16x384xf32>
    %19 = arith.addf %16, %18 : vector<16x384xf32>
    %20 = vector.extract_strided_slice %19 {offsets = [0, 0], sizes = [16, 128], strides = [1, 1]} : vector<16x384xf32> to vector<16x128xf32>
    %21 = vector.extract_strided_slice %19 {offsets = [0, 128], sizes = [16, 128], strides = [1, 1]} : vector<16x384xf32> to vector<16x128xf32>
    %22 = vector.extract_strided_slice %19 {offsets = [0, 256], sizes = [16, 128], strides = [1, 1]} : vector<16x384xf32> to vector<16x128xf32>
    %c0_11 = arith.constant 0 : index
    %c0_12 = arith.constant 0 : index
    %23 = vector.load %arg9[%c0_11, %c0_12] : memref<16x128xf32, #tpu.memory_space<vmem>>, vector<16x128xf32>
    %c0_13 = arith.constant 0 : index
    %c0_14 = arith.constant 0 : index
    %24 = vector.load %arg10[%c0_13, %c0_14] : memref<16x128xf32, #tpu.memory_space<vmem>>, vector<16x128xf32>
    %c0_15 = arith.constant 0 : index
    %c0_16 = arith.constant 0 : index
    %25 = vector.load %arg11[%c0_15, %c0_16] : memref<16x128xf32, #tpu.memory_space<vmem>>, vector<16x128xf32>
    %26 = arith.mulf %20, %23 : vector<16x128xf32>
    %27 = vector.extract_strided_slice %20 {offsets = [0, 16], sizes = [16, 112], strides = [1, 1]} : vector<16x128xf32> to vector<16x112xf32>
    %28 = vector.extract_strided_slice %20 {offsets = [0, 0], sizes = [16, 16], strides = [1, 1]} : vector<16x128xf32> to vector<16x16xf32>
    %29 = tpu.concatenate %27, %28 in 1 : vector<16x112xf32>, vector<16x16xf32> -> vector<16x128xf32>
    %30 = arith.mulf %29, %24 : vector<16x128xf32>
    %31 = arith.addf %26, %30 : vector<16x128xf32>
    %32 = vector.extract_strided_slice %20 {offsets = [0, 112], sizes = [16, 16], strides = [1, 1]} : vector<16x128xf32> to vector<16x16xf32>
    %33 = vector.extract_strided_slice %20 {offsets = [0, 0], sizes = [16, 112], strides = [1, 1]} : vector<16x128xf32> to vector<16x112xf32>
    %34 = tpu.concatenate %32, %33 in 1 : vector<16x16xf32>, vector<16x112xf32> -> vector<16x128xf32>
    %35 = arith.mulf %34, %25 : vector<16x128xf32>
    %36 = arith.addf %31, %35 : vector<16x128xf32>
    %37 = arith.mulf %21, %23 : vector<16x128xf32>
    %38 = vector.extract_strided_slice %21 {offsets = [0, 16], sizes = [16, 112], strides = [1, 1]} : vector<16x128xf32> to vector<16x112xf32>
    %39 = vector.extract_strided_slice %21 {offsets = [0, 0], sizes = [16, 16], strides = [1, 1]} : vector<16x128xf32> to vector<16x16xf32>
    %40 = tpu.concatenate %38, %39 in 1 : vector<16x112xf32>, vector<16x16xf32> -> vector<16x128xf32>
    %41 = arith.mulf %40, %24 : vector<16x128xf32>
    %42 = arith.addf %37, %41 : vector<16x128xf32>
    %43 = vector.extract_strided_slice %21 {offsets = [0, 112], sizes = [16, 16], strides = [1, 1]} : vector<16x128xf32> to vector<16x16xf32>
    %44 = vector.extract_strided_slice %21 {offsets = [0, 0], sizes = [16, 112], strides = [1, 1]} : vector<16x128xf32> to vector<16x112xf32>
    %45 = tpu.concatenate %43, %44 in 1 : vector<16x16xf32>, vector<16x112xf32> -> vector<16x128xf32>
    %46 = arith.mulf %45, %25 : vector<16x128xf32>
    %47 = arith.addf %42, %46 : vector<16x128xf32>
    %48 = tpu.iota {dimensions = array<i32: 0>} : vector<16x16xi32>
    %49 = tpu.iota {dimensions = array<i32: 1>} : vector<16x16xi32>
    %50 = arith.cmpi sle, %49, %48 : vector<16x16xi32>
    %cst_17 = arith.constant 0.000000e+00 : f32
    %cst_18 = arith.constant -1.000000e+30 : f32
    %51 = vector.broadcast %cst_17 : f32 to vector<16x16xf32>
    %52 = vector.broadcast %cst_18 : f32 to vector<16x16xf32>
    %53 = arith.select %50, %51, %52 : vector<16x16xi1>, vector<16x16xf32>
    %54 = vector.extract_strided_slice %36 {offsets = [0, 0], sizes = [16, 32], strides = [1, 1]} : vector<16x128xf32> to vector<16x32xf32>
    %55 = vector.extract_strided_slice %47 {offsets = [0, 0], sizes = [16, 32], strides = [1, 1]} : vector<16x128xf32> to vector<16x32xf32>
    %56 = vector.extract_strided_slice %22 {offsets = [0, 0], sizes = [16, 32], strides = [1, 1]} : vector<16x128xf32> to vector<16x32xf32>
    %57 = tpu.transpose %55, [1, 0] : vector<16x32xf32> -> vector<32x16xf32>
    %cst_19 = arith.constant dense<0.000000e+00> : vector<16x16xf32>
    %58 = tpu.matmul %54, %57, %cst_19 {dimension_numbers = #tpu.dot_dimension_numbers<[1], [0], [0], [1], [0, 0, 1, 1], [], []>, precision = #tpu.contract_precision<fp32>} : vector<16x32xf32>, vector<32x16xf32>, vector<16x16xf32> -> vector<16x16xf32>
    %59 = arith.addf %58, %53 : vector<16x16xf32>
    %cst_20 = arith.constant dense<0xFF800000> : vector<16xf32>
    %60 = vector.multi_reduction <maximumf>, %59, %cst_20 [1] : vector<16x16xf32> to vector<16xf32>
    %61 = vector.shape_cast %60 : vector<16xf32> to vector<16x1xf32>
    %62 = vector.broadcast %61 : vector<16x1xf32> to vector<16x16xf32>
    %63 = arith.subf %59, %62 : vector<16x16xf32>
    %64 = math.exp %63 : vector<16x16xf32>
    %cst_21 = arith.constant dense<0.000000e+00> : vector<16xf32>
    %65 = vector.multi_reduction <add>, %64, %cst_21 [1] : vector<16x16xf32> to vector<16xf32>
    %66 = vector.shape_cast %65 : vector<16xf32> to vector<16x1xf32>
    %67 = tpu.reciprocal %66 {approx = true} : vector<16x1xf32> -> vector<16x1xf32>
    %68 = arith.mulf %66, %67 : vector<16x1xf32>
    %cst_22 = arith.constant 2.000000e+00 : f32
    %69 = vector.broadcast %cst_22 : f32 to vector<16x1xf32>
    %70 = arith.subf %69, %68 : vector<16x1xf32>
    %71 = arith.mulf %67, %70 : vector<16x1xf32>
    %cst_23 = arith.constant dense<0.000000e+00> : vector<16x32xf32>
    %72 = tpu.matmul %64, %56, %cst_23 {dimension_numbers = #tpu.dot_dimension_numbers<[1], [0], [0], [1], [0, 0, 1, 1], [], []>, precision = #tpu.contract_precision<fp32>} : vector<16x16xf32>, vector<16x32xf32>, vector<16x32xf32> -> vector<16x32xf32>
    %73 = vector.broadcast %71 : vector<16x1xf32> to vector<16x32xf32>
    %74 = arith.mulf %72, %73 : vector<16x32xf32>
    %75 = vector.extract_strided_slice %36 {offsets = [0, 32], sizes = [16, 32], strides = [1, 1]} : vector<16x128xf32> to vector<16x32xf32>
    %76 = vector.extract_strided_slice %47 {offsets = [0, 32], sizes = [16, 32], strides = [1, 1]} : vector<16x128xf32> to vector<16x32xf32>
    %77 = vector.extract_strided_slice %22 {offsets = [0, 32], sizes = [16, 32], strides = [1, 1]} : vector<16x128xf32> to vector<16x32xf32>
    %78 = tpu.transpose %76, [1, 0] : vector<16x32xf32> -> vector<32x16xf32>
    %cst_24 = arith.constant dense<0.000000e+00> : vector<16x16xf32>
    %79 = tpu.matmul %75, %78, %cst_24 {dimension_numbers = #tpu.dot_dimension_numbers<[1], [0], [0], [1], [0, 0, 1, 1], [], []>, precision = #tpu.contract_precision<fp32>} : vector<16x32xf32>, vector<32x16xf32>, vector<16x16xf32> -> vector<16x16xf32>
    %80 = arith.addf %79, %53 : vector<16x16xf32>
    %cst_25 = arith.constant dense<0xFF800000> : vector<16xf32>
    %81 = vector.multi_reduction <maximumf>, %80, %cst_25 [1] : vector<16x16xf32> to vector<16xf32>
    %82 = vector.shape_cast %81 : vector<16xf32> to vector<16x1xf32>
    %83 = vector.broadcast %82 : vector<16x1xf32> to vector<16x16xf32>
    %84 = arith.subf %80, %83 : vector<16x16xf32>
    %85 = math.exp %84 : vector<16x16xf32>
    %cst_26 = arith.constant dense<0.000000e+00> : vector<16xf32>
    %86 = vector.multi_reduction <add>, %85, %cst_26 [1] : vector<16x16xf32> to vector<16xf32>
    %87 = vector.shape_cast %86 : vector<16xf32> to vector<16x1xf32>
    %88 = tpu.reciprocal %87 {approx = true} : vector<16x1xf32> -> vector<16x1xf32>
    %89 = arith.mulf %87, %88 : vector<16x1xf32>
    %cst_27 = arith.constant 2.000000e+00 : f32
    %90 = vector.broadcast %cst_27 : f32 to vector<16x1xf32>
    %91 = arith.subf %90, %89 : vector<16x1xf32>
    %92 = arith.mulf %88, %91 : vector<16x1xf32>
    %cst_28 = arith.constant dense<0.000000e+00> : vector<16x32xf32>
    %93 = tpu.matmul %85, %77, %cst_28 {dimension_numbers = #tpu.dot_dimension_numbers<[1], [0], [0], [1], [0, 0, 1, 1], [], []>, precision = #tpu.contract_precision<fp32>} : vector<16x16xf32>, vector<16x32xf32>, vector<16x32xf32> -> vector<16x32xf32>
    %94 = vector.broadcast %92 : vector<16x1xf32> to vector<16x32xf32>
    %95 = arith.mulf %93, %94 : vector<16x32xf32>
    %96 = vector.extract_strided_slice %36 {offsets = [0, 64], sizes = [16, 32], strides = [1, 1]} : vector<16x128xf32> to vector<16x32xf32>
    %97 = vector.extract_strided_slice %47 {offsets = [0, 64], sizes = [16, 32], strides = [1, 1]} : vector<16x128xf32> to vector<16x32xf32>
    %98 = vector.extract_strided_slice %22 {offsets = [0, 64], sizes = [16, 32], strides = [1, 1]} : vector<16x128xf32> to vector<16x32xf32>
    %99 = tpu.transpose %97, [1, 0] : vector<16x32xf32> -> vector<32x16xf32>
    %cst_29 = arith.constant dense<0.000000e+00> : vector<16x16xf32>
    %100 = tpu.matmul %96, %99, %cst_29 {dimension_numbers = #tpu.dot_dimension_numbers<[1], [0], [0], [1], [0, 0, 1, 1], [], []>, precision = #tpu.contract_precision<fp32>} : vector<16x32xf32>, vector<32x16xf32>, vector<16x16xf32> -> vector<16x16xf32>
    %101 = arith.addf %100, %53 : vector<16x16xf32>
    %cst_30 = arith.constant dense<0xFF800000> : vector<16xf32>
    %102 = vector.multi_reduction <maximumf>, %101, %cst_30 [1] : vector<16x16xf32> to vector<16xf32>
    %103 = vector.shape_cast %102 : vector<16xf32> to vector<16x1xf32>
    %104 = vector.broadcast %103 : vector<16x1xf32> to vector<16x16xf32>
    %105 = arith.subf %101, %104 : vector<16x16xf32>
    %106 = math.exp %105 : vector<16x16xf32>
    %cst_31 = arith.constant dense<0.000000e+00> : vector<16xf32>
    %107 = vector.multi_reduction <add>, %106, %cst_31 [1] : vector<16x16xf32> to vector<16xf32>
    %108 = vector.shape_cast %107 : vector<16xf32> to vector<16x1xf32>
    %109 = tpu.reciprocal %108 {approx = true} : vector<16x1xf32> -> vector<16x1xf32>
    %110 = arith.mulf %108, %109 : vector<16x1xf32>
    %cst_32 = arith.constant 2.000000e+00 : f32
    %111 = vector.broadcast %cst_32 : f32 to vector<16x1xf32>
    %112 = arith.subf %111, %110 : vector<16x1xf32>
    %113 = arith.mulf %109, %112 : vector<16x1xf32>
    %cst_33 = arith.constant dense<0.000000e+00> : vector<16x32xf32>
    %114 = tpu.matmul %106, %98, %cst_33 {dimension_numbers = #tpu.dot_dimension_numbers<[1], [0], [0], [1], [0, 0, 1, 1], [], []>, precision = #tpu.contract_precision<fp32>} : vector<16x16xf32>, vector<16x32xf32>, vector<16x32xf32> -> vector<16x32xf32>
    %115 = vector.broadcast %113 : vector<16x1xf32> to vector<16x32xf32>
    %116 = arith.mulf %114, %115 : vector<16x32xf32>
    %117 = vector.extract_strided_slice %36 {offsets = [0, 96], sizes = [16, 32], strides = [1, 1]} : vector<16x128xf32> to vector<16x32xf32>
    %118 = vector.extract_strided_slice %47 {offsets = [0, 96], sizes = [16, 32], strides = [1, 1]} : vector<16x128xf32> to vector<16x32xf32>
    %119 = vector.extract_strided_slice %22 {offsets = [0, 96], sizes = [16, 32], strides = [1, 1]} : vector<16x128xf32> to vector<16x32xf32>
    %120 = tpu.transpose %118, [1, 0] : vector<16x32xf32> -> vector<32x16xf32>
    %cst_34 = arith.constant dense<0.000000e+00> : vector<16x16xf32>
    %121 = tpu.matmul %117, %120, %cst_34 {dimension_numbers = #tpu.dot_dimension_numbers<[1], [0], [0], [1], [0, 0, 1, 1], [], []>, precision = #tpu.contract_precision<fp32>} : vector<16x32xf32>, vector<32x16xf32>, vector<16x16xf32> -> vector<16x16xf32>
    %122 = arith.addf %121, %53 : vector<16x16xf32>
    %cst_35 = arith.constant dense<0xFF800000> : vector<16xf32>
    %123 = vector.multi_reduction <maximumf>, %122, %cst_35 [1] : vector<16x16xf32> to vector<16xf32>
    %124 = vector.shape_cast %123 : vector<16xf32> to vector<16x1xf32>
    %125 = vector.broadcast %124 : vector<16x1xf32> to vector<16x16xf32>
    %126 = arith.subf %122, %125 : vector<16x16xf32>
    %127 = math.exp %126 : vector<16x16xf32>
    %cst_36 = arith.constant dense<0.000000e+00> : vector<16xf32>
    %128 = vector.multi_reduction <add>, %127, %cst_36 [1] : vector<16x16xf32> to vector<16xf32>
    %129 = vector.shape_cast %128 : vector<16xf32> to vector<16x1xf32>
    %130 = tpu.reciprocal %129 {approx = true} : vector<16x1xf32> -> vector<16x1xf32>
    %131 = arith.mulf %129, %130 : vector<16x1xf32>
    %cst_37 = arith.constant 2.000000e+00 : f32
    %132 = vector.broadcast %cst_37 : f32 to vector<16x1xf32>
    %133 = arith.subf %132, %131 : vector<16x1xf32>
    %134 = arith.mulf %130, %133 : vector<16x1xf32>
    %cst_38 = arith.constant dense<0.000000e+00> : vector<16x32xf32>
    %135 = tpu.matmul %127, %119, %cst_38 {dimension_numbers = #tpu.dot_dimension_numbers<[1], [0], [0], [1], [0, 0, 1, 1], [], []>, precision = #tpu.contract_precision<fp32>} : vector<16x16xf32>, vector<16x32xf32>, vector<16x32xf32> -> vector<16x32xf32>
    %136 = vector.broadcast %134 : vector<16x1xf32> to vector<16x32xf32>
    %137 = arith.mulf %135, %136 : vector<16x32xf32>
    %138 = tpu.concatenate %74, %95, %116, %137 in 1 : vector<16x32xf32>, vector<16x32xf32>, vector<16x32xf32>, vector<16x32xf32> -> vector<16x128xf32>
    %c0_39 = arith.constant 0 : index
    %c0_40 = arith.constant 0 : index
    %139 = vector.load %arg6[%c0_39, %c0_40] : memref<128x128xf32, #tpu.memory_space<vmem>>, vector<128x128xf32>
    %cst_41 = arith.constant dense<0.000000e+00> : vector<16x128xf32>
    %140 = tpu.matmul %138, %139, %cst_41 {dimension_numbers = #tpu.dot_dimension_numbers<[1], [0], [0], [1], [0, 0, 1, 1], [], []>, precision = #tpu.contract_precision<fp32>} : vector<16x128xf32>, vector<128x128xf32>, vector<16x128xf32> -> vector<16x128xf32>
    %141 = arith.addf %1, %140 : vector<16x128xf32>
    %142 = arith.mulf %141, %141 : vector<16x128xf32>
    %cst_42 = arith.constant dense<0.000000e+00> : vector<16xf32>
    %143 = vector.multi_reduction <add>, %142, %cst_42 [1] : vector<16x128xf32> to vector<16xf32>
    %144 = vector.shape_cast %143 : vector<16xf32> to vector<16x1xf32>
    %cst_43 = arith.constant 1.280000e+02 : f32
    %145 = vector.broadcast %cst_43 : f32 to vector<16x1xf32>
    %146 = arith.divf %144, %145 : vector<16x1xf32>
    %cst_44 = arith.constant 9.99999997E-7 : f32
    %147 = vector.broadcast %cst_44 : f32 to vector<16x1xf32>
    %148 = arith.addf %146, %147 : vector<16x1xf32>
    %149 = math.rsqrt %148 : vector<16x1xf32>
    %150 = vector.broadcast %149 : vector<16x1xf32> to vector<16x128xf32>
    %151 = arith.mulf %141, %150 : vector<16x128xf32>
    %c0_45 = arith.constant 0 : index
    %c0_46 = arith.constant 0 : index
    %152 = vector.load %arg3[%c0_45, %c0_46] : memref<1x128xf32, #tpu.memory_space<vmem>>, vector<1x128xf32>
    %153 = vector.broadcast %152 : vector<1x128xf32> to vector<16x128xf32>
    %154 = arith.mulf %151, %153 : vector<16x128xf32>
    %c0_47 = arith.constant 0 : index
    %c0_48 = arith.constant 0 : index
    %155 = vector.load %arg7[%c0_47, %c0_48] : memref<128x512xf32, #tpu.memory_space<vmem>>, vector<128x512xf32>
    %cst_49 = arith.constant dense<0.000000e+00> : vector<16x512xf32>
    %156 = tpu.matmul %154, %155, %cst_49 {dimension_numbers = #tpu.dot_dimension_numbers<[1], [0], [0], [1], [0, 0, 1, 1], [], []>, precision = #tpu.contract_precision<fp32>} : vector<16x128xf32>, vector<128x512xf32>, vector<16x512xf32> -> vector<16x512xf32>
    %157 = vector.extract_strided_slice %156 {offsets = [0, 0], sizes = [16, 256], strides = [1, 1]} : vector<16x512xf32> to vector<16x256xf32>
    %158 = vector.extract_strided_slice %156 {offsets = [0, 256], sizes = [16, 256], strides = [1, 1]} : vector<16x512xf32> to vector<16x256xf32>
    %cst_50 = arith.constant 0.000000e+00 : f32
    %159 = vector.broadcast %cst_50 : f32 to vector<16x256xf32>
    %160 = arith.subf %159, %157 : vector<16x256xf32>
    %161 = math.exp %160 : vector<16x256xf32>
    %cst_51 = arith.constant 1.000000e+00 : f32
    %162 = vector.broadcast %cst_51 : f32 to vector<16x256xf32>
    %163 = arith.addf %162, %161 : vector<16x256xf32>
    %cst_52 = arith.constant 1.000000e+00 : f32
    %164 = vector.broadcast %cst_52 : f32 to vector<16x256xf32>
    %165 = arith.divf %164, %163 : vector<16x256xf32>
    %166 = arith.mulf %157, %165 : vector<16x256xf32>
    %167 = arith.mulf %166, %158 : vector<16x256xf32>
    %c0_53 = arith.constant 0 : index
    %c0_54 = arith.constant 0 : index
    %168 = vector.load %arg8[%c0_53, %c0_54] : memref<256x128xf32, #tpu.memory_space<vmem>>, vector<256x128xf32>
    %cst_55 = arith.constant dense<0.000000e+00> : vector<16x128xf32>
    %169 = tpu.matmul %167, %168, %cst_55 {dimension_numbers = #tpu.dot_dimension_numbers<[1], [0], [0], [1], [0, 0, 1, 1], [], []>, precision = #tpu.contract_precision<fp32>} : vector<16x256xf32>, vector<256x128xf32>, vector<16x128xf32> -> vector<16x128xf32>
    %170 = arith.addf %141, %169 : vector<16x128xf32>
    %c0_56 = arith.constant 0 : index
    %c0_57 = arith.constant 0 : index
    %c0_58 = arith.constant 0 : index
    %171 = vector.load %arg12[%c0_56, %c0_57, %c0_58] : memref<1x16x128xf32, #tpu.memory_space<vmem>>, vector<1x16x128xf32>
    %172 = vector.shape_cast %171 : vector<1x16x128xf32> to vector<16x128xf32>
    %173 = vector.shape_cast %170 : vector<16x128xf32> to vector<1x16x128xf32>
    tpu.vector_store %arg12[%c0_56, %c0_57, %c0_58], %173 {strides = array<i32>} : memref<1x16x128xf32, #tpu.memory_space<vmem>>, vector<1x16x128xf32>,
    return
  }
  func.func @transform_0(%arg0: i32) -> (i32, i32, i32) {
    %c0_i32 = arith.constant 0 : i32
    %c0_i32_0 = arith.constant 0 : i32
    %c0_i32_1 = arith.constant 0 : i32
    return %arg0, %c0_i32, %c0_i32_0 : i32, i32, i32
  }
  func.func @transform_1(%arg0: i32) -> (i32, i32) {
    %c0_i32 = arith.constant 0 : i32
    %c0_i32_0 = arith.constant 0 : i32
    %c0_i32_1 = arith.constant 0 : i32
    return %c0_i32, %c0_i32_0 : i32, i32
  }
  func.func @transform_2(%arg0: i32) -> (i32, i32) {
    %c0_i32 = arith.constant 0 : i32
    %c0_i32_0 = arith.constant 0 : i32
    %c0_i32_1 = arith.constant 0 : i32
    return %c0_i32, %c0_i32_0 : i32, i32
  }
  func.func @transform_3(%arg0: i32) -> (i32, i32) {
    %c0_i32 = arith.constant 0 : i32
    %c0_i32_0 = arith.constant 0 : i32
    %c0_i32_1 = arith.constant 0 : i32
    return %c0_i32, %c0_i32_0 : i32, i32
  }
  func.func @transform_4(%arg0: i32) -> (i32, i32) {
    %c0_i32 = arith.constant 0 : i32
    %c0_i32_0 = arith.constant 0 : i32
    %c0_i32_1 = arith.constant 0 : i32
    return %c0_i32, %c0_i32_0 : i32, i32
  }
  func.func @transform_5(%arg0: i32) -> (i32, i32) {
    %c0_i32 = arith.constant 0 : i32
    %c0_i32_0 = arith.constant 0 : i32
    %c0_i32_1 = arith.constant 0 : i32
    return %c0_i32, %c0_i32_0 : i32, i32
  }
  func.func @transform_6(%arg0: i32) -> (i32, i32) {
    %c0_i32 = arith.constant 0 : i32
    %c0_i32_0 = arith.constant 0 : i32
    %c0_i32_1 = arith.constant 0 : i32
    return %c0_i32, %c0_i32_0 : i32, i32
  }
  func.func @transform_7(%arg0: i32) -> (i32, i32) {
    %c0_i32 = arith.constant 0 : i32
    %c0_i32_0 = arith.constant 0 : i32
    %c0_i32_1 = arith.constant 0 : i32
    return %c0_i32, %c0_i32_0 : i32, i32
  }
  func.func @transform_8(%arg0: i32) -> (i32, i32) {
    %c0_i32 = arith.constant 0 : i32
    %c0_i32_0 = arith.constant 0 : i32
    %c0_i32_1 = arith.constant 0 : i32
    return %c0_i32, %c0_i32_0 : i32, i32
  }
  func.func @transform_9(%arg0: i32) -> (i32, i32) {
    %c0_i32 = arith.constant 0 : i32
    %c0_i32_0 = arith.constant 0 : i32
    %c0_i32_1 = arith.constant 0 : i32
    return %c0_i32, %c0_i32_0 : i32, i32
  }
  func.func @transform_10(%arg0: i32) -> (i32, i32) {
    %c0_i32 = arith.constant 0 : i32
    %c0_i32_0 = arith.constant 0 : i32
    %c0_i32_1 = arith.constant 0 : i32
    return %c0_i32, %c0_i32_0 : i32, i32
  }
  func.func @transform_11(%arg0: i32) -> (i32, i32, i32) {
    %c0_i32 = arith.constant 0 : i32
    %c0_i32_0 = arith.constant 0 : i32
    %c0_i32_1 = arith.constant 0 : i32
    return %arg0, %c0_i32, %c0_i32_0 : i32, i32, i32
  }
}

</mosaic_0001>

<llo_original>
// kernel: tpu_custom_call.1
$region0: #{tpu_custom_call.1}
  #allocation0 [shape = 'u32[]', space=smem, size = 0x4, offset = 0x4, fixed_abs, tag = 'smem constant byte address 0x4 - core index']
  #allocation1 [shape = 'u32[144,128]{1,0:T(1,128)}', space=vmem, size = 0x12000, scoped, tag = 'internal scratch']
  %s0 = inlined_call_operand.hbm [shape: f32[2,16,128], index: 0, kind: input, shape index: {}]
  %s1 = inlined_call_operand.vmem [shape: f32[1,128], index: 1, kind: input, shape index: {}]
  %s2 = inlined_call_operand.vmem [shape: f32[1,128], index: 2, kind: input, shape index: {}]
  %s3 = inlined_call_operand.hbm [shape: f32[128,384], index: 3, kind: input, shape index: {}]
  %s4 = inlined_call_operand.hbm [shape: f32[1,384], index: 4, kind: input, shape index: {}]
  %s5 = inlined_call_operand.hbm [shape: f32[128,128], index: 5, kind: input, shape index: {}]
  %s6 = inlined_call_operand.hbm [shape: f32[128,512], index: 6, kind: input, shape index: {}]
  %s7 = inlined_call_operand.hbm [shape: f32[256,128], index: 7, kind: input, shape index: {}]
  %s8 = inlined_call_operand.vmem [shape: f32[16,128], index: 8, kind: input, shape index: {}]
  %s9 = inlined_call_operand.vmem [shape: f32[16,128], index: 9, kind: input, shape index: {}]
  %s10 = inlined_call_operand.hbm [shape: f32[16,128], index: 10, kind: input, shape index: {}]
  %s11 = inlined_call_operand.hbm [shape: f32[2,16,128], index: 11, kind: output, shape index: {}]
  %s12 = sld [smem:[#allocation0]]
  $region105: #{tpu_custom_call.1} parent=0
    _
  %s14 = ssub.s32 1, %s12
  %s15 = scalar_select 0, %s14, %s12
  $region1: #{tpu_custom_call.1} parent=0
    #allocation2 [shape = 'u8[16384]{0}', space=vmem, size = 0x4000, scoped, tag = 'input window, operand 0']
    #allocation3 [shape = 's32[2]{0}', space=sflag, size = 0x8, scoped, tag = 'scoped memory for tpu_custom_call.1']
    #allocation4 [shape = 's32[2]{0}', space=sflag, size = 0x8, scoped, tag = 'scoped memory for tpu_custom_call.1']
    #allocation5 [shape = 'u8[196608]{0}', space=vmem, size = 0x30000, scoped, tag = 'input window, operand 3, single buffered']
    #allocation6 [shape = 's32[1]{0}', space=sflag, size = 0x4, scoped, tag = 'scoped memory for tpu_custom_call.1']
    #allocation7 [shape = 'u8[1536]{0}', space=vmem, size = 0x800, scoped, tag = 'input window, operand 4, single buffered']
    #allocation8 [shape = 'u8[65536]{0}', space=vmem, size = 0x10000, scoped, tag = 'input window, operand 5, single buffered']
    #allocation9 [shape = 's32[1]{0}', space=sflag, size = 0x4, scoped, tag = 'scoped memory for tpu_custom_call.1']
    #allocation10 [shape = 'u8[262144]{0}', space=vmem, size = 0x40000, scoped, tag = 'input window, operand 6, single buffered']
    #allocation11 [shape = 'u8[131072]{0}', space=vmem, size = 0x20000, scoped, tag = 'input window, operand 7, single buffered']
    #allocation12 [shape = 's32[1]{0}', space=sflag, size = 0x4, scoped, tag = 'scoped memory for tpu_custom_call.1']
    #allocation13 [shape = 'u8[8192]{0}', space=vmem, size = 0x2000, scoped, tag = 'input window, operand 10, single buffered']
    #allocation14 [shape = 'u8[16384]{0}', space=vmem, size = 0x4000, scoped, tag = 'output window, operand 0']
    %16 = vsyncpa [#allocation3], 0
    %s17 = scalar_lea.sflag [#allocation3], 1
    %18 = vsyncpa %s17, 0
    %19 = vsyncpa [#allocation6], 0
    %20 = vsyncpa [#allocation9], 0
    %21 = vsyncpa [#allocation12], 0
    %22 = vsyncpa [#allocation4], 0
    %s23 = scalar_lea.sflag [#allocation4], 1
    %24 = vsyncpa %s23, 0
    loop: start=0, step=1, limit=4
    $region2: #{tpu_custom_call.1} parent=1 // loop_pre_header
      _
    $region3: #{tpu_custom_call.1} parent=1 // loop_header
      %s26 = sphi 0, %s30
      %p27 = scmp.ge.s32.totalorder %s26, 4
      %s36 = sphi 0, %s38
      %s39 = sphi 0, %s36
      %s40 = sphi 0, %s39
      %s56 = sphi 0, %s40
      %s60 = sphi 0, %s60
      %s62 = sphi 0, %s60
      %s63 = sphi 0, %s62
      %s77 = sphi 0, %s63
      %s81 = sphi 0, %s81
      %s83 = sphi 0, %s81
      %s84 = sphi 0, %s83
      %s98 = sphi 0, %s84
      %s102 = sphi 0, %s102
      %s104 = sphi 0, %s102
      %s105 = sphi 0, %s104
      %s119 = sphi 0, %s105
      %s123 = sphi 0, %s123
      %s125 = sphi 0, %s123
      %s126 = sphi 0, %s125
      %s140 = sphi 0, %s126
      %s144 = sphi 0, %s144
      %s146 = sphi 0, %s144
      %s147 = sphi 0, %s146
      %s161 = sphi 0, %s147
      %s165 = sphi 0, %s165
      %s167 = sphi 0, %s165
      %s168 = sphi 0, %s167
      %s182 = sphi 0, %s168
      %s186 = sphi 0, %s186
      %s188 = sphi 0, %s186
      %s189 = sphi 0, %s188
      %s203 = sphi 0, %s189
      %s207 = sphi 0, %s207
      %s209 = sphi 0, %s207
      %s210 = sphi 0, %s209
      %s224 = sphi 0, %s210
      %s228 = sphi 0, %s228
      %s230 = sphi 0, %s228
      %s231 = sphi 0, %s230
      %s245 = sphi 0, %s231
      %s249 = sphi 0, %s249
      %s251 = sphi 0, %s249
      %s252 = sphi 0, %s251
      %s266 = sphi 0, %s252
      %s272 = sphi 0, %s274
      %s275 = sphi 0, %s272
      %s276 = sphi 0, %s275
      %s292 = sphi 0, %s276
    $region4: #{tpu_custom_call.1} parent=1 // loop_header_branch
      %29 = sbr.rel (%p27) target = $region8
    $region5: #{tpu_custom_call.1} parent=1 // loop_body
      %s31 = ssub.s32 %s26, 1
      %s32 = ssub.s32 %s26, 2
      %s33 = sadd.s32 %s26, 1
      %s34 = ssub.s32 %s26, %s33
      %p35 = scmp.eq.s32.totalorder %s34, 0
      %s37 = sadd.s32 %s36, 1
      %s38 = scalar_select %p35, %s36, %s37
      %p41 = pneg %p35
      %p42 = scmp.eq.s32.totalorder %s26, 1
      %p43 = por %p41, %p42
      %p44 = scmp.ne.s32.totalorder %s36, %s39
      %p45 = scmp.eq.s32.totalorder %s26, 0
      %p46 = por %p44, %p45
      %p47 = scmp.ne.s32.totalorder %s36, %s39
      %p48 = scmp.eq.s32.totalorder %s31, 1
      %p49 = por %p47, %p48
      %p50 = scmp.ne.s32.totalorder %s39, %s40
      %p51 = scmp.eq.s32.totalorder %s31, 0
      %p52 = por %p50, %p51
      %p53 = scmp.ne.s32.totalorder %s39, %s40
      %p54 = scmp.eq.s32.totalorder %s32, 1
      %p55 = por %p53, %p54
      %p57 = scmp.ne.s32.totalorder %s40, %s56
      %p58 = scmp.eq.s32.totalorder %s32, 0
      %p59 = por %p57, %p58
      %s61 = sadd.s32 %s60, 1
      %p64 = scmp.eq.s32.totalorder %s26, 1
      %p65 = scmp.ne.s32.totalorder %s60, %s62
      %p66 = scmp.eq.s32.totalorder %s26, 0
      %p67 = por %p65, %p66
      %p68 = scmp.ne.s32.totalorder %s60, %s62
      %p69 = scmp.eq.s32.totalorder %s31, 1
      %p70 = por %p68, %p69
      %p71 = scmp.ne.s32.totalorder %s62, %s63
      %p72 = scmp.eq.s32.totalorder %s31, 0
      %p73 = por %p71, %p72
      %p74 = scmp.ne.s32.totalorder %s62, %s63
      %p75 = scmp.eq.s32.totalorder %s32, 1
      %p76 = por %p74, %p75
      %p78 = scmp.ne.s32.totalorder %s63, %s77
      %p79 = scmp.eq.s32.totalorder %s32, 0
      %p80 = por %p78, %p79
      %s82 = sadd.s32 %s81, 1
      %p85 = scmp.eq.s32.totalorder %s26, 1
      %p86 = scmp.ne.s32.totalorder %s81, %s83
      %p87 = scmp.eq.s32.totalorder %s26, 0
      %p88 = por %p86, %p87
      %p89 = scmp.ne.s32.totalorder %s81, %s83
      %p90 = scmp.eq.s32.totalorder %s31, 1
      %p91 = por %p89, %p90
      %p92 = scmp.ne.s32.totalorder %s83, %s84
      %p93 = scmp.eq.s32.totalorder %s31, 0
      %p94 = por %p92, %p93
      %p95 = scmp.ne.s32.totalorder %s83, %s84
      %p96 = scmp.eq.s32.totalorder %s32, 1
      %p97 = por %p95, %p96
      %p99 = scmp.ne.s32.totalorder %s84, %s98
      %p100 = scmp.eq.s32.totalorder %s32, 0
      %p101 = por %p99, %p100
      %s103 = sadd.s32 %s102, 1
      %p106 = scmp.eq.s32.totalorder %s26, 1
      %p107 = scmp.ne.s32.totalorder %s102, %s104
      %p108 = scmp.eq.s32.totalorder %s26, 0
      %p109 = por %p107, %p108
      %p110 = scmp.ne.s32.totalorder %s102, %s104
      %p111 = scmp.eq.s32.totalorder %s31, 1
      %p112 = por %p110, %p111
      %p113 = scmp.ne.s32.totalorder %s104, %s105
      %p114 = scmp.eq.s32.totalorder %s31, 0
      %p115 = por %p113, %p114
      %p116 = scmp.ne.s32.totalorder %s104, %s105
      %p117 = scmp.eq.s32.totalorder %s32, 1
      %p118 = por %p116, %p117
      %p120 = scmp.ne.s32.totalorder %s105, %s119
      %p121 = scmp.eq.s32.totalorder %s32, 0
      %p122 = por %p120, %p121
      %s124 = sadd.s32 %s123, 1
      %p127 = scmp.eq.s32.totalorder %s26, 1
      %p128 = scmp.ne.s32.totalorder %s123, %s125
      %p129 = scmp.eq.s32.totalorder %s26, 0
      %p130 = por %p128, %p129
      %p131 = scmp.ne.s32.totalorder %s123, %s125
      %p132 = scmp.eq.s32.totalorder %s31, 1
      %p133 = por %p131, %p132
      %p134 = scmp.ne.s32.totalorder %s125, %s126
      %p135 = scmp.eq.s32.totalorder %s31, 0
      %p136 = por %p134, %p135
      %p137 = scmp.ne.s32.totalorder %s125, %s126
      %p138 = scmp.eq.s32.totalorder %s32, 1
      %p139 = por %p137, %p138
      %p141 = scmp.ne.s32.totalorder %s126, %s140
      %p142 = scmp.eq.s32.totalorder %s32, 0
      %p143 = por %p141, %p142
      %s145 = sadd.s32 %s144, 1
      %p148 = scmp.eq.s32.totalorder %s26, 1
      %p149 = scmp.ne.s32.totalorder %s144, %s146
      %p150 = scmp.eq.s32.totalorder %s26, 0
      %p151 = por %p149, %p150
      %p152 = scmp.ne.s32.totalorder %s144, %s146
      %p153 = scmp.eq.s32.totalorder %s31, 1
      %p154 = por %p152, %p153
      %p155 = scmp.ne.s32.totalorder %s146, %s147
      %p156 = scmp.eq.s32.totalorder %s31, 0
      %p157 = por %p155, %p156
      %p158 = scmp.ne.s32.totalorder %s146, %s147
      %p159 = scmp.eq.s32.totalorder %s32, 1
      %p160 = por %p158, %p159
      %p162 = scmp.ne.s32.totalorder %s147, %s161
      %p163 = scmp.eq.s32.totalorder %s32, 0
      %p164 = por %p162, %p163
      %s166 = sadd.s32 %s165, 1
      %p169 = scmp.eq.s32.totalorder %s26, 1
      %p170 = scmp.ne.s32.totalorder %s165, %s167
      %p171 = scmp.eq.s32.totalorder %s26, 0
      %p172 = por %p170, %p171
      %p173 = scmp.ne.s32.totalorder %s165, %s167
      %p174 = scmp.eq.s32.totalorder %s31, 1
      %p175 = por %p173, %p174
      %p176 = scmp.ne.s32.totalorder %s167, %s168
      %p177 = scmp.eq.s32.totalorder %s31, 0
      %p178 = por %p176, %p177
      %p179 = scmp.ne.s32.totalorder %s167, %s168
      %p180 = scmp.eq.s32.totalorder %s32, 1
      %p181 = por %p179, %p180
      %p183 = scmp.ne.s32.totalorder %s168, %s182
      %p184 = scmp.eq.s32.totalorder %s32, 0
      %p185 = por %p183, %p184
      %s187 = sadd.s32 %s186, 1
      %p190 = scmp.eq.s32.totalorder %s26, 1
      %p191 = scmp.ne.s32.totalorder %s186, %s188
      %p192 = scmp.eq.s32.totalorder %s26, 0
      %p193 = por %p191, %p192
      %p194 = scmp.ne.s32.totalorder %s186, %s188
      %p195 = scmp.eq.s32.totalorder %s31, 1
      %p196 = por %p194, %p195
      %p197 = scmp.ne.s32.totalorder %s188, %s189
      %p198 = scmp.eq.s32.totalorder %s31, 0
      %p199 = por %p197, %p198
      %p200 = scmp.ne.s32.totalorder %s188, %s189
      %p201 = scmp.eq.s32.totalorder %s32, 1
      %p202 = por %p200, %p201
      %p204 = scmp.ne.s32.totalorder %s189, %s203
      %p205 = scmp.eq.s32.totalorder %s32, 0
      %p206 = por %p204, %p205
      %s208 = sadd.s32 %s207, 1
      %p211 = scmp.eq.s32.totalorder %s26, 1
      %p212 = scmp.ne.s32.totalorder %s207, %s209
      %p213 = scmp.eq.s32.totalorder %s26, 0
      %p214 = por %p212, %p213
      %p215 = scmp.ne.s32.totalorder %s207, %s209
      %p216 = scmp.eq.s32.totalorder %s31, 1
      %p217 = por %p215, %p216
      %p218 = scmp.ne.s32.totalorder %s209, %s210
      %p219 = scmp.eq.s32.totalorder %s31, 0
      %p220 = por %p218, %p219
      %p221 = scmp.ne.s32.totalorder %s209, %s210
      %p222 = scmp.eq.s32.totalorder %s32, 1
      %p223 = por %p221, %p222
      %p225 = scmp.ne.s32.totalorder %s210, %s224
      %p226 = scmp.eq.s32.totalorder %s32, 0
      %p227 = por %p225, %p226
      %s229 = sadd.s32 %s228, 1
      %p232 = scmp.eq.s32.totalorder %s26, 1
      %p233 = scmp.ne.s32.totalorder %s228, %s230
      %p234 = scmp.eq.s32.totalorder %s26, 0
      %p235 = por %p233, %p234
      %p236 = scmp.ne.s32.totalorder %s228, %s230
      %p237 = scmp.eq.s32.totalorder %s31, 1
      %p238 = por %p236, %p237
      %p239 = scmp.ne.s32.totalorder %s230, %s231
      %p240 = scmp.eq.s32.totalorder %s31, 0
      %p241 = por %p239, %p240
      %p242 = scmp.ne.s32.totalorder %s230, %s231
      %p243 = scmp.eq.s32.totalorder %s32, 1
      %p244 = por %p242, %p243
      %p246 = scmp.ne.s32.totalorder %s231, %s245
      %p247 = scmp.eq.s32.totalorder %s32, 0
      %p248 = por %p246, %p247
      %s250 = sadd.s32 %s249, 1
      %p253 = scmp.eq.s32.totalorder %s26, 1
      %p254 = scmp.ne.s32.totalorder %s249, %s251
      %p255 = scmp.eq.s32.totalorder %s26, 0
      %p256 = por %p254, %p255
      %p257 = scmp.ne.s32.totalorder %s249, %s251
      %p258 = scmp.eq.s32.totalorder %s31, 1
      %p259 = por %p257, %p258
      %p260 = scmp.ne.s32.totalorder %s251, %s252
      %p261 = scmp.eq.s32.totalorder %s31, 0
      %p262 = por %p260, %p261
      %p263 = scmp.ne.s32.totalorder %s251, %s252
      %p264 = scmp.eq.s32.totalorder %s32, 1
      %p265 = por %p263, %p264
      %p267 = scmp.ne.s32.totalorder %s252, %s266
      %p268 = scmp.eq.s32.totalorder %s32, 0
      %p269 = por %p267, %p268
      %s270 = ssub.s32 %s26, %s33
      %p271 = scmp.eq.s32.totalorder %s270, 0
      %s273 = sadd.s32 %s272, 1
      %s274 = scalar_select %p271, %s272, %s273
      %p277 = pneg %p271
      %p278 = scmp.eq.s32.totalorder %s26, 1
      %p279 = por %p277, %p278
      %p280 = scmp.ne.s32.totalorder %s272, %s275
      %p281 = scmp.eq.s32.totalorder %s26, 0
      %p282 = por %p280, %p281
      %p283 = scmp.ne.s32.totalorder %s272, %s275
      %p284 = scmp.eq.s32.totalorder %s31, 1
      %p285 = por %p283, %p284
      %p286 = scmp.ne.s32.totalorder %s275, %s276
      %p287 = scmp.eq.s32.totalorder %s31, 0
      %p288 = por %p286, %p287
      %p289 = scmp.ne.s32.totalorder %s275, %s276
      %p290 = scmp.eq.s32.totalorder %s32, 1
      %p291 = por %p289, %p290
      %p293 = scmp.ne.s32.totalorder %s276, %s292
      %p294 = scmp.eq.s32.totalorder %s32, 0
      %p295 = por %p293, %p294
      %p296 = scmp.le.s32.totalorder 1, %s26
      %p297 = scmp.lt.s32.totalorder %s26, 3
      %p298 = pnand %p296, %p297
      %p299 = pneg %p298
      // Predicated region
      $region9: #{tpu_custom_call.1} parent=5 // pred_check
        _
      $region10: #{tpu_custom_call.1} parent=5 // pred_check_branch
        %301 = sbr.rel (%p298) target = $region12
      $region11: #{tpu_custom_call.1} parent=5 // pred_region
        %s302 = ssub.s32 %s26, 1
        // Predicated region
        $region13: #{tpu_custom_call.1} parent=11 // pred_check
          %p303 = pneg %p73
        $region14: #{tpu_custom_call.1} parent=11 // pred_check_branch
          %305 = sbr.rel (%p303) target = $region16
        $region15: #{tpu_custom_call.1} parent=11 // pred_region
          _
        $region16: #{tpu_custom_call.1} parent=11 // pred_fallthru
          _
        // Predicated region
        $region17: #{tpu_custom_call.1} parent=11 // pred_check
          %p306 = pneg %p94
        $region18: #{tpu_custom_call.1} parent=11 // pred_check_branch
          %308 = sbr.rel (%p306) target = $region20
        $region19: #{tpu_custom_call.1} parent=11 // pred_region
          _
        $region20: #{tpu_custom_call.1} parent=11 // pred_fallthru
          _
        // Predicated region
        $region21: #{tpu_custom_call.1} parent=11 // pred_check
          %p309 = pneg %p115
        $region22: #{tpu_custom_call.1} parent=11 // pred_check_branch
          %311 = sbr.rel (%p309) target = $region24
        $region23: #{tpu_custom_call.1} parent=11 // pred_region
          %s313 = ssub.s32 6144, 6144
          %314 = vsyncadd [#allocation6], %s313
          %s315 = sshll.u32 [#allocation5], 4
          %s316 = int_to_ptr.vmem [resolvable:$true] %s315
          %321 = dma.hbm_to_vmem [thread:$0]  %s3, 6144, %s316, [#allocation6], 384, 384, 24
        $region24: #{tpu_custom_call.1} parent=11 // pred_fallthru
          _
        // Predicated region
        $region25: #{tpu_custom_call.1} parent=11 // pred_check
          %p322 = pneg %p136
        $region26: #{tpu_custom_call.1} parent=11 // pred_check_branch
          %324 = sbr.rel (%p322) target = $region28
        $region27: #{tpu_custom_call.1} parent=11 // pred_region
          %s326 = ssub.s32 48, 48
          %327 = vsyncadd [#allocation6], %s326
          %s329 = sshll.u32 [#allocation7], 4
          %s330 = int_to_ptr.vmem [resolvable:$true] %s329
          %332 = dma.hbm_to_vmem [thread:$0]  %s4, 48, %s330, [#allocation6]
        $region28: #{tpu_custom_call.1} parent=11 // pred_fallthru
          _
        // Predicated region
        $region29: #{tpu_custom_call.1} parent=11 // pred_check
          %p333 = pneg %p157
        $region30: #{tpu_custom_call.1} parent=11 // pred_check_branch
          %335 = sbr.rel (%p333) target = $region32
        $region31: #{tpu_custom_call.1} parent=11 // pred_region
          %s337 = ssub.s32 2048, 2048
          %338 = vsyncadd [#allocation9], %s337
          %s339 = sshll.u32 [#allocation8], 4
          %s340 = int_to_ptr.vmem [resolvable:$true] %s339
          %345 = dma.hbm_to_vmem [thread:$0]  %s5, 2048, %s340, [#allocation9], 128, 128, 8
        $region32: #{tpu_custom_call.1} parent=11 // pred_fallthru
          _
        // Predicated region
        $region33: #{tpu_custom_call.1} parent=11 // pred_check
          %p346 = pneg %p178
        $region34: #{tpu_custom_call.1} parent=11 // pred_check_branch
          %348 = sbr.rel (%p346) target = $region36
        $region35: #{tpu_custom_call.1} parent=11 // pred_region
          %s350 = ssub.s32 8192, 8192
          %351 = vsyncadd [#allocation9], %s350
          %s352 = sshll.u32 [#allocation10], 4
          %s353 = int_to_ptr.vmem [resolvable:$true] %s352
          %358 = dma.hbm_to_vmem [thread:$0]  %s6, 8192, %s353, [#allocation9], 512, 512, 32
        $region36: #{tpu_custom_call.1} parent=11 // pred_fallthru
          _
        // Predicated region
        $region37: #{tpu_custom_call.1} parent=11 // pred_check
          %p359 = pneg %p199
        $region38: #{tpu_custom_call.1} parent=11 // pred_check_branch
          %361 = sbr.rel (%p359) target = $region40
        $region39: #{tpu_custom_call.1} parent=11 // pred_region
          %s363 = ssub.s32 4096, 4096
          %364 = vsyncadd [#allocation12], %s363
          %s365 = sshll.u32 [#allocation11], 4
          %s366 = int_to_ptr.vmem [resolvable:$true] %s365
          %371 = dma.hbm_to_vmem [thread:$0]  %s7, 4096, %s366, [#allocation12], 128, 128, 8
        $region40: #{tpu_custom_call.1} parent=11 // pred_fallthru
          _
        // Predicated region
        $region41: #{tpu_custom_call.1} parent=11 // pred_check
          %p372 = pneg %p220
        $region42: #{tpu_custom_call.1} parent=11 // pred_check_branch
          %374 = sbr.rel (%p372) target = $region44
        $region43: #{tpu_custom_call.1} parent=11 // pred_region
          _
        $region44: #{tpu_custom_call.1} parent=11 // pred_fallthru
          _
        // Predicated region
        $region45: #{tpu_custom_call.1} parent=11 // pred_check
          %p375 = pneg %p241
        $region46: #{tpu_custom_call.1} parent=11 // pred_check_branch
          %377 = sbr.rel (%p375) target = $region48
        $region47: #{tpu_custom_call.1} parent=11 // pred_region
          _
        $region48: #{tpu_custom_call.1} parent=11 // pred_fallthru
          _
        // Predicated region
        $region49: #{tpu_custom_call.1} parent=11 // pred_check
          %p378 = pneg %p262
        $region50: #{tpu_custom_call.1} parent=11 // pred_check_branch
          %380 = sbr.rel (%p378) target = $region52
        $region51: #{tpu_custom_call.1} parent=11 // pred_region
          %s382 = ssub.s32 256, 256
          %383 = vsyncadd [#allocation12], %s382
          %s384 = sshll.u32 [#allocation13], 4
          %s385 = int_to_ptr.vmem [resolvable:$true] %s384
          %390 = dma.hbm_to_vmem [thread:$0]  %s10, 256, %s385, [#allocation12], 128, 128, 8
        $region52: #{tpu_custom_call.1} parent=11 // pred_fallthru
          _
      $region12: #{tpu_custom_call.1} parent=5 // pred_fallthru
        _
      %p391 = scmp.lt.s32.totalorder %s26, 2
      // Predicated region
      $region53: #{tpu_custom_call.1} parent=5 // pred_check
        %p392 = pneg %p391
      $region54: #{tpu_custom_call.1} parent=5 // pred_check_branch
        %394 = sbr.rel (%p392) target = $region56
      $region55: #{tpu_custom_call.1} parent=5 // pred_region
        // Predicated region
        $region57: #{tpu_custom_call.1} parent=55 // pred_check
          %p395 = pneg %p46
        $region58: #{tpu_custom_call.1} parent=55 // pred_check_branch
          %397 = sbr.rel (%p395) target = $region60
        $region59: #{tpu_custom_call.1} parent=55 // pred_region
          %s398 = sand.u32 %s36, 1
          %s399 = scalar_lea.sflag [#allocation3], %s398
          %s400 = sand.u32 %s36, 1
          %s401 = smul.addr %s400, 16
          %s402 = scalar_lea.vmem [#allocation2], %s401
          %s404 = ssub.s32 256, 256
          %405 = vsyncadd %s399, %s404
          %s406 = smul.addr %s26, 2
          %s407 = smul.addr %s406, 128
          %s408 = scalar_lea.hbm %s0, %s407
          %s409 = sshll.u32 %s402, 4
          %s410 = int_to_ptr.vmem [resolvable:$true] %s409
          %415 = dma.hbm_to_vmem [thread:$0]  %s408, 256, %s410, %s399, 128, 128, 8
        $region60: #{tpu_custom_call.1} parent=55 // pred_fallthru
          _
      $region56: #{tpu_custom_call.1} parent=5 // pred_fallthru
        _
      %p416 = scmp.le.s32.totalorder 1, %s26
      %p417 = scmp.lt.s32.totalorder %s26, 3
      %p418 = pnand %p416, %p417
      %p419 = pneg %p418
      // Predicated region
      $region61: #{tpu_custom_call.1} parent=5 // pred_check
        _
      $region62: #{tpu_custom_call.1} parent=5 // pred_check_branch
        %421 = sbr.rel (%p418) target = $region64
      $region63: #{tpu_custom_call.1} parent=5 // pred_region
        %s422 = ssub.s32 %s26, 1
        %s423 = sand.u32 %s39, 1
        %s424 = scalar_lea.sflag [#allocation3], %s423
        %s425 = sand.u32 %s39, 1
        %s426 = smul.addr %s425, 16
        %s427 = scalar_lea.vmem [#allocation2], %s426
        // Predicated region
        $region65: #{tpu_custom_call.1} parent=63 // pred_check
          %p428 = pneg %p52
        $region66: #{tpu_custom_call.1} parent=63 // pred_check_branch
          %430 = sbr.rel (%p428) target = $region68
        $region67: #{tpu_custom_call.1} parent=63 // pred_region
          %431 = dma.done %s424, 256
        $region68: #{tpu_custom_call.1} parent=63 // pred_fallthru
          _
        // Predicated region
        $region69: #{tpu_custom_call.1} parent=63 // pred_check
          %p432 = pneg %p115
        $region70: #{tpu_custom_call.1} parent=63 // pred_check_branch
          %434 = sbr.rel (%p432) target = $region72
        $region71: #{tpu_custom_call.1} parent=63 // pred_region
          %435 = dma.done [#allocation6], 6144
        $region72: #{tpu_custom_call.1} parent=63 // pred_fallthru
          _
        // Predicated region
        $region73: #{tpu_custom_call.1} parent=63 // pred_check
          %p436 = pneg %p136
        $region74: #{tpu_custom_call.1} parent=63 // pred_check_branch
          %438 = sbr.rel (%p436) target = $region76
        $region75: #{tpu_custom_call.1} parent=63 // pred_region
          %439 = dma.done [#allocation6], 48
        $region76: #{tpu_custom_call.1} parent=63 // pred_fallthru
          _
        // Predicated region
        $region77: #{tpu_custom_call.1} parent=63 // pred_check
          %p440 = pneg %p157
        $region78: #{tpu_custom_call.1} parent=63 // pred_check_branch
          %442 = sbr.rel (%p440) target = $region80
        $region79: #{tpu_custom_call.1} parent=63 // pred_region
          %443 = dma.done [#allocation9], 2048
        $region80: #{tpu_custom_call.1} parent=63 // pred_fallthru
          _
        // Predicated region
        $region81: #{tpu_custom_call.1} parent=63 // pred_check
          %p444 = pneg %p178
        $region82: #{tpu_custom_call.1} parent=63 // pred_check_branch
          %446 = sbr.rel (%p444) target = $region84
        $region83: #{tpu_custom_call.1} parent=63 // pred_region
          %447 = dma.done [#allocation9], 8192
        $region84: #{tpu_custom_call.1} parent=63 // pred_fallthru
          _
        // Predicated region
        $region85: #{tpu_custom_call.1} parent=63 // pred_check
          %p448 = pneg %p199
        $region86: #{tpu_custom_call.1} parent=63 // pred_check_branch
          %450 = sbr.rel (%p448) target = $region88
        $region87: #{tpu_custom_call.1} parent=63 // pred_region
          %451 = dma.done [#allocation12], 4096
        $region88: #{tpu_custom_call.1} parent=63 // pred_fallthru
          _
        // Predicated region
        $region89: #{tpu_custom_call.1} parent=63 // pred_check
          %p452 = pneg %p262
        $region90: #{tpu_custom_call.1} parent=63 // pred_check_branch
          %454 = sbr.rel (%p452) target = $region92
        $region91: #{tpu_custom_call.1} parent=63 // pred_region
          %455 = dma.done [#allocation12], 256
        $region92: #{tpu_custom_call.1} parent=63 // pred_fallthru
          _
        %s456 = sand.u32 %s39, 1
        %s457 = scalar_lea.sflag [#allocation3], %s456
        %s458 = sand.u32 %s39, 1
        %s459 = smul.addr %s458, 16
        %s460 = scalar_lea.vmem [#allocation2], %s459
        %p461 = pneg %p52
        %p462 = pneg %p49
        %p463 = pneg %p73
        %p464 = pneg %p70
        %p465 = pneg %p94
        %p466 = pneg %p91
        %p467 = pneg %p115
        %p468 = pneg %p112
        %p469 = pneg %p136
        %p470 = pneg %p133
        %p471 = pneg %p157
        %p472 = pneg %p154
        %p473 = pneg %p178
        %p474 = pneg %p175
        %p475 = pneg %p199
        %p476 = pneg %p196
        %p477 = pneg %p220
        %p478 = pneg %p217
        %p479 = pneg %p241
        %p480 = pneg %p238
        %p481 = pneg %p262
        %p482 = pneg %p259
        %p483 = pneg %p288
        %p484 = pneg %p285
        %s485 = sand.u32 %s275, 1
        %s486 = scalar_lea.sflag [#allocation4], %s485
        %s487 = sand.u32 %s275, 1
        %s488 = smul.addr %s487, 16
        %s489 = scalar_lea.vmem [#allocation14], %s488
        %v490 = vld [vmem:[%s427] sm:$0xff]
        %v491 = vld [vmem:[%s427 + $0x8] sm:$0xff]
        %v492 = vmul.f32 %v490, %v490
        %v493 = vmul.f32 %v491, %v491
        %494 = vadd.xlane.f32.xlu0 %v492
        %v495 = vpop.xlane.xlu0 %494
        %496 = vadd.xlane.f32.xlu0 %v493
        %v497 = vpop.xlane.xlu0 %496
        %v498 = vrcp.pop 128.0
        %v499 = vmul.f32 %v495, %v498
        %v500 = vmul.f32 %v497, %v498
        %v501 = vadd.f32 %v499, 1e-06
        %v502 = vadd.f32 %v500, 1e-06
        %v503 = vrsqrt.pop %v501
        %v504 = vrsqrt.pop %v502
        %v505 = vmul.f32 %v490, %v503
        %v506 = vmul.f32 %v491, %v504
        %v507 = vld [vmem:[%s1] sm:$0x1]
        %v509 = vlaneseq
        %v510 = vshrl.u32 %v509, 7
        %v511 = vsub.s32 0, %v510
        %v512 = vrot.slane %v507, %v511
        %v514 = vmul.f32 %v505, %v512
        %v515 = vmul.f32 %v506, %v512
        %v516 = vld [vmem:[#allocation5] sm:$0xff]
        %v517 = vld [vmem:[#allocation5 + $0x8] sm:$0xff]
        %v518 = vld [vmem:[#allocation5 + $0x10] sm:$0xff]
        %v519 = vld [vmem:[#allocation5 + $0x18] sm:$0xff]
        %v520 = vld [vmem:[#allocation5 + $0x20] sm:$0xff]
        %v521 = vld [vmem:[#allocation5 + $0x28] sm:$0xff]
        %v522 = vld [vmem:[#allocation5 + $0x30] sm:$0xff]
        %v523 = vld [vmem:[#allocation5 + $0x38] sm:$0xff]
        %v524 = vld [vmem:[#allocation5 + $0x40] sm:$0xff]
        %v525 = vld [vmem:[#allocation5 + $0x48] sm:$0xff]
        %v526 = vld [vmem:[#allocation5 + $0x50] sm:$0xff]
        %v527 = vld [vmem:[#allocation5 + $0x58] sm:$0xff]
        %v528 = vld [vmem:[#allocation5 + $0x60] sm:$0xff]
        %v529 = vld [vmem:[#allocation5 + $0x68] sm:$0xff]
        %v530 = vld [vmem:[#allocation5 + $0x70] sm:$0xff]
        %v531 = vld [vmem:[#allocation5 + $0x78] sm:$0xff]
        %v532 = vld [vmem:[#allocation5 + $0x80] sm:$0xff]
        %v533 = vld [vmem:[#allocation5 + $0x88] sm:$0xff]
        %v534 = vld [vmem:[#allocation5 + $0x90] sm:$0xff]
        %v535 = vld [vmem:[#allocation5 + $0x98] sm:$0xff]
        %v536 = vld [vmem:[#allocation5 + $0xa0] sm:$0xff]
        %v537 = vld [vmem:[#allocation5 + $0xa8] sm:$0xff]
        %v538 = vld [vmem:[#allocation5 + $0xb0] sm:$0xff]
        %v539 = vld [vmem:[#allocation5 + $0xb8] sm:$0xff]
        %v540 = vld [vmem:[#allocation5 + $0xc0] sm:$0xff]
        %v541 = vld [vmem:[#allocation5 + $0xc8] sm:$0xff]
        %v542 = vld [vmem:[#allocation5 + $0xd0] sm:$0xff]
        %v543 = vld [vmem:[#allocation5 + $0xd8] sm:$0xff]
        %v544 = vld [vmem:[#allocation5 + $0xe0] sm:$0xff]
        %v545 = vld [vmem:[#allocation5 + $0xe8] sm:$0xff]
        %v546 = vld [vmem:[#allocation5 + $0xf0] sm:$0xff]
        %v547 = vld [vmem:[#allocation5 + $0xf8] sm:$0xff]
        %v548 = vld [vmem:[#allocation5 + $0x100] sm:$0xff]
        %v549 = vld [vmem:[#allocation5 + $0x108] sm:$0xff]
        %v550 = vld [vmem:[#allocation5 + $0x110] sm:$0xff]
        %v551 = vld [vmem:[#allocation5 + $0x118] sm:$0xff]
        %v552 = vld [vmem:[#allocation5 + $0x120] sm:$0xff]
        %v553 = vld [vmem:[#allocation5 + $0x128] sm:$0xff]
        %v554 = vld [vmem:[#allocation5 + $0x130] sm:$0xff]
        %v555 = vld [vmem:[#allocation5 + $0x138] sm:$0xff]
        %v556 = vld [vmem:[#allocation5 + $0x140] sm:$0xff]
        %v557 = vld [vmem:[#allocation5 + $0x148] sm:$0xff]
        %v558 = vld [vmem:[#allocation5 + $0x150] sm:$0xff]
        %v559 = vld [vmem:[#allocation5 + $0x158] sm:$0xff]
        %v560 = vld [vmem:[#allocation5 + $0x160] sm:$0xff]
        %v561 = vld [vmem:[#allocation5 + $0x168] sm:$0xff]
        %v562 = vld [vmem:[#allocation5 + $0x170] sm:$0xff]
        %v563 = vld [vmem:[#allocation5 + $0x178] sm:$0xff]
        %v564 = vld [vmem:[#allocation7] sm:$0x7]
        %v566 = vlaneseq
        %v567 = vshrl.u32 %v566, 7
        %v568 = vsub.s32 0, %v567
        %v569 = vrot.slane %v564, %v568
        %v570 = vlaneseq
        %v571 = vshrl.u32 %v570, 7
        %v572 = vsub.s32 1, %v571
        %v573 = vrot.slane %v564, %v572
        %v574 = vlaneseq
        %v575 = vshrl.u32 %v574, 7
        %v576 = vsub.s32 2, %v575
        %v577 = vrot.slane %v564, %v576
        %v581 = vand.u32 %v517, 4294901760
        %582 = vmatprep.subr.mxu0 %v581
        %v583 = vand.u32 %v516, 4294901760
        %584 = vmatpush1.msra.mxu0 %v583
        %v585 = vand.u32 %v520, 4294901760
        %586 = vmatprep.subr.mxu0 %v585
        %v587 = vand.u32 %v519, 4294901760
        %588 = vmatpush1.msra.mxu0 %v587
        %v589 = vand.u32 %v523, 4294901760
        %590 = vmatprep.subr.mxu0 %v589
        %v591 = vand.u32 %v522, 4294901760
        %592 = vmatpush1.msra.mxu0 %v591
        %v593 = vand.u32 %v526, 4294901760
        %594 = vmatprep.subr.mxu0 %v593
        %v595 = vand.u32 %v525, 4294901760
        %596 = vmatpush1.msra.mxu0 %v595
        %v597 = vand.u32 %v529, 4294901760
        %598 = vmatprep.subr.mxu0 %v597
        %v599 = vand.u32 %v528, 4294901760
        %600 = vmatpush1.msra.mxu0 %v599
        %v601 = vand.u32 %v532, 4294901760
        %602 = vmatprep.subr.mxu0 %v601
        %v603 = vand.u32 %v531, 4294901760
        %604 = vmatpush1.msra.mxu0 %v603
        %v605 = vand.u32 %v535, 4294901760
        %606 = vmatprep.subr.mxu0 %v605
        %v607 = vand.u32 %v534, 4294901760
        %608 = vmatpush1.msra.mxu0 %v607
        %v609 = vand.u32 %v538, 4294901760
        %610 = vmatprep.subr.mxu0 %v609
        %v611 = vand.u32 %v537, 4294901760
        %612 = vmatpush1.msra.mxu0 %v611
        %v613 = vand.u32 %v541, 4294901760
        %614 = vmatprep.subr.mxu0 %v613
        %v615 = vand.u32 %v540, 4294901760
        %616 = vmatpush1.msra.mxu0 %v615
        %v617 = vand.u32 %v544, 4294901760
        %618 = vmatprep.subr.mxu0 %v617
        %v619 = vand.u32 %v543, 4294901760
        %620 = vmatpush1.msra.mxu0 %v619
        %v621 = vand.u32 %v547, 4294901760
        %622 = vmatprep.subr.mxu0 %v621
        %v623 = vand.u32 %v546, 4294901760
        %624 = vmatpush1.msra.mxu0 %v623
        %v625 = vand.u32 %v550, 4294901760
        %626 = vmatprep.subr.mxu0 %v625
        %v627 = vand.u32 %v549, 4294901760
        %628 = vmatpush1.msra.mxu0 %v627
        %v629 = vand.u32 %v553, 4294901760
        %630 = vmatprep.subr.mxu0 %v629
        %v631 = vand.u32 %v552, 4294901760
        %632 = vmatpush1.msra.mxu0 %v631
        %v633 = vand.u32 %v556, 4294901760
        %634 = vmatprep.subr.mxu0 %v633
        %v635 = vand.u32 %v555, 4294901760
        %636 = vmatpush1.msra.mxu0 %v635
        %v637 = vand.u32 %v559, 4294901760
        %638 = vmatprep.subr.mxu0 %v637
        %v639 = vand.u32 %v558, 4294901760
        %640 = vmatpush1.msra.mxu0 %v639
        %v641 = vand.u32 %v562, 4294901760
        %642 = vmatprep.subr.mxu0 %v641
        %v643 = vand.u32 %v561, 4294901760
        %644 = vmatpush1.msra.mxu0 %v643
        %645 = vmatprep.subr.mxu0 0.0
        %646 = vmatpush1.msra.mxu0 0.0
        %647 = vmatprep.subr.mxu0 0.0
        %648 = vmatpush1.msra.mxu0 0.0
        %649 = vmatprep.subr.mxu0 0.0
        %650 = vmatpush1.msra.mxu0 0.0
        %651 = vmatprep.subr.mxu0 0.0
        %652 = vmatpush1.msra.mxu0 0.0
        %653 = vmatprep.subr.mxu0 0.0
        %654 = vmatpush1.msra.mxu0 0.0
        %655 = vmatprep.subr.mxu0 0.0
        %656 = vmatpush1.msra.mxu0 0.0
        %657 = vmatprep.subr.mxu0 0.0
        %658 = vmatpush1.msra.mxu0 0.0
        %659 = vmatprep.subr.mxu0 0.0
        %660 = vmatpush1.msra.mxu0 0.0
        %661 = vmatprep.subr.mxu0 0.0
        %662 = vmatpush1.msra.mxu0 0.0
        %663 = vmatprep.subr.mxu0 0.0
        %664 = vmatpush1.msra.mxu0 0.0
        %665 = vmatprep.subr.mxu0 0.0
        %666 = vmatpush1.msra.mxu0 0.0
        %667 = vmatprep.subr.mxu0 0.0
        %668 = vmatpush1.msra.mxu0 0.0
        %669 = vmatprep.subr.mxu0 0.0
        %670 = vmatpush1.msra.mxu0 0.0
        %671 = vmatprep.subr.mxu0 0.0
        %672 = vmatpush1.msra.mxu0 0.0
        %673 = vmatprep.subr.mxu0 0.0
        %674 = vmatpush1.msra.mxu0 0.0
        %675 = vmatprep.subr.mxu0 0.0
        %676 = vmatpush1.msra.mxu0 0.0
        %677 = vmatprep.mubr.f32.mxu0 0.0
        %v678 = vand.u32 %v514, 4294901760
        %v679 = vsub.f32 %v514, %v678
        %v680 = vand.u32 %v679, 4294901760
        %v681 = vsub.f32 %v679, %v680
        %v682 = vand.u32 %v681, 4294901760
        %683 = vmatmul.mubr.f32.gmra.mrb[0].mxu0 %v682
        %v684 = vpop.f32.mrb[0].mxu0
        %v685 = vadd.f32 %v569, %v684
        %v686 = vpop.f32.mrb[0].mxu0
        %v687 = vadd.f32 %v573, %v686
        %688 = vmatprep.mubr.f32.mxu0 0.0
        %v689 = vand.u32 %v515, 4294901760
        %v690 = vsub.f32 %v515, %v689
        %v691 = vand.u32 %v690, 4294901760
        %v692 = vsub.f32 %v690, %v691
        %v693 = vand.u32 %v692, 4294901760
        %694 = vmatmul.mubr.f32.gmra.mrb[0].mxu0 %v693
        %v695 = vpop.f32.mrb[0].mxu0
        %v696 = vadd.f32 %v569, %v695
        %v697 = vpop.f32.mrb[0].mxu0
        %v698 = vadd.f32 %v573, %v697
        %699 = vdwg.mxu0
        %v700 = vand.u32 %v517, 4294901760
        %v701 = vsub.f32 %v517, %v700
        %v702 = vand.u32 %v701, 4294901760
        %v703 = vsub.f32 %v701, %v702
        %v704 = vand.u32 %v703, 4294901760
        %705 = vmatprep.subr.mxu0 %v704
        %v706 = vand.u32 %v516, 4294901760
        %v707 = vsub.f32 %v516, %v706
        %v708 = vand.u32 %v707, 4294901760
        %v709 = vsub.f32 %v707, %v708
        %v710 = vand.u32 %v709, 4294901760
        %711 = vmatpush1.msra.mxu0 %v710
        %v712 = vand.u32 %v520, 4294901760
        %v713 = vsub.f32 %v520, %v712
        %v714 = vand.u32 %v713, 4294901760
        %v715 = vsub.f32 %v713, %v714
        %v716 = vand.u32 %v715, 4294901760
        %717 = vmatprep.subr.mxu0 %v716
        %v718 = vand.u32 %v519, 4294901760
        %v719 = vsub.f32 %v519, %v718
        %v720 = vand.u32 %v719, 4294901760
        %v721 = vsub.f32 %v719, %v720
        %v722 = vand.u32 %v721, 4294901760
        %723 = vmatpush1.msra.mxu0 %v722
        %v724 = vand.u32 %v523, 4294901760
        %v725 = vsub.f32 %v523, %v724
        %v726 = vand.u32 %v725, 4294901760
        %v727 = vsub.f32 %v725, %v726
        %v728 = vand.u32 %v727, 4294901760
        %729 = vmatprep.subr.mxu0 %v728
        %v730 = vand.u32 %v522, 4294901760
        %v731 = vsub.f32 %v522, %v730
        %v732 = vand.u32 %v731, 4294901760
        %v733 = vsub.f32 %v731, %v732
        %v734 = vand.u32 %v733, 4294901760
        %735 = vmatpush1.msra.mxu0 %v734
        %v736 = vand.u32 %v526, 4294901760
        %v737 = vsub.f32 %v526, %v736
        %v738 = vand.u32 %v737, 4294901760
        %v739 = vsub.f32 %v737, %v738
        %v740 = vand.u32 %v739, 4294901760
        %741 = vmatprep.subr.mxu0 %v740
        %v742 = vand.u32 %v525, 4294901760
        %v743 = vsub.f32 %v525, %v742
        %v744 = vand.u32 %v743, 4294901760
        %v745 = vsub.f32 %v743, %v744
        %v746 = vand.u32 %v745, 4294901760
        %747 = vmatpush1.msra.mxu0 %v746
        %v748 = vand.u32 %v529, 4294901760
        %v749 = vsub.f32 %v529, %v748
        %v750 = vand.u32 %v749, 4294901760
        %v751 = vsub.f32 %v749, %v750
        %v752 = vand.u32 %v751, 4294901760
        %753 = vmatprep.subr.mxu0 %v752
        %v754 = vand.u32 %v528, 4294901760
        %v755 = vsub.f32 %v528, %v754
        %v756 = vand.u32 %v755, 4294901760
        %v757 = vsub.f32 %v755, %v756
        %v758 = vand.u32 %v757, 4294901760
        %759 = vmatpush1.msra.mxu0 %v758
        %v760 = vand.u32 %v532, 4294901760
        %v761 = vsub.f32 %v532, %v760
        %v762 = vand.u32 %v761, 4294901760
        %v763 = vsub.f32 %v761, %v762
        %v764 = vand.u32 %v763, 4294901760
        %765 = vmatprep.subr.mxu0 %v764
        %v766 = vand.u32 %v531, 4294901760
        %v767 = vsub.f32 %v531, %v766
        %v768 = vand.u32 %v767, 4294901760
        %v769 = vsub.f32 %v767, %v768
        %v770 = vand.u32 %v769, 4294901760
        %771 = vmatpush1.msra.mxu0 %v770
        %v772 = vand.u32 %v535, 4294901760
        %v773 = vsub.f32 %v535, %v772
        %v774 = vand.u32 %v773, 4294901760
        %v775 = vsub.f32 %v773, %v774
        %v776 = vand.u32 %v775, 4294901760
        %777 = vmatprep.subr.mxu0 %v776
        %v778 = vand.u32 %v534, 4294901760
        %v779 = vsub.f32 %v534, %v778
        %v780 = vand.u32 %v779, 4294901760
        %v781 = vsub.f32 %v779, %v780
        %v782 = vand.u32 %v781, 4294901760
        %783 = vmatpush1.msra.mxu0 %v782
        %v784 = vand.u32 %v538, 4294901760
        %v785 = vsub.f32 %v538, %v784
        %v786 = vand.u32 %v785, 4294901760
        %v787 = vsub.f32 %v785, %v786
        %v788 = vand.u32 %v787, 4294901760
        %789 = vmatprep.subr.mxu0 %v788
        %v790 = vand.u32 %v537, 4294901760
        %v791 = vsub.f32 %v537, %v790
        %v792 = vand.u32 %v791, 4294901760
        %v793 = vsub.f32 %v791, %v792
        %v794 = vand.u32 %v793, 4294901760
        %795 = vmatpush1.msra.mxu0 %v794
        %v796 = vand.u32 %v541, 4294901760
        %v797 = vsub.f32 %v541, %v796
        %v798 = vand.u32 %v797, 4294901760
        %v799 = vsub.f32 %v797, %v798
        %v800 = vand.u32 %v799, 4294901760
        %801 = vmatprep.subr.mxu0 %v800
        %v802 = vand.u32 %v540, 4294901760
        %v803 = vsub.f32 %v540, %v802
        %v804 = vand.u32 %v803, 4294901760
        %v805 = vsub.f32 %v803, %v804
        %v806 = vand.u32 %v805, 4294901760
        %807 = vmatpush1.msra.mxu0 %v806
        %v808 = vand.u32 %v544, 4294901760
        %v809 = vsub.f32 %v544, %v808
        %v810 = vand.u32 %v809, 4294901760
        %v811 = vsub.f32 %v809, %v810
        %v812 = vand.u32 %v811, 4294901760
        %813 = vmatprep.subr.mxu0 %v812
        %v814 = vand.u32 %v543, 4294901760
        %v815 = vsub.f32 %v543, %v814
        %v816 = vand.u32 %v815, 4294901760
        %v817 = vsub.f32 %v815, %v816
        %v818 = vand.u32 %v817, 4294901760
        %819 = vmatpush1.msra.mxu0 %v818
        %v820 = vand.u32 %v547, 4294901760
        %v821 = vsub.f32 %v547, %v820
        %v822 = vand.u32 %v821, 4294901760
        %v823 = vsub.f32 %v821, %v822
        %v824 = vand.u32 %v823, 4294901760
        %825 = vmatprep.subr.mxu0 %v824
        %v826 = vand.u32 %v546, 4294901760
        %v827 = vsub.f32 %v546, %v826
        %v828 = vand.u32 %v827, 4294901760
        %v829 = vsub.f32 %v827, %v828
        %v830 = vand.u32 %v829, 4294901760
        %831 = vmatpush1.msra.mxu0 %v830
        %v832 = vand.u32 %v550, 4294901760
        %v833 = vsub.f32 %v550, %v832
        %v834 = vand.u32 %v833, 4294901760
        %v835 = vsub.f32 %v833, %v834
        %v836 = vand.u32 %v835, 4294901760
        %837 = vmatprep.subr.mxu0 %v836
        %v838 = vand.u32 %v549, 4294901760
        %v839 = vsub.f32 %v549, %v838
        %v840 = vand.u32 %v839, 4294901760
        %v841 = vsub.f32 %v839, %v840
        %v842 = vand.u32 %v841, 4294901760
        %843 = vmatpush1.msra.mxu0 %v842
        %v844 = vand.u32 %v553, 4294901760
        %v845 = vsub.f32 %v553, %v844
        %v846 = vand.u32 %v845, 4294901760
        %v847 = vsub.f32 %v845, %v846
        %v848 = vand.u32 %v847, 4294901760
        %849 = vmatprep.subr.mxu0 %v848
        %v850 = vand.u32 %v552, 4294901760
        %v851 = vsub.f32 %v552, %v850
        %v852 = vand.u32 %v851, 4294901760
        %v853 = vsub.f32 %v851, %v852
        %v854 = vand.u32 %v853, 4294901760
        %855 = vmatpush1.msra.mxu0 %v854
        %v856 = vand.u32 %v556, 4294901760
        %v857 = vsub.f32 %v556, %v856
        %v858 = vand.u32 %v857, 4294901760
        %v859 = vsub.f32 %v857, %v858
        %v860 = vand.u32 %v859, 4294901760
        %861 = vmatprep.subr.mxu0 %v860
        %v862 = vand.u32 %v555, 4294901760
        %v863 = vsub.f32 %v555, %v862
        %v864 = vand.u32 %v863, 4294901760
        %v865 = vsub.f32 %v863, %v864
        %v866 = vand.u32 %v865, 4294901760
        %867 = vmatpush1.msra.mxu0 %v866
        %v868 = vand.u32 %v559, 4294901760
        %v869 = vsub.f32 %v559, %v868
        %v870 = vand.u32 %v869, 4294901760
        %v871 = vsub.f32 %v869, %v870
        %v872 = vand.u32 %v871, 4294901760
        %873 = vmatprep.subr.mxu0 %v872
        %v874 = vand.u32 %v558, 4294901760
        %v875 = vsub.f32 %v558, %v874
        %v876 = vand.u32 %v875, 4294901760
        %v877 = vsub.f32 %v875, %v876
        %v878 = vand.u32 %v877, 4294901760
        %879 = vmatpush1.msra.mxu0 %v878
        %v880 = vand.u32 %v562, 4294901760
        %v881 = vsub.f32 %v562, %v880
        %v882 = vand.u32 %v881, 4294901760
        %v883 = vsub.f32 %v881, %v882
        %v884 = vand.u32 %v883, 4294901760
        %885 = vmatprep.subr.mxu0 %v884
        %v886 = vand.u32 %v561, 4294901760
        %v887 = vsub.f32 %v561, %v886
        %v888 = vand.u32 %v887, 4294901760
        %v889 = vsub.f32 %v887, %v888
        %v890 = vand.u32 %v889, 4294901760
        %891 = vmatpush1.msra.mxu0 %v890
        %892 = vmatprep.subr.mxu0 0.0
        %893 = vmatpush1.msra.mxu0 0.0
        %894 = vmatprep.subr.mxu0 0.0
        %895 = vmatpush1.msra.mxu0 0.0
        %896 = vmatprep.subr.mxu0 0.0
        %897 = vmatpush1.msra.mxu0 0.0
        %898 = vmatprep.subr.mxu0 0.0
        %899 = vmatpush1.msra.mxu0 0.0
        %900 = vmatprep.subr.mxu0 0.0
        %901 = vmatpush1.msra.mxu0 0.0
        %902 = vmatprep.subr.mxu0 0.0
        %903 = vmatpush1.msra.mxu0 0.0
        %904 = vmatprep.subr.mxu0 0.0
        %905 = vmatpush1.msra.mxu0 0.0
        %906 = vmatprep.subr.mxu0 0.0
        %907 = vmatpush1.msra.mxu0 0.0
        %908 = vmatprep.subr.mxu0 0.0
        %909 = vmatpush1.msra.mxu0 0.0
        %910 = vmatprep.subr.mxu0 0.0
        %911 = vmatpush1.msra.mxu0 0.0
        %912 = vmatprep.subr.mxu0 0.0
        %913 = vmatpush1.msra.mxu0 0.0
        %914 = vmatprep.subr.mxu0 0.0
        %915 = vmatpush1.msra.mxu0 0.0
        %916 = vmatprep.subr.mxu0 0.0
        %917 = vmatpush1.msra.mxu0 0.0
        %918 = vmatprep.subr.mxu0 0.0
        %919 = vmatpush1.msra.mxu0 0.0
        %920 = vmatprep.subr.mxu0 0.0
        %921 = vmatpush1.msra.mxu0 0.0
        %922 = vmatprep.subr.mxu0 0.0
        %923 = vmatpush1.msra.mxu0 0.0
        %924 = vmatprep.mubr.f32.mxu0 0.0
        %v925 = vand.u32 %v514, 4294901760
        %926 = vmatmul.mubr.f32.gmra.mrb[0].mxu0 %v925
        %v927 = vpop.f32.mrb[0].mxu0
        %v928 = vadd.f32 %v685, %v927
        %v929 = vpop.f32.mrb[0].mxu0
        %v930 = vadd.f32 %v687, %v929
        %931 = vmatprep.mubr.f32.mxu0 0.0
        %v932 = vand.u32 %v515, 4294901760
        %933 = vmatmul.mubr.f32.gmra.mrb[0].mxu0 %v932
        %v934 = vpop.f32.mrb[0].mxu0
        %v935 = vadd.f32 %v696, %v934
        %v936 = vpop.f32.mrb[0].mxu0
        %v937 = vadd.f32 %v698, %v936
        %938 = vdwg.mxu0
        %v939 = vand.u32 %v517, 4294901760
        %v940 = vsub.f32 %v517, %v939
        %941 = vmatprep.subr.mxu0 %v940
        %v942 = vand.u32 %v516, 4294901760
        %v943 = vsub.f32 %v516, %v942
        %944 = vmatpush1.msra.mxu0 %v943
        %v945 = vand.u32 %v520, 4294901760
        %v946 = vsub.f32 %v520, %v945
        %947 = vmatprep.subr.mxu0 %v946
        %v948 = vand.u32 %v519, 4294901760
        %v949 = vsub.f32 %v519, %v948
        %950 = vmatpush1.msra.mxu0 %v949
        %v951 = vand.u32 %v523, 4294901760
        %v952 = vsub.f32 %v523, %v951
        %953 = vmatprep.subr.mxu0 %v952
        %v954 = vand.u32 %v522, 4294901760
        %v955 = vsub.f32 %v522, %v954
        %956 = vmatpush1.msra.mxu0 %v955
        %v957 = vand.u32 %v526, 4294901760
        %v958 = vsub.f32 %v526, %v957
        %959 = vmatprep.subr.mxu0 %v958
        %v960 = vand.u32 %v525, 4294901760
        %v961 = vsub.f32 %v525, %v960
        %962 = vmatpush1.msra.mxu0 %v961
        %v963 = vand.u32 %v529, 4294901760
        %v964 = vsub.f32 %v529, %v963
        %965 = vmatprep.subr.mxu0 %v964
        %v966 = vand.u32 %v528, 4294901760
        %v967 = vsub.f32 %v528, %v966
        %968 = vmatpush1.msra.mxu0 %v967
        %v969 = vand.u32 %v532, 4294901760
        %v970 = vsub.f32 %v532, %v969
        %971 = vmatprep.subr.mxu0 %v970
        %v972 = vand.u32 %v531, 4294901760
        %v973 = vsub.f32 %v531, %v972
        %974 = vmatpush1.msra.mxu0 %v973
        %v975 = vand.u32 %v535, 4294901760
        %v976 = vsub.f32 %v535, %v975
        %977 = vmatprep.subr.mxu0 %v976
        %v978 = vand.u32 %v534, 4294901760
        %v979 = vsub.f32 %v534, %v978
        %980 = vmatpush1.msra.mxu0 %v979
        %v981 = vand.u32 %v538, 4294901760
        %v982 = vsub.f32 %v538, %v981
        %983 = vmatprep.subr.mxu0 %v982
        %v984 = vand.u32 %v537, 4294901760
        %v985 = vsub.f32 %v537, %v984
        %986 = vmatpush1.msra.mxu0 %v985
        %v987 = vand.u32 %v541, 4294901760
        %v988 = vsub.f32 %v541, %v987
        %989 = vmatprep.subr.mxu0 %v988
        %v990 = vand.u32 %v540, 4294901760
        %v991 = vsub.f32 %v540, %v990
        %992 = vmatpush1.msra.mxu0 %v991
        %v993 = vand.u32 %v544, 4294901760
        %v994 = vsub.f32 %v544, %v993
        %995 = vmatprep.subr.mxu0 %v994
        %v996 = vand.u32 %v543, 4294901760
        %v997 = vsub.f32 %v543, %v996
        %998 = vmatpush1.msra.mxu0 %v997
        %v999 = vand.u32 %v547, 4294901760
        %v1000 = vsub.f32 %v547, %v999
        %1001 = vmatprep.subr.mxu0 %v1000
        %v1002 = vand.u32 %v546, 4294901760
        %v1003 = vsub.f32 %v546, %v1002
        %1004 = vmatpush1.msra.mxu0 %v1003
        %v1005 = vand.u32 %v550, 4294901760
        %v1006 = vsub.f32 %v550, %v1005
        %1007 = vmatprep.subr.mxu0 %v1006
        %v1008 = vand.u32 %v549, 4294901760
        %v1009 = vsub.f32 %v549, %v1008
        %1010 = vmatpush1.msra.mxu0 %v1009
        %v1011 = vand.u32 %v553, 4294901760
        %v1012 = vsub.f32 %v553, %v1011
        %1013 = vmatprep.subr.mxu0 %v1012
        %v1014 = vand.u32 %v552, 4294901760
        %v1015 = vsub.f32 %v552, %v1014
        %1016 = vmatpush1.msra.mxu0 %v1015
        %v1017 = vand.u32 %v556, 4294901760
        %v1018 = vsub.f32 %v556, %v1017
        %1019 = vmatprep.subr.mxu0 %v1018
        %v1020 = vand.u32 %v555, 4294901760
        %v1021 = vsub.f32 %v555, %v1020
        %1022 = vmatpush1.msra.mxu0 %v1021
        %v1023 = vand.u32 %v559, 4294901760
        %v1024 = vsub.f32 %v559, %v1023
        %1025 = vmatprep.subr.mxu0 %v1024
        %v1026 = vand.u32 %v558, 4294901760
        %v1027 = vsub.f32 %v558, %v1026
        %1028 = vmatpush1.msra.mxu0 %v1027
        %v1029 = vand.u32 %v562, 4294901760
        %v1030 = vsub.f32 %v562, %v1029
        %1031 = vmatprep.subr.mxu0 %v1030
        %v1032 = vand.u32 %v561, 4294901760
        %v1033 = vsub.f32 %v561, %v1032
        %1034 = vmatpush1.msra.mxu0 %v1033
        %1035 = vmatprep.subr.mxu0 0.0
        %1036 = vmatpush1.msra.mxu0 0.0
        %1037 = vmatprep.subr.mxu0 0.0
        %1038 = vmatpush1.msra.mxu0 0.0
        %1039 = vmatprep.subr.mxu0 0.0
        %1040 = vmatpush1.msra.mxu0 0.0
        %1041 = vmatprep.subr.mxu0 0.0
        %1042 = vmatpush1.msra.mxu0 0.0
        %1043 = vmatprep.subr.mxu0 0.0
        %1044 = vmatpush1.msra.mxu0 0.0
        %1045 = vmatprep.subr.mxu0 0.0
        %1046 = vmatpush1.msra.mxu0 0.0
        %1047 = vmatprep.subr.mxu0 0.0
        %1048 = vmatpush1.msra.mxu0 0.0
        %1049 = vmatprep.subr.mxu0 0.0
        %1050 = vmatpush1.msra.mxu0 0.0
        %1051 = vmatprep.subr.mxu0 0.0
        %1052 = vmatpush1.msra.mxu0 0.0
        %1053 = vmatprep.subr.mxu0 0.0
        %1054 = vmatpush1.msra.mxu0 0.0
        %1055 = vmatprep.subr.mxu0 0.0
        %1056 = vmatpush1.msra.mxu0 0.0
        %1057 = vmatprep.subr.mxu0 0.0
        %1058 = vmatpush1.msra.mxu0 0.0
        %1059 = vmatprep.subr.mxu0 0.0
        %1060 = vmatpush1.msra.mxu0 0.0
        %1061 = vmatprep.subr.mxu0 0.0
        %1062 = vmatpush1.msra.mxu0 0.0
        %1063 = vmatprep.subr.mxu0 0.0
        %1064 = vmatpush1.msra.mxu0 0.0
        %1065 = vmatprep.subr.mxu0 0.0
        %1066 = vmatpush1.msra.mxu0 0.0
        %1067 = vmatprep.mubr.f32.mxu0 0.0
        %v1068 = vand.u32 %v514, 4294901760
        %v1069 = vsub.f32 %v514, %v1068
        %1070 = vmatmul.mubr.f32.gmra.mrb[0].mxu0 %v1069
        %v1071 = vpop.f32.mrb[0].mxu0
        %v1072 = vadd.f32 %v928, %v1071
        %v1073 = vpop.f32.mrb[0].mxu0
        %v1074 = vadd.f32 %v930, %v1073
        %1075 = vmatprep.mubr.f32.mxu0 0.0
        %v1076 = vand.u32 %v515, 4294901760
        %v1077 = vsub.f32 %v515, %v1076
        %1078 = vmatmul.mubr.f32.gmra.mrb[0].mxu0 %v1077
        %v1079 = vpop.f32.mrb[0].mxu0
        %v1080 = vadd.f32 %v935, %v1079
        %v1081 = vpop.f32.mrb[0].mxu0
        %v1082 = vadd.f32 %v937, %v1081
        %1083 = vdwg.mxu0
        %v1084 = vand.u32 %v517, 4294901760
        %1085 = vmatprep.subr.mxu0 %v1084
        %v1086 = vand.u32 %v516, 4294901760
        %1087 = vmatpush1.msra.mxu0 %v1086
        %v1088 = vand.u32 %v520, 4294901760
        %1089 = vmatprep.subr.mxu0 %v1088
        %v1090 = vand.u32 %v519, 4294901760
        %1091 = vmatpush1.msra.mxu0 %v1090
        %v1092 = vand.u32 %v523, 4294901760
        %1093 = vmatprep.subr.mxu0 %v1092
        %v1094 = vand.u32 %v522, 4294901760
        %1095 = vmatpush1.msra.mxu0 %v1094
        %v1096 = vand.u32 %v526, 4294901760
        %1097 = vmatprep.subr.mxu0 %v1096
        %v1098 = vand.u32 %v525, 4294901760
        %1099 = vmatpush1.msra.mxu0 %v1098
        %v1100 = vand.u32 %v529, 4294901760
        %1101 = vmatprep.subr.mxu0 %v1100
        %v1102 = vand.u32 %v528, 4294901760
        %1103 = vmatpush1.msra.mxu0 %v1102
        %v1104 = vand.u32 %v532, 4294901760
        %1105 = vmatprep.subr.mxu0 %v1104
        %v1106 = vand.u32 %v531, 4294901760
        %1107 = vmatpush1.msra.mxu0 %v1106
        %v1108 = vand.u32 %v535, 4294901760
        %1109 = vmatprep.subr.mxu0 %v1108
        %v1110 = vand.u32 %v534, 4294901760
        %1111 = vmatpush1.msra.mxu0 %v1110
        %v1112 = vand.u32 %v538, 4294901760
        %1113 = vmatprep.subr.mxu0 %v1112
        %v1114 = vand.u32 %v537, 4294901760
        %1115 = vmatpush1.msra.mxu0 %v1114
        %v1116 = vand.u32 %v541, 4294901760
        %1117 = vmatprep.subr.mxu0 %v1116
        %v1118 = vand.u32 %v540, 4294901760
        %1119 = vmatpush1.msra.mxu0 %v1118
        %v1120 = vand.u32 %v544, 4294901760
        %1121 = vmatprep.subr.mxu0 %v1120
        %v1122 = vand.u32 %v543, 4294901760
        %1123 = vmatpush1.msra.mxu0 %v1122
        %v1124 = vand.u32 %v547, 4294901760
        %1125 = vmatprep.subr.mxu0 %v1124
        %v1126 = vand.u32 %v546, 4294901760
        %1127 = vmatpush1.msra.mxu0 %v1126
        %v1128 = vand.u32 %v550, 4294901760
        %1129 = vmatprep.subr.mxu0 %v1128
        %v1130 = vand.u32 %v549, 4294901760
        %1131 = vmatpush1.msra.mxu0 %v1130
        %v1132 = vand.u32 %v553, 4294901760
        %1133 = vmatprep.subr.mxu0 %v1132
        %v1134 = vand.u32 %v552, 4294901760
        %1135 = vmatpush1.msra.mxu0 %v1134
        %v1136 = vand.u32 %v556, 4294901760
        %1137 = vmatprep.subr.mxu0 %v1136
        %v1138 = vand.u32 %v555, 4294901760
        %1139 = vmatpush1.msra.mxu0 %v1138
        %v1140 = vand.u32 %v559, 4294901760
        %1141 = vmatprep.subr.mxu0 %v1140
        %v1142 = vand.u32 %v558, 4294901760
        %1143 = vmatpush1.msra.mxu0 %v1142
        %v1144 = vand.u32 %v562, 4294901760
        %1145 = vmatprep.subr.mxu0 %v1144
        %v1146 = vand.u32 %v561, 4294901760
        %1147 = vmatpush1.msra.mxu0 %v1146
        %1148 = vmatprep.subr.mxu0 0.0
        %1149 = vmatpush1.msra.mxu0 0.0
        %1150 = vmatprep.subr.mxu0 0.0
        %1151 = vmatpush1.msra.mxu0 0.0
        %1152 = vmatprep.subr.mxu0 0.0
        %1153 = vmatpush1.msra.mxu0 0.0
        %1154 = vmatprep.subr.mxu0 0.0
        %1155 = vmatpush1.msra.mxu0 0.0
        %1156 = vmatprep.subr.mxu0 0.0
        %1157 = vmatpush1.msra.mxu0 0.0
        %1158 = vmatprep.subr.mxu0 0.0
        %1159 = vmatpush1.msra.mxu0 0.0
        %1160 = vmatprep.subr.mxu0 0.0
        %1161 = vmatpush1.msra.mxu0 0.0
        %1162 = vmatprep.subr.mxu0 0.0
        %1163 = vmatpush1.msra.mxu0 0.0
        %1164 = vmatprep.subr.mxu0 0.0
        %1165 = vmatpush1.msra.mxu0 0.0
        %1166 = vmatprep.subr.mxu0 0.0
        %1167 = vmatpush1.msra.mxu0 0.0
        %1168 = vmatprep.subr.mxu0 0.0
        %1169 = vmatpush1.msra.mxu0 0.0
        %1170 = vmatprep.subr.mxu0 0.0
        %1171 = vmatpush1.msra.mxu0 0.0
        %1172 = vmatprep.subr.mxu0 0.0
        %1173 = vmatpush1.msra.mxu0 0.0
        %1174 = vmatprep.subr.mxu0 0.0
        %1175 = vmatpush1.msra.mxu0 0.0
        %1176 = vmatprep.subr.mxu0 0.0
        %1177 = vmatpush1.msra.mxu0 0.0
        %1178 = vmatprep.subr.mxu0 0.0
        %1179 = vmatpush1.msra.mxu0 0.0
        %1180 = vmatprep.mubr.f32.mxu0 0.0
        %v1181 = vand.u32 %v514, 4294901760
        %v1182 = vsub.f32 %v514, %v1181
        %v1183 = vand.u32 %v1182, 4294901760
        %1184 = vmatmul.mubr.f32.gmra.mrb[0].mxu0 %v1183
        %v1185 = vpop.f32.mrb[0].mxu0
        %v1186 = vadd.f32 %v1072, %v1185
        %v1187 = vpop.f32.mrb[0].mxu0
        %v1188 = vadd.f32 %v1074, %v1187
        %1189 = vmatprep.mubr.f32.mxu0 0.0
        %v1190 = vand.u32 %v515, 4294901760
        %v1191 = vsub.f32 %v515, %v1190
        %v1192 = vand.u32 %v1191, 4294901760
        %1193 = vmatmul.mubr.f32.gmra.mrb[0].mxu0 %v1192
        %v1194 = vpop.f32.mrb[0].mxu0
        %v1195 = vadd.f32 %v1080, %v1194
        %v1196 = vpop.f32.mrb[0].mxu0
        %v1197 = vadd.f32 %v1082, %v1196
        %1198 = vdwg.mxu0
        %v1199 = vand.u32 %v517, 4294901760
        %v1200 = vsub.f32 %v517, %v1199
        %v1201 = vand.u32 %v1200, 4294901760
        %1202 = vmatprep.subr.mxu0 %v1201
        %v1203 = vand.u32 %v516, 4294901760
        %v1204 = vsub.f32 %v516, %v1203
        %v1205 = vand.u32 %v1204, 4294901760
        %1206 = vmatpush1.msra.mxu0 %v1205
        %v1207 = vand.u32 %v520, 4294901760
        %v1208 = vsub.f32 %v520, %v1207
        %v1209 = vand.u32 %v1208, 4294901760
        %1210 = vmatprep.subr.mxu0 %v1209
        %v1211 = vand.u32 %v519, 4294901760
        %v1212 = vsub.f32 %v519, %v1211
        %v1213 = vand.u32 %v1212, 4294901760
        %1214 = vmatpush1.msra.mxu0 %v1213
        %v1215 = vand.u32 %v523, 4294901760
        %v1216 = vsub.f32 %v523, %v1215
        %v1217 = vand.u32 %v1216, 4294901760
        %1218 = vmatprep.subr.mxu0 %v1217
        %v1219 = vand.u32 %v522, 4294901760
        %v1220 = vsub.f32 %v522, %v1219
        %v1221 = vand.u32 %v1220, 4294901760
        %1222 = vmatpush1.msra.mxu0 %v1221
        %v1223 = vand.u32 %v526, 4294901760
        %v1224 = vsub.f32 %v526, %v1223
        %v1225 = vand.u32 %v1224, 4294901760
        %1226 = vmatprep.subr.mxu0 %v1225
        %v1227 = vand.u32 %v525, 4294901760
        %v1228 = vsub.f32 %v525, %v1227
        %v1229 = vand.u32 %v1228, 4294901760
        %1230 = vmatpush1.msra.mxu0 %v1229
        %v1231 = vand.u32 %v529, 4294901760
        %v1232 = vsub.f32 %v529, %v1231
        %v1233 = vand.u32 %v1232, 4294901760
        %1234 = vmatprep.subr.mxu0 %v1233
        %v1235 = vand.u32 %v528, 4294901760
        %v1236 = vsub.f32 %v528, %v1235
        %v1237 = vand.u32 %v1236, 4294901760
        %1238 = vmatpush1.msra.mxu0 %v1237
        %v1239 = vand.u32 %v532, 4294901760
        %v1240 = vsub.f32 %v532, %v1239
        %v1241 = vand.u32 %v1240, 4294901760
        %1242 = vmatprep.subr.mxu0 %v1241
        %v1243 = vand.u32 %v531, 4294901760
        %v1244 = vsub.f32 %v531, %v1243
        %v1245 = vand.u32 %v1244, 4294901760
        %1246 = vmatpush1.msra.mxu0 %v1245
        %v1247 = vand.u32 %v535, 4294901760
        %v1248 = vsub.f32 %v535, %v1247
        %v1249 = vand.u32 %v1248, 4294901760
        %1250 = vmatprep.subr.mxu0 %v1249
        %v1251 = vand.u32 %v534, 4294901760
        %v1252 = vsub.f32 %v534, %v1251
        %v1253 = vand.u32 %v1252, 4294901760
        %1254 = vmatpush1.msra.mxu0 %v1253
        %v1255 = vand.u32 %v538, 4294901760
        %v1256 = vsub.f32 %v538, %v1255
        %v1257 = vand.u32 %v1256, 4294901760
        %1258 = vmatprep.subr.mxu0 %v1257
        %v1259 = vand.u32 %v537, 4294901760
        %v1260 = vsub.f32 %v537, %v1259
        %v1261 = vand.u32 %v1260, 4294901760
        %1262 = vmatpush1.msra.mxu0 %v1261
        %v1263 = vand.u32 %v541, 4294901760
        %v1264 = vsub.f32 %v541, %v1263
        %v1265 = vand.u32 %v1264, 4294901760
        %1266 = vmatprep.subr.mxu0 %v1265
        %v1267 = vand.u32 %v540, 4294901760
        %v1268 = vsub.f32 %v540, %v1267
        %v1269 = vand.u32 %v1268, 4294901760
        %1270 = vmatpush1.msra.mxu0 %v1269
        %v1271 = vand.u32 %v544, 4294901760
        %v1272 = vsub.f32 %v544, %v1271
        %v1273 = vand.u32 %v1272, 4294901760
        %1274 = vmatprep.subr.mxu0 %v1273
        %v1275 = vand.u32 %v543, 4294901760
        %v1276 = vsub.f32 %v543, %v1275
        %v1277 = vand.u32 %v1276, 4294901760
        %1278 = vmatpush1.msra.mxu0 %v1277
        %v1279 = vand.u32 %v547, 4294901760
        %v1280 = vsub.f32 %v547, %v1279
        %v1281 = vand.u32 %v1280, 4294901760
        %1282 = vmatprep.subr.mxu0 %v1281
        %v1283 = vand.u32 %v546, 4294901760
        %v1284 = vsub.f32 %v546, %v1283
        %v1285 = vand.u32 %v1284, 4294901760
        %1286 = vmatpush1.msra.mxu0 %v1285
        %v1287 = vand.u32 %v550, 4294901760
        %v1288 = vsub.f32 %v550, %v1287
        %v1289 = vand.u32 %v1288, 4294901760
        %1290 = vmatprep.subr.mxu0 %v1289
        %v1291 = vand.u32 %v549, 4294901760
        %v1292 = vsub.f32 %v549, %v1291
        %v1293 = vand.u32 %v1292, 4294901760
        %1294 = vmatpush1.msra.mxu0 %v1293
        %v1295 = vand.u32 %v553, 4294901760
        %v1296 = vsub.f32 %v553, %v1295
        %v1297 = vand.u32 %v1296, 4294901760
        %1298 = vmatprep.subr.mxu0 %v1297
        %v1299 = vand.u32 %v552, 4294901760
        %v1300 = vsub.f32 %v552, %v1299
        %v1301 = vand.u32 %v1300, 4294901760
        %1302 = vmatpush1.msra.mxu0 %v1301
        %v1303 = vand.u32 %v556, 4294901760
        %v1304 = vsub.f32 %v556, %v1303
        %v1305 = vand.u32 %v1304, 4294901760
        %1306 = vmatprep.subr.mxu0 %v1305
        %v1307 = vand.u32 %v555, 4294901760
        %v1308 = vsub.f32 %v555, %v1307
        %v1309 = vand.u32 %v1308, 4294901760
        %1310 = vmatpush1.msra.mxu0 %v1309
        %v1311 = vand.u32 %v559, 4294901760
        %v1312 = vsub.f32 %v559, %v1311
        %v1313 = vand.u32 %v1312, 4294901760
        %1314 = vmatprep.subr.mxu0 %v1313
        %v1315 = vand.u32 %v558, 4294901760
        %v1316 = vsub.f32 %v558, %v1315
        %v1317 = vand.u32 %v1316, 4294901760
        %1318 = vmatpush1.msra.mxu0 %v1317
        %v1319 = vand.u32 %v562, 4294901760
        %v1320 = vsub.f32 %v562, %v1319
        %v1321 = vand.u32 %v1320, 4294901760
        %1322 = vmatprep.subr.mxu0 %v1321
        %v1323 = vand.u32 %v561, 4294901760
        %v1324 = vsub.f32 %v561, %v1323
        %v1325 = vand.u32 %v1324, 4294901760
        %1326 = vmatpush1.msra.mxu0 %v1325
        %1327 = vmatprep.subr.mxu0 0.0
        %1328 = vmatpush1.msra.mxu0 0.0
        %1329 = vmatprep.subr.mxu0 0.0
        %1330 = vmatpush1.msra.mxu0 0.0
        %1331 = vmatprep.subr.mxu0 0.0
        %1332 = vmatpush1.msra.mxu0 0.0
        %1333 = vmatprep.subr.mxu0 0.0
        %1334 = vmatpush1.msra.mxu0 0.0
        %1335 = vmatprep.subr.mxu0 0.0
        %1336 = vmatpush1.msra.mxu0 0.0
        %1337 = vmatprep.subr.mxu0 0.0
        %1338 = vmatpush1.msra.mxu0 0.0
        %1339 = vmatprep.subr.mxu0 0.0
        %1340 = vmatpush1.msra.mxu0 0.0
        %1341 = vmatprep.subr.mxu0 0.0
        %1342 = vmatpush1.msra.mxu0 0.0
        %1343 = vmatprep.subr.mxu0 0.0
        %1344 = vmatpush1.msra.mxu0 0.0
        %1345 = vmatprep.subr.mxu0 0.0
        %1346 = vmatpush1.msra.mxu0 0.0
        %1347 = vmatprep.subr.mxu0 0.0
        %1348 = vmatpush1.msra.mxu0 0.0
        %1349 = vmatprep.subr.mxu0 0.0
        %1350 = vmatpush1.msra.mxu0 0.0
        %1351 = vmatprep.subr.mxu0 0.0
        %1352 = vmatpush1.msra.mxu0 0.0
        %1353 = vmatprep.subr.mxu0 0.0
        %1354 = vmatpush1.msra.mxu0 0.0
        %1355 = vmatprep.subr.mxu0 0.0
        %1356 = vmatpush1.msra.mxu0 0.0
        %1357 = vmatprep.subr.mxu0 0.0
        %1358 = vmatpush1.msra.mxu0 0.0
        %1359 = vmatprep.mubr.f32.mxu0 0.0
        %v1360 = vand.u32 %v514, 4294901760
        %1361 = vmatmul.mubr.f32.gmra.mrb[0].mxu0 %v1360
        %v1362 = vpop.f32.mrb[0].mxu0
        %v1363 = vadd.f32 %v1186, %v1362
        %v1364 = vpop.f32.mrb[0].mxu0
        %v1365 = vadd.f32 %v1188, %v1364
        %1366 = vmatprep.mubr.f32.mxu0 0.0
        %v1367 = vand.u32 %v515, 4294901760
        %1368 = vmatmul.mubr.f32.gmra.mrb[0].mxu0 %v1367
        %v1369 = vpop.f32.mrb[0].mxu0
        %v1370 = vadd.f32 %v1195, %v1369
        %v1371 = vpop.f32.mrb[0].mxu0
        %v1372 = vadd.f32 %v1197, %v1371
        %1373 = vdwg.mxu0
        %v1374 = vand.u32 %v517, 4294901760
        %1375 = vmatprep.subr.mxu0 %v1374
        %v1376 = vand.u32 %v516, 4294901760
        %1377 = vmatpush1.msra.mxu0 %v1376
        %v1378 = vand.u32 %v520, 4294901760
        %1379 = vmatprep.subr.mxu0 %v1378
        %v1380 = vand.u32 %v519, 4294901760
        %1381 = vmatpush1.msra.mxu0 %v1380
        %v1382 = vand.u32 %v523, 4294901760
        %1383 = vmatprep.subr.mxu0 %v1382
        %v1384 = vand.u32 %v522, 4294901760
        %1385 = vmatpush1.msra.mxu0 %v1384
        %v1386 = vand.u32 %v526, 4294901760
        %1387 = vmatprep.subr.mxu0 %v1386
        %v1388 = vand.u32 %v525, 4294901760
        %1389 = vmatpush1.msra.mxu0 %v1388
        %v1390 = vand.u32 %v529, 4294901760
        %1391 = vmatprep.subr.mxu0 %v1390
        %v1392 = vand.u32 %v528, 4294901760
        %1393 = vmatpush1.msra.mxu0 %v1392
        %v1394 = vand.u32 %v532, 4294901760
        %1395 = vmatprep.subr.mxu0 %v1394
        %v1396 = vand.u32 %v531, 4294901760
        %1397 = vmatpush1.msra.mxu0 %v1396
        %v1398 = vand.u32 %v535, 4294901760
        %1399 = vmatprep.subr.mxu0 %v1398
        %v1400 = vand.u32 %v534, 4294901760
        %1401 = vmatpush1.msra.mxu0 %v1400
        %v1402 = vand.u32 %v538, 4294901760
        %1403 = vmatprep.subr.mxu0 %v1402
        %v1404 = vand.u32 %v537, 4294901760
        %1405 = vmatpush1.msra.mxu0 %v1404
        %v1406 = vand.u32 %v541, 4294901760
        %1407 = vmatprep.subr.mxu0 %v1406
        %v1408 = vand.u32 %v540, 4294901760
        %1409 = vmatpush1.msra.mxu0 %v1408
        %v1410 = vand.u32 %v544, 4294901760
        %1411 = vmatprep.subr.mxu0 %v1410
        %v1412 = vand.u32 %v543, 4294901760
        %1413 = vmatpush1.msra.mxu0 %v1412
        %v1414 = vand.u32 %v547, 4294901760
        %1415 = vmatprep.subr.mxu0 %v1414
        %v1416 = vand.u32 %v546, 4294901760
        %1417 = vmatpush1.msra.mxu0 %v1416
        %v1418 = vand.u32 %v550, 4294901760
        %1419 = vmatprep.subr.mxu0 %v1418
        %v1420 = vand.u32 %v549, 4294901760
        %1421 = vmatpush1.msra.mxu0 %v1420
        %v1422 = vand.u32 %v553, 4294901760
        %1423 = vmatprep.subr.mxu0 %v1422
        %v1424 = vand.u32 %v552, 4294901760
        %1425 = vmatpush1.msra.mxu0 %v1424
        %v1426 = vand.u32 %v556, 4294901760
        %1427 = vmatprep.subr.mxu0 %v1426
        %v1428 = vand.u32 %v555, 4294901760
        %1429 = vmatpush1.msra.mxu0 %v1428
        %v1430 = vand.u32 %v559, 4294901760
        %1431 = vmatprep.subr.mxu0 %v1430
        %v1432 = vand.u32 %v558, 4294901760
        %1433 = vmatpush1.msra.mxu0 %v1432
        %v1434 = vand.u32 %v562, 4294901760
        %1435 = vmatprep.subr.mxu0 %v1434
        %v1436 = vand.u32 %v561, 4294901760
        %1437 = vmatpush1.msra.mxu0 %v1436
        %1438 = vmatprep.subr.mxu0 0.0
        %1439 = vmatpush1.msra.mxu0 0.0
        %1440 = vmatprep.subr.mxu0 0.0
        %1441 = vmatpush1.msra.mxu0 0.0
        %1442 = vmatprep.subr.mxu0 0.0
        %1443 = vmatpush1.msra.mxu0 0.0
        %1444 = vmatprep.subr.mxu0 0.0
        %1445 = vmatpush1.msra.mxu0 0.0
        %1446 = vmatprep.subr.mxu0 0.0
        %1447 = vmatpush1.msra.mxu0 0.0
        %1448 = vmatprep.subr.mxu0 0.0
        %1449 = vmatpush1.msra.mxu0 0.0
        %1450 = vmatprep.subr.mxu0 0.0
        %1451 = vmatpush1.msra.mxu0 0.0
        %1452 = vmatprep.subr.mxu0 0.0
        %1453 = vmatpush1.msra.mxu0 0.0
        %1454 = vmatprep.subr.mxu0 0.0
        %1455 = vmatpush1.msra.mxu0 0.0
        %1456 = vmatprep.subr.mxu0 0.0
        %1457 = vmatpush1.msra.mxu0 0.0
        %1458 = vmatprep.subr.mxu0 0.0
        %1459 = vmatpush1.msra.mxu0 0.0
        %1460 = vmatprep.subr.mxu0 0.0
        %1461 = vmatpush1.msra.mxu0 0.0
        %1462 = vmatprep.subr.mxu0 0.0
        %1463 = vmatpush1.msra.mxu0 0.0
        %1464 = vmatprep.subr.mxu0 0.0
        %1465 = vmatpush1.msra.mxu0 0.0
        %1466 = vmatprep.subr.mxu0 0.0
        %1467 = vmatpush1.msra.mxu0 0.0
        %1468 = vmatprep.subr.mxu0 0.0
        %1469 = vmatpush1.msra.mxu0 0.0
        %1470 = vmatprep.mubr.f32.mxu0 0.0
        %v1471 = vand.u32 %v514, 4294901760
        %1472 = vmatmul.mubr.f32.gmra.mrb[0].mxu0 %v1471
        %v1473 = vpop.f32.mrb[0].mxu0
        %v1474 = vadd.f32 %v1363, %v1473
        %v1475 = vpop.f32.mrb[0].mxu0
        %v1476 = vadd.f32 %v1365, %v1475
        %1477 = vmatprep.mubr.f32.mxu0 0.0
        %v1478 = vand.u32 %v515, 4294901760
        %1479 = vmatmul.mubr.f32.gmra.mrb[0].mxu0 %v1478
        %v1480 = vpop.f32.mrb[0].mxu0
        %v1481 = vadd.f32 %v1370, %v1480
        %v1482 = vpop.f32.mrb[0].mxu0
        %v1483 = vadd.f32 %v1372, %v1482
        %1484 = vdwg.mxu0
        %1485 = vmatprep.subr.mxu0 0.0
        %v1486 = vand.u32 %v518, 4294901760
        %1487 = vmatpush1.msra.mxu0 %v1486
        %1488 = vmatprep.subr.mxu0 0.0
        %v1489 = vand.u32 %v521, 4294901760
        %1490 = vmatpush1.msra.mxu0 %v1489
        %1491 = vmatprep.subr.mxu0 0.0
        %v1492 = vand.u32 %v524, 4294901760
        %1493 = vmatpush1.msra.mxu0 %v1492
        %1494 = vmatprep.subr.mxu0 0.0
        %v1495 = vand.u32 %v527, 4294901760
        %1496 = vmatpush1.msra.mxu0 %v1495
        %1497 = vmatprep.subr.mxu0 0.0
        %v1498 = vand.u32 %v530, 4294901760
        %1499 = vmatpush1.msra.mxu0 %v1498
        %1500 = vmatprep.subr.mxu0 0.0
        %v1501 = vand.u32 %v533, 4294901760
        %1502 = vmatpush1.msra.mxu0 %v1501
        %1503 = vmatprep.subr.mxu0 0.0
        %v1504 = vand.u32 %v536, 4294901760
        %1505 = vmatpush1.msra.mxu0 %v1504
        %1506 = vmatprep.subr.mxu0 0.0
        %v1507 = vand.u32 %v539, 4294901760
        %1508 = vmatpush1.msra.mxu0 %v1507
        %1509 = vmatprep.subr.mxu0 0.0
        %v1510 = vand.u32 %v542, 4294901760
        %1511 = vmatpush1.msra.mxu0 %v1510
        %1512 = vmatprep.subr.mxu0 0.0
        %v1513 = vand.u32 %v545, 4294901760
        %1514 = vmatpush1.msra.mxu0 %v1513
        %1515 = vmatprep.subr.mxu0 0.0
        %v1516 = vand.u32 %v548, 4294901760
        %1517 = vmatpush1.msra.mxu0 %v1516
        %1518 = vmatprep.subr.mxu0 0.0
        %v1519 = vand.u32 %v551, 4294901760
        %1520 = vmatpush1.msra.mxu0 %v1519
        %1521 = vmatprep.subr.mxu0 0.0
        %v1522 = vand.u32 %v554, 4294901760
        %1523 = vmatpush1.msra.mxu0 %v1522
        %1524 = vmatprep.subr.mxu0 0.0
        %v1525 = vand.u32 %v557, 4294901760
        %1526 = vmatpush1.msra.mxu0 %v1525
        %1527 = vmatprep.subr.mxu0 0.0
        %v1528 = vand.u32 %v560, 4294901760
        %1529 = vmatpush1.msra.mxu0 %v1528
        %1530 = vmatprep.subr.mxu0 0.0
        %v1531 = vand.u32 %v563, 4294901760
        %1532 = vmatpush1.msra.mxu0 %v1531
        %1533 = vmatprep.subr.mxu0 0.0
        %1534 = vmatpush1.msra.mxu0 0.0
        %1535 = vmatprep.subr.mxu0 0.0
        %1536 = vmatpush1.msra.mxu0 0.0
        %1537 = vmatprep.subr.mxu0 0.0
        %1538 = vmatpush1.msra.mxu0 0.0
        %1539 = vmatprep.subr.mxu0 0.0
        %1540 = vmatpush1.msra.mxu0 0.0
        %1541 = vmatprep.subr.mxu0 0.0
        %1542 = vmatpush1.msra.mxu0 0.0
        %1543 = vmatprep.subr.mxu0 0.0
        %1544 = vmatpush1.msra.mxu0 0.0
        %1545 = vmatprep.subr.mxu0 0.0
        %1546 = vmatpush1.msra.mxu0 0.0
        %1547 = vmatprep.subr.mxu0 0.0
        %1548 = vmatpush1.msra.mxu0 0.0
        %1549 = vmatprep.subr.mxu0 0.0
        %1550 = vmatpush1.msra.mxu0 0.0
        %1551 = vmatprep.subr.mxu0 0.0
        %1552 = vmatpush1.msra.mxu0 0.0
        %1553 = vmatprep.subr.mxu0 0.0
        %1554 = vmatpush1.msra.mxu0 0.0
        %1555 = vmatprep.subr.mxu0 0.0
        %1556 = vmatpush1.msra.mxu0 0.0
        %1557 = vmatprep.subr.mxu0 0.0
        %1558 = vmatpush1.msra.mxu0 0.0
        %1559 = vmatprep.subr.mxu0 0.0
        %1560 = vmatpush1.msra.mxu0 0.0
        %1561 = vmatprep.subr.mxu0 0.0
        %1562 = vmatpush1.msra.mxu0 0.0
        %1563 = vmatprep.subr.mxu0 0.0
        %1564 = vmatpush1.msra.mxu0 0.0
        %1565 = vmatprep.mubr.f32.mxu0 0.0
        %v1566 = vand.u32 %v514, 4294901760
        %v1567 = vsub.f32 %v514, %v1566
        %v1568 = vand.u32 %v1567, 4294901760
        %v1569 = vsub.f32 %v1567, %v1568
        %v1570 = vand.u32 %v1569, 4294901760
        %1571 = vmatmul.mubr.f32.gmra.mrb[0].mxu0 %v1570
        %v1572 = vpop.f32.mrb[0].mxu0
        %v1573 = vadd.f32 %v577, %v1572
        %v1574 = vpop.f32.mrb[0].mxu0
        %1575 = vmatprep.mubr.f32.mxu0 0.0
        %v1576 = vand.u32 %v515, 4294901760
        %v1577 = vsub.f32 %v515, %v1576
        %v1578 = vand.u32 %v1577, 4294901760
        %v1579 = vsub.f32 %v1577, %v1578
        %v1580 = vand.u32 %v1579, 4294901760
        %1581 = vmatmul.mubr.f32.gmra.mrb[0].mxu0 %v1580
        %v1582 = vpop.f32.mrb[0].mxu0
        %v1583 = vadd.f32 %v577, %v1582
        %v1584 = vpop.f32.mrb[0].mxu0
        %1585 = vdwg.mxu0
        %1586 = vmatprep.subr.mxu0 0.0
        %v1587 = vand.u32 %v518, 4294901760
        %v1588 = vsub.f32 %v518, %v1587
        %v1589 = vand.u32 %v1588, 4294901760
        %v1590 = vsub.f32 %v1588, %v1589
        %v1591 = vand.u32 %v1590, 4294901760
        %1592 = vmatpush1.msra.mxu0 %v1591
        %1593 = vmatprep.subr.mxu0 0.0
        %v1594 = vand.u32 %v521, 4294901760
        %v1595 = vsub.f32 %v521, %v1594
        %v1596 = vand.u32 %v1595, 4294901760
        %v1597 = vsub.f32 %v1595, %v1596
        %v1598 = vand.u32 %v1597, 4294901760
        %1599 = vmatpush1.msra.mxu0 %v1598
        %1600 = vmatprep.subr.mxu0 0.0
        %v1601 = vand.u32 %v524, 4294901760
        %v1602 = vsub.f32 %v524, %v1601
        %v1603 = vand.u32 %v1602, 4294901760
        %v1604 = vsub.f32 %v1602, %v1603
        %v1605 = vand.u32 %v1604, 4294901760
        %1606 = vmatpush1.msra.mxu0 %v1605
        %1607 = vmatprep.subr.mxu0 0.0
        %v1608 = vand.u32 %v527, 4294901760
        %v1609 = vsub.f32 %v527, %v1608
        %v1610 = vand.u32 %v1609, 4294901760
        %v1611 = vsub.f32 %v1609, %v1610
        %v1612 = vand.u32 %v1611, 4294901760
        %1613 = vmatpush1.msra.mxu0 %v1612
        %1614 = vmatprep.subr.mxu0 0.0
        %v1615 = vand.u32 %v530, 4294901760
        %v1616 = vsub.f32 %v530, %v1615
        %v1617 = vand.u32 %v1616, 4294901760
        %v1618 = vsub.f32 %v1616, %v1617
        %v1619 = vand.u32 %v1618, 4294901760
        %1620 = vmatpush1.msra.mxu0 %v1619
        %1621 = vmatprep.subr.mxu0 0.0
        %v1622 = vand.u32 %v533, 4294901760
        %v1623 = vsub.f32 %v533, %v1622
        %v1624 = vand.u32 %v1623, 4294901760
        %v1625 = vsub.f32 %v1623, %v1624
        %v1626 = vand.u32 %v1625, 4294901760
        %1627 = vmatpush1.msra.mxu0 %v1626
        %1628 = vmatprep.subr.mxu0 0.0
        %v1629 = vand.u32 %v536, 4294901760
        %v1630 = vsub.f32 %v536, %v1629
        %v1631 = vand.u32 %v1630, 4294901760
        %v1632 = vsub.f32 %v1630, %v1631
        %v1633 = vand.u32 %v1632, 4294901760
        %1634 = vmatpush1.msra.mxu0 %v1633
        %1635 = vmatprep.subr.mxu0 0.0
        %v1636 = vand.u32 %v539, 4294901760
        %v1637 = vsub.f32 %v539, %v1636
        %v1638 = vand.u32 %v1637, 4294901760
        %v1639 = vsub.f32 %v1637, %v1638
        %v1640 = vand.u32 %v1639, 4294901760
        %1641 = vmatpush1.msra.mxu0 %v1640
        %1642 = vmatprep.subr.mxu0 0.0
        %v1643 = vand.u32 %v542, 4294901760
        %v1644 = vsub.f32 %v542, %v1643
        %v1645 = vand.u32 %v1644, 4294901760
        %v1646 = vsub.f32 %v1644, %v1645
        %v1647 = vand.u32 %v1646, 4294901760
        %1648 = vmatpush1.msra.mxu0 %v1647
        %1649 = vmatprep.subr.mxu0 0.0
        %v1650 = vand.u32 %v545, 4294901760
        %v1651 = vsub.f32 %v545, %v1650
        %v1652 = vand.u32 %v1651, 4294901760
        %v1653 = vsub.f32 %v1651, %v1652
        %v1654 = vand.u32 %v1653, 4294901760
        %1655 = vmatpush1.msra.mxu0 %v1654
        %1656 = vmatprep.subr.mxu0 0.0
        %v1657 = vand.u32 %v548, 4294901760
        %v1658 = vsub.f32 %v548, %v1657
        %v1659 = vand.u32 %v1658, 4294901760
        %v1660 = vsub.f32 %v1658, %v1659
        %v1661 = vand.u32 %v1660, 4294901760
        %1662 = vmatpush1.msra.mxu0 %v1661
        %1663 = vmatprep.subr.mxu0 0.0
        %v1664 = vand.u32 %v551, 4294901760
        %v1665 = vsub.f32 %v551, %v1664
        %v1666 = vand.u32 %v1665, 4294901760
        %v1667 = vsub.f32 %v1665, %v1666
        %v1668 = vand.u32 %v1667, 4294901760
        %1669 = vmatpush1.msra.mxu0 %v1668
        %1670 = vmatprep.subr.mxu0 0.0
        %v1671 = vand.u32 %v554, 4294901760
        %v1672 = vsub.f32 %v554, %v1671
        %v1673 = vand.u32 %v1672, 4294901760
        %v1674 = vsub.f32 %v1672, %v1673
        %v1675 = vand.u32 %v1674, 4294901760
        %1676 = vmatpush1.msra.mxu0 %v1675
        %1677 = vmatprep.subr.mxu0 0.0
        %v1678 = vand.u32 %v557, 4294901760
        %v1679 = vsub.f32 %v557, %v1678
        %v1680 = vand.u32 %v1679, 4294901760
        %v1681 = vsub.f32 %v1679, %v1680
        %v1682 = vand.u32 %v1681, 4294901760
        %1683 = vmatpush1.msra.mxu0 %v1682
        %1684 = vmatprep.subr.mxu0 0.0
        %v1685 = vand.u32 %v560, 4294901760
        %v1686 = vsub.f32 %v560, %v1685
        %v1687 = vand.u32 %v1686, 4294901760
        %v1688 = vsub.f32 %v1686, %v1687
        %v1689 = vand.u32 %v1688, 4294901760
        %1690 = vmatpush1.msra.mxu0 %v1689
        %1691 = vmatprep.subr.mxu0 0.0
        %v1692 = vand.u32 %v563, 4294901760
        %v1693 = vsub.f32 %v563, %v1692
        %v1694 = vand.u32 %v1693, 4294901760
        %v1695 = vsub.f32 %v1693, %v1694
        %v1696 = vand.u32 %v1695, 4294901760
        %1697 = vmatpush1.msra.mxu0 %v1696
        %1698 = vmatprep.subr.mxu0 0.0
        %1699 = vmatpush1.msra.mxu0 0.0
        %1700 = vmatprep.subr.mxu0 0.0
        %1701 = vmatpush1.msra.mxu0 0.0
        %1702 = vmatprep.subr.mxu0 0.0
        %1703 = vmatpush1.msra.mxu0 0.0
        %1704 = vmatprep.subr.mxu0 0.0
        %1705 = vmatpush1.msra.mxu0 0.0
        %1706 = vmatprep.subr.mxu0 0.0
        %1707 = vmatpush1.msra.mxu0 0.0
        %1708 = vmatprep.subr.mxu0 0.0
        %1709 = vmatpush1.msra.mxu0 0.0
        %1710 = vmatprep.subr.mxu0 0.0
        %1711 = vmatpush1.msra.mxu0 0.0
        %1712 = vmatprep.subr.mxu0 0.0
        %1713 = vmatpush1.msra.mxu0 0.0
        %1714 = vmatprep.subr.mxu0 0.0
        %1715 = vmatpush1.msra.mxu0 0.0
        %1716 = vmatprep.subr.mxu0 0.0
        %1717 = vmatpush1.msra.mxu0 0.0
        %1718 = vmatprep.subr.mxu0 0.0
        %1719 = vmatpush1.msra.mxu0 0.0
        %1720 = vmatprep.subr.mxu0 0.0
        %1721 = vmatpush1.msra.mxu0 0.0
        %1722 = vmatprep.subr.mxu0 0.0
        %1723 = vmatpush1.msra.mxu0 0.0
        %1724 = vmatprep.subr.mxu0 0.0
        %1725 = vmatpush1.msra.mxu0 0.0
        %1726 = vmatprep.subr.mxu0 0.0
        %1727 = vmatpush1.msra.mxu0 0.0
        %1728 = vmatprep.subr.mxu0 0.0
        %1729 = vmatpush1.msra.mxu0 0.0
        %1730 = vmatprep.mubr.f32.mxu0 0.0
        %v1731 = vand.u32 %v514, 4294901760
        %1732 = vmatmul.mubr.f32.gmra.mrb[0].mxu0 %v1731
        %v1733 = vpop.f32.mrb[0].mxu0
        %v1734 = vadd.f32 %v1573, %v1733
        %v1735 = vpop.f32.mrb[0].mxu0
        %1736 = vmatprep.mubr.f32.mxu0 0.0
        %v1737 = vand.u32 %v515, 4294901760
        %1738 = vmatmul.mubr.f32.gmra.mrb[0].mxu0 %v1737
        %v1739 = vpop.f32.mrb[0].mxu0
        %v1740 = vadd.f32 %v1583, %v1739
        %v1741 = vpop.f32.mrb[0].mxu0
        %1742 = vdwg.mxu0
        %1743 = vmatprep.subr.mxu0 0.0
        %v1744 = vand.u32 %v518, 4294901760
        %v1745 = vsub.f32 %v518, %v1744
        %1746 = vmatpush1.msra.mxu0 %v1745
        %1747 = vmatprep.subr.mxu0 0.0
        %v1748 = vand.u32 %v521, 4294901760
        %v1749 = vsub.f32 %v521, %v1748
        %1750 = vmatpush1.msra.mxu0 %v1749
        %1751 = vmatprep.subr.mxu0 0.0
        %v1752 = vand.u32 %v524, 4294901760
        %v1753 = vsub.f32 %v524, %v1752
        %1754 = vmatpush1.msra.mxu0 %v1753
        %1755 = vmatprep.subr.mxu0 0.0
        %v1756 = vand.u32 %v527, 4294901760
        %v1757 = vsub.f32 %v527, %v1756
        %1758 = vmatpush1.msra.mxu0 %v1757
        %1759 = vmatprep.subr.mxu0 0.0
        %v1760 = vand.u32 %v530, 4294901760
        %v1761 = vsub.f32 %v530, %v1760
        %1762 = vmatpush1.msra.mxu0 %v1761
        %1763 = vmatprep.subr.mxu0 0.0
        %v1764 = vand.u32 %v533, 4294901760
        %v1765 = vsub.f32 %v533, %v1764
        %1766 = vmatpush1.msra.mxu0 %v1765
        %1767 = vmatprep.subr.mxu0 0.0
        %v1768 = vand.u32 %v536, 4294901760
        %v1769 = vsub.f32 %v536, %v1768
        %1770 = vmatpush1.msra.mxu0 %v1769
        %1771 = vmatprep.subr.mxu0 0.0
        %v1772 = vand.u32 %v539, 4294901760
        %v1773 = vsub.f32 %v539, %v1772
        %1774 = vmatpush1.msra.mxu0 %v1773
        %1775 = vmatprep.subr.mxu0 0.0
        %v1776 = vand.u32 %v542, 4294901760
        %v1777 = vsub.f32 %v542, %v1776
        %1778 = vmatpush1.msra.mxu0 %v1777
        %1779 = vmatprep.subr.mxu0 0.0
        %v1780 = vand.u32 %v545, 4294901760
        %v1781 = vsub.f32 %v545, %v1780
        %1782 = vmatpush1.msra.mxu0 %v1781
        %1783 = vmatprep.subr.mxu0 0.0
        %v1784 = vand.u32 %v548, 4294901760
        %v1785 = vsub.f32 %v548, %v1784
        %1786 = vmatpush1.msra.mxu0 %v1785
        %1787 = vmatprep.subr.mxu0 0.0
        %v1788 = vand.u32 %v551, 4294901760
        %v1789 = vsub.f32 %v551, %v1788
        %1790 = vmatpush1.msra.mxu0 %v1789
        %1791 = vmatprep.subr.mxu0 0.0
        %v1792 = vand.u32 %v554, 4294901760
        %v1793 = vsub.f32 %v554, %v1792
        %1794 = vmatpush1.msra.mxu0 %v1793
        %1795 = vmatprep.subr.mxu0 0.0
        %v1796 = vand.u32 %v557, 4294901760
        %v1797 = vsub.f32 %v557, %v1796
        %1798 = vmatpush1.msra.mxu0 %v1797
        %1799 = vmatprep.subr.mxu0 0.0
        %v1800 = vand.u32 %v560, 4294901760
        %v1801 = vsub.f32 %v560, %v1800
        %1802 = vmatpush1.msra.mxu0 %v1801
        %1803 = vmatprep.subr.mxu0 0.0
        %v1804 = vand.u32 %v563, 4294901760
        %v1805 = vsub.f32 %v563, %v1804
        %1806 = vmatpush1.msra.mxu0 %v1805
        %1807 = vmatprep.subr.mxu0 0.0
        %1808 = vmatpush1.msra.mxu0 0.0
        %1809 = vmatprep.subr.mxu0 0.0
        %1810 = vmatpush1.msra.mxu0 0.0
        %1811 = vmatprep.subr.mxu0 0.0
        %1812 = vmatpush1.msra.mxu0 0.0
        %1813 = vmatprep.subr.mxu0 0.0
        %1814 = vmatpush1.msra.mxu0 0.0
        %1815 = vmatprep.subr.mxu0 0.0
        %1816 = vmatpush1.msra.mxu0 0.0
        %1817 = vmatprep.subr.mxu0 0.0
        %1818 = vmatpush1.msra.mxu0 0.0
        %1819 = vmatprep.subr.mxu0 0.0
        %1820 = vmatpush1.msra.mxu0 0.0
        %1821 = vmatprep.subr.mxu0 0.0
        %1822 = vmatpush1.msra.mxu0 0.0
        %1823 = vmatprep.subr.mxu0 0.0
        %1824 = vmatpush1.msra.mxu0 0.0
        %1825 = vmatprep.subr.mxu0 0.0
        %1826 = vmatpush1.msra.mxu0 0.0
        %1827 = vmatprep.subr.mxu0 0.0
        %1828 = vmatpush1.msra.mxu0 0.0
        %1829 = vmatprep.subr.mxu0 0.0
        %1830 = vmatpush1.msra.mxu0 0.0
        %1831 = vmatprep.subr.mxu0 0.0
        %1832 = vmatpush1.msra.mxu0 0.0
        %1833 = vmatprep.subr.mxu0 0.0
        %1834 = vmatpush1.msra.mxu0 0.0
        %1835 = vmatprep.subr.mxu0 0.0
        %1836 = vmatpush1.msra.mxu0 0.0
        %1837 = vmatprep.subr.mxu0 0.0
        %1838 = vmatpush1.msra.mxu0 0.0
        %1839 = vmatprep.mubr.f32.mxu0 0.0
        %v1840 = vand.u32 %v514, 4294901760
        %v1841 = vsub.f32 %v514, %v1840
        %1842 = vmatmul.mubr.f32.gmra.mrb[0].mxu0 %v1841
        %v1843 = vpop.f32.mrb[0].mxu0
        %v1844 = vadd.f32 %v1734, %v1843
        %v1845 = vpop.f32.mrb[0].mxu0
        %1846 = vmatprep.mubr.f32.mxu0 0.0
        %v1847 = vand.u32 %v515, 4294901760
        %v1848 = vsub.f32 %v515, %v1847
        %1849 = vmatmul.mubr.f32.gmra.mrb[0].mxu0 %v1848
        %v1850 = vpop.f32.mrb[0].mxu0
        %v1851 = vadd.f32 %v1740, %v1850
        %v1852 = vpop.f32.mrb[0].mxu0
        %1853 = vdwg.mxu0
        %1854 = vmatprep.subr.mxu0 0.0
        %v1855 = vand.u32 %v518, 4294901760
        %1856 = vmatpush1.msra.mxu0 %v1855
        %1857 = vmatprep.subr.mxu0 0.0
        %v1858 = vand.u32 %v521, 4294901760
        %1859 = vmatpush1.msra.mxu0 %v1858
        %1860 = vmatprep.subr.mxu0 0.0
        %v1861 = vand.u32 %v524, 4294901760
        %1862 = vmatpush1.msra.mxu0 %v1861
        %1863 = vmatprep.subr.mxu0 0.0
        %v1864 = vand.u32 %v527, 4294901760
        %1865 = vmatpush1.msra.mxu0 %v1864
        %1866 = vmatprep.subr.mxu0 0.0
        %v1867 = vand.u32 %v530, 4294901760
        %1868 = vmatpush1.msra.mxu0 %v1867
        %1869 = vmatprep.subr.mxu0 0.0
        %v1870 = vand.u32 %v533, 4294901760
        %1871 = vmatpush1.msra.mxu0 %v1870
        %1872 = vmatprep.subr.mxu0 0.0
        %v1873 = vand.u32 %v536, 4294901760
        %1874 = vmatpush1.msra.mxu0 %v1873
        %1875 = vmatprep.subr.mxu0 0.0
        %v1876 = vand.u32 %v539, 4294901760
        %1877 = vmatpush1.msra.mxu0 %v1876
        %1878 = vmatprep.subr.mxu0 0.0
        %v1879 = vand.u32 %v542, 4294901760
        %1880 = vmatpush1.msra.mxu0 %v1879
        %1881 = vmatprep.subr.mxu0 0.0
        %v1882 = vand.u32 %v545, 4294901760
        %1883 = vmatpush1.msra.mxu0 %v1882
        %1884 = vmatprep.subr.mxu0 0.0
        %v1885 = vand.u32 %v548, 4294901760
        %1886 = vmatpush1.msra.mxu0 %v1885
        %1887 = vmatprep.subr.mxu0 0.0
        %v1888 = vand.u32 %v551, 4294901760
        %1889 = vmatpush1.msra.mxu0 %v1888
        %1890 = vmatprep.subr.mxu0 0.0
        %v1891 = vand.u32 %v554, 4294901760
        %1892 = vmatpush1.msra.mxu0 %v1891
        %1893 = vmatprep.subr.mxu0 0.0
        %v1894 = vand.u32 %v557, 4294901760
        %1895 = vmatpush1.msra.mxu0 %v1894
        %1896 = vmatprep.subr.mxu0 0.0
        %v1897 = vand.u32 %v560, 4294901760
        %1898 = vmatpush1.msra.mxu0 %v1897
        %1899 = vmatprep.subr.mxu0 0.0
        %v1900 = vand.u32 %v563, 4294901760
        %1901 = vmatpush1.msra.mxu0 %v1900
        %1902 = vmatprep.subr.mxu0 0.0
        %1903 = vmatpush1.msra.mxu0 0.0
        %1904 = vmatprep.subr.mxu0 0.0
        %1905 = vmatpush1.msra.mxu0 0.0
        %1906 = vmatprep.subr.mxu0 0.0
        %1907 = vmatpush1.msra.mxu0 0.0
        %1908 = vmatprep.subr.mxu0 0.0
        %1909 = vmatpush1.msra.mxu0 0.0
        %1910 = vmatprep.subr.mxu0 0.0
        %1911 = vmatpush1.msra.mxu0 0.0
        %1912 = vmatprep.subr.mxu0 0.0
        %1913 = vmatpush1.msra.mxu0 0.0
        %1914 = vmatprep.subr.mxu0 0.0
        %1915 = vmatpush1.msra.mxu0 0.0
        %1916 = vmatprep.subr.mxu0 0.0
        %1917 = vmatpush1.msra.mxu0 0.0
        %1918 = vmatprep.subr.mxu0 0.0
        %1919 = vmatpush1.msra.mxu0 0.0
        %1920 = vmatprep.subr.mxu0 0.0
        %1921 = vmatpush1.msra.mxu0 0.0
        %1922 = vmatprep.subr.mxu0 0.0
        %1923 = vmatpush1.msra.mxu0 0.0
        %1924 = vmatprep.subr.mxu0 0.0
        %1925 = vmatpush1.msra.mxu0 0.0
        %1926 = vmatprep.subr.mxu0 0.0
        %1927 = vmatpush1.msra.mxu0 0.0
        %1928 = vmatprep.subr.mxu0 0.0
        %1929 = vmatpush1.msra.mxu0 0.0
        %1930 = vmatprep.subr.mxu0 0.0
        %1931 = vmatpush1.msra.mxu0 0.0
        %1932 = vmatprep.subr.mxu0 0.0
        %1933 = vmatpush1.msra.mxu0 0.0
        %1934 = vmatprep.mubr.f32.mxu0 0.0
        %v1935 = vand.u32 %v514, 4294901760
        %v1936 = vsub.f32 %v514, %v1935
        %v1937 = vand.u32 %v1936, 4294901760
        %1938 = vmatmul.mubr.f32.gmra.mrb[0].mxu0 %v1937
        %v1939 = vpop.f32.mrb[0].mxu0
        %v1940 = vadd.f32 %v1844, %v1939
        %v1941 = vpop.f32.mrb[0].mxu0
        %1942 = vmatprep.mubr.f32.mxu0 0.0
        %v1943 = vand.u32 %v515, 4294901760
        %v1944 = vsub.f32 %v515, %v1943
        %v1945 = vand.u32 %v1944, 4294901760
        %1946 = vmatmul.mubr.f32.gmra.mrb[0].mxu0 %v1945
        %v1947 = vpop.f32.mrb[0].mxu0
        %v1948 = vadd.f32 %v1851, %v1947
        %v1949 = vpop.f32.mrb[0].mxu0
        %1950 = vdwg.mxu0
        %1951 = vmatprep.subr.mxu0 0.0
        %v1952 = vand.u32 %v518, 4294901760
        %v1953 = vsub.f32 %v518, %v1952
        %v1954 = vand.u32 %v1953, 4294901760
        %1955 = vmatpush1.msra.mxu0 %v1954
        %1956 = vmatprep.subr.mxu0 0.0
        %v1957 = vand.u32 %v521, 4294901760
        %v1958 = vsub.f32 %v521, %v1957
        %v1959 = vand.u32 %v1958, 4294901760
        %1960 = vmatpush1.msra.mxu0 %v1959
        %1961 = vmatprep.subr.mxu0 0.0
        %v1962 = vand.u32 %v524, 4294901760
        %v1963 = vsub.f32 %v524, %v1962
        %v1964 = vand.u32 %v1963, 4294901760
        %1965 = vmatpush1.msra.mxu0 %v1964
        %1966 = vmatprep.subr.mxu0 0.0
        %v1967 = vand.u32 %v527, 4294901760
        %v1968 = vsub.f32 %v527, %v1967
        %v1969 = vand.u32 %v1968, 4294901760
        %1970 = vmatpush1.msra.mxu0 %v1969
        %1971 = vmatprep.subr.mxu0 0.0
        %v1972 = vand.u32 %v530, 4294901760
        %v1973 = vsub.f32 %v530, %v1972
        %v1974 = vand.u32 %v1973, 4294901760
        %1975 = vmatpush1.msra.mxu0 %v1974
        %1976 = vmatprep.subr.mxu0 0.0
        %v1977 = vand.u32 %v533, 4294901760
        %v1978 = vsub.f32 %v533, %v1977
        %v1979 = vand.u32 %v1978, 4294901760
        %1980 = vmatpush1.msra.mxu0 %v1979
        %1981 = vmatprep.subr.mxu0 0.0
        %v1982 = vand.u32 %v536, 4294901760
        %v1983 = vsub.f32 %v536, %v1982
        %v1984 = vand.u32 %v1983, 4294901760
        %1985 = vmatpush1.msra.mxu0 %v1984
        %1986 = vmatprep.subr.mxu0 0.0
        %v1987 = vand.u32 %v539, 4294901760
        %v1988 = vsub.f32 %v539, %v1987
        %v1989 = vand.u32 %v1988, 4294901760
        %1990 = vmatpush1.msra.mxu0 %v1989
        %1991 = vmatprep.subr.mxu0 0.0
        %v1992 = vand.u32 %v542, 4294901760
        %v1993 = vsub.f32 %v542, %v1992
        %v1994 = vand.u32 %v1993, 4294901760
        %1995 = vmatpush1.msra.mxu0 %v1994
        %1996 = vmatprep.subr.mxu0 0.0
        %v1997 = vand.u32 %v545, 4294901760
        %v1998 = vsub.f32 %v545, %v1997
        %v1999 = vand.u32 %v1998, 4294901760
        %2000 = vmatpush1.msra.mxu0 %v1999
        %2001 = vmatprep.subr.mxu0 0.0
        %v2002 = vand.u32 %v548, 4294901760
        %v2003 = vsub.f32 %v548, %v2002
        %v2004 = vand.u32 %v2003, 4294901760
        %2005 = vmatpush1.msra.mxu0 %v2004
        %2006 = vmatprep.subr.mxu0 0.0
        %v2007 = vand.u32 %v551, 4294901760
        %v2008 = vsub.f32 %v551, %v2007
        %v2009 = vand.u32 %v2008, 4294901760
        %2010 = vmatpush1.msra.mxu0 %v2009
        %2011 = vmatprep.subr.mxu0 0.0
        %v2012 = vand.u32 %v554, 4294901760
        %v2013 = vsub.f32 %v554, %v2012
        %v2014 = vand.u32 %v2013, 4294901760
        %2015 = vmatpush1.msra.mxu0 %v2014
        %2016 = vmatprep.subr.mxu0 0.0
        %v2017 = vand.u32 %v557, 4294901760
        %v2018 = vsub.f32 %v557, %v2017
        %v2019 = vand.u32 %v2018, 4294901760
        %2020 = vmatpush1.msra.mxu0 %v2019
        %2021 = vmatprep.subr.mxu0 0.0
        %v2022 = vand.u32 %v560, 4294901760
        %v2023 = vsub.f32 %v560, %v2022
        %v2024 = vand.u32 %v2023, 4294901760
        %2025 = vmatpush1.msra.mxu0 %v2024
        %2026 = vmatprep.subr.mxu0 0.0
        %v2027 = vand.u32 %v563, 4294901760
        %v2028 = vsub.f32 %v563, %v2027
        %v2029 = vand.u32 %v2028, 4294901760
        %2030 = vmatpush1.msra.mxu0 %v2029
        %2031 = vmatprep.subr.mxu0 0.0
        %2032 = vmatpush1.msra.mxu0 0.0
        %2033 = vmatprep.subr.mxu0 0.0
        %2034 = vmatpush1.msra.mxu0 0.0
        %2035 = vmatprep.subr.mxu0 0.0
        %2036 = vmatpush1.msra.mxu0 0.0
        %2037 = vmatprep.subr.mxu0 0.0
        %2038 = vmatpush1.msra.mxu0 0.0
        %2039 = vmatprep.subr.mxu0 0.0
        %2040 = vmatpush1.msra.mxu0 0.0
        %2041 = vmatprep.subr.mxu0 0.0
        %2042 = vmatpush1.msra.mxu0 0.0
        %2043 = vmatprep.subr.mxu0 0.0
        %2044 = vmatpush1.msra.mxu0 0.0
        %2045 = vmatprep.subr.mxu0 0.0
        %2046 = vmatpush1.msra.mxu0 0.0
        %2047 = vmatprep.subr.mxu0 0.0
        %2048 = vmatpush1.msra.mxu0 0.0
        %2049 = vmatprep.subr.mxu0 0.0
        %2050 = vmatpush1.msra.mxu0 0.0
        %2051 = vmatprep.subr.mxu0 0.0
        %2052 = vmatpush1.msra.mxu0 0.0
        %2053 = vmatprep.subr.mxu0 0.0
        %2054 = vmatpush1.msra.mxu0 0.0
        %2055 = vmatprep.subr.mxu0 0.0
        %2056 = vmatpush1.msra.mxu0 0.0
        %2057 = vmatprep.subr.mxu0 0.0
        %2058 = vmatpush1.msra.mxu0 0.0
        %2059 = vmatprep.subr.mxu0 0.0
        %2060 = vmatpush1.msra.mxu0 0.0
        %2061 = vmatprep.subr.mxu0 0.0
        %2062 = vmatpush1.msra.mxu0 0.0
        %2063 = vmatprep.mubr.f32.mxu0 0.0
        %v2064 = vand.u32 %v514, 4294901760
        %2065 = vmatmul.mubr.f32.gmra.mrb[0].mxu0 %v2064
        %v2066 = vpop.f32.mrb[0].mxu0
        %v2067 = vadd.f32 %v1940, %v2066
        %v2068 = vpop.f32.mrb[0].mxu0
        %2069 = vmatprep.mubr.f32.mxu0 0.0
        %v2070 = vand.u32 %v515, 4294901760
        %2071 = vmatmul.mubr.f32.gmra.mrb[0].mxu0 %v2070
        %v2072 = vpop.f32.mrb[0].mxu0
        %v2073 = vadd.f32 %v1948, %v2072
        %v2074 = vpop.f32.mrb[0].mxu0
        %2075 = vdwg.mxu0
        %2076 = vmatprep.subr.mxu0 0.0
        %v2077 = vand.u32 %v518, 4294901760
        %2078 = vmatpush1.msra.mxu0 %v2077
        %2079 = vmatprep.subr.mxu0 0.0
        %v2080 = vand.u32 %v521, 4294901760
        %2081 = vmatpush1.msra.mxu0 %v2080
        %2082 = vmatprep.subr.mxu0 0.0
        %v2083 = vand.u32 %v524, 4294901760
        %2084 = vmatpush1.msra.mxu0 %v2083
        %2085 = vmatprep.subr.mxu0 0.0
        %v2086 = vand.u32 %v527, 4294901760
        %2087 = vmatpush1.msra.mxu0 %v2086
        %2088 = vmatprep.subr.mxu0 0.0
        %v2089 = vand.u32 %v530, 4294901760
        %2090 = vmatpush1.msra.mxu0 %v2089
        %2091 = vmatprep.subr.mxu0 0.0
        %v2092 = vand.u32 %v533, 4294901760
        %2093 = vmatpush1.msra.mxu0 %v2092
        %2094 = vmatprep.subr.mxu0 0.0
        %v2095 = vand.u32 %v536, 4294901760
        %2096 = vmatpush1.msra.mxu0 %v2095
        %2097 = vmatprep.subr.mxu0 0.0
        %v2098 = vand.u32 %v539, 4294901760
        %2099 = vmatpush1.msra.mxu0 %v2098
        %2100 = vmatprep.subr.mxu0 0.0
        %v2101 = vand.u32 %v542, 4294901760
        %2102 = vmatpush1.msra.mxu0 %v2101
        %2103 = vmatprep.subr.mxu0 0.0
        %v2104 = vand.u32 %v545, 4294901760
        %2105 = vmatpush1.msra.mxu0 %v2104
        %2106 = vmatprep.subr.mxu0 0.0
        %v2107 = vand.u32 %v548, 4294901760
        %2108 = vmatpush1.msra.mxu0 %v2107
        %2109 = vmatprep.subr.mxu0 0.0
        %v2110 = vand.u32 %v551, 4294901760
        %2111 = vmatpush1.msra.mxu0 %v2110
        %2112 = vmatprep.subr.mxu0 0.0
        %v2113 = vand.u32 %v554, 4294901760
        %2114 = vmatpush1.msra.mxu0 %v2113
        %2115 = vmatprep.subr.mxu0 0.0
        %v2116 = vand.u32 %v557, 4294901760
        %2117 = vmatpush1.msra.mxu0 %v2116
        %2118 = vmatprep.subr.mxu0 0.0
        %v2119 = vand.u32 %v560, 4294901760
        %2120 = vmatpush1.msra.mxu0 %v2119
        %2121 = vmatprep.subr.mxu0 0.0
        %v2122 = vand.u32 %v563, 4294901760
        %2123 = vmatpush1.msra.mxu0 %v2122
        %2124 = vmatprep.subr.mxu0 0.0
        %2125 = vmatpush1.msra.mxu0 0.0
        %2126 = vmatprep.subr.mxu0 0.0
        %2127 = vmatpush1.msra.mxu0 0.0
        %2128 = vmatprep.subr.mxu0 0.0
        %2129 = vmatpush1.msra.mxu0 0.0
        %2130 = vmatprep.subr.mxu0 0.0
        %2131 = vmatpush1.msra.mxu0 0.0
        %2132 = vmatprep.subr.mxu0 0.0
        %2133 = vmatpush1.msra.mxu0 0.0
        %2134 = vmatprep.subr.mxu0 0.0
        %2135 = vmatpush1.msra.mxu0 0.0
        %2136 = vmatprep.subr.mxu0 0.0
        %2137 = vmatpush1.msra.mxu0 0.0
        %2138 = vmatprep.subr.mxu0 0.0
        %2139 = vmatpush1.msra.mxu0 0.0
        %2140 = vmatprep.subr.mxu0 0.0
        %2141 = vmatpush1.msra.mxu0 0.0
        %2142 = vmatprep.subr.mxu0 0.0
        %2143 = vmatpush1.msra.mxu0 0.0
        %2144 = vmatprep.subr.mxu0 0.0
        %2145 = vmatpush1.msra.mxu0 0.0
        %2146 = vmatprep.subr.mxu0 0.0
        %2147 = vmatpush1.msra.mxu0 0.0
        %2148 = vmatprep.subr.mxu0 0.0
        %2149 = vmatpush1.msra.mxu0 0.0
        %2150 = vmatprep.subr.mxu0 0.0
        %2151 = vmatpush1.msra.mxu0 0.0
        %2152 = vmatprep.subr.mxu0 0.0
        %2153 = vmatpush1.msra.mxu0 0.0
        %2154 = vmatprep.subr.mxu0 0.0
        %2155 = vmatpush1.msra.mxu0 0.0
        %2156 = vmatprep.mubr.f32.mxu0 0.0
        %v2157 = vand.u32 %v514, 4294901760
        %2158 = vmatmul.mubr.f32.gmra.mrb[0].mxu0 %v2157
        %v2159 = vpop.f32.mrb[0].mxu0
        %v2160 = vadd.f32 %v2067, %v2159
        %v2161 = vpop.f32.mrb[0].mxu0
        %2162 = vmatprep.mubr.f32.mxu0 0.0
        %v2163 = vand.u32 %v515, 4294901760
        %2164 = vmatmul.mubr.f32.gmra.mrb[0].mxu0 %v2163
        %v2165 = vpop.f32.mrb[0].mxu0
        %v2166 = vadd.f32 %v2073, %v2165
        %v2167 = vpop.f32.mrb[0].mxu0
        %2168 = vdwg.mxu0
        %v2169 = vld [vmem:[%s8] sm:$0xff]
        %v2170 = vld [vmem:[%s8 + $0x8] sm:$0xff]
        %v2171 = vld [vmem:[%s9] sm:$0xff]
        %v2172 = vld [vmem:[%s9 + $0x8] sm:$0xff]
        %v2173 = vld [vmem:[#allocation13] sm:$0xff]
        %v2174 = vld [vmem:[#allocation13 + $0x8] sm:$0xff]
        %v2175 = vmul.f32 %v1474, %v2169
        %v2176 = vmul.f32 %v1481, %v2170
        %2179 = vrot.lane.b32.xlu0 %v1474, 112
        %v2180 = vpop.permute.xlu0 %2179
        %2181 = vrot.lane.b32.xlu0 %v1481, 112
        %v2182 = vpop.permute.xlu0 %2181
        %v2185 = vmul.f32 %v2180, %v2171
        %v2186 = vmul.f32 %v2182, %v2172
        %v2187 = vadd.f32 %v2175, %v2185
        %v2188 = vadd.f32 %v2176, %v2186
        %2189 = vrot.lane.b32.xlu0 %v1474, 16
        %v2190 = vpop.permute.xlu0 %2189
        %2191 = vrot.lane.b32.xlu0 %v1481, 16
        %v2192 = vpop.permute.xlu0 %2191
        %vm2195 = vcmask 130048
        %v2196 = vmul.f32 %v2190, %v2173
        %v2197 = vmul.f32 %v2192, %v2174
        %v2198 = vadd.f32 %v2187, %v2196
        %v2199 = vadd.f32 %v2188, %v2197
        %v2200 = vmul.f32 %v1476, %v2169
        %v2201 = vmul.f32 %v1483, %v2170
        %2204 = vrot.lane.b32.xlu0 %v1476, 112
        %v2205 = vpop.permute.xlu0 %2204
        %2206 = vrot.lane.b32.xlu0 %v1483, 112
        %v2207 = vpop.permute.xlu0 %2206
        %v2210 = vmul.f32 %v2205, %v2171
        %v2211 = vmul.f32 %v2207, %v2172
        %v2212 = vadd.f32 %v2200, %v2210
        %v2213 = vadd.f32 %v2201, %v2211
        %2214 = vrot.lane.b32.xlu0 %v1476, 16
        %v2215 = vpop.permute.xlu0 %2214
        %2216 = vrot.lane.b32.xlu0 %v1483, 16
        %v2217 = vpop.permute.xlu0 %2216
        %v2220 = vmul.f32 %v2215, %v2173
        %v2221 = vmul.f32 %v2217, %v2174
        %v2222 = vadd.f32 %v2212, %v2220
        %v2223 = vadd.f32 %v2213, %v2221
        %v2224 = vlaneseq
        %v2225 = vshrl.u32 %v2224, 7
        %v2226 = vadd.s32 %v2225, 8
        %v2227 = vlaneseq
        %v2228 = vand.u32 %v2227, 127
        %vm2229 = vcmp.le.s32.totalorder %v2228, %v2225
        %vm2230 = vcmp.le.s32.totalorder %v2228, %v2226
        %v2231 = vsel %vm2229, 0.0, -1e+30
        %v2232 = vsel %vm2230, 0.0, -1e+30
        %vm2233 = vcmask 261120
        %v2235 = vsel %vm2233, %v2198, 0
        %v2238 = vsel %vm2233, %v2199, 0
        %v2241 = vsel %vm2233, %v2222, 0
        %v2244 = vsel %vm2233, %v2223, 0
        %2246 = vmatprep.subr.mxu0 0.0
        %v2247 = vand.u32 %v2241, 4294901760
        %2248 = vmatpush1.xpose.msra.mxu0 %v2247
        %2249 = vmatprep.subr.mxu0 0.0
        %v2250 = vand.u32 %v2244, 4294901760
        %2251 = vmatpush1.xpose.msra.mxu0 %v2250
        %2252 = vmatprep.subr.mxu0 0.0
        %2253 = vmatpush1.xpose.msra.mxu0 0.0
        %2254 = vmatprep.subr.mxu0 0.0
        %2255 = vmatpush1.xpose.msra.mxu0 0.0
        %2256 = vmatprep.subr.mxu0 0.0
        %2257 = vmatpush1.xpose.msra.mxu0 0.0
        %2258 = vmatprep.subr.mxu0 0.0
        %2259 = vmatpush1.xpose.msra.mxu0 0.0
        %2260 = vmatprep.subr.mxu0 0.0
        %2261 = vmatpush1.xpose.msra.mxu0 0.0
        %2262 = vmatprep.subr.mxu0 0.0
        %2263 = vmatpush1.xpose.msra.mxu0 0.0
        %2264 = vmatprep.subr.mxu0 0.0
        %2265 = vmatpush1.xpose.msra.mxu0 0.0
        %2266 = vmatprep.subr.mxu0 0.0
        %2267 = vmatpush1.xpose.msra.mxu0 0.0
        %2268 = vmatprep.subr.mxu0 0.0
        %2269 = vmatpush1.xpose.msra.mxu0 0.0
        %2270 = vmatprep.subr.mxu0 0.0
        %2271 = vmatpush1.xpose.msra.mxu0 0.0
        %2272 = vmatprep.subr.mxu0 0.0
        %2273 = vmatpush1.xpose.msra.mxu0 0.0
        %2274 = vmatprep.subr.mxu0 0.0
        %2275 = vmatpush1.xpose.msra.mxu0 0.0
        %2276 = vmatprep.subr.mxu0 0.0
        %2277 = vmatpush1.xpose.msra.mxu0 0.0
        %2278 = vmatprep.subr.mxu0 0.0
        %2279 = vmatpush1.xpose.msra.mxu0 0.0
        %2280 = vmatprep.subr.mxu0 0.0
        %2281 = vmatpush1.xpose.msra.mxu0 0.0
        %2282 = vmatprep.subr.mxu0 0.0
        %2283 = vmatpush1.xpose.msra.mxu0 0.0
        %2284 = vmatprep.subr.mxu0 0.0
        %2285 = vmatpush1.xpose.msra.mxu0 0.0
        %2286 = vmatprep.subr.mxu0 0.0
        %2287 = vmatpush1.xpose.msra.mxu0 0.0
        %2288 = vmatprep.subr.mxu0 0.0
        %2289 = vmatpush1.xpose.msra.mxu0 0.0
        %2290 = vmatprep.subr.mxu0 0.0
        %2291 = vmatpush1.xpose.msra.mxu0 0.0
        %2292 = vmatprep.subr.mxu0 0.0
        %2293 = vmatpush1.xpose.msra.mxu0 0.0
        %2294 = vmatprep.subr.mxu0 0.0
        %2295 = vmatpush1.xpose.msra.mxu0 0.0
        %2296 = vmatprep.subr.mxu0 0.0
        %2297 = vmatpush1.xpose.msra.mxu0 0.0
        %2298 = vmatprep.subr.mxu0 0.0
        %2299 = vmatpush1.xpose.msra.mxu0 0.0
        %2300 = vmatprep.subr.mxu0 0.0
        %2301 = vmatpush1.xpose.msra.mxu0 0.0
        %2302 = vmatprep.subr.mxu0 0.0
        %2303 = vmatpush1.xpose.msra.mxu0 0.0
        %2304 = vmatprep.subr.mxu0 0.0
        %2305 = vmatpush1.xpose.msra.mxu0 0.0
        %2306 = vmatprep.subr.mxu0 0.0
        %2307 = vmatpush1.xpose.msra.mxu0 0.0
        %2308 = vmatprep.subr.mxu0 0.0
        %2309 = vmatpush1.xpose.msra.mxu0 0.0
        %2310 = vmatprep.subr.mxu0 0.0
        %2311 = vmatpush1.xpose.msra.mxu0 0.0
        %2312 = vmatprep.mubr.f32.mxu0 0.0
        %v2313 = vand.u32 %v2235, 4294901760
        %v2314 = vsub.f32 %v2235, %v2313
        %v2315 = vand.u32 %v2314, 4294901760
        %v2316 = vsub.f32 %v2314, %v2315
        %v2317 = vand.u32 %v2316, 4294901760
        %2318 = vmatmul.mubr.f32.gmra.mrb[0].mxu0 %v2317
        %v2319 = vpop.f32.mrb[0].mxu0
        %v2320 = vadd.f32 %v2231, %v2319
        %v2321 = vpop.f32.mrb[0].mxu0
        %2322 = vmatprep.mubr.f32.mxu0 0.0
        %v2323 = vand.u32 %v2238, 4294901760
        %v2324 = vsub.f32 %v2238, %v2323
        %v2325 = vand.u32 %v2324, 4294901760
        %v2326 = vsub.f32 %v2324, %v2325
        %v2327 = vand.u32 %v2326, 4294901760
        %2328 = vmatmul.mubr.f32.gmra.mrb[0].mxu0 %v2327
        %v2329 = vpop.f32.mrb[0].mxu0
        %v2330 = vadd.f32 %v2232, %v2329
        %v2331 = vpop.f32.mrb[0].mxu0
        %2332 = vdwg.mxu0
        %2333 = vmatprep.subr.mxu0 0.0
        %v2334 = vand.u32 %v2241, 4294901760
        %v2335 = vsub.f32 %v2241, %v2334
        %v2336 = vand.u32 %v2335, 4294901760
        %v2337 = vsub.f32 %v2335, %v2336
        %v2338 = vand.u32 %v2337, 4294901760
        %2339 = vmatpush1.xpose.msra.mxu0 %v2338
        %2340 = vmatprep.subr.mxu0 0.0
        %v2341 = vand.u32 %v2244, 4294901760
        %v2342 = vsub.f32 %v2244, %v2341
        %v2343 = vand.u32 %v2342, 4294901760
        %v2344 = vsub.f32 %v2342, %v2343
        %v2345 = vand.u32 %v2344, 4294901760
        %2346 = vmatpush1.xpose.msra.mxu0 %v2345
        %2347 = vmatprep.subr.mxu0 0.0
        %2348 = vmatpush1.xpose.msra.mxu0 0.0
        %2349 = vmatprep.subr.mxu0 0.0
        %2350 = vmatpush1.xpose.msra.mxu0 0.0
        %2351 = vmatprep.subr.mxu0 0.0
        %2352 = vmatpush1.xpose.msra.mxu0 0.0
        %2353 = vmatprep.subr.mxu0 0.0
        %2354 = vmatpush1.xpose.msra.mxu0 0.0
        %2355 = vmatprep.subr.mxu0 0.0
        %2356 = vmatpush1.xpose.msra.mxu0 0.0
        %2357 = vmatprep.subr.mxu0 0.0
        %2358 = vmatpush1.xpose.msra.mxu0 0.0
        %2359 = vmatprep.subr.mxu0 0.0
        %2360 = vmatpush1.xpose.msra.mxu0 0.0
        %2361 = vmatprep.subr.mxu0 0.0
        %2362 = vmatpush1.xpose.msra.mxu0 0.0
        %2363 = vmatprep.subr.mxu0 0.0
        %2364 = vmatpush1.xpose.msra.mxu0 0.0
        %2365 = vmatprep.subr.mxu0 0.0
        %2366 = vmatpush1.xpose.msra.mxu0 0.0
        %2367 = vmatprep.subr.mxu0 0.0
        %2368 = vmatpush1.xpose.msra.mxu0 0.0
        %2369 = vmatprep.subr.mxu0 0.0
        %2370 = vmatpush1.xpose.msra.mxu0 0.0
        %2371 = vmatprep.subr.mxu0 0.0
        %2372 = vmatpush1.xpose.msra.mxu0 0.0
        %2373 = vmatprep.subr.mxu0 0.0
        %2374 = vmatpush1.xpose.msra.mxu0 0.0
        %2375 = vmatprep.subr.mxu0 0.0
        %2376 = vmatpush1.xpose.msra.mxu0 0.0
        %2377 = vmatprep.subr.mxu0 0.0
        %2378 = vmatpush1.xpose.msra.mxu0 0.0
        %2379 = vmatprep.subr.mxu0 0.0
        %2380 = vmatpush1.xpose.msra.mxu0 0.0
        %2381 = vmatprep.subr.mxu0 0.0
        %2382 = vmatpush1.xpose.msra.mxu0 0.0
        %2383 = vmatprep.subr.mxu0 0.0
        %2384 = vmatpush1.xpose.msra.mxu0 0.0
        %2385 = vmatprep.subr.mxu0 0.0
        %2386 = vmatpush1.xpose.msra.mxu0 0.0
        %2387 = vmatprep.subr.mxu0 0.0
        %2388 = vmatpush1.xpose.msra.mxu0 0.0
        %2389 = vmatprep.subr.mxu0 0.0
        %2390 = vmatpush1.xpose.msra.mxu0 0.0
        %2391 = vmatprep.subr.mxu0 0.0
        %2392 = vmatpush1.xpose.msra.mxu0 0.0
        %2393 = vmatprep.subr.mxu0 0.0
        %2394 = vmatpush1.xpose.msra.mxu0 0.0
        %2395 = vmatprep.subr.mxu0 0.0
        %2396 = vmatpush1.xpose.msra.mxu0 0.0
        %2397 = vmatprep.subr.mxu0 0.0
        %2398 = vmatpush1.xpose.msra.mxu0 0.0
        %2399 = vmatprep.subr.mxu0 0.0
        %2400 = vmatpush1.xpose.msra.mxu0 0.0
        %2401 = vmatprep.subr.mxu0 0.0
        %2402 = vmatpush1.xpose.msra.mxu0 0.0
        %2403 = vmatprep.subr.mxu0 0.0
        %2404 = vmatpush1.xpose.msra.mxu0 0.0
        %2405 = vmatprep.subr.mxu0 0.0
        %2406 = vmatpush1.xpose.msra.mxu0 0.0
        %2407 = vmatprep.mubr.f32.mxu0 0.0
        %v2408 = vand.u32 %v2235, 4294901760
        %2409 = vmatmul.mubr.f32.gmra.mrb[0].mxu0 %v2408
        %v2410 = vpop.f32.mrb[0].mxu0
        %v2411 = vadd.f32 %v2320, %v2410
        %v2412 = vpop.f32.mrb[0].mxu0
        %2413 = vmatprep.mubr.f32.mxu0 0.0
        %v2414 = vand.u32 %v2238, 4294901760
        %2415 = vmatmul.mubr.f32.gmra.mrb[0].mxu0 %v2414
        %v2416 = vpop.f32.mrb[0].mxu0
        %v2417 = vadd.f32 %v2330, %v2416
        %v2418 = vpop.f32.mrb[0].mxu0
        %2419 = vdwg.mxu0
        %2420 = vmatprep.subr.mxu0 0.0
        %v2421 = vand.u32 %v2241, 4294901760
        %v2422 = vsub.f32 %v2241, %v2421
        %2423 = vmatpush1.xpose.msra.mxu0 %v2422
        %2424 = vmatprep.subr.mxu0 0.0
        %v2425 = vand.u32 %v2244, 4294901760
        %v2426 = vsub.f32 %v2244, %v2425
        %2427 = vmatpush1.xpose.msra.mxu0 %v2426
        %2428 = vmatprep.subr.mxu0 0.0
        %2429 = vmatpush1.xpose.msra.mxu0 0.0
        %2430 = vmatprep.subr.mxu0 0.0
        %2431 = vmatpush1.xpose.msra.mxu0 0.0
        %2432 = vmatprep.subr.mxu0 0.0
        %2433 = vmatpush1.xpose.msra.mxu0 0.0
        %2434 = vmatprep.subr.mxu0 0.0
        %2435 = vmatpush1.xpose.msra.mxu0 0.0
        %2436 = vmatprep.subr.mxu0 0.0
        %2437 = vmatpush1.xpose.msra.mxu0 0.0
        %2438 = vmatprep.subr.mxu0 0.0
        %2439 = vmatpush1.xpose.msra.mxu0 0.0
        %2440 = vmatprep.subr.mxu0 0.0
        %2441 = vmatpush1.xpose.msra.mxu0 0.0
        %2442 = vmatprep.subr.mxu0 0.0
        %2443 = vmatpush1.xpose.msra.mxu0 0.0
        %2444 = vmatprep.subr.mxu0 0.0
        %2445 = vmatpush1.xpose.msra.mxu0 0.0
        %2446 = vmatprep.subr.mxu0 0.0
        %2447 = vmatpush1.xpose.msra.mxu0 0.0
        %2448 = vmatprep.subr.mxu0 0.0
        %2449 = vmatpush1.xpose.msra.mxu0 0.0
        %2450 = vmatprep.subr.mxu0 0.0
        %2451 = vmatpush1.xpose.msra.mxu0 0.0
        %2452 = vmatprep.subr.mxu0 0.0
        %2453 = vmatpush1.xpose.msra.mxu0 0.0
        %2454 = vmatprep.subr.mxu0 0.0
        %2455 = vmatpush1.xpose.msra.mxu0 0.0
        %2456 = vmatprep.subr.mxu0 0.0
        %2457 = vmatpush1.xpose.msra.mxu0 0.0
        %2458 = vmatprep.subr.mxu0 0.0
        %2459 = vmatpush1.xpose.msra.mxu0 0.0
        %2460 = vmatprep.subr.mxu0 0.0
        %2461 = vmatpush1.xpose.msra.mxu0 0.0
        %2462 = vmatprep.subr.mxu0 0.0
        %2463 = vmatpush1.xpose.msra.mxu0 0.0
        %2464 = vmatprep.subr.mxu0 0.0
        %2465 = vmatpush1.xpose.msra.mxu0 0.0
        %2466 = vmatprep.subr.mxu0 0.0
        %2467 = vmatpush1.xpose.msra.mxu0 0.0
        %2468 = vmatprep.subr.mxu0 0.0
        %2469 = vmatpush1.xpose.msra.mxu0 0.0
        %2470 = vmatprep.subr.mxu0 0.0
        %2471 = vmatpush1.xpose.msra.mxu0 0.0
        %2472 = vmatprep.subr.mxu0 0.0
        %2473 = vmatpush1.xpose.msra.mxu0 0.0
        %2474 = vmatprep.subr.mxu0 0.0
        %2475 = vmatpush1.xpose.msra.mxu0 0.0
        %2476 = vmatprep.subr.mxu0 0.0
        %2477 = vmatpush1.xpose.msra.mxu0 0.0
        %2478 = vmatprep.subr.mxu0 0.0
        %2479 = vmatpush1.xpose.msra.mxu0 0.0
        %2480 = vmatprep.subr.mxu0 0.0
        %2481 = vmatpush1.xpose.msra.mxu0 0.0
        %2482 = vmatprep.subr.mxu0 0.0
        %2483 = vmatpush1.xpose.msra.mxu0 0.0
        %2484 = vmatprep.subr.mxu0 0.0
        %2485 = vmatpush1.xpose.msra.mxu0 0.0
        %2486 = vmatprep.subr.mxu0 0.0
        %2487 = vmatpush1.xpose.msra.mxu0 0.0
        %2488 = vmatprep.mubr.f32.mxu0 0.0
        %v2489 = vand.u32 %v2235, 4294901760
        %v2490 = vsub.f32 %v2235, %v2489
        %2491 = vmatmul.mubr.f32.gmra.mrb[0].mxu0 %v2490
        %v2492 = vpop.f32.mrb[0].mxu0
        %v2493 = vadd.f32 %v2411, %v2492
        %v2494 = vpop.f32.mrb[0].mxu0
        %2495 = vmatprep.mubr.f32.mxu0 0.0
        %v2496 = vand.u32 %v2238, 4294901760
        %v2497 = vsub.f32 %v2238, %v2496
        %2498 = vmatmul.mubr.f32.gmra.mrb[0].mxu0 %v2497
        %v2499 = vpop.f32.mrb[0].mxu0
        %v2500 = vadd.f32 %v2417, %v2499
        %v2501 = vpop.f32.mrb[0].mxu0
        %2502 = vdwg.mxu0
        %2503 = vmatprep.subr.mxu0 0.0
        %v2504 = vand.u32 %v2241, 4294901760
        %2505 = vmatpush1.xpose.msra.mxu0 %v2504
        %2506 = vmatprep.subr.mxu0 0.0
        %v2507 = vand.u32 %v2244, 4294901760
        %2508 = vmatpush1.xpose.msra.mxu0 %v2507
        %2509 = vmatprep.subr.mxu0 0.0
        %2510 = vmatpush1.xpose.msra.mxu0 0.0
        %2511 = vmatprep.subr.mxu0 0.0
        %2512 = vmatpush1.xpose.msra.mxu0 0.0
        %2513 = vmatprep.subr.mxu0 0.0
        %2514 = vmatpush1.xpose.msra.mxu0 0.0
        %2515 = vmatprep.subr.mxu0 0.0
        %2516 = vmatpush1.xpose.msra.mxu0 0.0
        %2517 = vmatprep.subr.mxu0 0.0
        %2518 = vmatpush1.xpose.msra.mxu0 0.0
        %2519 = vmatprep.subr.mxu0 0.0
        %2520 = vmatpush1.xpose.msra.mxu0 0.0
        %2521 = vmatprep.subr.mxu0 0.0
        %2522 = vmatpush1.xpose.msra.mxu0 0.0
        %2523 = vmatprep.subr.mxu0 0.0
        %2524 = vmatpush1.xpose.msra.mxu0 0.0
        %2525 = vmatprep.subr.mxu0 0.0
        %2526 = vmatpush1.xpose.msra.mxu0 0.0
        %2527 = vmatprep.subr.mxu0 0.0
        %2528 = vmatpush1.xpose.msra.mxu0 0.0
        %2529 = vmatprep.subr.mxu0 0.0
        %2530 = vmatpush1.xpose.msra.mxu0 0.0
        %2531 = vmatprep.subr.mxu0 0.0
        %2532 = vmatpush1.xpose.msra.mxu0 0.0
        %2533 = vmatprep.subr.mxu0 0.0
        %2534 = vmatpush1.xpose.msra.mxu0 0.0
        %2535 = vmatprep.subr.mxu0 0.0
        %2536 = vmatpush1.xpose.msra.mxu0 0.0
        %2537 = vmatprep.subr.mxu0 0.0
        %2538 = vmatpush1.xpose.msra.mxu0 0.0
        %2539 = vmatprep.subr.mxu0 0.0
        %2540 = vmatpush1.xpose.msra.mxu0 0.0
        %2541 = vmatprep.subr.mxu0 0.0
        %2542 = vmatpush1.xpose.msra.mxu0 0.0
        %2543 = vmatprep.subr.mxu0 0.0
        %2544 = vmatpush1.xpose.msra.mxu0 0.0
        %2545 = vmatprep.subr.mxu0 0.0
        %2546 = vmatpush1.xpose.msra.mxu0 0.0
        %2547 = vmatprep.subr.mxu0 0.0
        %2548 = vmatpush1.xpose.msra.mxu0 0.0
        %2549 = vmatprep.subr.mxu0 0.0
        %2550 = vmatpush1.xpose.msra.mxu0 0.0
        %2551 = vmatprep.subr.mxu0 0.0
        %2552 = vmatpush1.xpose.msra.mxu0 0.0
        %2553 = vmatprep.subr.mxu0 0.0
        %2554 = vmatpush1.xpose.msra.mxu0 0.0
        %2555 = vmatprep.subr.mxu0 0.0
        %2556 = vmatpush1.xpose.msra.mxu0 0.0
        %2557 = vmatprep.subr.mxu0 0.0
        %2558 = vmatpush1.xpose.msra.mxu0 0.0
        %2559 = vmatprep.subr.mxu0 0.0
        %2560 = vmatpush1.xpose.msra.mxu0 0.0
        %2561 = vmatprep.subr.mxu0 0.0
        %2562 = vmatpush1.xpose.msra.mxu0 0.0
        %2563 = vmatprep.subr.mxu0 0.0
        %2564 = vmatpush1.xpose.msra.mxu0 0.0
        %2565 = vmatprep.subr.mxu0 0.0
        %2566 = vmatpush1.xpose.msra.mxu0 0.0
        %2567 = vmatprep.subr.mxu0 0.0
        %2568 = vmatpush1.xpose.msra.mxu0 0.0
        %2569 = vmatprep.mubr.f32.mxu0 0.0
        %v2570 = vand.u32 %v2235, 4294901760
        %v2571 = vsub.f32 %v2235, %v2570
        %v2572 = vand.u32 %v2571, 4294901760
        %2573 = vmatmul.mubr.f32.gmra.mrb[0].mxu0 %v2572
        %v2574 = vpop.f32.mrb[0].mxu0
        %v2575 = vadd.f32 %v2493, %v2574
        %v2576 = vpop.f32.mrb[0].mxu0
        %2577 = vmatprep.mubr.f32.mxu0 0.0
        %v2578 = vand.u32 %v2238, 4294901760
        %v2579 = vsub.f32 %v2238, %v2578
        %v2580 = vand.u32 %v2579, 4294901760
        %2581 = vmatmul.mubr.f32.gmra.mrb[0].mxu0 %v2580
        %v2582 = vpop.f32.mrb[0].mxu0
        %v2583 = vadd.f32 %v2500, %v2582
        %v2584 = vpop.f32.mrb[0].mxu0
        %2585 = vdwg.mxu0
        %2586 = vmatprep.subr.mxu0 0.0
        %v2587 = vand.u32 %v2241, 4294901760
        %v2588 = vsub.f32 %v2241, %v2587
        %v2589 = vand.u32 %v2588, 4294901760
        %2590 = vmatpush1.xpose.msra.mxu0 %v2589
        %2591 = vmatprep.subr.mxu0 0.0
        %v2592 = vand.u32 %v2244, 4294901760
        %v2593 = vsub.f32 %v2244, %v2592
        %v2594 = vand.u32 %v2593, 4294901760
        %2595 = vmatpush1.xpose.msra.mxu0 %v2594
        %2596 = vmatprep.subr.mxu0 0.0
        %2597 = vmatpush1.xpose.msra.mxu0 0.0
        %2598 = vmatprep.subr.mxu0 0.0
        %2599 = vmatpush1.xpose.msra.mxu0 0.0
        %2600 = vmatprep.subr.mxu0 0.0
        %2601 = vmatpush1.xpose.msra.mxu0 0.0
        %2602 = vmatprep.subr.mxu0 0.0
        %2603 = vmatpush1.xpose.msra.mxu0 0.0
        %2604 = vmatprep.subr.mxu0 0.0
        %2605 = vmatpush1.xpose.msra.mxu0 0.0
        %2606 = vmatprep.subr.mxu0 0.0
        %2607 = vmatpush1.xpose.msra.mxu0 0.0
        %2608 = vmatprep.subr.mxu0 0.0
        %2609 = vmatpush1.xpose.msra.mxu0 0.0
        %2610 = vmatprep.subr.mxu0 0.0
        %2611 = vmatpush1.xpose.msra.mxu0 0.0
        %2612 = vmatprep.subr.mxu0 0.0
        %2613 = vmatpush1.xpose.msra.mxu0 0.0
        %2614 = vmatprep.subr.mxu0 0.0
        %2615 = vmatpush1.xpose.msra.mxu0 0.0
        %2616 = vmatprep.subr.mxu0 0.0
        %2617 = vmatpush1.xpose.msra.mxu0 0.0
        %2618 = vmatprep.subr.mxu0 0.0
        %2619 = vmatpush1.xpose.msra.mxu0 0.0
        %2620 = vmatprep.subr.mxu0 0.0
        %2621 = vmatpush1.xpose.msra.mxu0 0.0
        %2622 = vmatprep.subr.mxu0 0.0
        %2623 = vmatpush1.xpose.msra.mxu0 0.0
        %2624 = vmatprep.subr.mxu0 0.0
        %2625 = vmatpush1.xpose.msra.mxu0 0.0
        %2626 = vmatprep.subr.mxu0 0.0
        %2627 = vmatpush1.xpose.msra.mxu0 0.0
        %2628 = vmatprep.subr.mxu0 0.0
        %2629 = vmatpush1.xpose.msra.mxu0 0.0
        %2630 = vmatprep.subr.mxu0 0.0
        %2631 = vmatpush1.xpose.msra.mxu0 0.0
        %2632 = vmatprep.subr.mxu0 0.0
        %2633 = vmatpush1.xpose.msra.mxu0 0.0
        %2634 = vmatprep.subr.mxu0 0.0
        %2635 = vmatpush1.xpose.msra.mxu0 0.0
        %2636 = vmatprep.subr.mxu0 0.0
        %2637 = vmatpush1.xpose.msra.mxu0 0.0
        %2638 = vmatprep.subr.mxu0 0.0
        %2639 = vmatpush1.xpose.msra.mxu0 0.0
        %2640 = vmatprep.subr.mxu0 0.0
        %2641 = vmatpush1.xpose.msra.mxu0 0.0
        %2642 = vmatprep.subr.mxu0 0.0
        %2643 = vmatpush1.xpose.msra.mxu0 0.0
        %2644 = vmatprep.subr.mxu0 0.0
        %2645 = vmatpush1.xpose.msra.mxu0 0.0
        %2646 = vmatprep.subr.mxu0 0.0
        %2647 = vmatpush1.xpose.msra.mxu0 0.0
        %2648 = vmatprep.subr.mxu0 0.0
        %2649 = vmatpush1.xpose.msra.mxu0 0.0
        %2650 = vmatprep.subr.mxu0 0.0
        %2651 = vmatpush1.xpose.msra.mxu0 0.0
        %2652 = vmatprep.subr.mxu0 0.0
        %2653 = vmatpush1.xpose.msra.mxu0 0.0
        %2654 = vmatprep.subr.mxu0 0.0
        %2655 = vmatpush1.xpose.msra.mxu0 0.0
        %2656 = vmatprep.mubr.f32.mxu0 0.0
        %v2657 = vand.u32 %v2235, 4294901760
        %2658 = vmatmul.mubr.f32.gmra.mrb[0].mxu0 %v2657
        %v2659 = vpop.f32.mrb[0].mxu0
        %v2660 = vadd.f32 %v2575, %v2659
        %v2661 = vpop.f32.mrb[0].mxu0
        %2662 = vmatprep.mubr.f32.mxu0 0.0
        %v2663 = vand.u32 %v2238, 4294901760
        %2664 = vmatmul.mubr.f32.gmra.mrb[0].mxu0 %v2663
        %v2665 = vpop.f32.mrb[0].mxu0
        %v2666 = vadd.f32 %v2583, %v2665
        %v2667 = vpop.f32.mrb[0].mxu0
        %2668 = vdwg.mxu0
        %2669 = vmatprep.subr.mxu0 0.0
        %v2670 = vand.u32 %v2241, 4294901760
        %2671 = vmatpush1.xpose.msra.mxu0 %v2670
        %2672 = vmatprep.subr.mxu0 0.0
        %v2673 = vand.u32 %v2244, 4294901760
        %2674 = vmatpush1.xpose.msra.mxu0 %v2673
        %2675 = vmatprep.subr.mxu0 0.0
        %2676 = vmatpush1.xpose.msra.mxu0 0.0
        %2677 = vmatprep.subr.mxu0 0.0
        %2678 = vmatpush1.xpose.msra.mxu0 0.0
        %2679 = vmatprep.subr.mxu0 0.0
        %2680 = vmatpush1.xpose.msra.mxu0 0.0
        %2681 = vmatprep.subr.mxu0 0.0
        %2682 = vmatpush1.xpose.msra.mxu0 0.0
        %2683 = vmatprep.subr.mxu0 0.0
        %2684 = vmatpush1.xpose.msra.mxu0 0.0
        %2685 = vmatprep.subr.mxu0 0.0
        %2686 = vmatpush1.xpose.msra.mxu0 0.0
        %2687 = vmatprep.subr.mxu0 0.0
        %2688 = vmatpush1.xpose.msra.mxu0 0.0
        %2689 = vmatprep.subr.mxu0 0.0
        %2690 = vmatpush1.xpose.msra.mxu0 0.0
        %2691 = vmatprep.subr.mxu0 0.0
        %2692 = vmatpush1.xpose.msra.mxu0 0.0
        %2693 = vmatprep.subr.mxu0 0.0
        %2694 = vmatpush1.xpose.msra.mxu0 0.0
        %2695 = vmatprep.subr.mxu0 0.0
        %2696 = vmatpush1.xpose.msra.mxu0 0.0
        %2697 = vmatprep.subr.mxu0 0.0
        %2698 = vmatpush1.xpose.msra.mxu0 0.0
        %2699 = vmatprep.subr.mxu0 0.0
        %2700 = vmatpush1.xpose.msra.mxu0 0.0
        %2701 = vmatprep.subr.mxu0 0.0
        %2702 = vmatpush1.xpose.msra.mxu0 0.0
        %2703 = vmatprep.subr.mxu0 0.0
        %2704 = vmatpush1.xpose.msra.mxu0 0.0
        %2705 = vmatprep.subr.mxu0 0.0
        %2706 = vmatpush1.xpose.msra.mxu0 0.0
        %2707 = vmatprep.subr.mxu0 0.0
        %2708 = vmatpush1.xpose.msra.mxu0 0.0
        %2709 = vmatprep.subr.mxu0 0.0
        %2710 = vmatpush1.xpose.msra.mxu0 0.0
        %2711 = vmatprep.subr.mxu0 0.0
        %2712 = vmatpush1.xpose.msra.mxu0 0.0
        %2713 = vmatprep.subr.mxu0 0.0
        %2714 = vmatpush1.xpose.msra.mxu0 0.0
        %2715 = vmatprep.subr.mxu0 0.0
        %2716 = vmatpush1.xpose.msra.mxu0 0.0
        %2717 = vmatprep.subr.mxu0 0.0
        %2718 = vmatpush1.xpose.msra.mxu0 0.0
        %2719 = vmatprep.subr.mxu0 0.0
        %2720 = vmatpush1.xpose.msra.mxu0 0.0
        %2721 = vmatprep.subr.mxu0 0.0
        %2722 = vmatpush1.xpose.msra.mxu0 0.0
        %2723 = vmatprep.subr.mxu0 0.0
        %2724 = vmatpush1.xpose.msra.mxu0 0.0
        %2725 = vmatprep.subr.mxu0 0.0
        %2726 = vmatpush1.xpose.msra.mxu0 0.0
        %2727 = vmatprep.subr.mxu0 0.0
        %2728 = vmatpush1.xpose.msra.mxu0 0.0
        %2729 = vmatprep.subr.mxu0 0.0
        %2730 = vmatpush1.xpose.msra.mxu0 0.0
        %2731 = vmatprep.subr.mxu0 0.0
        %2732 = vmatpush1.xpose.msra.mxu0 0.0
        %2733 = vmatprep.subr.mxu0 0.0
        %2734 = vmatpush1.xpose.msra.mxu0 0.0
        %2735 = vmatprep.mubr.f32.mxu0 0.0
        %v2736 = vand.u32 %v2235, 4294901760
        %2737 = vmatmul.mubr.f32.gmra.mrb[0].mxu0 %v2736
        %v2738 = vpop.f32.mrb[0].mxu0
        %v2739 = vadd.f32 %v2660, %v2738
        %v2740 = vpop.f32.mrb[0].mxu0
        %2741 = vmatprep.mubr.f32.mxu0 0.0
        %v2742 = vand.u32 %v2238, 4294901760
        %2743 = vmatmul.mubr.f32.gmra.mrb[0].mxu0 %v2742
        %v2744 = vpop.f32.mrb[0].mxu0
        %v2745 = vadd.f32 %v2666, %v2744
        %v2746 = vpop.f32.mrb[0].mxu0
        %2747 = vdwg.mxu0
        %v2748 = vsel %vm2195, %v2739, -inf
        %2749 = vmax.xlane.f32.xlu0 %v2748
        %v2750 = vpop.xlane.xlu0 %2749
        %v2751 = vsel %vm2195, %v2745, -inf
        %2752 = vmax.xlane.f32.xlu0 %v2751
        %v2753 = vpop.xlane.xlu0 %2752
        %v2754 = vsub.f32 %v2739, %v2750
        %v2755 = vsub.f32 %v2745, %v2753
        %v2756 = vmul.f32 %v2754, 1.442695
        %v2757 = vpow.pop %v2756
        %v2758 = vmul.f32 %v2755, 1.442695
        %v2759 = vpow.pop %v2758
        %v2760 = vsel %vm2195, %v2757, 0.0
        %2761 = vadd.xlane.f32.xlu0 %v2760
        %v2762 = vpop.xlane.xlu0 %2761
        %v2763 = vsel %vm2195, %v2759, 0.0
        %2764 = vadd.xlane.f32.xlu0 %v2763
        %v2765 = vpop.xlane.xlu0 %2764
        %v2766 = vrcp.pop %v2762
        %v2767 = vrcp.pop %v2765
        %v2768 = vmul.f32 %v2762, %v2766
        %v2769 = vmul.f32 %v2765, %v2767
        %v2770 = vsub.f32 2.0, %v2768
        %v2771 = vsub.f32 2.0, %v2769
        %v2772 = vmul.f32 %v2766, %v2770
        %v2773 = vmul.f32 %v2767, %v2771
        %v2775 = vsel %vm2195, %v2757, 0
        %v2778 = vsel %vm2195, %v2759, 0
        %2780 = vmatprep.subr.mxu0 0.0
        %v2781 = vand.u32 %v2160, 4294901760
        %2782 = vmatpush1.msra.mxu0 %v2781
        %2783 = vmatprep.subr.mxu0 0.0
        %v2784 = vand.u32 %v2166, 4294901760
        %2785 = vmatpush1.msra.mxu0 %v2784
        %2786 = vmatprep.subr.mxu0 0.0
        %2787 = vmatpush1.msra.mxu0 0.0
        %2788 = vmatprep.subr.mxu0 0.0
        %2789 = vmatpush1.msra.mxu0 0.0
        %2790 = vmatprep.subr.mxu0 0.0
        %2791 = vmatpush1.msra.mxu0 0.0
        %2792 = vmatprep.subr.mxu0 0.0
        %2793 = vmatpush1.msra.mxu0 0.0
        %2794 = vmatprep.subr.mxu0 0.0
        %2795 = vmatpush1.msra.mxu0 0.0
        %2796 = vmatprep.subr.mxu0 0.0
        %2797 = vmatpush1.msra.mxu0 0.0
        %2798 = vmatprep.subr.mxu0 0.0
        %2799 = vmatpush1.msra.mxu0 0.0
        %2800 = vmatprep.subr.mxu0 0.0
        %2801 = vmatpush1.msra.mxu0 0.0
        %2802 = vmatprep.subr.mxu0 0.0
        %2803 = vmatpush1.msra.mxu0 0.0
        %2804 = vmatprep.subr.mxu0 0.0
        %2805 = vmatpush1.msra.mxu0 0.0
        %2806 = vmatprep.subr.mxu0 0.0
        %2807 = vmatpush1.msra.mxu0 0.0
        %2808 = vmatprep.subr.mxu0 0.0
        %2809 = vmatpush1.msra.mxu0 0.0
        %2810 = vmatprep.subr.mxu0 0.0
        %2811 = vmatpush1.msra.mxu0 0.0
        %2812 = vmatprep.subr.mxu0 0.0
        %2813 = vmatpush1.msra.mxu0 0.0
        %2814 = vmatprep.subr.mxu0 0.0
        %2815 = vmatpush1.msra.mxu0 0.0
        %2816 = vmatprep.subr.mxu0 0.0
        %2817 = vmatpush1.msra.mxu0 0.0
        %2818 = vmatprep.subr.mxu0 0.0
        %2819 = vmatpush1.msra.mxu0 0.0
        %2820 = vmatprep.subr.mxu0 0.0
        %2821 = vmatpush1.msra.mxu0 0.0
        %2822 = vmatprep.subr.mxu0 0.0
        %2823 = vmatpush1.msra.mxu0 0.0
        %2824 = vmatprep.subr.mxu0 0.0
        %2825 = vmatpush1.msra.mxu0 0.0
        %2826 = vmatprep.subr.mxu0 0.0
        %2827 = vmatpush1.msra.mxu0 0.0
        %2828 = vmatprep.subr.mxu0 0.0
        %2829 = vmatpush1.msra.mxu0 0.0
        %2830 = vmatprep.subr.mxu0 0.0
        %2831 = vmatpush1.msra.mxu0 0.0
        %2832 = vmatprep.subr.mxu0 0.0
        %2833 = vmatpush1.msra.mxu0 0.0
        %2834 = vmatprep.subr.mxu0 0.0
        %2835 = vmatpush1.msra.mxu0 0.0
        %2836 = vmatprep.subr.mxu0 0.0
        %2837 = vmatpush1.msra.mxu0 0.0
        %2838 = vmatprep.subr.mxu0 0.0
        %2839 = vmatpush1.msra.mxu0 0.0
        %2840 = vmatprep.subr.mxu0 0.0
        %2841 = vmatpush1.msra.mxu0 0.0
        %2842 = vmatprep.subr.mxu0 0.0
        %2843 = vmatpush1.msra.mxu0 0.0
        %2844 = vmatprep.subr.mxu0 0.0
        %2845 = vmatpush1.msra.mxu0 0.0
        %2846 = vmatprep.mubr.f32.mxu0 0.0
        %v2847 = vand.u32 %v2775, 4294901760
        %v2848 = vsub.f32 %v2775, %v2847
        %v2849 = vand.u32 %v2848, 4294901760
        %v2850 = vsub.f32 %v2848, %v2849
        %v2851 = vand.u32 %v2850, 4294901760
        %2852 = vmatmul.mubr.f32.gmra.mrb[0].mxu0 %v2851
        %v2853 = vpop.f32.mrb[0].mxu0
        %v2854 = vadd.f32 0.0, %v2853
        %v2855 = vpop.f32.mrb[0].mxu0
        %2856 = vmatprep.mubr.f32.mxu0 0.0
        %v2857 = vand.u32 %v2778, 4294901760
        %v2858 = vsub.f32 %v2778, %v2857
        %v2859 = vand.u32 %v2858, 4294901760
        %v2860 = vsub.f32 %v2858, %v2859
        %v2861 = vand.u32 %v2860, 4294901760
        %2862 = vmatmul.mubr.f32.gmra.mrb[0].mxu0 %v2861
        %v2863 = vpop.f32.mrb[0].mxu0
        %v2864 = vadd.f32 0.0, %v2863
        %v2865 = vpop.f32.mrb[0].mxu0
        %2866 = vdwg.mxu0
        %2867 = vmatprep.subr.mxu0 0.0
        %v2868 = vand.u32 %v2160, 4294901760
        %v2869 = vsub.f32 %v2160, %v2868
        %v2870 = vand.u32 %v2869, 4294901760
        %v2871 = vsub.f32 %v2869, %v2870
        %v2872 = vand.u32 %v2871, 4294901760
        %2873 = vmatpush1.msra.mxu0 %v2872
        %2874 = vmatprep.subr.mxu0 0.0
        %v2875 = vand.u32 %v2166, 4294901760
        %v2876 = vsub.f32 %v2166, %v2875
        %v2877 = vand.u32 %v2876, 4294901760
        %v2878 = vsub.f32 %v2876, %v2877
        %v2879 = vand.u32 %v2878, 4294901760
        %2880 = vmatpush1.msra.mxu0 %v2879
        %2881 = vmatprep.subr.mxu0 0.0
        %2882 = vmatpush1.msra.mxu0 0.0
        %2883 = vmatprep.subr.mxu0 0.0
        %2884 = vmatpush1.msra.mxu0 0.0
        %2885 = vmatprep.subr.mxu0 0.0
        %2886 = vmatpush1.msra.mxu0 0.0
        %2887 = vmatprep.subr.mxu0 0.0
        %2888 = vmatpush1.msra.mxu0 0.0
        %2889 = vmatprep.subr.mxu0 0.0
        %2890 = vmatpush1.msra.mxu0 0.0
        %2891 = vmatprep.subr.mxu0 0.0
        %2892 = vmatpush1.msra.mxu0 0.0
        %2893 = vmatprep.subr.mxu0 0.0
        %2894 = vmatpush1.msra.mxu0 0.0
        %2895 = vmatprep.subr.mxu0 0.0
        %2896 = vmatpush1.msra.mxu0 0.0
        %2897 = vmatprep.subr.mxu0 0.0
        %2898 = vmatpush1.msra.mxu0 0.0
        %2899 = vmatprep.subr.mxu0 0.0
        %2900 = vmatpush1.msra.mxu0 0.0
        %2901 = vmatprep.subr.mxu0 0.0
        %2902 = vmatpush1.msra.mxu0 0.0
        %2903 = vmatprep.subr.mxu0 0.0
        %2904 = vmatpush1.msra.mxu0 0.0
        %2905 = vmatprep.subr.mxu0 0.0
        %2906 = vmatpush1.msra.mxu0 0.0
        %2907 = vmatprep.subr.mxu0 0.0
        %2908 = vmatpush1.msra.mxu0 0.0
        %2909 = vmatprep.subr.mxu0 0.0
        %2910 = vmatpush1.msra.mxu0 0.0
        %2911 = vmatprep.subr.mxu0 0.0
        %2912 = vmatpush1.msra.mxu0 0.0
        %2913 = vmatprep.subr.mxu0 0.0
        %2914 = vmatpush1.msra.mxu0 0.0
        %2915 = vmatprep.subr.mxu0 0.0
        %2916 = vmatpush1.msra.mxu0 0.0
        %2917 = vmatprep.subr.mxu0 0.0
        %2918 = vmatpush1.msra.mxu0 0.0
        %2919 = vmatprep.subr.mxu0 0.0
        %2920 = vmatpush1.msra.mxu0 0.0
        %2921 = vmatprep.subr.mxu0 0.0
        %2922 = vmatpush1.msra.mxu0 0.0
        %2923 = vmatprep.subr.mxu0 0.0
        %2924 = vmatpush1.msra.mxu0 0.0
        %2925 = vmatprep.subr.mxu0 0.0
        %2926 = vmatpush1.msra.mxu0 0.0
        %2927 = vmatprep.subr.mxu0 0.0
        %2928 = vmatpush1.msra.mxu0 0.0
        %2929 = vmatprep.subr.mxu0 0.0
        %2930 = vmatpush1.msra.mxu0 0.0
        %2931 = vmatprep.subr.mxu0 0.0
        %2932 = vmatpush1.msra.mxu0 0.0
        %2933 = vmatprep.subr.mxu0 0.0
        %2934 = vmatpush1.msra.mxu0 0.0
        %2935 = vmatprep.subr.mxu0 0.0
        %2936 = vmatpush1.msra.mxu0 0.0
        %2937 = vmatprep.subr.mxu0 0.0
        %2938 = vmatpush1.msra.mxu0 0.0
        %2939 = vmatprep.subr.mxu0 0.0
        %2940 = vmatpush1.msra.mxu0 0.0
        %2941 = vmatprep.mubr.f32.mxu0 0.0
        %v2942 = vand.u32 %v2775, 4294901760
        %2943 = vmatmul.mubr.f32.gmra.mrb[0].mxu0 %v2942
        %v2944 = vpop.f32.mrb[0].mxu0
        %v2945 = vadd.f32 %v2854, %v2944
        %v2946 = vpop.f32.mrb[0].mxu0
        %2947 = vmatprep.mubr.f32.mxu0 0.0
        %v2948 = vand.u32 %v2778, 4294901760
        %2949 = vmatmul.mubr.f32.gmra.mrb[0].mxu0 %v2948
        %v2950 = vpop.f32.mrb[0].mxu0
        %v2951 = vadd.f32 %v2864, %v2950
        %v2952 = vpop.f32.mrb[0].mxu0
        %2953 = vdwg.mxu0
        %2954 = vmatprep.subr.mxu0 0.0
        %v2955 = vand.u32 %v2160, 4294901760
        %v2956 = vsub.f32 %v2160, %v2955
        %2957 = vmatpush1.msra.mxu0 %v2956
        %2958 = vmatprep.subr.mxu0 0.0
        %v2959 = vand.u32 %v2166, 4294901760
        %v2960 = vsub.f32 %v2166, %v2959
        %2961 = vmatpush1.msra.mxu0 %v2960
        %2962 = vmatprep.subr.mxu0 0.0
        %2963 = vmatpush1.msra.mxu0 0.0
        %2964 = vmatprep.subr.mxu0 0.0
        %2965 = vmatpush1.msra.mxu0 0.0
        %2966 = vmatprep.subr.mxu0 0.0
        %2967 = vmatpush1.msra.mxu0 0.0
        %2968 = vmatprep.subr.mxu0 0.0
        %2969 = vmatpush1.msra.mxu0 0.0
        %2970 = vmatprep.subr.mxu0 0.0
        %2971 = vmatpush1.msra.mxu0 0.0
        %2972 = vmatprep.subr.mxu0 0.0
        %2973 = vmatpush1.msra.mxu0 0.0
        %2974 = vmatprep.subr.mxu0 0.0
        %2975 = vmatpush1.msra.mxu0 0.0
        %2976 = vmatprep.subr.mxu0 0.0
        %2977 = vmatpush1.msra.mxu0 0.0
        %2978 = vmatprep.subr.mxu0 0.0
        %2979 = vmatpush1.msra.mxu0 0.0
        %2980 = vmatprep.subr.mxu0 0.0
        %2981 = vmatpush1.msra.mxu0 0.0
        %2982 = vmatprep.subr.mxu0 0.0
        %2983 = vmatpush1.msra.mxu0 0.0
        %2984 = vmatprep.subr.mxu0 0.0
        %2985 = vmatpush1.msra.mxu0 0.0
        %2986 = vmatprep.subr.mxu0 0.0
        %2987 = vmatpush1.msra.mxu0 0.0
        %2988 = vmatprep.subr.mxu0 0.0
        %2989 = vmatpush1.msra.mxu0 0.0
        %2990 = vmatprep.subr.mxu0 0.0
        %2991 = vmatpush1.msra.mxu0 0.0
        %2992 = vmatprep.subr.mxu0 0.0
        %2993 = vmatpush1.msra.mxu0 0.0
        %2994 = vmatprep.subr.mxu0 0.0
        %2995 = vmatpush1.msra.mxu0 0.0
        %2996 = vmatprep.subr.mxu0 0.0
        %2997 = vmatpush1.msra.mxu0 0.0
        %2998 = vmatprep.subr.mxu0 0.0
        %2999 = vmatpush1.msra.mxu0 0.0
        %3000 = vmatprep.subr.mxu0 0.0
        %3001 = vmatpush1.msra.mxu0 0.0
        %3002 = vmatprep.subr.mxu0 0.0
        %3003 = vmatpush1.msra.mxu0 0.0
        %3004 = vmatprep.subr.mxu0 0.0
        %3005 = vmatpush1.msra.mxu0 0.0
        %3006 = vmatprep.subr.mxu0 0.0
        %3007 = vmatpush1.msra.mxu0 0.0
        %3008 = vmatprep.subr.mxu0 0.0
        %3009 = vmatpush1.msra.mxu0 0.0
        %3010 = vmatprep.subr.mxu0 0.0
        %3011 = vmatpush1.msra.mxu0 0.0
        %3012 = vmatprep.subr.mxu0 0.0
        %3013 = vmatpush1.msra.mxu0 0.0
        %3014 = vmatprep.subr.mxu0 0.0
        %3015 = vmatpush1.msra.mxu0 0.0
        %3016 = vmatprep.subr.mxu0 0.0
        %3017 = vmatpush1.msra.mxu0 0.0
        %3018 = vmatprep.subr.mxu0 0.0
        %3019 = vmatpush1.msra.mxu0 0.0
        %3020 = vmatprep.subr.mxu0 0.0
        %3021 = vmatpush1.msra.mxu0 0.0
        %3022 = vmatprep.mubr.f32.mxu0 0.0
        %v3023 = vand.u32 %v2775, 4294901760
        %v3024 = vsub.f32 %v2775, %v3023
        %3025 = vmatmul.mubr.f32.gmra.mrb[0].mxu0 %v3024
        %v3026 = vpop.f32.mrb[0].mxu0
        %v3027 = vadd.f32 %v2945, %v3026
        %v3028 = vpop.f32.mrb[0].mxu0
        %3029 = vmatprep.mubr.f32.mxu0 0.0
        %v3030 = vand.u32 %v2778, 4294901760
        %v3031 = vsub.f32 %v2778, %v3030
        %3032 = vmatmul.mubr.f32.gmra.mrb[0].mxu0 %v3031
        %v3033 = vpop.f32.mrb[0].mxu0
        %v3034 = vadd.f32 %v2951, %v3033
        %v3035 = vpop.f32.mrb[0].mxu0
        %3036 = vdwg.mxu0
        %3037 = vmatprep.subr.mxu0 0.0
        %v3038 = vand.u32 %v2160, 4294901760
        %3039 = vmatpush1.msra.mxu0 %v3038
        %3040 = vmatprep.subr.mxu0 0.0
        %v3041 = vand.u32 %v2166, 4294901760
        %3042 = vmatpush1.msra.mxu0 %v3041
        %3043 = vmatprep.subr.mxu0 0.0
        %3044 = vmatpush1.msra.mxu0 0.0
        %3045 = vmatprep.subr.mxu0 0.0
        %3046 = vmatpush1.msra.mxu0 0.0
        %3047 = vmatprep.subr.mxu0 0.0
        %3048 = vmatpush1.msra.mxu0 0.0
        %3049 = vmatprep.subr.mxu0 0.0
        %3050 = vmatpush1.msra.mxu0 0.0
        %3051 = vmatprep.subr.mxu0 0.0
        %3052 = vmatpush1.msra.mxu0 0.0
        %3053 = vmatprep.subr.mxu0 0.0
        %3054 = vmatpush1.msra.mxu0 0.0
        %3055 = vmatprep.subr.mxu0 0.0
        %3056 = vmatpush1.msra.mxu0 0.0
        %3057 = vmatprep.subr.mxu0 0.0
        %3058 = vmatpush1.msra.mxu0 0.0
        %3059 = vmatprep.subr.mxu0 0.0
        %3060 = vmatpush1.msra.mxu0 0.0
        %3061 = vmatprep.subr.mxu0 0.0
        %3062 = vmatpush1.msra.mxu0 0.0
        %3063 = vmatprep.subr.mxu0 0.0
        %3064 = vmatpush1.msra.mxu0 0.0
        %3065 = vmatprep.subr.mxu0 0.0
        %3066 = vmatpush1.msra.mxu0 0.0
        %3067 = vmatprep.subr.mxu0 0.0
        %3068 = vmatpush1.msra.mxu0 0.0
        %3069 = vmatprep.subr.mxu0 0.0
        %3070 = vmatpush1.msra.mxu0 0.0
        %3071 = vmatprep.subr.mxu0 0.0
        %3072 = vmatpush1.msra.mxu0 0.0
        %3073 = vmatprep.subr.mxu0 0.0
        %3074 = vmatpush1.msra.mxu0 0.0
        %3075 = vmatprep.subr.mxu0 0.0
        %3076 = vmatpush1.msra.mxu0 0.0
        %3077 = vmatprep.subr.mxu0 0.0
        %3078 = vmatpush1.msra.mxu0 0.0
        %3079 = vmatprep.subr.mxu0 0.0
        %3080 = vmatpush1.msra.mxu0 0.0
        %3081 = vmatprep.subr.mxu0 0.0
        %3082 = vmatpush1.msra.mxu0 0.0
        %3083 = vmatprep.subr.mxu0 0.0
        %3084 = vmatpush1.msra.mxu0 0.0
        %3085 = vmatprep.subr.mxu0 0.0
        %3086 = vmatpush1.msra.mxu0 0.0
        %3087 = vmatprep.subr.mxu0 0.0
        %3088 = vmatpush1.msra.mxu0 0.0
        %3089 = vmatprep.subr.mxu0 0.0
        %3090 = vmatpush1.msra.mxu0 0.0
        %3091 = vmatprep.subr.mxu0 0.0
        %3092 = vmatpush1.msra.mxu0 0.0
        %3093 = vmatprep.subr.mxu0 0.0
        %3094 = vmatpush1.msra.mxu0 0.0
        %3095 = vmatprep.subr.mxu0 0.0
        %3096 = vmatpush1.msra.mxu0 0.0
        %3097 = vmatprep.subr.mxu0 0.0
        %3098 = vmatpush1.msra.mxu0 0.0
        %3099 = vmatprep.subr.mxu0 0.0
        %3100 = vmatpush1.msra.mxu0 0.0
        %3101 = vmatprep.subr.mxu0 0.0
        %3102 = vmatpush1.msra.mxu0 0.0
        %3103 = vmatprep.mubr.f32.mxu0 0.0
        %v3104 = vand.u32 %v2775, 4294901760
        %v3105 = vsub.f32 %v2775, %v3104
        %v3106 = vand.u32 %v3105, 4294901760
        %3107 = vmatmul.mubr.f32.gmra.mrb[0].mxu0 %v3106
        %v3108 = vpop.f32.mrb[0].mxu0
        %v3109 = vadd.f32 %v3027, %v3108
        %v3110 = vpop.f32.mrb[0].mxu0
        %3111 = vmatprep.mubr.f32.mxu0 0.0
        %v3112 = vand.u32 %v2778, 4294901760
        %v3113 = vsub.f32 %v2778, %v3112
        %v3114 = vand.u32 %v3113, 4294901760
        %3115 = vmatmul.mubr.f32.gmra.mrb[0].mxu0 %v3114
        %v3116 = vpop.f32.mrb[0].mxu0
        %v3117 = vadd.f32 %v3034, %v3116
        %v3118 = vpop.f32.mrb[0].mxu0
        %3119 = vdwg.mxu0
        %3120 = vmatprep.subr.mxu0 0.0
        %v3121 = vand.u32 %v2160, 4294901760
        %v3122 = vsub.f32 %v2160, %v3121
        %v3123 = vand.u32 %v3122, 4294901760
        %3124 = vmatpush1.msra.mxu0 %v3123
        %3125 = vmatprep.subr.mxu0 0.0
        %v3126 = vand.u32 %v2166, 4294901760
        %v3127 = vsub.f32 %v2166, %v3126
        %v3128 = vand.u32 %v3127, 4294901760
        %3129 = vmatpush1.msra.mxu0 %v3128
        %3130 = vmatprep.subr.mxu0 0.0
        %3131 = vmatpush1.msra.mxu0 0.0
        %3132 = vmatprep.subr.mxu0 0.0
        %3133 = vmatpush1.msra.mxu0 0.0
        %3134 = vmatprep.subr.mxu0 0.0
        %3135 = vmatpush1.msra.mxu0 0.0
        %3136 = vmatprep.subr.mxu0 0.0
        %3137 = vmatpush1.msra.mxu0 0.0
        %3138 = vmatprep.subr.mxu0 0.0
        %3139 = vmatpush1.msra.mxu0 0.0
        %3140 = vmatprep.subr.mxu0 0.0
        %3141 = vmatpush1.msra.mxu0 0.0
        %3142 = vmatprep.subr.mxu0 0.0
        %3143 = vmatpush1.msra.mxu0 0.0
        %3144 = vmatprep.subr.mxu0 0.0
        %3145 = vmatpush1.msra.mxu0 0.0
        %3146 = vmatprep.subr.mxu0 0.0
        %3147 = vmatpush1.msra.mxu0 0.0
        %3148 = vmatprep.subr.mxu0 0.0
        %3149 = vmatpush1.msra.mxu0 0.0
        %3150 = vmatprep.subr.mxu0 0.0
        %3151 = vmatpush1.msra.mxu0 0.0
        %3152 = vmatprep.subr.mxu0 0.0
        %3153 = vmatpush1.msra.mxu0 0.0
        %3154 = vmatprep.subr.mxu0 0.0
        %3155 = vmatpush1.msra.mxu0 0.0
        %3156 = vmatprep.subr.mxu0 0.0
        %3157 = vmatpush1.msra.mxu0 0.0
        %3158 = vmatprep.subr.mxu0 0.0
        %3159 = vmatpush1.msra.mxu0 0.0
        %3160 = vmatprep.subr.mxu0 0.0
        %3161 = vmatpush1.msra.mxu0 0.0
        %3162 = vmatprep.subr.mxu0 0.0
        %3163 = vmatpush1.msra.mxu0 0.0
        %3164 = vmatprep.subr.mxu0 0.0
        %3165 = vmatpush1.msra.mxu0 0.0
        %3166 = vmatprep.subr.mxu0 0.0
        %3167 = vmatpush1.msra.mxu0 0.0
        %3168 = vmatprep.subr.mxu0 0.0
        %3169 = vmatpush1.msra.mxu0 0.0
        %3170 = vmatprep.subr.mxu0 0.0
        %3171 = vmatpush1.msra.mxu0 0.0
        %3172 = vmatprep.subr.mxu0 0.0
        %3173 = vmatpush1.msra.mxu0 0.0
        %3174 = vmatprep.subr.mxu0 0.0
        %3175 = vmatpush1.msra.mxu0 0.0
        %3176 = vmatprep.subr.mxu0 0.0
        %3177 = vmatpush1.msra.mxu0 0.0
        %3178 = vmatprep.subr.mxu0 0.0
        %3179 = vmatpush1.msra.mxu0 0.0
        %3180 = vmatprep.subr.mxu0 0.0
        %3181 = vmatpush1.msra.mxu0 0.0
        %3182 = vmatprep.subr.mxu0 0.0
        %3183 = vmatpush1.msra.mxu0 0.0
        %3184 = vmatprep.subr.mxu0 0.0
        %3185 = vmatpush1.msra.mxu0 0.0
        %3186 = vmatprep.subr.mxu0 0.0
        %3187 = vmatpush1.msra.mxu0 0.0
        %3188 = vmatprep.subr.mxu0 0.0
        %3189 = vmatpush1.msra.mxu0 0.0
        %3190 = vmatprep.mubr.f32.mxu0 0.0
        %v3191 = vand.u32 %v2775, 4294901760
        %3192 = vmatmul.mubr.f32.gmra.mrb[0].mxu0 %v3191
        %v3193 = vpop.f32.mrb[0].mxu0
        %v3194 = vadd.f32 %v3109, %v3193
        %v3195 = vpop.f32.mrb[0].mxu0
        %3196 = vmatprep.mubr.f32.mxu0 0.0
        %v3197 = vand.u32 %v2778, 4294901760
        %3198 = vmatmul.mubr.f32.gmra.mrb[0].mxu0 %v3197
        %v3199 = vpop.f32.mrb[0].mxu0
        %v3200 = vadd.f32 %v3117, %v3199
        %v3201 = vpop.f32.mrb[0].mxu0
        %3202 = vdwg.mxu0
        %3203 = vmatprep.subr.mxu0 0.0
        %v3204 = vand.u32 %v2160, 4294901760
        %3205 = vmatpush1.msra.mxu0 %v3204
        %3206 = vmatprep.subr.mxu0 0.0
        %v3207 = vand.u32 %v2166, 4294901760
        %3208 = vmatpush1.msra.mxu0 %v3207
        %3209 = vmatprep.subr.mxu0 0.0
        %3210 = vmatpush1.msra.mxu0 0.0
        %3211 = vmatprep.subr.mxu0 0.0
        %3212 = vmatpush1.msra.mxu0 0.0
        %3213 = vmatprep.subr.mxu0 0.0
        %3214 = vmatpush1.msra.mxu0 0.0
        %3215 = vmatprep.subr.mxu0 0.0
        %3216 = vmatpush1.msra.mxu0 0.0
        %3217 = vmatprep.subr.mxu0 0.0
        %3218 = vmatpush1.msra.mxu0 0.0
        %3219 = vmatprep.subr.mxu0 0.0
        %3220 = vmatpush1.msra.mxu0 0.0
        %3221 = vmatprep.subr.mxu0 0.0
        %3222 = vmatpush1.msra.mxu0 0.0
        %3223 = vmatprep.subr.mxu0 0.0
        %3224 = vmatpush1.msra.mxu0 0.0
        %3225 = vmatprep.subr.mxu0 0.0
        %3226 = vmatpush1.msra.mxu0 0.0
        %3227 = vmatprep.subr.mxu0 0.0
        %3228 = vmatpush1.msra.mxu0 0.0
        %3229 = vmatprep.subr.mxu0 0.0
        %3230 = vmatpush1.msra.mxu0 0.0
        %3231 = vmatprep.subr.mxu0 0.0
        %3232 = vmatpush1.msra.mxu0 0.0
        %3233 = vmatprep.subr.mxu0 0.0
        %3234 = vmatpush1.msra.mxu0 0.0
        %3235 = vmatprep.subr.mxu0 0.0
        %3236 = vmatpush1.msra.mxu0 0.0
        %3237 = vmatprep.subr.mxu0 0.0
        %3238 = vmatpush1.msra.mxu0 0.0
        %3239 = vmatprep.subr.mxu0 0.0
        %3240 = vmatpush1.msra.mxu0 0.0
        %3241 = vmatprep.subr.mxu0 0.0
        %3242 = vmatpush1.msra.mxu0 0.0
        %3243 = vmatprep.subr.mxu0 0.0
        %3244 = vmatpush1.msra.mxu0 0.0
        %3245 = vmatprep.subr.mxu0 0.0
        %3246 = vmatpush1.msra.mxu0 0.0
        %3247 = vmatprep.subr.mxu0 0.0
        %3248 = vmatpush1.msra.mxu0 0.0
        %3249 = vmatprep.subr.mxu0 0.0
        %3250 = vmatpush1.msra.mxu0 0.0
        %3251 = vmatprep.subr.mxu0 0.0
        %3252 = vmatpush1.msra.mxu0 0.0
        %3253 = vmatprep.subr.mxu0 0.0
        %3254 = vmatpush1.msra.mxu0 0.0
        %3255 = vmatprep.subr.mxu0 0.0
        %3256 = vmatpush1.msra.mxu0 0.0
        %3257 = vmatprep.subr.mxu0 0.0
        %3258 = vmatpush1.msra.mxu0 0.0
        %3259 = vmatprep.subr.mxu0 0.0
        %3260 = vmatpush1.msra.mxu0 0.0
        %3261 = vmatprep.subr.mxu0 0.0
        %3262 = vmatpush1.msra.mxu0 0.0
        %3263 = vmatprep.subr.mxu0 0.0
        %3264 = vmatpush1.msra.mxu0 0.0
        %3265 = vmatprep.subr.mxu0 0.0
        %3266 = vmatpush1.msra.mxu0 0.0
        %3267 = vmatprep.subr.mxu0 0.0
        %3268 = vmatpush1.msra.mxu0 0.0
        %3269 = vmatprep.mubr.f32.mxu0 0.0
        %v3270 = vand.u32 %v2775, 4294901760
        %3271 = vmatmul.mubr.f32.gmra.mrb[0].mxu0 %v3270
        %v3272 = vpop.f32.mrb[0].mxu0
        %v3273 = vadd.f32 %v3194, %v3272
        %v3274 = vpop.f32.mrb[0].mxu0
        %3275 = vmatprep.mubr.f32.mxu0 0.0
        %v3276 = vand.u32 %v2778, 4294901760
        %3277 = vmatmul.mubr.f32.gmra.mrb[0].mxu0 %v3276
        %v3278 = vpop.f32.mrb[0].mxu0
        %v3279 = vadd.f32 %v3200, %v3278
        %v3280 = vpop.f32.mrb[0].mxu0
        %3281 = vdwg.mxu0
        %v3282 = vmul.f32 %v3273, %v2772
        %v3283 = vmul.f32 %v3279, %v2773
        %3284 = vrot.lane.b32.xlu0 %v2198, 96
        %v3285 = vpop.permute.xlu0 %3284
        %3286 = vrot.lane.b32.xlu0 %v2199, 96
        %v3287 = vpop.permute.xlu0 %3286
        %3288 = vrot.lane.b32.xlu0 %v2222, 96
        %v3289 = vpop.permute.xlu0 %3288
        %3290 = vrot.lane.b32.xlu0 %v2223, 96
        %v3291 = vpop.permute.xlu0 %3290
        %v3292 = vsel %vm2233, %v3285, 0
        %v3294 = vsel %vm2233, %v3287, 0
        %v3296 = vsel %vm2233, %v3289, 0
        %v3298 = vsel %vm2233, %v3291, 0
        %3300 = vmatprep.subr.mxu0 0.0
        %v3301 = vand.u32 %v3296, 4294901760
        %3302 = vmatpush1.xpose.msra.mxu0 %v3301
        %3303 = vmatprep.subr.mxu0 0.0
        %v3304 = vand.u32 %v3298, 4294901760
        %3305 = vmatpush1.xpose.msra.mxu0 %v3304
        %3306 = vmatprep.subr.mxu0 0.0
        %3307 = vmatpush1.xpose.msra.mxu0 0.0
        %3308 = vmatprep.subr.mxu0 0.0
        %3309 = vmatpush1.xpose.msra.mxu0 0.0
        %3310 = vmatprep.subr.mxu0 0.0
        %3311 = vmatpush1.xpose.msra.mxu0 0.0
        %3312 = vmatprep.subr.mxu0 0.0
        %3313 = vmatpush1.xpose.msra.mxu0 0.0
        %3314 = vmatprep.subr.mxu0 0.0
        %3315 = vmatpush1.xpose.msra.mxu0 0.0
        %3316 = vmatprep.subr.mxu0 0.0
        %3317 = vmatpush1.xpose.msra.mxu0 0.0
        %3318 = vmatprep.subr.mxu0 0.0
        %3319 = vmatpush1.xpose.msra.mxu0 0.0
        %3320 = vmatprep.subr.mxu0 0.0
        %3321 = vmatpush1.xpose.msra.mxu0 0.0
        %3322 = vmatprep.subr.mxu0 0.0
        %3323 = vmatpush1.xpose.msra.mxu0 0.0
        %3324 = vmatprep.subr.mxu0 0.0
        %3325 = vmatpush1.xpose.msra.mxu0 0.0
        %3326 = vmatprep.subr.mxu0 0.0
        %3327 = vmatpush1.xpose.msra.mxu0 0.0
        %3328 = vmatprep.subr.mxu0 0.0
        %3329 = vmatpush1.xpose.msra.mxu0 0.0
        %3330 = vmatprep.subr.mxu0 0.0
        %3331 = vmatpush1.xpose.msra.mxu0 0.0
        %3332 = vmatprep.subr.mxu0 0.0
        %3333 = vmatpush1.xpose.msra.mxu0 0.0
        %3334 = vmatprep.subr.mxu0 0.0
        %3335 = vmatpush1.xpose.msra.mxu0 0.0
        %3336 = vmatprep.subr.mxu0 0.0
        %3337 = vmatpush1.xpose.msra.mxu0 0.0
        %3338 = vmatprep.subr.mxu0 0.0
        %3339 = vmatpush1.xpose.msra.mxu0 0.0
        %3340 = vmatprep.subr.mxu0 0.0
        %3341 = vmatpush1.xpose.msra.mxu0 0.0
        %3342 = vmatprep.subr.mxu0 0.0
        %3343 = vmatpush1.xpose.msra.mxu0 0.0
        %3344 = vmatprep.subr.mxu0 0.0
        %3345 = vmatpush1.xpose.msra.mxu0 0.0
        %3346 = vmatprep.subr.mxu0 0.0
        %3347 = vmatpush1.xpose.msra.mxu0 0.0
        %3348 = vmatprep.subr.mxu0 0.0
        %3349 = vmatpush1.xpose.msra.mxu0 0.0
        %3350 = vmatprep.subr.mxu0 0.0
        %3351 = vmatpush1.xpose.msra.mxu0 0.0
        %3352 = vmatprep.subr.mxu0 0.0
        %3353 = vmatpush1.xpose.msra.mxu0 0.0
        %3354 = vmatprep.subr.mxu0 0.0
        %3355 = vmatpush1.xpose.msra.mxu0 0.0
        %3356 = vmatprep.subr.mxu0 0.0
        %3357 = vmatpush1.xpose.msra.mxu0 0.0
        %3358 = vmatprep.subr.mxu0 0.0
        %3359 = vmatpush1.xpose.msra.mxu0 0.0
        %3360 = vmatprep.subr.mxu0 0.0
        %3361 = vmatpush1.xpose.msra.mxu0 0.0
        %3362 = vmatprep.subr.mxu0 0.0
        %3363 = vmatpush1.xpose.msra.mxu0 0.0
        %3364 = vmatprep.subr.mxu0 0.0
        %3365 = vmatpush1.xpose.msra.mxu0 0.0
        %3366 = vmatprep.mubr.f32.mxu0 0.0
        %v3367 = vand.u32 %v3292, 4294901760
        %v3368 = vsub.f32 %v3292, %v3367
        %v3369 = vand.u32 %v3368, 4294901760
        %v3370 = vsub.f32 %v3368, %v3369
        %v3371 = vand.u32 %v3370, 4294901760
        %3372 = vmatmul.mubr.f32.gmra.mrb[0].mxu0 %v3371
        %v3373 = vpop.f32.mrb[0].mxu0
        %v3374 = vadd.f32 %v2231, %v3373
        %v3375 = vpop.f32.mrb[0].mxu0
        %3376 = vmatprep.mubr.f32.mxu0 0.0
        %v3377 = vand.u32 %v3294, 4294901760
        %v3378 = vsub.f32 %v3294, %v3377
        %v3379 = vand.u32 %v3378, 4294901760
        %v3380 = vsub.f32 %v3378, %v3379
        %v3381 = vand.u32 %v3380, 4294901760
        %3382 = vmatmul.mubr.f32.gmra.mrb[0].mxu0 %v3381
        %v3383 = vpop.f32.mrb[0].mxu0
        %v3384 = vadd.f32 %v2232, %v3383
        %v3385 = vpop.f32.mrb[0].mxu0
        %3386 = vdwg.mxu0
        %3387 = vmatprep.subr.mxu0 0.0
        %v3388 = vand.u32 %v3296, 4294901760
        %v3389 = vsub.f32 %v3296, %v3388
        %v3390 = vand.u32 %v3389, 4294901760
        %v3391 = vsub.f32 %v3389, %v3390
        %v3392 = vand.u32 %v3391, 4294901760
        %3393 = vmatpush1.xpose.msra.mxu0 %v3392
        %3394 = vmatprep.subr.mxu0 0.0
        %v3395 = vand.u32 %v3298, 4294901760
        %v3396 = vsub.f32 %v3298, %v3395
        %v3397 = vand.u32 %v3396, 4294901760
        %v3398 = vsub.f32 %v3396, %v3397
        %v3399 = vand.u32 %v3398, 4294901760
        %3400 = vmatpush1.xpose.msra.mxu0 %v3399
        %3401 = vmatprep.subr.mxu0 0.0
        %3402 = vmatpush1.xpose.msra.mxu0 0.0
        %3403 = vmatprep.subr.mxu0 0.0
        %3404 = vmatpush1.xpose.msra.mxu0 0.0
        %3405 = vmatprep.subr.mxu0 0.0
        %3406 = vmatpush1.xpose.msra.mxu0 0.0
        %3407 = vmatprep.subr.mxu0 0.0
        %3408 = vmatpush1.xpose.msra.mxu0 0.0
        %3409 = vmatprep.subr.mxu0 0.0
        %3410 = vmatpush1.xpose.msra.mxu0 0.0
        %3411 = vmatprep.subr.mxu0 0.0
        %3412 = vmatpush1.xpose.msra.mxu0 0.0
        %3413 = vmatprep.subr.mxu0 0.0
        %3414 = vmatpush1.xpose.msra.mxu0 0.0
        %3415 = vmatprep.subr.mxu0 0.0
        %3416 = vmatpush1.xpose.msra.mxu0 0.0
        %3417 = vmatprep.subr.mxu0 0.0
        %3418 = vmatpush1.xpose.msra.mxu0 0.0
        %3419 = vmatprep.subr.mxu0 0.0
        %3420 = vmatpush1.xpose.msra.mxu0 0.0
        %3421 = vmatprep.subr.mxu0 0.0
        %3422 = vmatpush1.xpose.msra.mxu0 0.0
        %3423 = vmatprep.subr.mxu0 0.0
        %3424 = vmatpush1.xpose.msra.mxu0 0.0
        %3425 = vmatprep.subr.mxu0 0.0
        %3426 = vmatpush1.xpose.msra.mxu0 0.0
        %3427 = vmatprep.subr.mxu0 0.0
        %3428 = vmatpush1.xpose.msra.mxu0 0.0
        %3429 = vmatprep.subr.mxu0 0.0
        %3430 = vmatpush1.xpose.msra.mxu0 0.0
        %3431 = vmatprep.subr.mxu0 0.0
        %3432 = vmatpush1.xpose.msra.mxu0 0.0
        %3433 = vmatprep.subr.mxu0 0.0
        %3434 = vmatpush1.xpose.msra.mxu0 0.0
        %3435 = vmatprep.subr.mxu0 0.0
        %3436 = vmatpush1.xpose.msra.mxu0 0.0
        %3437 = vmatprep.subr.mxu0 0.0
        %3438 = vmatpush1.xpose.msra.mxu0 0.0
        %3439 = vmatprep.subr.mxu0 0.0
        %3440 = vmatpush1.xpose.msra.mxu0 0.0
        %3441 = vmatprep.subr.mxu0 0.0
        %3442 = vmatpush1.xpose.msra.mxu0 0.0
        %3443 = vmatprep.subr.mxu0 0.0
        %3444 = vmatpush1.xpose.msra.mxu0 0.0
        %3445 = vmatprep.subr.mxu0 0.0
        %3446 = vmatpush1.xpose.msra.mxu0 0.0
        %3447 = vmatprep.subr.mxu0 0.0
        %3448 = vmatpush1.xpose.msra.mxu0 0.0
        %3449 = vmatprep.subr.mxu0 0.0
        %3450 = vmatpush1.xpose.msra.mxu0 0.0
        %3451 = vmatprep.subr.mxu0 0.0
        %3452 = vmatpush1.xpose.msra.mxu0 0.0
        %3453 = vmatprep.subr.mxu0 0.0
        %3454 = vmatpush1.xpose.msra.mxu0 0.0
        %3455 = vmatprep.subr.mxu0 0.0
        %3456 = vmatpush1.xpose.msra.mxu0 0.0
        %3457 = vmatprep.subr.mxu0 0.0
        %3458 = vmatpush1.xpose.msra.mxu0 0.0
        %3459 = vmatprep.subr.mxu0 0.0
        %3460 = vmatpush1.xpose.msra.mxu0 0.0
        %3461 = vmatprep.mubr.f32.mxu0 0.0
        %v3462 = vand.u32 %v3292, 4294901760
        %3463 = vmatmul.mubr.f32.gmra.mrb[0].mxu0 %v3462
        %v3464 = vpop.f32.mrb[0].mxu0
        %v3465 = vadd.f32 %v3374, %v3464
        %v3466 = vpop.f32.mrb[0].mxu0
        %3467 = vmatprep.mubr.f32.mxu0 0.0
        %v3468 = vand.u32 %v3294, 4294901760
        %3469 = vmatmul.mubr.f32.gmra.mrb[0].mxu0 %v3468
        %v3470 = vpop.f32.mrb[0].mxu0
        %v3471 = vadd.f32 %v3384, %v3470
        %v3472 = vpop.f32.mrb[0].mxu0
        %3473 = vdwg.mxu0
        %3474 = vmatprep.subr.mxu0 0.0
        %v3475 = vand.u32 %v3296, 4294901760
        %v3476 = vsub.f32 %v3296, %v3475
        %3477 = vmatpush1.xpose.msra.mxu0 %v3476
        %3478 = vmatprep.subr.mxu0 0.0
        %v3479 = vand.u32 %v3298, 4294901760
        %v3480 = vsub.f32 %v3298, %v3479
        %3481 = vmatpush1.xpose.msra.mxu0 %v3480
        %3482 = vmatprep.subr.mxu0 0.0
        %3483 = vmatpush1.xpose.msra.mxu0 0.0
        %3484 = vmatprep.subr.mxu0 0.0
        %3485 = vmatpush1.xpose.msra.mxu0 0.0
        %3486 = vmatprep.subr.mxu0 0.0
        %3487 = vmatpush1.xpose.msra.mxu0 0.0
        %3488 = vmatprep.subr.mxu0 0.0
        %3489 = vmatpush1.xpose.msra.mxu0 0.0
        %3490 = vmatprep.subr.mxu0 0.0
        %3491 = vmatpush1.xpose.msra.mxu0 0.0
        %3492 = vmatprep.subr.mxu0 0.0
        %3493 = vmatpush1.xpose.msra.mxu0 0.0
        %3494 = vmatprep.subr.mxu0 0.0
        %3495 = vmatpush1.xpose.msra.mxu0 0.0
        %3496 = vmatprep.subr.mxu0 0.0
        %3497 = vmatpush1.xpose.msra.mxu0 0.0
        %3498 = vmatprep.subr.mxu0 0.0
        %3499 = vmatpush1.xpose.msra.mxu0 0.0
        %3500 = vmatprep.subr.mxu0 0.0
        %3501 = vmatpush1.xpose.msra.mxu0 0.0
        %3502 = vmatprep.subr.mxu0 0.0
        %3503 = vmatpush1.xpose.msra.mxu0 0.0
        %3504 = vmatprep.subr.mxu0 0.0
        %3505 = vmatpush1.xpose.msra.mxu0 0.0
        %3506 = vmatprep.subr.mxu0 0.0
        %3507 = vmatpush1.xpose.msra.mxu0 0.0
        %3508 = vmatprep.subr.mxu0 0.0
        %3509 = vmatpush1.xpose.msra.mxu0 0.0
        %3510 = vmatprep.subr.mxu0 0.0
        %3511 = vmatpush1.xpose.msra.mxu0 0.0
        %3512 = vmatprep.subr.mxu0 0.0
        %3513 = vmatpush1.xpose.msra.mxu0 0.0
        %3514 = vmatprep.subr.mxu0 0.0
        %3515 = vmatpush1.xpose.msra.mxu0 0.0
        %3516 = vmatprep.subr.mxu0 0.0
        %3517 = vmatpush1.xpose.msra.mxu0 0.0
        %3518 = vmatprep.subr.mxu0 0.0
        %3519 = vmatpush1.xpose.msra.mxu0 0.0
        %3520 = vmatprep.subr.mxu0 0.0
        %3521 = vmatpush1.xpose.msra.mxu0 0.0
        %3522 = vmatprep.subr.mxu0 0.0
        %3523 = vmatpush1.xpose.msra.mxu0 0.0
        %3524 = vmatprep.subr.mxu0 0.0
        %3525 = vmatpush1.xpose.msra.mxu0 0.0
        %3526 = vmatprep.subr.mxu0 0.0
        %3527 = vmatpush1.xpose.msra.mxu0 0.0
        %3528 = vmatprep.subr.mxu0 0.0
        %3529 = vmatpush1.xpose.msra.mxu0 0.0
        %3530 = vmatprep.subr.mxu0 0.0
        %3531 = vmatpush1.xpose.msra.mxu0 0.0
        %3532 = vmatprep.subr.mxu0 0.0
        %3533 = vmatpush1.xpose.msra.mxu0 0.0
        %3534 = vmatprep.subr.mxu0 0.0
        %3535 = vmatpush1.xpose.msra.mxu0 0.0
        %3536 = vmatprep.subr.mxu0 0.0
        %3537 = vmatpush1.xpose.msra.mxu0 0.0
        %3538 = vmatprep.subr.mxu0 0.0
        %3539 = vmatpush1.xpose.msra.mxu0 0.0
        %3540 = vmatprep.subr.mxu0 0.0
        %3541 = vmatpush1.xpose.msra.mxu0 0.0
        %3542 = vmatprep.mubr.f32.mxu0 0.0
        %v3543 = vand.u32 %v3292, 4294901760
        %v3544 = vsub.f32 %v3292, %v3543
        %3545 = vmatmul.mubr.f32.gmra.mrb[0].mxu0 %v3544
        %v3546 = vpop.f32.mrb[0].mxu0
        %v3547 = vadd.f32 %v3465, %v3546
        %v3548 = vpop.f32.mrb[0].mxu0
        %3549 = vmatprep.mubr.f32.mxu0 0.0
        %v3550 = vand.u32 %v3294, 4294901760
        %v3551 = vsub.f32 %v3294, %v3550
        %3552 = vmatmul.mubr.f32.gmra.mrb[0].mxu0 %v3551
        %v3553 = vpop.f32.mrb[0].mxu0
        %v3554 = vadd.f32 %v3471, %v3553
        %v3555 = vpop.f32.mrb[0].mxu0
        %3556 = vdwg.mxu0
        %3557 = vmatprep.subr.mxu0 0.0
        %v3558 = vand.u32 %v3296, 4294901760
        %3559 = vmatpush1.xpose.msra.mxu0 %v3558
        %3560 = vmatprep.subr.mxu0 0.0
        %v3561 = vand.u32 %v3298, 4294901760
        %3562 = vmatpush1.xpose.msra.mxu0 %v3561
        %3563 = vmatprep.subr.mxu0 0.0
        %3564 = vmatpush1.xpose.msra.mxu0 0.0
        %3565 = vmatprep.subr.mxu0 0.0
        %3566 = vmatpush1.xpose.msra.mxu0 0.0
        %3567 = vmatprep.subr.mxu0 0.0
        %3568 = vmatpush1.xpose.msra.mxu0 0.0
        %3569 = vmatprep.subr.mxu0 0.0
        %3570 = vmatpush1.xpose.msra.mxu0 0.0
        %3571 = vmatprep.subr.mxu0 0.0
        %3572 = vmatpush1.xpose.msra.mxu0 0.0
        %3573 = vmatprep.subr.mxu0 0.0
        %3574 = vmatpush1.xpose.msra.mxu0 0.0
        %3575 = vmatprep.subr.mxu0 0.0
        %3576 = vmatpush1.xpose.msra.mxu0 0.0
        %3577 = vmatprep.subr.mxu0 0.0
        %3578 = vmatpush1.xpose.msra.mxu0 0.0
        %3579 = vmatprep.subr.mxu0 0.0
        %3580 = vmatpush1.xpose.msra.mxu0 0.0
        %3581 = vmatprep.subr.mxu0 0.0
        %3582 = vmatpush1.xpose.msra.mxu0 0.0
        %3583 = vmatprep.subr.mxu0 0.0
        %3584 = vmatpush1.xpose.msra.mxu0 0.0
        %3585 = vmatprep.subr.mxu0 0.0
        %3586 = vmatpush1.xpose.msra.mxu0 0.0
        %3587 = vmatprep.subr.mxu0 0.0
        %3588 = vmatpush1.xpose.msra.mxu0 0.0
        %3589 = vmatprep.subr.mxu0 0.0
        %3590 = vmatpush1.xpose.msra.mxu0 0.0
        %3591 = vmatprep.subr.mxu0 0.0
        %3592 = vmatpush1.xpose.msra.mxu0 0.0
        %3593 = vmatprep.subr.mxu0 0.0
        %3594 = vmatpush1.xpose.msra.mxu0 0.0
        %3595 = vmatprep.subr.mxu0 0.0
        %3596 = vmatpush1.xpose.msra.mxu0 0.0
        %3597 = vmatprep.subr.mxu0 0.0
        %3598 = vmatpush1.xpose.msra.mxu0 0.0
        %3599 = vmatprep.subr.mxu0 0.0
        %3600 = vmatpush1.xpose.msra.mxu0 0.0
        %3601 = vmatprep.subr.mxu0 0.0
        %3602 = vmatpush1.xpose.msra.mxu0 0.0
        %3603 = vmatprep.subr.mxu0 0.0
        %3604 = vmatpush1.xpose.msra.mxu0 0.0
        %3605 = vmatprep.subr.mxu0 0.0
        %3606 = vmatpush1.xpose.msra.mxu0 0.0
        %3607 = vmatprep.subr.mxu0 0.0
        %3608 = vmatpush1.xpose.msra.mxu0 0.0
        %3609 = vmatprep.subr.mxu0 0.0
        %3610 = vmatpush1.xpose.msra.mxu0 0.0
        %3611 = vmatprep.subr.mxu0 0.0
        %3612 = vmatpush1.xpose.msra.mxu0 0.0
        %3613 = vmatprep.subr.mxu0 0.0
        %3614 = vmatpush1.xpose.msra.mxu0 0.0
        %3615 = vmatprep.subr.mxu0 0.0
        %3616 = vmatpush1.xpose.msra.mxu0 0.0
        %3617 = vmatprep.subr.mxu0 0.0
        %3618 = vmatpush1.xpose.msra.mxu0 0.0
        %3619 = vmatprep.subr.mxu0 0.0
        %3620 = vmatpush1.xpose.msra.mxu0 0.0
        %3621 = vmatprep.subr.mxu0 0.0
        %3622 = vmatpush1.xpose.msra.mxu0 0.0
        %3623 = vmatprep.mubr.f32.mxu0 0.0
        %v3624 = vand.u32 %v3292, 4294901760
        %v3625 = vsub.f32 %v3292, %v3624
        %v3626 = vand.u32 %v3625, 4294901760
        %3627 = vmatmul.mubr.f32.gmra.mrb[0].mxu0 %v3626
        %v3628 = vpop.f32.mrb[0].mxu0
        %v3629 = vadd.f32 %v3547, %v3628
        %v3630 = vpop.f32.mrb[0].mxu0
        %3631 = vmatprep.mubr.f32.mxu0 0.0
        %v3632 = vand.u32 %v3294, 4294901760
        %v3633 = vsub.f32 %v3294, %v3632
        %v3634 = vand.u32 %v3633, 4294901760
        %3635 = vmatmul.mubr.f32.gmra.mrb[0].mxu0 %v3634
        %v3636 = vpop.f32.mrb[0].mxu0
        %v3637 = vadd.f32 %v3554, %v3636
        %v3638 = vpop.f32.mrb[0].mxu0
        %3639 = vdwg.mxu0
        %3640 = vmatprep.subr.mxu0 0.0
        %v3641 = vand.u32 %v3296, 4294901760
        %v3642 = vsub.f32 %v3296, %v3641
        %v3643 = vand.u32 %v3642, 4294901760
        %3644 = vmatpush1.xpose.msra.mxu0 %v3643
        %3645 = vmatprep.subr.mxu0 0.0
        %v3646 = vand.u32 %v3298, 4294901760
        %v3647 = vsub.f32 %v3298, %v3646
        %v3648 = vand.u32 %v3647, 4294901760
        %3649 = vmatpush1.xpose.msra.mxu0 %v3648
        %3650 = vmatprep.subr.mxu0 0.0
        %3651 = vmatpush1.xpose.msra.mxu0 0.0
        %3652 = vmatprep.subr.mxu0 0.0
        %3653 = vmatpush1.xpose.msra.mxu0 0.0
        %3654 = vmatprep.subr.mxu0 0.0
        %3655 = vmatpush1.xpose.msra.mxu0 0.0
        %3656 = vmatprep.subr.mxu0 0.0
        %3657 = vmatpush1.xpose.msra.mxu0 0.0
        %3658 = vmatprep.subr.mxu0 0.0
        %3659 = vmatpush1.xpose.msra.mxu0 0.0
        %3660 = vmatprep.subr.mxu0 0.0
        %3661 = vmatpush1.xpose.msra.mxu0 0.0
        %3662 = vmatprep.subr.mxu0 0.0
        %3663 = vmatpush1.xpose.msra.mxu0 0.0
        %3664 = vmatprep.subr.mxu0 0.0
        %3665 = vmatpush1.xpose.msra.mxu0 0.0
        %3666 = vmatprep.subr.mxu0 0.0
        %3667 = vmatpush1.xpose.msra.mxu0 0.0
        %3668 = vmatprep.subr.mxu0 0.0
        %3669 = vmatpush1.xpose.msra.mxu0 0.0
        %3670 = vmatprep.subr.mxu0 0.0
        %3671 = vmatpush1.xpose.msra.mxu0 0.0
        %3672 = vmatprep.subr.mxu0 0.0
        %3673 = vmatpush1.xpose.msra.mxu0 0.0
        %3674 = vmatprep.subr.mxu0 0.0
        %3675 = vmatpush1.xpose.msra.mxu0 0.0
        %3676 = vmatprep.subr.mxu0 0.0
        %3677 = vmatpush1.xpose.msra.mxu0 0.0
        %3678 = vmatprep.subr.mxu0 0.0
        %3679 = vmatpush1.xpose.msra.mxu0 0.0
        %3680 = vmatprep.subr.mxu0 0.0
        %3681 = vmatpush1.xpose.msra.mxu0 0.0
        %3682 = vmatprep.subr.mxu0 0.0
        %3683 = vmatpush1.xpose.msra.mxu0 0.0
        %3684 = vmatprep.subr.mxu0 0.0
        %3685 = vmatpush1.xpose.msra.mxu0 0.0
        %3686 = vmatprep.subr.mxu0 0.0
        %3687 = vmatpush1.xpose.msra.mxu0 0.0
        %3688 = vmatprep.subr.mxu0 0.0
        %3689 = vmatpush1.xpose.msra.mxu0 0.0
        %3690 = vmatprep.subr.mxu0 0.0
        %3691 = vmatpush1.xpose.msra.mxu0 0.0
        %3692 = vmatprep.subr.mxu0 0.0
        %3693 = vmatpush1.xpose.msra.mxu0 0.0
        %3694 = vmatprep.subr.mxu0 0.0
        %3695 = vmatpush1.xpose.msra.mxu0 0.0
        %3696 = vmatprep.subr.mxu0 0.0
        %3697 = vmatpush1.xpose.msra.mxu0 0.0
        %3698 = vmatprep.subr.mxu0 0.0
        %3699 = vmatpush1.xpose.msra.mxu0 0.0
        %3700 = vmatprep.subr.mxu0 0.0
        %3701 = vmatpush1.xpose.msra.mxu0 0.0
        %3702 = vmatprep.subr.mxu0 0.0
        %3703 = vmatpush1.xpose.msra.mxu0 0.0
        %3704 = vmatprep.subr.mxu0 0.0
        %3705 = vmatpush1.xpose.msra.mxu0 0.0
        %3706 = vmatprep.subr.mxu0 0.0
        %3707 = vmatpush1.xpose.msra.mxu0 0.0
        %3708 = vmatprep.subr.mxu0 0.0
        %3709 = vmatpush1.xpose.msra.mxu0 0.0
        %3710 = vmatprep.mubr.f32.mxu0 0.0
        %v3711 = vand.u32 %v3292, 4294901760
        %3712 = vmatmul.mubr.f32.gmra.mrb[0].mxu0 %v3711
        %v3713 = vpop.f32.mrb[0].mxu0
        %v3714 = vadd.f32 %v3629, %v3713
        %v3715 = vpop.f32.mrb[0].mxu0
        %3716 = vmatprep.mubr.f32.mxu0 0.0
        %v3717 = vand.u32 %v3294, 4294901760
        %3718 = vmatmul.mubr.f32.gmra.mrb[0].mxu0 %v3717
        %v3719 = vpop.f32.mrb[0].mxu0
        %v3720 = vadd.f32 %v3637, %v3719
        %v3721 = vpop.f32.mrb[0].mxu0
        %3722 = vdwg.mxu0
        %3723 = vmatprep.subr.mxu0 0.0
        %v3724 = vand.u32 %v3296, 4294901760
        %3725 = vmatpush1.xpose.msra.mxu0 %v3724
        %3726 = vmatprep.subr.mxu0 0.0
        %v3727 = vand.u32 %v3298, 4294901760
        %3728 = vmatpush1.xpose.msra.mxu0 %v3727
        %3729 = vmatprep.subr.mxu0 0.0
        %3730 = vmatpush1.xpose.msra.mxu0 0.0
        %3731 = vmatprep.subr.mxu0 0.0
        %3732 = vmatpush1.xpose.msra.mxu0 0.0
        %3733 = vmatprep.subr.mxu0 0.0
        %3734 = vmatpush1.xpose.msra.mxu0 0.0
        %3735 = vmatprep.subr.mxu0 0.0
        %3736 = vmatpush1.xpose.msra.mxu0 0.0
        %3737 = vmatprep.subr.mxu0 0.0
        %3738 = vmatpush1.xpose.msra.mxu0 0.0
        %3739 = vmatprep.subr.mxu0 0.0
        %3740 = vmatpush1.xpose.msra.mxu0 0.0
        %3741 = vmatprep.subr.mxu0 0.0
        %3742 = vmatpush1.xpose.msra.mxu0 0.0
        %3743 = vmatprep.subr.mxu0 0.0
        %3744 = vmatpush1.xpose.msra.mxu0 0.0
        %3745 = vmatprep.subr.mxu0 0.0
        %3746 = vmatpush1.xpose.msra.mxu0 0.0
        %3747 = vmatprep.subr.mxu0 0.0
        %3748 = vmatpush1.xpose.msra.mxu0 0.0
        %3749 = vmatprep.subr.mxu0 0.0
        %3750 = vmatpush1.xpose.msra.mxu0 0.0
        %3751 = vmatprep.subr.mxu0 0.0
        %3752 = vmatpush1.xpose.msra.mxu0 0.0
        %3753 = vmatprep.subr.mxu0 0.0
        %3754 = vmatpush1.xpose.msra.mxu0 0.0
        %3755 = vmatprep.subr.mxu0 0.0
        %3756 = vmatpush1.xpose.msra.mxu0 0.0
        %3757 = vmatprep.subr.mxu0 0.0
        %3758 = vmatpush1.xpose.msra.mxu0 0.0
        %3759 = vmatprep.subr.mxu0 0.0
        %3760 = vmatpush1.xpose.msra.mxu0 0.0
        %3761 = vmatprep.subr.mxu0 0.0
        %3762 = vmatpush1.xpose.msra.mxu0 0.0
        %3763 = vmatprep.subr.mxu0 0.0
        %3764 = vmatpush1.xpose.msra.mxu0 0.0
        %3765 = vmatprep.subr.mxu0 0.0
        %3766 = vmatpush1.xpose.msra.mxu0 0.0
        %3767 = vmatprep.subr.mxu0 0.0
        %3768 = vmatpush1.xpose.msra.mxu0 0.0
        %3769 = vmatprep.subr.mxu0 0.0
        %3770 = vmatpush1.xpose.msra.mxu0 0.0
        %3771 = vmatprep.subr.mxu0 0.0
        %3772 = vmatpush1.xpose.msra.mxu0 0.0
        %3773 = vmatprep.subr.mxu0 0.0
        %3774 = vmatpush1.xpose.msra.mxu0 0.0
        %3775 = vmatprep.subr.mxu0 0.0
        %3776 = vmatpush1.xpose.msra.mxu0 0.0
        %3777 = vmatprep.subr.mxu0 0.0
        %3778 = vmatpush1.xpose.msra.mxu0 0.0
        %3779 = vmatprep.subr.mxu0 0.0
        %3780 = vmatpush1.xpose.msra.mxu0 0.0
        %3781 = vmatprep.subr.mxu0 0.0
        %3782 = vmatpush1.xpose.msra.mxu0 0.0
        %3783 = vmatprep.subr.mxu0 0.0
        %3784 = vmatpush1.xpose.msra.mxu0 0.0
        %3785 = vmatprep.subr.mxu0 0.0
        %3786 = vmatpush1.xpose.msra.mxu0 0.0
        %3787 = vmatprep.subr.mxu0 0.0
        %3788 = vmatpush1.xpose.msra.mxu0 0.0
        %3789 = vmatprep.mubr.f32.mxu0 0.0
        %v3790 = vand.u32 %v3292, 4294901760
        %3791 = vmatmul.mubr.f32.gmra.mrb[0].mxu0 %v3790
        %v3792 = vpop.f32.mrb[0].mxu0
        %v3793 = vadd.f32 %v3714, %v3792
        %v3794 = vpop.f32.mrb[0].mxu0
        %3795 = vmatprep.mubr.f32.mxu0 0.0
        %v3796 = vand.u32 %v3294, 4294901760
        %3797 = vmatmul.mubr.f32.gmra.mrb[0].mxu0 %v3796
        %v3798 = vpop.f32.mrb[0].mxu0
        %v3799 = vadd.f32 %v3720, %v3798
        %v3800 = vpop.f32.mrb[0].mxu0
        %3801 = vdwg.mxu0
        %v3802 = vsel %vm2195, %v3793, -inf
        %3803 = vmax.xlane.f32.xlu0 %v3802
        %v3804 = vpop.xlane.xlu0 %3803
        %v3805 = vsel %vm2195, %v3799, -inf
        %3806 = vmax.xlane.f32.xlu0 %v3805
        %v3807 = vpop.xlane.xlu0 %3806
        %v3808 = vsub.f32 %v3793, %v3804
        %v3809 = vsub.f32 %v3799, %v3807
        %v3810 = vmul.f32 %v3808, 1.442695
        %v3811 = vpow.pop %v3810
        %v3812 = vmul.f32 %v3809, 1.442695
        %v3813 = vpow.pop %v3812
        %v3814 = vsel %vm2195, %v3811, 0.0
        %3815 = vadd.xlane.f32.xlu0 %v3814
        %v3816 = vpop.xlane.xlu0 %3815
        %v3817 = vsel %vm2195, %v3813, 0.0
        %3818 = vadd.xlane.f32.xlu0 %v3817
        %v3819 = vpop.xlane.xlu0 %3818
        %v3820 = vrcp.pop %v3816
        %v3821 = vrcp.pop %v3819
        %v3822 = vmul.f32 %v3816, %v3820
        %v3823 = vmul.f32 %v3819, %v3821
        %v3824 = vsub.f32 2.0, %v3822
        %v3825 = vsub.f32 2.0, %v3823
        %v3826 = vmul.f32 %v3820, %v3824
        %v3827 = vmul.f32 %v3821, %v3825
        %3830 = vrot.lane.b32.xlu0 %v2160, 96
        %v3831 = vpop.permute.xlu0 %3830
        %3832 = vrot.lane.b32.xlu0 %v2166, 96
        %v3833 = vpop.permute.xlu0 %3832
        %v3837 = vsel %vm2195, %v3811, 0
        %v3840 = vsel %vm2195, %v3813, 0
        %3842 = vmatprep.subr.mxu0 0.0
        %v3843 = vand.u32 %v3831, 4294901760
        %3844 = vmatpush1.msra.mxu0 %v3843
        %3845 = vmatprep.subr.mxu0 0.0
        %v3846 = vand.u32 %v3833, 4294901760
        %3847 = vmatpush1.msra.mxu0 %v3846
        %3848 = vmatprep.subr.mxu0 0.0
        %3849 = vmatpush1.msra.mxu0 0.0
        %3850 = vmatprep.subr.mxu0 0.0
        %3851 = vmatpush1.msra.mxu0 0.0
        %3852 = vmatprep.subr.mxu0 0.0
        %3853 = vmatpush1.msra.mxu0 0.0
        %3854 = vmatprep.subr.mxu0 0.0
        %3855 = vmatpush1.msra.mxu0 0.0
        %3856 = vmatprep.subr.mxu0 0.0
        %3857 = vmatpush1.msra.mxu0 0.0
        %3858 = vmatprep.subr.mxu0 0.0
        %3859 = vmatpush1.msra.mxu0 0.0
        %3860 = vmatprep.subr.mxu0 0.0
        %3861 = vmatpush1.msra.mxu0 0.0
        %3862 = vmatprep.subr.mxu0 0.0
        %3863 = vmatpush1.msra.mxu0 0.0
        %3864 = vmatprep.subr.mxu0 0.0
        %3865 = vmatpush1.msra.mxu0 0.0
        %3866 = vmatprep.subr.mxu0 0.0
        %3867 = vmatpush1.msra.mxu0 0.0
        %3868 = vmatprep.subr.mxu0 0.0
        %3869 = vmatpush1.msra.mxu0 0.0
        %3870 = vmatprep.subr.mxu0 0.0
        %3871 = vmatpush1.msra.mxu0 0.0
        %3872 = vmatprep.subr.mxu0 0.0
        %3873 = vmatpush1.msra.mxu0 0.0
        %3874 = vmatprep.subr.mxu0 0.0
        %3875 = vmatpush1.msra.mxu0 0.0
        %3876 = vmatprep.subr.mxu0 0.0
        %3877 = vmatpush1.msra.mxu0 0.0
        %3878 = vmatprep.subr.mxu0 0.0
        %3879 = vmatpush1.msra.mxu0 0.0
        %3880 = vmatprep.subr.mxu0 0.0
        %3881 = vmatpush1.msra.mxu0 0.0
        %3882 = vmatprep.subr.mxu0 0.0
        %3883 = vmatpush1.msra.mxu0 0.0
        %3884 = vmatprep.subr.mxu0 0.0
        %3885 = vmatpush1.msra.mxu0 0.0
        %3886 = vmatprep.subr.mxu0 0.0
        %3887 = vmatpush1.msra.mxu0 0.0
        %3888 = vmatprep.subr.mxu0 0.0
        %3889 = vmatpush1.msra.mxu0 0.0
        %3890 = vmatprep.subr.mxu0 0.0
        %3891 = vmatpush1.msra.mxu0 0.0
        %3892 = vmatprep.subr.mxu0 0.0
        %3893 = vmatpush1.msra.mxu0 0.0
        %3894 = vmatprep.subr.mxu0 0.0
        %3895 = vmatpush1.msra.mxu0 0.0
        %3896 = vmatprep.subr.mxu0 0.0
        %3897 = vmatpush1.msra.mxu0 0.0
        %3898 = vmatprep.subr.mxu0 0.0
        %3899 = vmatpush1.msra.mxu0 0.0
        %3900 = vmatprep.subr.mxu0 0.0
        %3901 = vmatpush1.msra.mxu0 0.0
        %3902 = vmatprep.subr.mxu0 0.0
        %3903 = vmatpush1.msra.mxu0 0.0
        %3904 = vmatprep.subr.mxu0 0.0
        %3905 = vmatpush1.msra.mxu0 0.0
        %3906 = vmatprep.subr.mxu0 0.0
        %3907 = vmatpush1.msra.mxu0 0.0
        %3908 = vmatprep.mubr.f32.mxu0 0.0
        %v3909 = vand.u32 %v3837, 4294901760
        %v3910 = vsub.f32 %v3837, %v3909
        %v3911 = vand.u32 %v3910, 4294901760
        %v3912 = vsub.f32 %v3910, %v3911
        %v3913 = vand.u32 %v3912, 4294901760
        %3914 = vmatmul.mubr.f32.gmra.mrb[0].mxu0 %v3913
        %v3915 = vpop.f32.mrb[0].mxu0
        %v3916 = vadd.f32 0.0, %v3915
        %v3917 = vpop.f32.mrb[0].mxu0
        %3918 = vmatprep.mubr.f32.mxu0 0.0
        %v3919 = vand.u32 %v3840, 4294901760
        %v3920 = vsub.f32 %v3840, %v3919
        %v3921 = vand.u32 %v3920, 4294901760
        %v3922 = vsub.f32 %v3920, %v3921
        %v3923 = vand.u32 %v3922, 4294901760
        %3924 = vmatmul.mubr.f32.gmra.mrb[0].mxu0 %v3923
        %v3925 = vpop.f32.mrb[0].mxu0
        %v3926 = vadd.f32 0.0, %v3925
        %v3927 = vpop.f32.mrb[0].mxu0
        %3928 = vdwg.mxu0
        %3929 = vmatprep.subr.mxu0 0.0
        %v3930 = vand.u32 %v3831, 4294901760
        %v3931 = vsub.f32 %v3831, %v3930
        %v3932 = vand.u32 %v3931, 4294901760
        %v3933 = vsub.f32 %v3931, %v3932
        %v3934 = vand.u32 %v3933, 4294901760
        %3935 = vmatpush1.msra.mxu0 %v3934
        %3936 = vmatprep.subr.mxu0 0.0
        %v3937 = vand.u32 %v3833, 4294901760
        %v3938 = vsub.f32 %v3833, %v3937
        %v3939 = vand.u32 %v3938, 4294901760
        %v3940 = vsub.f32 %v3938, %v3939
        %v3941 = vand.u32 %v3940, 4294901760
        %3942 = vmatpush1.msra.mxu0 %v3941
        %3943 = vmatprep.subr.mxu0 0.0
        %3944 = vmatpush1.msra.mxu0 0.0
        %3945 = vmatprep.subr.mxu0 0.0
        %3946 = vmatpush1.msra.mxu0 0.0
        %3947 = vmatprep.subr.mxu0 0.0
        %3948 = vmatpush1.msra.mxu0 0.0
        %3949 = vmatprep.subr.mxu0 0.0
        %3950 = vmatpush1.msra.mxu0 0.0
        %3951 = vmatprep.subr.mxu0 0.0
        %3952 = vmatpush1.msra.mxu0 0.0
        %3953 = vmatprep.subr.mxu0 0.0
        %3954 = vmatpush1.msra.mxu0 0.0
        %3955 = vmatprep.subr.mxu0 0.0
        %3956 = vmatpush1.msra.mxu0 0.0
        %3957 = vmatprep.subr.mxu0 0.0
        %3958 = vmatpush1.msra.mxu0 0.0
        %3959 = vmatprep.subr.mxu0 0.0
        %3960 = vmatpush1.msra.mxu0 0.0
        %3961 = vmatprep.subr.mxu0 0.0
        %3962 = vmatpush1.msra.mxu0 0.0
        %3963 = vmatprep.subr.mxu0 0.0
        %3964 = vmatpush1.msra.mxu0 0.0
        %3965 = vmatprep.subr.mxu0 0.0
        %3966 = vmatpush1.msra.mxu0 0.0
        %3967 = vmatprep.subr.mxu0 0.0
        %3968 = vmatpush1.msra.mxu0 0.0
        %3969 = vmatprep.subr.mxu0 0.0
        %3970 = vmatpush1.msra.mxu0 0.0
        %3971 = vmatprep.subr.mxu0 0.0
        %3972 = vmatpush1.msra.mxu0 0.0
        %3973 = vmatprep.subr.mxu0 0.0
        %3974 = vmatpush1.msra.mxu0 0.0
        %3975 = vmatprep.subr.mxu0 0.0
        %3976 = vmatpush1.msra.mxu0 0.0
        %3977 = vmatprep.subr.mxu0 0.0
        %3978 = vmatpush1.msra.mxu0 0.0
        %3979 = vmatprep.subr.mxu0 0.0
        %3980 = vmatpush1.msra.mxu0 0.0
        %3981 = vmatprep.subr.mxu0 0.0
        %3982 = vmatpush1.msra.mxu0 0.0
        %3983 = vmatprep.subr.mxu0 0.0
        %3984 = vmatpush1.msra.mxu0 0.0
        %3985 = vmatprep.subr.mxu0 0.0
        %3986 = vmatpush1.msra.mxu0 0.0
        %3987 = vmatprep.subr.mxu0 0.0
        %3988 = vmatpush1.msra.mxu0 0.0
        %3989 = vmatprep.subr.mxu0 0.0
        %3990 = vmatpush1.msra.mxu0 0.0
        %3991 = vmatprep.subr.mxu0 0.0
        %3992 = vmatpush1.msra.mxu0 0.0
        %3993 = vmatprep.subr.mxu0 0.0
        %3994 = vmatpush1.msra.mxu0 0.0
        %3995 = vmatprep.subr.mxu0 0.0
        %3996 = vmatpush1.msra.mxu0 0.0
        %3997 = vmatprep.subr.mxu0 0.0
        %3998 = vmatpush1.msra.mxu0 0.0
        %3999 = vmatprep.subr.mxu0 0.0
        %4000 = vmatpush1.msra.mxu0 0.0
        %4001 = vmatprep.subr.mxu0 0.0
        %4002 = vmatpush1.msra.mxu0 0.0
        %4003 = vmatprep.mubr.f32.mxu0 0.0
        %v4004 = vand.u32 %v3837, 4294901760
        %4005 = vmatmul.mubr.f32.gmra.mrb[0].mxu0 %v4004
        %v4006 = vpop.f32.mrb[0].mxu0
        %v4007 = vadd.f32 %v3916, %v4006
        %v4008 = vpop.f32.mrb[0].mxu0
        %4009 = vmatprep.mubr.f32.mxu0 0.0
        %v4010 = vand.u32 %v3840, 4294901760
        %4011 = vmatmul.mubr.f32.gmra.mrb[0].mxu0 %v4010
        %v4012 = vpop.f32.mrb[0].mxu0
        %v4013 = vadd.f32 %v3926, %v4012
        %v4014 = vpop.f32.mrb[0].mxu0
        %4015 = vdwg.mxu0
        %4016 = vmatprep.subr.mxu0 0.0
        %v4017 = vand.u32 %v3831, 4294901760
        %v4018 = vsub.f32 %v3831, %v4017
        %4019 = vmatpush1.msra.mxu0 %v4018
        %4020 = vmatprep.subr.mxu0 0.0
        %v4021 = vand.u32 %v3833, 4294901760
        %v4022 = vsub.f32 %v3833, %v4021
        %4023 = vmatpush1.msra.mxu0 %v4022
        %4024 = vmatprep.subr.mxu0 0.0
        %4025 = vmatpush1.msra.mxu0 0.0
        %4026 = vmatprep.subr.mxu0 0.0
        %4027 = vmatpush1.msra.mxu0 0.0
        %4028 = vmatprep.subr.mxu0 0.0
        %4029 = vmatpush1.msra.mxu0 0.0
        %4030 = vmatprep.subr.mxu0 0.0
        %4031 = vmatpush1.msra.mxu0 0.0
        %4032 = vmatprep.subr.mxu0 0.0
        %4033 = vmatpush1.msra.mxu0 0.0
        %4034 = vmatprep.subr.mxu0 0.0
        %4035 = vmatpush1.msra.mxu0 0.0
        %4036 = vmatprep.subr.mxu0 0.0
        %4037 = vmatpush1.msra.mxu0 0.0
        %4038 = vmatprep.subr.mxu0 0.0
        %4039 = vmatpush1.msra.mxu0 0.0
        %4040 = vmatprep.subr.mxu0 0.0
        %4041 = vmatpush1.msra.mxu0 0.0
        %4042 = vmatprep.subr.mxu0 0.0
        %4043 = vmatpush1.msra.mxu0 0.0
        %4044 = vmatprep.subr.mxu0 0.0
        %4045 = vmatpush1.msra.mxu0 0.0
        %4046 = vmatprep.subr.mxu0 0.0
        %4047 = vmatpush1.msra.mxu0 0.0
        %4048 = vmatprep.subr.mxu0 0.0
        %4049 = vmatpush1.msra.mxu0 0.0
        %4050 = vmatprep.subr.mxu0 0.0
        %4051 = vmatpush1.msra.mxu0 0.0
        %4052 = vmatprep.subr.mxu0 0.0
        %4053 = vmatpush1.msra.mxu0 0.0
        %4054 = vmatprep.subr.mxu0 0.0
        %4055 = vmatpush1.msra.mxu0 0.0
        %4056 = vmatprep.subr.mxu0 0.0
        %4057 = vmatpush1.msra.mxu0 0.0
        %4058 = vmatprep.subr.mxu0 0.0
        %4059 = vmatpush1.msra.mxu0 0.0
        %4060 = vmatprep.subr.mxu0 0.0
        %4061 = vmatpush1.msra.mxu0 0.0
        %4062 = vmatprep.subr.mxu0 0.0
        %4063 = vmatpush1.msra.mxu0 0.0
        %4064 = vmatprep.subr.mxu0 0.0
        %4065 = vmatpush1.msra.mxu0 0.0
        %4066 = vmatprep.subr.mxu0 0.0
        %4067 = vmatpush1.msra.mxu0 0.0
        %4068 = vmatprep.subr.mxu0 0.0
        %4069 = vmatpush1.msra.mxu0 0.0
        %4070 = vmatprep.subr.mxu0 0.0
        %4071 = vmatpush1.msra.mxu0 0.0
        %4072 = vmatprep.subr.mxu0 0.0
        %4073 = vmatpush1.msra.mxu0 0.0
        %4074 = vmatprep.subr.mxu0 0.0
        %4075 = vmatpush1.msra.mxu0 0.0
        %4076 = vmatprep.subr.mxu0 0.0
        %4077 = vmatpush1.msra.mxu0 0.0
        %4078 = vmatprep.subr.mxu0 0.0
        %4079 = vmatpush1.msra.mxu0 0.0
        %4080 = vmatprep.subr.mxu0 0.0
        %4081 = vmatpush1.msra.mxu0 0.0
        %4082 = vmatprep.subr.mxu0 0.0
        %4083 = vmatpush1.msra.mxu0 0.0
        %4084 = vmatprep.mubr.f32.mxu0 0.0
        %v4085 = vand.u32 %v3837, 4294901760
        %v4086 = vsub.f32 %v3837, %v4085
        %4087 = vmatmul.mubr.f32.gmra.mrb[0].mxu0 %v4086
        %v4088 = vpop.f32.mrb[0].mxu0
        %v4089 = vadd.f32 %v4007, %v4088
        %v4090 = vpop.f32.mrb[0].mxu0
        %4091 = vmatprep.mubr.f32.mxu0 0.0
        %v4092 = vand.u32 %v3840, 4294901760
        %v4093 = vsub.f32 %v3840, %v4092
        %4094 = vmatmul.mubr.f32.gmra.mrb[0].mxu0 %v4093
        %v4095 = vpop.f32.mrb[0].mxu0
        %v4096 = vadd.f32 %v4013, %v4095
        %v4097 = vpop.f32.mrb[0].mxu0
        %4098 = vdwg.mxu0
        %4099 = vmatprep.subr.mxu0 0.0
        %v4100 = vand.u32 %v3831, 4294901760
        %4101 = vmatpush1.msra.mxu0 %v4100
        %4102 = vmatprep.subr.mxu0 0.0
        %v4103 = vand.u32 %v3833, 4294901760
        %4104 = vmatpush1.msra.mxu0 %v4103
        %4105 = vmatprep.subr.mxu0 0.0
        %4106 = vmatpush1.msra.mxu0 0.0
        %4107 = vmatprep.subr.mxu0 0.0
        %4108 = vmatpush1.msra.mxu0 0.0
        %4109 = vmatprep.subr.mxu0 0.0
        %4110 = vmatpush1.msra.mxu0 0.0
        %4111 = vmatprep.subr.mxu0 0.0
        %4112 = vmatpush1.msra.mxu0 0.0
        %4113 = vmatprep.subr.mxu0 0.0
        %4114 = vmatpush1.msra.mxu0 0.0
        %4115 = vmatprep.subr.mxu0 0.0
        %4116 = vmatpush1.msra.mxu0 0.0
        %4117 = vmatprep.subr.mxu0 0.0
        %4118 = vmatpush1.msra.mxu0 0.0
        %4119 = vmatprep.subr.mxu0 0.0
        %4120 = vmatpush1.msra.mxu0 0.0
        %4121 = vmatprep.subr.mxu0 0.0
        %4122 = vmatpush1.msra.mxu0 0.0
        %4123 = vmatprep.subr.mxu0 0.0
        %4124 = vmatpush1.msra.mxu0 0.0
        %4125 = vmatprep.subr.mxu0 0.0
        %4126 = vmatpush1.msra.mxu0 0.0
        %4127 = vmatprep.subr.mxu0 0.0
        %4128 = vmatpush1.msra.mxu0 0.0
        %4129 = vmatprep.subr.mxu0 0.0
        %4130 = vmatpush1.msra.mxu0 0.0
        %4131 = vmatprep.subr.mxu0 0.0
        %4132 = vmatpush1.msra.mxu0 0.0
        %4133 = vmatprep.subr.mxu0 0.0
        %4134 = vmatpush1.msra.mxu0 0.0
        %4135 = vmatprep.subr.mxu0 0.0
        %4136 = vmatpush1.msra.mxu0 0.0
        %4137 = vmatprep.subr.mxu0 0.0
        %4138 = vmatpush1.msra.mxu0 0.0
        %4139 = vmatprep.subr.mxu0 0.0
        %4140 = vmatpush1.msra.mxu0 0.0
        %4141 = vmatprep.subr.mxu0 0.0
        %4142 = vmatpush1.msra.mxu0 0.0
        %4143 = vmatprep.subr.mxu0 0.0
        %4144 = vmatpush1.msra.mxu0 0.0
        %4145 = vmatprep.subr.mxu0 0.0
        %4146 = vmatpush1.msra.mxu0 0.0
        %4147 = vmatprep.subr.mxu0 0.0
        %4148 = vmatpush1.msra.mxu0 0.0
        %4149 = vmatprep.subr.mxu0 0.0
        %4150 = vmatpush1.msra.mxu0 0.0
        %4151 = vmatprep.subr.mxu0 0.0
        %4152 = vmatpush1.msra.mxu0 0.0
        %4153 = vmatprep.subr.mxu0 0.0
        %4154 = vmatpush1.msra.mxu0 0.0
        %4155 = vmatprep.subr.mxu0 0.0
        %4156 = vmatpush1.msra.mxu0 0.0
        %4157 = vmatprep.subr.mxu0 0.0
        %4158 = vmatpush1.msra.mxu0 0.0
        %4159 = vmatprep.subr.mxu0 0.0
        %4160 = vmatpush1.msra.mxu0 0.0
        %4161 = vmatprep.subr.mxu0 0.0
        %4162 = vmatpush1.msra.mxu0 0.0
        %4163 = vmatprep.subr.mxu0 0.0
        %4164 = vmatpush1.msra.mxu0 0.0
        %4165 = vmatprep.mubr.f32.mxu0 0.0
        %v4166 = vand.u32 %v3837, 4294901760
        %v4167 = vsub.f32 %v3837, %v4166
        %v4168 = vand.u32 %v4167, 4294901760
        %4169 = vmatmul.mubr.f32.gmra.mrb[0].mxu0 %v4168
        %v4170 = vpop.f32.mrb[0].mxu0
        %v4171 = vadd.f32 %v4089, %v4170
        %v4172 = vpop.f32.mrb[0].mxu0
        %4173 = vmatprep.mubr.f32.mxu0 0.0
        %v4174 = vand.u32 %v3840, 4294901760
        %v4175 = vsub.f32 %v3840, %v4174
        %v4176 = vand.u32 %v4175, 4294901760
        %4177 = vmatmul.mubr.f32.gmra.mrb[0].mxu0 %v4176
        %v4178 = vpop.f32.mrb[0].mxu0
        %v4179 = vadd.f32 %v4096, %v4178
        %v4180 = vpop.f32.mrb[0].mxu0
        %4181 = vdwg.mxu0
        %4182 = vmatprep.subr.mxu0 0.0
        %v4183 = vand.u32 %v3831, 4294901760
        %v4184 = vsub.f32 %v3831, %v4183
        %v4185 = vand.u32 %v4184, 4294901760
        %4186 = vmatpush1.msra.mxu0 %v4185
        %4187 = vmatprep.subr.mxu0 0.0
        %v4188 = vand.u32 %v3833, 4294901760
        %v4189 = vsub.f32 %v3833, %v4188
        %v4190 = vand.u32 %v4189, 4294901760
        %4191 = vmatpush1.msra.mxu0 %v4190
        %4192 = vmatprep.subr.mxu0 0.0
        %4193 = vmatpush1.msra.mxu0 0.0
        %4194 = vmatprep.subr.mxu0 0.0
        %4195 = vmatpush1.msra.mxu0 0.0
        %4196 = vmatprep.subr.mxu0 0.0
        %4197 = vmatpush1.msra.mxu0 0.0
        %4198 = vmatprep.subr.mxu0 0.0
        %4199 = vmatpush1.msra.mxu0 0.0
        %4200 = vmatprep.subr.mxu0 0.0
        %4201 = vmatpush1.msra.mxu0 0.0
        %4202 = vmatprep.subr.mxu0 0.0
        %4203 = vmatpush1.msra.mxu0 0.0
        %4204 = vmatprep.subr.mxu0 0.0
        %4205 = vmatpush1.msra.mxu0 0.0
        %4206 = vmatprep.subr.mxu0 0.0
        %4207 = vmatpush1.msra.mxu0 0.0
        %4208 = vmatprep.subr.mxu0 0.0
        %4209 = vmatpush1.msra.mxu0 0.0
        %4210 = vmatprep.subr.mxu0 0.0
        %4211 = vmatpush1.msra.mxu0 0.0
        %4212 = vmatprep.subr.mxu0 0.0
        %4213 = vmatpush1.msra.mxu0 0.0
        %4214 = vmatprep.subr.mxu0 0.0
        %4215 = vmatpush1.msra.mxu0 0.0
        %4216 = vmatprep.subr.mxu0 0.0
        %4217 = vmatpush1.msra.mxu0 0.0
        %4218 = vmatprep.subr.mxu0 0.0
        %4219 = vmatpush1.msra.mxu0 0.0
        %4220 = vmatprep.subr.mxu0 0.0
        %4221 = vmatpush1.msra.mxu0 0.0
        %4222 = vmatprep.subr.mxu0 0.0
        %4223 = vmatpush1.msra.mxu0 0.0
        %4224 = vmatprep.subr.mxu0 0.0
        %4225 = vmatpush1.msra.mxu0 0.0
        %4226 = vmatprep.subr.mxu0 0.0
        %4227 = vmatpush1.msra.mxu0 0.0
        %4228 = vmatprep.subr.mxu0 0.0
        %4229 = vmatpush1.msra.mxu0 0.0
        %4230 = vmatprep.subr.mxu0 0.0
        %4231 = vmatpush1.msra.mxu0 0.0
        %4232 = vmatprep.subr.mxu0 0.0
        %4233 = vmatpush1.msra.mxu0 0.0
        %4234 = vmatprep.subr.mxu0 0.0
        %4235 = vmatpush1.msra.mxu0 0.0
        %4236 = vmatprep.subr.mxu0 0.0
        %4237 = vmatpush1.msra.mxu0 0.0
        %4238 = vmatprep.subr.mxu0 0.0
        %4239 = vmatpush1.msra.mxu0 0.0
        %4240 = vmatprep.subr.mxu0 0.0
        %4241 = vmatpush1.msra.mxu0 0.0
        %4242 = vmatprep.subr.mxu0 0.0
        %4243 = vmatpush1.msra.mxu0 0.0
        %4244 = vmatprep.subr.mxu0 0.0
        %4245 = vmatpush1.msra.mxu0 0.0
        %4246 = vmatprep.subr.mxu0 0.0
        %4247 = vmatpush1.msra.mxu0 0.0
        %4248 = vmatprep.subr.mxu0 0.0
        %4249 = vmatpush1.msra.mxu0 0.0
        %4250 = vmatprep.subr.mxu0 0.0
        %4251 = vmatpush1.msra.mxu0 0.0
        %4252 = vmatprep.mubr.f32.mxu0 0.0
        %v4253 = vand.u32 %v3837, 4294901760
        %4254 = vmatmul.mubr.f32.gmra.mrb[0].mxu0 %v4253
        %v4255 = vpop.f32.mrb[0].mxu0
        %v4256 = vadd.f32 %v4171, %v4255
        %v4257 = vpop.f32.mrb[0].mxu0
        %4258 = vmatprep.mubr.f32.mxu0 0.0
        %v4259 = vand.u32 %v3840, 4294901760
        %4260 = vmatmul.mubr.f32.gmra.mrb[0].mxu0 %v4259
        %v4261 = vpop.f32.mrb[0].mxu0
        %v4262 = vadd.f32 %v4179, %v4261
        %v4263 = vpop.f32.mrb[0].mxu0
        %4264 = vdwg.mxu0
        %4265 = vmatprep.subr.mxu0 0.0
        %v4266 = vand.u32 %v3831, 4294901760
        %4267 = vmatpush1.msra.mxu0 %v4266
        %4268 = vmatprep.subr.mxu0 0.0
        %v4269 = vand.u32 %v3833, 4294901760
        %4270 = vmatpush1.msra.mxu0 %v4269
        %4271 = vmatprep.subr.mxu0 0.0
        %4272 = vmatpush1.msra.mxu0 0.0
        %4273 = vmatprep.subr.mxu0 0.0
        %4274 = vmatpush1.msra.mxu0 0.0
        %4275 = vmatprep.subr.mxu0 0.0
        %4276 = vmatpush1.msra.mxu0 0.0
        %4277 = vmatprep.subr.mxu0 0.0
        %4278 = vmatpush1.msra.mxu0 0.0
        %4279 = vmatprep.subr.mxu0 0.0
        %4280 = vmatpush1.msra.mxu0 0.0
        %4281 = vmatprep.subr.mxu0 0.0
        %4282 = vmatpush1.msra.mxu0 0.0
        %4283 = vmatprep.subr.mxu0 0.0
        %4284 = vmatpush1.msra.mxu0 0.0
        %4285 = vmatprep.subr.mxu0 0.0
        %4286 = vmatpush1.msra.mxu0 0.0
        %4287 = vmatprep.subr.mxu0 0.0
        %4288 = vmatpush1.msra.mxu0 0.0
        %4289 = vmatprep.subr.mxu0 0.0
        %4290 = vmatpush1.msra.mxu0 0.0
        %4291 = vmatprep.subr.mxu0 0.0
        %4292 = vmatpush1.msra.mxu0 0.0
        %4293 = vmatprep.subr.mxu0 0.0
        %4294 = vmatpush1.msra.mxu0 0.0
        %4295 = vmatprep.subr.mxu0 0.0
        %4296 = vmatpush1.msra.mxu0 0.0
        %4297 = vmatprep.subr.mxu0 0.0
        %4298 = vmatpush1.msra.mxu0 0.0
        %4299 = vmatprep.subr.mxu0 0.0
        %4300 = vmatpush1.msra.mxu0 0.0
        %4301 = vmatprep.subr.mxu0 0.0
        %4302 = vmatpush1.msra.mxu0 0.0
        %4303 = vmatprep.subr.mxu0 0.0
        %4304 = vmatpush1.msra.mxu0 0.0
        %4305 = vmatprep.subr.mxu0 0.0
        %4306 = vmatpush1.msra.mxu0 0.0
        %4307 = vmatprep.subr.mxu0 0.0
        %4308 = vmatpush1.msra.mxu0 0.0
        %4309 = vmatprep.subr.mxu0 0.0
        %4310 = vmatpush1.msra.mxu0 0.0
        %4311 = vmatprep.subr.mxu0 0.0
        %4312 = vmatpush1.msra.mxu0 0.0
        %4313 = vmatprep.subr.mxu0 0.0
        %4314 = vmatpush1.msra.mxu0 0.0
        %4315 = vmatprep.subr.mxu0 0.0
        %4316 = vmatpush1.msra.mxu0 0.0
        %4317 = vmatprep.subr.mxu0 0.0
        %4318 = vmatpush1.msra.mxu0 0.0
        %4319 = vmatprep.subr.mxu0 0.0
        %4320 = vmatpush1.msra.mxu0 0.0
        %4321 = vmatprep.subr.mxu0 0.0
        %4322 = vmatpush1.msra.mxu0 0.0
        %4323 = vmatprep.subr.mxu0 0.0
        %4324 = vmatpush1.msra.mxu0 0.0
        %4325 = vmatprep.subr.mxu0 0.0
        %4326 = vmatpush1.msra.mxu0 0.0
        %4327 = vmatprep.subr.mxu0 0.0
        %4328 = vmatpush1.msra.mxu0 0.0
        %4329 = vmatprep.subr.mxu0 0.0
        %4330 = vmatpush1.msra.mxu0 0.0
        %4331 = vmatprep.mubr.f32.mxu0 0.0
        %v4332 = vand.u32 %v3837, 4294901760
        %4333 = vmatmul.mubr.f32.gmra.mrb[0].mxu0 %v4332
        %v4334 = vpop.f32.mrb[0].mxu0
        %v4335 = vadd.f32 %v4256, %v4334
        %v4336 = vpop.f32.mrb[0].mxu0
        %4337 = vmatprep.mubr.f32.mxu0 0.0
        %v4338 = vand.u32 %v3840, 4294901760
        %4339 = vmatmul.mubr.f32.gmra.mrb[0].mxu0 %v4338
        %v4340 = vpop.f32.mrb[0].mxu0
        %v4341 = vadd.f32 %v4262, %v4340
        %v4342 = vpop.f32.mrb[0].mxu0
        %4343 = vdwg.mxu0
        %v4344 = vmul.f32 %v4335, %v3826
        %v4345 = vmul.f32 %v4341, %v3827
        %4346 = vrot.lane.b32.xlu0 %v2198, 64
        %v4347 = vpop.permute.xlu0 %4346
        %4348 = vrot.lane.b32.xlu0 %v2199, 64
        %v4349 = vpop.permute.xlu0 %4348
        %4350 = vrot.lane.b32.xlu0 %v2222, 64
        %v4351 = vpop.permute.xlu0 %4350
        %4352 = vrot.lane.b32.xlu0 %v2223, 64
        %v4353 = vpop.permute.xlu0 %4352
        %v4354 = vsel %vm2233, %v4347, 0
        %v4356 = vsel %vm2233, %v4349, 0
        %v4358 = vsel %vm2233, %v4351, 0
        %v4360 = vsel %vm2233, %v4353, 0
        %4362 = vmatprep.subr.mxu0 0.0
        %v4363 = vand.u32 %v4358, 4294901760
        %4364 = vmatpush1.xpose.msra.mxu0 %v4363
        %4365 = vmatprep.subr.mxu0 0.0
        %v4366 = vand.u32 %v4360, 4294901760
        %4367 = vmatpush1.xpose.msra.mxu0 %v4366
        %4368 = vmatprep.subr.mxu0 0.0
        %4369 = vmatpush1.xpose.msra.mxu0 0.0
        %4370 = vmatprep.subr.mxu0 0.0
        %4371 = vmatpush1.xpose.msra.mxu0 0.0
        %4372 = vmatprep.subr.mxu0 0.0
        %4373 = vmatpush1.xpose.msra.mxu0 0.0
        %4374 = vmatprep.subr.mxu0 0.0
        %4375 = vmatpush1.xpose.msra.mxu0 0.0
        %4376 = vmatprep.subr.mxu0 0.0
        %4377 = vmatpush1.xpose.msra.mxu0 0.0
        %4378 = vmatprep.subr.mxu0 0.0
        %4379 = vmatpush1.xpose.msra.mxu0 0.0
        %4380 = vmatprep.subr.mxu0 0.0
        %4381 = vmatpush1.xpose.msra.mxu0 0.0
        %4382 = vmatprep.subr.mxu0 0.0
        %4383 = vmatpush1.xpose.msra.mxu0 0.0
        %4384 = vmatprep.subr.mxu0 0.0
        %4385 = vmatpush1.xpose.msra.mxu0 0.0
        %4386 = vmatprep.subr.mxu0 0.0
        %4387 = vmatpush1.xpose.msra.mxu0 0.0
        %4388 = vmatprep.subr.mxu0 0.0
        %4389 = vmatpush1.xpose.msra.mxu0 0.0
        %4390 = vmatprep.subr.mxu0 0.0
        %4391 = vmatpush1.xpose.msra.mxu0 0.0
        %4392 = vmatprep.subr.mxu0 0.0
        %4393 = vmatpush1.xpose.msra.mxu0 0.0
        %4394 = vmatprep.subr.mxu0 0.0
        %4395 = vmatpush1.xpose.msra.mxu0 0.0
        %4396 = vmatprep.subr.mxu0 0.0
        %4397 = vmatpush1.xpose.msra.mxu0 0.0
        %4398 = vmatprep.subr.mxu0 0.0
        %4399 = vmatpush1.xpose.msra.mxu0 0.0
        %4400 = vmatprep.subr.mxu0 0.0
        %4401 = vmatpush1.xpose.msra.mxu0 0.0
        %4402 = vmatprep.subr.mxu0 0.0
        %4403 = vmatpush1.xpose.msra.mxu0 0.0
        %4404 = vmatprep.subr.mxu0 0.0
        %4405 = vmatpush1.xpose.msra.mxu0 0.0
        %4406 = vmatprep.subr.mxu0 0.0
        %4407 = vmatpush1.xpose.msra.mxu0 0.0
        %4408 = vmatprep.subr.mxu0 0.0
        %4409 = vmatpush1.xpose.msra.mxu0 0.0
        %4410 = vmatprep.subr.mxu0 0.0
        %4411 = vmatpush1.xpose.msra.mxu0 0.0
        %4412 = vmatprep.subr.mxu0 0.0
        %4413 = vmatpush1.xpose.msra.mxu0 0.0
        %4414 = vmatprep.subr.mxu0 0.0
        %4415 = vmatpush1.xpose.msra.mxu0 0.0
        %4416 = vmatprep.subr.mxu0 0.0
        %4417 = vmatpush1.xpose.msra.mxu0 0.0
        %4418 = vmatprep.subr.mxu0 0.0
        %4419 = vmatpush1.xpose.msra.mxu0 0.0
        %4420 = vmatprep.subr.mxu0 0.0
        %4421 = vmatpush1.xpose.msra.mxu0 0.0
        %4422 = vmatprep.subr.mxu0 0.0
        %4423 = vmatpush1.xpose.msra.mxu0 0.0
        %4424 = vmatprep.subr.mxu0 0.0
        %4425 = vmatpush1.xpose.msra.mxu0 0.0
        %4426 = vmatprep.subr.mxu0 0.0
        %4427 = vmatpush1.xpose.msra.mxu0 0.0
        %4428 = vmatprep.mubr.f32.mxu0 0.0
        %v4429 = vand.u32 %v4354, 4294901760
        %v4430 = vsub.f32 %v4354, %v4429
        %v4431 = vand.u32 %v4430, 4294901760
        %v4432 = vsub.f32 %v4430, %v4431
        %v4433 = vand.u32 %v4432, 4294901760
        %4434 = vmatmul.mubr.f32.gmra.mrb[0].mxu0 %v4433
        %v4435 = vpop.f32.mrb[0].mxu0
        %v4436 = vadd.f32 %v2231, %v4435
        %v4437 = vpop.f32.mrb[0].mxu0
        %4438 = vmatprep.mubr.f32.mxu0 0.0
        %v4439 = vand.u32 %v4356, 4294901760
        %v4440 = vsub.f32 %v4356, %v4439
        %v4441 = vand.u32 %v4440, 4294901760
        %v4442 = vsub.f32 %v4440, %v4441
        %v4443 = vand.u32 %v4442, 4294901760
        %4444 = vmatmul.mubr.f32.gmra.mrb[0].mxu0 %v4443
        %v4445 = vpop.f32.mrb[0].mxu0
        %v4446 = vadd.f32 %v2232, %v4445
        %v4447 = vpop.f32.mrb[0].mxu0
        %4448 = vdwg.mxu0
        %4449 = vmatprep.subr.mxu0 0.0
        %v4450 = vand.u32 %v4358, 4294901760
        %v4451 = vsub.f32 %v4358, %v4450
        %v4452 = vand.u32 %v4451, 4294901760
        %v4453 = vsub.f32 %v4451, %v4452
        %v4454 = vand.u32 %v4453, 4294901760
        %4455 = vmatpush1.xpose.msra.mxu0 %v4454
        %4456 = vmatprep.subr.mxu0 0.0
        %v4457 = vand.u32 %v4360, 4294901760
        %v4458 = vsub.f32 %v4360, %v4457
        %v4459 = vand.u32 %v4458, 4294901760
        %v4460 = vsub.f32 %v4458, %v4459
        %v4461 = vand.u32 %v4460, 4294901760
        %4462 = vmatpush1.xpose.msra.mxu0 %v4461
        %4463 = vmatprep.subr.mxu0 0.0
        %4464 = vmatpush1.xpose.msra.mxu0 0.0
        %4465 = vmatprep.subr.mxu0 0.0
        %4466 = vmatpush1.xpose.msra.mxu0 0.0
        %4467 = vmatprep.subr.mxu0 0.0
        %4468 = vmatpush1.xpose.msra.mxu0 0.0
        %4469 = vmatprep.subr.mxu0 0.0
        %4470 = vmatpush1.xpose.msra.mxu0 0.0
        %4471 = vmatprep.subr.mxu0 0.0
        %4472 = vmatpush1.xpose.msra.mxu0 0.0
        %4473 = vmatprep.subr.mxu0 0.0
        %4474 = vmatpush1.xpose.msra.mxu0 0.0
        %4475 = vmatprep.subr.mxu0 0.0
        %4476 = vmatpush1.xpose.msra.mxu0 0.0
        %4477 = vmatprep.subr.mxu0 0.0
        %4478 = vmatpush1.xpose.msra.mxu0 0.0
        %4479 = vmatprep.subr.mxu0 0.0
        %4480 = vmatpush1.xpose.msra.mxu0 0.0
        %4481 = vmatprep.subr.mxu0 0.0
        %4482 = vmatpush1.xpose.msra.mxu0 0.0
        %4483 = vmatprep.subr.mxu0 0.0
        %4484 = vmatpush1.xpose.msra.mxu0 0.0
        %4485 = vmatprep.subr.mxu0 0.0
        %4486 = vmatpush1.xpose.msra.mxu0 0.0
        %4487 = vmatprep.subr.mxu0 0.0
        %4488 = vmatpush1.xpose.msra.mxu0 0.0
        %4489 = vmatprep.subr.mxu0 0.0
        %4490 = vmatpush1.xpose.msra.mxu0 0.0
        %4491 = vmatprep.subr.mxu0 0.0
        %4492 = vmatpush1.xpose.msra.mxu0 0.0
        %4493 = vmatprep.subr.mxu0 0.0
        %4494 = vmatpush1.xpose.msra.mxu0 0.0
        %4495 = vmatprep.subr.mxu0 0.0
        %4496 = vmatpush1.xpose.msra.mxu0 0.0
        %4497 = vmatprep.subr.mxu0 0.0
        %4498 = vmatpush1.xpose.msra.mxu0 0.0
        %4499 = vmatprep.subr.mxu0 0.0
        %4500 = vmatpush1.xpose.msra.mxu0 0.0
        %4501 = vmatprep.subr.mxu0 0.0
        %4502 = vmatpush1.xpose.msra.mxu0 0.0
        %4503 = vmatprep.subr.mxu0 0.0
        %4504 = vmatpush1.xpose.msra.mxu0 0.0
        %4505 = vmatprep.subr.mxu0 0.0
        %4506 = vmatpush1.xpose.msra.mxu0 0.0
        %4507 = vmatprep.subr.mxu0 0.0
        %4508 = vmatpush1.xpose.msra.mxu0 0.0
        %4509 = vmatprep.subr.mxu0 0.0
        %4510 = vmatpush1.xpose.msra.mxu0 0.0
        %4511 = vmatprep.subr.mxu0 0.0
        %4512 = vmatpush1.xpose.msra.mxu0 0.0
        %4513 = vmatprep.subr.mxu0 0.0
        %4514 = vmatpush1.xpose.msra.mxu0 0.0
        %4515 = vmatprep.subr.mxu0 0.0
        %4516 = vmatpush1.xpose.msra.mxu0 0.0
        %4517 = vmatprep.subr.mxu0 0.0
        %4518 = vmatpush1.xpose.msra.mxu0 0.0
        %4519 = vmatprep.subr.mxu0 0.0
        %4520 = vmatpush1.xpose.msra.mxu0 0.0
        %4521 = vmatprep.subr.mxu0 0.0
        %4522 = vmatpush1.xpose.msra.mxu0 0.0
        %4523 = vmatprep.mubr.f32.mxu0 0.0
        %v4524 = vand.u32 %v4354, 4294901760
        %4525 = vmatmul.mubr.f32.gmra.mrb[0].mxu0 %v4524
        %v4526 = vpop.f32.mrb[0].mxu0
        %v4527 = vadd.f32 %v4436, %v4526
        %v4528 = vpop.f32.mrb[0].mxu0
        %4529 = vmatprep.mubr.f32.mxu0 0.0
        %v4530 = vand.u32 %v4356, 4294901760
        %4531 = vmatmul.mubr.f32.gmra.mrb[0].mxu0 %v4530
        %v4532 = vpop.f32.mrb[0].mxu0
        %v4533 = vadd.f32 %v4446, %v4532
        %v4534 = vpop.f32.mrb[0].mxu0
        %4535 = vdwg.mxu0
        %4536 = vmatprep.subr.mxu0 0.0
        %v4537 = vand.u32 %v4358, 4294901760
        %v4538 = vsub.f32 %v4358, %v4537
        %4539 = vmatpush1.xpose.msra.mxu0 %v4538
        %4540 = vmatprep.subr.mxu0 0.0
        %v4541 = vand.u32 %v4360, 4294901760
        %v4542 = vsub.f32 %v4360, %v4541
        %4543 = vmatpush1.xpose.msra.mxu0 %v4542
        %4544 = vmatprep.subr.mxu0 0.0
        %4545 = vmatpush1.xpose.msra.mxu0 0.0
        %4546 = vmatprep.subr.mxu0 0.0
        %4547 = vmatpush1.xpose.msra.mxu0 0.0
        %4548 = vmatprep.subr.mxu0 0.0
        %4549 = vmatpush1.xpose.msra.mxu0 0.0
        %4550 = vmatprep.subr.mxu0 0.0
        %4551 = vmatpush1.xpose.msra.mxu0 0.0
        %4552 = vmatprep.subr.mxu0 0.0
        %4553 = vmatpush1.xpose.msra.mxu0 0.0
        %4554 = vmatprep.subr.mxu0 0.0
        %4555 = vmatpush1.xpose.msra.mxu0 0.0
        %4556 = vmatprep.subr.mxu0 0.0
        %4557 = vmatpush1.xpose.msra.mxu0 0.0
        %4558 = vmatprep.subr.mxu0 0.0
        %4559 = vmatpush1.xpose.msra.mxu0 0.0
        %4560 = vmatprep.subr.mxu0 0.0
        %4561 = vmatpush1.xpose.msra.mxu0 0.0
        %4562 = vmatprep.subr.mxu0 0.0
        %4563 = vmatpush1.xpose.msra.mxu0 0.0
        %4564 = vmatprep.subr.mxu0 0.0
        %4565 = vmatpush1.xpose.msra.mxu0 0.0
        %4566 = vmatprep.subr.mxu0 0.0
        %4567 = vmatpush1.xpose.msra.mxu0 0.0
        %4568 = vmatprep.subr.mxu0 0.0
        %4569 = vmatpush1.xpose.msra.mxu0 0.0
        %4570 = vmatprep.subr.mxu0 0.0
        %4571 = vmatpush1.xpose.msra.mxu0 0.0
        %4572 = vmatprep.subr.mxu0 0.0
        %4573 = vmatpush1.xpose.msra.mxu0 0.0
        %4574 = vmatprep.subr.mxu0 0.0
        %4575 = vmatpush1.xpose.msra.mxu0 0.0
        %4576 = vmatprep.subr.mxu0 0.0
        %4577 = vmatpush1.xpose.msra.mxu0 0.0
        %4578 = vmatprep.subr.mxu0 0.0
        %4579 = vmatpush1.xpose.msra.mxu0 0.0
        %4580 = vmatprep.subr.mxu0 0.0
        %4581 = vmatpush1.xpose.msra.mxu0 0.0
        %4582 = vmatprep.subr.mxu0 0.0
        %4583 = vmatpush1.xpose.msra.mxu0 0.0
        %4584 = vmatprep.subr.mxu0 0.0
        %4585 = vmatpush1.xpose.msra.mxu0 0.0
        %4586 = vmatprep.subr.mxu0 0.0
        %4587 = vmatpush1.xpose.msra.mxu0 0.0
        %4588 = vmatprep.subr.mxu0 0.0
        %4589 = vmatpush1.xpose.msra.mxu0 0.0
        %4590 = vmatprep.subr.mxu0 0.0
        %4591 = vmatpush1.xpose.msra.mxu0 0.0
        %4592 = vmatprep.subr.mxu0 0.0
        %4593 = vmatpush1.xpose.msra.mxu0 0.0
        %4594 = vmatprep.subr.mxu0 0.0
        %4595 = vmatpush1.xpose.msra.mxu0 0.0
        %4596 = vmatprep.subr.mxu0 0.0
        %4597 = vmatpush1.xpose.msra.mxu0 0.0
        %4598 = vmatprep.subr.mxu0 0.0
        %4599 = vmatpush1.xpose.msra.mxu0 0.0
        %4600 = vmatprep.subr.mxu0 0.0
        %4601 = vmatpush1.xpose.msra.mxu0 0.0
        %4602 = vmatprep.subr.mxu0 0.0
        %4603 = vmatpush1.xpose.msra.mxu0 0.0
        %4604 = vmatprep.mubr.f32.mxu0 0.0
        %v4605 = vand.u32 %v4354, 4294901760
        %v4606 = vsub.f32 %v4354, %v4605
        %4607 = vmatmul.mubr.f32.gmra.mrb[0].mxu0 %v4606
        %v4608 = vpop.f32.mrb[0].mxu0
        %v4609 = vadd.f32 %v4527, %v4608
        %v4610 = vpop.f32.mrb[0].mxu0
        %4611 = vmatprep.mubr.f32.mxu0 0.0
        %v4612 = vand.u32 %v4356, 4294901760
        %v4613 = vsub.f32 %v4356, %v4612
        %4614 = vmatmul.mubr.f32.gmra.mrb[0].mxu0 %v4613
        %v4615 = vpop.f32.mrb[0].mxu0
        %v4616 = vadd.f32 %v4533, %v4615
        %v4617 = vpop.f32.mrb[0].mxu0
        %4618 = vdwg.mxu0
        %4619 = vmatprep.subr.mxu0 0.0
        %v4620 = vand.u32 %v4358, 4294901760
        %4621 = vmatpush1.xpose.msra.mxu0 %v4620
        %4622 = vmatprep.subr.mxu0 0.0
        %v4623 = vand.u32 %v4360, 4294901760
        %4624 = vmatpush1.xpose.msra.mxu0 %v4623
        %4625 = vmatprep.subr.mxu0 0.0
        %4626 = vmatpush1.xpose.msra.mxu0 0.0
        %4627 = vmatprep.subr.mxu0 0.0
        %4628 = vmatpush1.xpose.msra.mxu0 0.0
        %4629 = vmatprep.subr.mxu0 0.0
        %4630 = vmatpush1.xpose.msra.mxu0 0.0
        %4631 = vmatprep.subr.mxu0 0.0
        %4632 = vmatpush1.xpose.msra.mxu0 0.0
        %4633 = vmatprep.subr.mxu0 0.0
        %4634 = vmatpush1.xpose.msra.mxu0 0.0
        %4635 = vmatprep.subr.mxu0 0.0
        %4636 = vmatpush1.xpose.msra.mxu0 0.0
        %4637 = vmatprep.subr.mxu0 0.0
        %4638 = vmatpush1.xpose.msra.mxu0 0.0
        %4639 = vmatprep.subr.mxu0 0.0
        %4640 = vmatpush1.xpose.msra.mxu0 0.0
        %4641 = vmatprep.subr.mxu0 0.0
        %4642 = vmatpush1.xpose.msra.mxu0 0.0
        %4643 = vmatprep.subr.mxu0 0.0
        %4644 = vmatpush1.xpose.msra.mxu0 0.0
        %4645 = vmatprep.subr.mxu0 0.0
        %4646 = vmatpush1.xpose.msra.mxu0 0.0
        %4647 = vmatprep.subr.mxu0 0.0
        %4648 = vmatpush1.xpose.msra.mxu0 0.0
        %4649 = vmatprep.subr.mxu0 0.0
        %4650 = vmatpush1.xpose.msra.mxu0 0.0
        %4651 = vmatprep.subr.mxu0 0.0
        %4652 = vmatpush1.xpose.msra.mxu0 0.0
        %4653 = vmatprep.subr.mxu0 0.0
        %4654 = vmatpush1.xpose.msra.mxu0 0.0
        %4655 = vmatprep.subr.mxu0 0.0
        %4656 = vmatpush1.xpose.msra.mxu0 0.0
        %4657 = vmatprep.subr.mxu0 0.0
        %4658 = vmatpush1.xpose.msra.mxu0 0.0
        %4659 = vmatprep.subr.mxu0 0.0
        %4660 = vmatpush1.xpose.msra.mxu0 0.0
        %4661 = vmatprep.subr.mxu0 0.0
        %4662 = vmatpush1.xpose.msra.mxu0 0.0
        %4663 = vmatprep.subr.mxu0 0.0
        %4664 = vmatpush1.xpose.msra.mxu0 0.0
        %4665 = vmatprep.subr.mxu0 0.0
        %4666 = vmatpush1.xpose.msra.mxu0 0.0
        %4667 = vmatprep.subr.mxu0 0.0
        %4668 = vmatpush1.xpose.msra.mxu0 0.0
        %4669 = vmatprep.subr.mxu0 0.0
        %4670 = vmatpush1.xpose.msra.mxu0 0.0
        %4671 = vmatprep.subr.mxu0 0.0
        %4672 = vmatpush1.xpose.msra.mxu0 0.0
        %4673 = vmatprep.subr.mxu0 0.0
        %4674 = vmatpush1.xpose.msra.mxu0 0.0
        %4675 = vmatprep.subr.mxu0 0.0
        %4676 = vmatpush1.xpose.msra.mxu0 0.0
        %4677 = vmatprep.subr.mxu0 0.0
        %4678 = vmatpush1.xpose.msra.mxu0 0.0
        %4679 = vmatprep.subr.mxu0 0.0
        %4680 = vmatpush1.xpose.msra.mxu0 0.0
        %4681 = vmatprep.subr.mxu0 0.0
        %4682 = vmatpush1.xpose.msra.mxu0 0.0
        %4683 = vmatprep.subr.mxu0 0.0
        %4684 = vmatpush1.xpose.msra.mxu0 0.0
        %4685 = vmatprep.mubr.f32.mxu0 0.0
        %v4686 = vand.u32 %v4354, 4294901760
        %v4687 = vsub.f32 %v4354, %v4686
        %v4688 = vand.u32 %v4687, 4294901760
        %4689 = vmatmul.mubr.f32.gmra.mrb[0].mxu0 %v4688
        %v4690 = vpop.f32.mrb[0].mxu0
        %v4691 = vadd.f32 %v4609, %v4690
        %v4692 = vpop.f32.mrb[0].mxu0
        %4693 = vmatprep.mubr.f32.mxu0 0.0
        %v4694 = vand.u32 %v4356, 4294901760
        %v4695 = vsub.f32 %v4356, %v4694
        %v4696 = vand.u32 %v4695, 4294901760
        %4697 = vmatmul.mubr.f32.gmra.mrb[0].mxu0 %v4696
        %v4698 = vpop.f32.mrb[0].mxu0
        %v4699 = vadd.f32 %v4616, %v4698
        %v4700 = vpop.f32.mrb[0].mxu0
        %4701 = vdwg.mxu0
        %4702 = vmatprep.subr.mxu0 0.0
        %v4703 = vand.u32 %v4358, 4294901760
        %v4704 = vsub.f32 %v4358, %v4703
        %v4705 = vand.u32 %v4704, 4294901760
        %4706 = vmatpush1.xpose.msra.mxu0 %v4705
        %4707 = vmatprep.subr.mxu0 0.0
        %v4708 = vand.u32 %v4360, 4294901760
        %v4709 = vsub.f32 %v4360, %v4708
        %v4710 = vand.u32 %v4709, 4294901760
        %4711 = vmatpush1.xpose.msra.mxu0 %v4710
        %4712 = vmatprep.subr.mxu0 0.0
        %4713 = vmatpush1.xpose.msra.mxu0 0.0
        %4714 = vmatprep.subr.mxu0 0.0
        %4715 = vmatpush1.xpose.msra.mxu0 0.0
        %4716 = vmatprep.subr.mxu0 0.0
        %4717 = vmatpush1.xpose.msra.mxu0 0.0
        %4718 = vmatprep.subr.mxu0 0.0
        %4719 = vmatpush1.xpose.msra.mxu0 0.0
        %4720 = vmatprep.subr.mxu0 0.0
        %4721 = vmatpush1.xpose.msra.mxu0 0.0
        %4722 = vmatprep.subr.mxu0 0.0
        %4723 = vmatpush1.xpose.msra.mxu0 0.0
        %4724 = vmatprep.subr.mxu0 0.0
        %4725 = vmatpush1.xpose.msra.mxu0 0.0
        %4726 = vmatprep.subr.mxu0 0.0
        %4727 = vmatpush1.xpose.msra.mxu0 0.0
        %4728 = vmatprep.subr.mxu0 0.0
        %4729 = vmatpush1.xpose.msra.mxu0 0.0
        %4730 = vmatprep.subr.mxu0 0.0
        %4731 = vmatpush1.xpose.msra.mxu0 0.0
        %4732 = vmatprep.subr.mxu0 0.0
        %4733 = vmatpush1.xpose.msra.mxu0 0.0
        %4734 = vmatprep.subr.mxu0 0.0
        %4735 = vmatpush1.xpose.msra.mxu0 0.0
        %4736 = vmatprep.subr.mxu0 0.0
        %4737 = vmatpush1.xpose.msra.mxu0 0.0
        %4738 = vmatprep.subr.mxu0 0.0
        %4739 = vmatpush1.xpose.msra.mxu0 0.0
        %4740 = vmatprep.subr.mxu0 0.0
        %4741 = vmatpush1.xpose.msra.mxu0 0.0
        %4742 = vmatprep.subr.mxu0 0.0
        %4743 = vmatpush1.xpose.msra.mxu0 0.0
        %4744 = vmatprep.subr.mxu0 0.0
        %4745 = vmatpush1.xpose.msra.mxu0 0.0
        %4746 = vmatprep.subr.mxu0 0.0
        %4747 = vmatpush1.xpose.msra.mxu0 0.0
        %4748 = vmatprep.subr.mxu0 0.0
        %4749 = vmatpush1.xpose.msra.mxu0 0.0
        %4750 = vmatprep.subr.mxu0 0.0
        %4751 = vmatpush1.xpose.msra.mxu0 0.0
        %4752 = vmatprep.subr.mxu0 0.0
        %4753 = vmatpush1.xpose.msra.mxu0 0.0
        %4754 = vmatprep.subr.mxu0 0.0
        %4755 = vmatpush1.xpose.msra.mxu0 0.0
        %4756 = vmatprep.subr.mxu0 0.0
        %4757 = vmatpush1.xpose.msra.mxu0 0.0
        %4758 = vmatprep.subr.mxu0 0.0
        %4759 = vmatpush1.xpose.msra.mxu0 0.0
        %4760 = vmatprep.subr.mxu0 0.0
        %4761 = vmatpush1.xpose.msra.mxu0 0.0
        %4762 = vmatprep.subr.mxu0 0.0
        %4763 = vmatpush1.xpose.msra.mxu0 0.0
        %4764 = vmatprep.subr.mxu0 0.0
        %4765 = vmatpush1.xpose.msra.mxu0 0.0
        %4766 = vmatprep.subr.mxu0 0.0
        %4767 = vmatpush1.xpose.msra.mxu0 0.0
        %4768 = vmatprep.subr.mxu0 0.0
        %4769 = vmatpush1.xpose.msra.mxu0 0.0
        %4770 = vmatprep.subr.mxu0 0.0
        %4771 = vmatpush1.xpose.msra.mxu0 0.0
        %4772 = vmatprep.mubr.f32.mxu0 0.0
        %v4773 = vand.u32 %v4354, 4294901760
        %4774 = vmatmul.mubr.f32.gmra.mrb[0].mxu0 %v4773
        %v4775 = vpop.f32.mrb[0].mxu0
        %v4776 = vadd.f32 %v4691, %v4775
        %v4777 = vpop.f32.mrb[0].mxu0
        %4778 = vmatprep.mubr.f32.mxu0 0.0
        %v4779 = vand.u32 %v4356, 4294901760
        %4780 = vmatmul.mubr.f32.gmra.mrb[0].mxu0 %v4779
        %v4781 = vpop.f32.mrb[0].mxu0
        %v4782 = vadd.f32 %v4699, %v4781
        %v4783 = vpop.f32.mrb[0].mxu0
        %4784 = vdwg.mxu0
        %4785 = vmatprep.subr.mxu0 0.0
        %v4786 = vand.u32 %v4358, 4294901760
        %4787 = vmatpush1.xpose.msra.mxu0 %v4786
        %4788 = vmatprep.subr.mxu0 0.0
        %v4789 = vand.u32 %v4360, 4294901760
        %4790 = vmatpush1.xpose.msra.mxu0 %v4789
        %4791 = vmatprep.subr.mxu0 0.0
        %4792 = vmatpush1.xpose.msra.mxu0 0.0
        %4793 = vmatprep.subr.mxu0 0.0
        %4794 = vmatpush1.xpose.msra.mxu0 0.0
        %4795 = vmatprep.subr.mxu0 0.0
        %4796 = vmatpush1.xpose.msra.mxu0 0.0
        %4797 = vmatprep.subr.mxu0 0.0
        %4798 = vmatpush1.xpose.msra.mxu0 0.0
        %4799 = vmatprep.subr.mxu0 0.0
        %4800 = vmatpush1.xpose.msra.mxu0 0.0
        %4801 = vmatprep.subr.mxu0 0.0
        %4802 = vmatpush1.xpose.msra.mxu0 0.0
        %4803 = vmatprep.subr.mxu0 0.0
        %4804 = vmatpush1.xpose.msra.mxu0 0.0
        %4805 = vmatprep.subr.mxu0 0.0
        %4806 = vmatpush1.xpose.msra.mxu0 0.0
        %4807 = vmatprep.subr.mxu0 0.0
        %4808 = vmatpush1.xpose.msra.mxu0 0.0
        %4809 = vmatprep.subr.mxu0 0.0
        %4810 = vmatpush1.xpose.msra.mxu0 0.0
        %4811 = vmatprep.subr.mxu0 0.0
        %4812 = vmatpush1.xpose.msra.mxu0 0.0
        %4813 = vmatprep.subr.mxu0 0.0
        %4814 = vmatpush1.xpose.msra.mxu0 0.0
        %4815 = vmatprep.subr.mxu0 0.0
        %4816 = vmatpush1.xpose.msra.mxu0 0.0
        %4817 = vmatprep.subr.mxu0 0.0
        %4818 = vmatpush1.xpose.msra.mxu0 0.0
        %4819 = vmatprep.subr.mxu0 0.0
        %4820 = vmatpush1.xpose.msra.mxu0 0.0
        %4821 = vmatprep.subr.mxu0 0.0
        %4822 = vmatpush1.xpose.msra.mxu0 0.0
        %4823 = vmatprep.subr.mxu0 0.0
        %4824 = vmatpush1.xpose.msra.mxu0 0.0
        %4825 = vmatprep.subr.mxu0 0.0
        %4826 = vmatpush1.xpose.msra.mxu0 0.0
        %4827 = vmatprep.subr.mxu0 0.0
        %4828 = vmatpush1.xpose.msra.mxu0 0.0
        %4829 = vmatprep.subr.mxu0 0.0
        %4830 = vmatpush1.xpose.msra.mxu0 0.0
        %4831 = vmatprep.subr.mxu0 0.0
        %4832 = vmatpush1.xpose.msra.mxu0 0.0
        %4833 = vmatprep.subr.mxu0 0.0
        %4834 = vmatpush1.xpose.msra.mxu0 0.0
        %4835 = vmatprep.subr.mxu0 0.0
        %4836 = vmatpush1.xpose.msra.mxu0 0.0
        %4837 = vmatprep.subr.mxu0 0.0
        %4838 = vmatpush1.xpose.msra.mxu0 0.0
        %4839 = vmatprep.subr.mxu0 0.0
        %4840 = vmatpush1.xpose.msra.mxu0 0.0
        %4841 = vmatprep.subr.mxu0 0.0
        %4842 = vmatpush1.xpose.msra.mxu0 0.0
        %4843 = vmatprep.subr.mxu0 0.0
        %4844 = vmatpush1.xpose.msra.mxu0 0.0
        %4845 = vmatprep.subr.mxu0 0.0
        %4846 = vmatpush1.xpose.msra.mxu0 0.0
        %4847 = vmatprep.subr.mxu0 0.0
        %4848 = vmatpush1.xpose.msra.mxu0 0.0
        %4849 = vmatprep.subr.mxu0 0.0
        %4850 = vmatpush1.xpose.msra.mxu0 0.0
        %4851 = vmatprep.mubr.f32.mxu0 0.0
        %v4852 = vand.u32 %v4354, 4294901760
        %4853 = vmatmul.mubr.f32.gmra.mrb[0].mxu0 %v4852
        %v4854 = vpop.f32.mrb[0].mxu0
        %v4855 = vadd.f32 %v4776, %v4854
        %v4856 = vpop.f32.mrb[0].mxu0
        %4857 = vmatprep.mubr.f32.mxu0 0.0
        %v4858 = vand.u32 %v4356, 4294901760
        %4859 = vmatmul.mubr.f32.gmra.mrb[0].mxu0 %v4858
        %v4860 = vpop.f32.mrb[0].mxu0
        %v4861 = vadd.f32 %v4782, %v4860
        %v4862 = vpop.f32.mrb[0].mxu0
        %4863 = vdwg.mxu0
        %v4864 = vsel %vm2195, %v4855, -inf
        %4865 = vmax.xlane.f32.xlu0 %v4864
        %v4866 = vpop.xlane.xlu0 %4865
        %v4867 = vsel %vm2195, %v4861, -inf
        %4868 = vmax.xlane.f32.xlu0 %v4867
        %v4869 = vpop.xlane.xlu0 %4868
        %v4870 = vsub.f32 %v4855, %v4866
        %v4871 = vsub.f32 %v4861, %v4869
        %v4872 = vmul.f32 %v4870, 1.442695
        %v4873 = vpow.pop %v4872
        %v4874 = vmul.f32 %v4871, 1.442695
        %v4875 = vpow.pop %v4874
        %v4876 = vsel %vm2195, %v4873, 0.0
        %4877 = vadd.xlane.f32.xlu0 %v4876
        %v4878 = vpop.xlane.xlu0 %4877
        %v4879 = vsel %vm2195, %v4875, 0.0
        %4880 = vadd.xlane.f32.xlu0 %v4879
        %v4881 = vpop.xlane.xlu0 %4880
        %v4882 = vrcp.pop %v4878
        %v4883 = vrcp.pop %v4881
        %v4884 = vmul.f32 %v4878, %v4882
        %v4885 = vmul.f32 %v4881, %v4883
        %v4886 = vsub.f32 2.0, %v4884
        %v4887 = vsub.f32 2.0, %v4885
        %v4888 = vmul.f32 %v4882, %v4886
        %v4889 = vmul.f32 %v4883, %v4887
        %4890 = vrot.lane.b32.xlu0 %v2160, 64
        %v4891 = vpop.permute.xlu0 %4890
        %4892 = vrot.lane.b32.xlu0 %v2166, 64
        %v4893 = vpop.permute.xlu0 %4892
        %v4897 = vsel %vm2195, %v4873, 0
        %v4900 = vsel %vm2195, %v4875, 0
        %4902 = vmatprep.subr.mxu0 0.0
        %v4903 = vand.u32 %v4891, 4294901760
        %4904 = vmatpush1.msra.mxu0 %v4903
        %4905 = vmatprep.subr.mxu0 0.0
        %v4906 = vand.u32 %v4893, 4294901760
        %4907 = vmatpush1.msra.mxu0 %v4906
        %4908 = vmatprep.subr.mxu0 0.0
        %4909 = vmatpush1.msra.mxu0 0.0
        %4910 = vmatprep.subr.mxu0 0.0
        %4911 = vmatpush1.msra.mxu0 0.0
        %4912 = vmatprep.subr.mxu0 0.0
        %4913 = vmatpush1.msra.mxu0 0.0
        %4914 = vmatprep.subr.mxu0 0.0
        %4915 = vmatpush1.msra.mxu0 0.0
        %4916 = vmatprep.subr.mxu0 0.0
        %4917 = vmatpush1.msra.mxu0 0.0
        %4918 = vmatprep.subr.mxu0 0.0
        %4919 = vmatpush1.msra.mxu0 0.0
        %4920 = vmatprep.subr.mxu0 0.0
        %4921 = vmatpush1.msra.mxu0 0.0
        %4922 = vmatprep.subr.mxu0 0.0
        %4923 = vmatpush1.msra.mxu0 0.0
        %4924 = vmatprep.subr.mxu0 0.0
        %4925 = vmatpush1.msra.mxu0 0.0
        %4926 = vmatprep.subr.mxu0 0.0
        %4927 = vmatpush1.msra.mxu0 0.0
        %4928 = vmatprep.subr.mxu0 0.0
        %4929 = vmatpush1.msra.mxu0 0.0
        %4930 = vmatprep.subr.mxu0 0.0
        %4931 = vmatpush1.msra.mxu0 0.0
        %4932 = vmatprep.subr.mxu0 0.0
        %4933 = vmatpush1.msra.mxu0 0.0
        %4934 = vmatprep.subr.mxu0 0.0
        %4935 = vmatpush1.msra.mxu0 0.0
        %4936 = vmatprep.subr.mxu0 0.0
        %4937 = vmatpush1.msra.mxu0 0.0
        %4938 = vmatprep.subr.mxu0 0.0
        %4939 = vmatpush1.msra.mxu0 0.0
        %4940 = vmatprep.subr.mxu0 0.0
        %4941 = vmatpush1.msra.mxu0 0.0
        %4942 = vmatprep.subr.mxu0 0.0
        %4943 = vmatpush1.msra.mxu0 0.0
        %4944 = vmatprep.subr.mxu0 0.0
        %4945 = vmatpush1.msra.mxu0 0.0
        %4946 = vmatprep.subr.mxu0 0.0
        %4947 = vmatpush1.msra.mxu0 0.0
        %4948 = vmatprep.subr.mxu0 0.0
        %4949 = vmatpush1.msra.mxu0 0.0
        %4950 = vmatprep.subr.mxu0 0.0
        %4951 = vmatpush1.msra.mxu0 0.0
        %4952 = vmatprep.subr.mxu0 0.0
        %4953 = vmatpush1.msra.mxu0 0.0
        %4954 = vmatprep.subr.mxu0 0.0
        %4955 = vmatpush1.msra.mxu0 0.0
        %4956 = vmatprep.subr.mxu0 0.0
        %4957 = vmatpush1.msra.mxu0 0.0
        %4958 = vmatprep.subr.mxu0 0.0
        %4959 = vmatpush1.msra.mxu0 0.0
        %4960 = vmatprep.subr.mxu0 0.0
        %4961 = vmatpush1.msra.mxu0 0.0
        %4962 = vmatprep.subr.mxu0 0.0
        %4963 = vmatpush1.msra.mxu0 0.0
        %4964 = vmatprep.subr.mxu0 0.0
        %4965 = vmatpush1.msra.mxu0 0.0
        %4966 = vmatprep.subr.mxu0 0.0
        %4967 = vmatpush1.msra.mxu0 0.0
        %4968 = vmatprep.mubr.f32.mxu0 0.0
        %v4969 = vand.u32 %v4897, 4294901760
        %v4970 = vsub.f32 %v4897, %v4969
        %v4971 = vand.u32 %v4970, 4294901760
        %v4972 = vsub.f32 %v4970, %v4971
        %v4973 = vand.u32 %v4972, 4294901760
        %4974 = vmatmul.mubr.f32.gmra.mrb[0].mxu0 %v4973
        %v4975 = vpop.f32.mrb[0].mxu0
        %v4976 = vadd.f32 0.0, %v4975
        %v4977 = vpop.f32.mrb[0].mxu0
        %4978 = vmatprep.mubr.f32.mxu0 0.0
        %v4979 = vand.u32 %v4900, 4294901760
        %v4980 = vsub.f32 %v4900, %v4979
        %v4981 = vand.u32 %v4980, 4294901760
        %v4982 = vsub.f32 %v4980, %v4981
        %v4983 = vand.u32 %v4982, 4294901760
        %4984 = vmatmul.mubr.f32.gmra.mrb[0].mxu0 %v4983
        %v4985 = vpop.f32.mrb[0].mxu0
        %v4986 = vadd.f32 0.0, %v4985
        %v4987 = vpop.f32.mrb[0].mxu0
        %4988 = vdwg.mxu0
        %4989 = vmatprep.subr.mxu0 0.0
        %v4990 = vand.u32 %v4891, 4294901760
        %v4991 = vsub.f32 %v4891, %v4990
        %v4992 = vand.u32 %v4991, 4294901760
        %v4993 = vsub.f32 %v4991, %v4992
        %v4994 = vand.u32 %v4993, 4294901760
        %4995 = vmatpush1.msra.mxu0 %v4994
        %4996 = vmatprep.subr.mxu0 0.0
        %v4997 = vand.u32 %v4893, 4294901760
        %v4998 = vsub.f32 %v4893, %v4997
        %v4999 = vand.u32 %v4998, 4294901760
        %v5000 = vsub.f32 %v4998, %v4999
        %v5001 = vand.u32 %v5000, 4294901760
        %5002 = vmatpush1.msra.mxu0 %v5001
        %5003 = vmatprep.subr.mxu0 0.0
        %5004 = vmatpush1.msra.mxu0 0.0
        %5005 = vmatprep.subr.mxu0 0.0
        %5006 = vmatpush1.msra.mxu0 0.0
        %5007 = vmatprep.subr.mxu0 0.0
        %5008 = vmatpush1.msra.mxu0 0.0
        %5009 = vmatprep.subr.mxu0 0.0
        %5010 = vmatpush1.msra.mxu0 0.0
        %5011 = vmatprep.subr.mxu0 0.0
        %5012 = vmatpush1.msra.mxu0 0.0
        %5013 = vmatprep.subr.mxu0 0.0
        %5014 = vmatpush1.msra.mxu0 0.0
        %5015 = vmatprep.subr.mxu0 0.0
        %5016 = vmatpush1.msra.mxu0 0.0
        %5017 = vmatprep.subr.mxu0 0.0
        %5018 = vmatpush1.msra.mxu0 0.0
        %5019 = vmatprep.subr.mxu0 0.0
        %5020 = vmatpush1.msra.mxu0 0.0
        %5021 = vmatprep.subr.mxu0 0.0
        %5022 = vmatpush1.msra.mxu0 0.0
        %5023 = vmatprep.subr.mxu0 0.0
        %5024 = vmatpush1.msra.mxu0 0.0
        %5025 = vmatprep.subr.mxu0 0.0
        %5026 = vmatpush1.msra.mxu0 0.0
        %5027 = vmatprep.subr.mxu0 0.0
        %5028 = vmatpush1.msra.mxu0 0.0
        %5029 = vmatprep.subr.mxu0 0.0
        %5030 = vmatpush1.msra.mxu0 0.0
        %5031 = vmatprep.subr.mxu0 0.0
        %5032 = vmatpush1.msra.mxu0 0.0
        %5033 = vmatprep.subr.mxu0 0.0
        %5034 = vmatpush1.msra.mxu0 0.0
        %5035 = vmatprep.subr.mxu0 0.0
        %5036 = vmatpush1.msra.mxu0 0.0
        %5037 = vmatprep.subr.mxu0 0.0
        %5038 = vmatpush1.msra.mxu0 0.0
        %5039 = vmatprep.subr.mxu0 0.0
        %5040 = vmatpush1.msra.mxu0 0.0
        %5041 = vmatprep.subr.mxu0 0.0
        %5042 = vmatpush1.msra.mxu0 0.0
        %5043 = vmatprep.subr.mxu0 0.0
        %5044 = vmatpush1.msra.mxu0 0.0
        %5045 = vmatprep.subr.mxu0 0.0
        %5046 = vmatpush1.msra.mxu0 0.0
        %5047 = vmatprep.subr.mxu0 0.0
        %5048 = vmatpush1.msra.mxu0 0.0
        %5049 = vmatprep.subr.mxu0 0.0
        %5050 = vmatpush1.msra.mxu0 0.0
        %5051 = vmatprep.subr.mxu0 0.0
        %5052 = vmatpush1.msra.mxu0 0.0
        %5053 = vmatprep.subr.mxu0 0.0
        %5054 = vmatpush1.msra.mxu0 0.0
        %5055 = vmatprep.subr.mxu0 0.0
        %5056 = vmatpush1.msra.mxu0 0.0
        %5057 = vmatprep.subr.mxu0 0.0
        %5058 = vmatpush1.msra.mxu0 0.0
        %5059 = vmatprep.subr.mxu0 0.0
        %5060 = vmatpush1.msra.mxu0 0.0
        %5061 = vmatprep.subr.mxu0 0.0
        %5062 = vmatpush1.msra.mxu0 0.0
        %5063 = vmatprep.mubr.f32.mxu0 0.0
        %v5064 = vand.u32 %v4897, 4294901760
        %5065 = vmatmul.mubr.f32.gmra.mrb[0].mxu0 %v5064
        %v5066 = vpop.f32.mrb[0].mxu0
        %v5067 = vadd.f32 %v4976, %v5066
        %v5068 = vpop.f32.mrb[0].mxu0
        %5069 = vmatprep.mubr.f32.mxu0 0.0
        %v5070 = vand.u32 %v4900, 4294901760
        %5071 = vmatmul.mubr.f32.gmra.mrb[0].mxu0 %v5070
        %v5072 = vpop.f32.mrb[0].mxu0
        %v5073 = vadd.f32 %v4986, %v5072
        %v5074 = vpop.f32.mrb[0].mxu0
        %5075 = vdwg.mxu0
        %5076 = vmatprep.subr.mxu0 0.0
        %v5077 = vand.u32 %v4891, 4294901760
        %v5078 = vsub.f32 %v4891, %v5077
        %5079 = vmatpush1.msra.mxu0 %v5078
        %5080 = vmatprep.subr.mxu0 0.0
        %v5081 = vand.u32 %v4893, 4294901760
        %v5082 = vsub.f32 %v4893, %v5081
        %5083 = vmatpush1.msra.mxu0 %v5082
        %5084 = vmatprep.subr.mxu0 0.0
        %5085 = vmatpush1.msra.mxu0 0.0
        %5086 = vmatprep.subr.mxu0 0.0
        %5087 = vmatpush1.msra.mxu0 0.0
        %5088 = vmatprep.subr.mxu0 0.0
        %5089 = vmatpush1.msra.mxu0 0.0
        %5090 = vmatprep.subr.mxu0 0.0
        %5091 = vmatpush1.msra.mxu0 0.0
        %5092 = vmatprep.subr.mxu0 0.0
        %5093 = vmatpush1.msra.mxu0 0.0
        %5094 = vmatprep.subr.mxu0 0.0
        %5095 = vmatpush1.msra.mxu0 0.0
        %5096 = vmatprep.subr.mxu0 0.0
        %5097 = vmatpush1.msra.mxu0 0.0
        %5098 = vmatprep.subr.mxu0 0.0
        %5099 = vmatpush1.msra.mxu0 0.0
        %5100 = vmatprep.subr.mxu0 0.0
        %5101 = vmatpush1.msra.mxu0 0.0
        %5102 = vmatprep.subr.mxu0 0.0
        %5103 = vmatpush1.msra.mxu0 0.0
        %5104 = vmatprep.subr.mxu0 0.0
        %5105 = vmatpush1.msra.mxu0 0.0
        %5106 = vmatprep.subr.mxu0 0.0
        %5107 = vmatpush1.msra.mxu0 0.0
        %5108 = vmatprep.subr.mxu0 0.0
        %5109 = vmatpush1.msra.mxu0 0.0
        %5110 = vmatprep.subr.mxu0 0.0
        %5111 = vmatpush1.msra.mxu0 0.0
        %5112 = vmatprep.subr.mxu0 0.0
        %5113 = vmatpush1.msra.mxu0 0.0
        %5114 = vmatprep.subr.mxu0 0.0
        %5115 = vmatpush1.msra.mxu0 0.0
        %5116 = vmatprep.subr.mxu0 0.0
        %5117 = vmatpush1.msra.mxu0 0.0
        %5118 = vmatprep.subr.mxu0 0.0
        %5119 = vmatpush1.msra.mxu0 0.0
        %5120 = vmatprep.subr.mxu0 0.0
        %5121 = vmatpush1.msra.mxu0 0.0
        %5122 = vmatprep.subr.mxu0 0.0
        %5123 = vmatpush1.msra.mxu0 0.0
        %5124 = vmatprep.subr.mxu0 0.0
        %5125 = vmatpush1.msra.mxu0 0.0
        %5126 = vmatprep.subr.mxu0 0.0
        %5127 = vmatpush1.msra.mxu0 0.0
        %5128 = vmatprep.subr.mxu0 0.0
        %5129 = vmatpush1.msra.mxu0 0.0
        %5130 = vmatprep.subr.mxu0 0.0
        %5131 = vmatpush1.msra.mxu0 0.0
        %5132 = vmatprep.subr.mxu0 0.0
        %5133 = vmatpush1.msra.mxu0 0.0
        %5134 = vmatprep.subr.mxu0 0.0
        %5135 = vmatpush1.msra.mxu0 0.0
        %5136 = vmatprep.subr.mxu0 0.0
        %5137 = vmatpush1.msra.mxu0 0.0
        %5138 = vmatprep.subr.mxu0 0.0
        %5139 = vmatpush1.msra.mxu0 0.0
        %5140 = vmatprep.subr.mxu0 0.0
        %5141 = vmatpush1.msra.mxu0 0.0
        %5142 = vmatprep.subr.mxu0 0.0
        %5143 = vmatpush1.msra.mxu0 0.0
        %5144 = vmatprep.mubr.f32.mxu0 0.0
        %v5145 = vand.u32 %v4897, 4294901760
        %v5146 = vsub.f32 %v4897, %v5145
        %5147 = vmatmul.mubr.f32.gmra.mrb[0].mxu0 %v5146
        %v5148 = vpop.f32.mrb[0].mxu0
        %v5149 = vadd.f32 %v5067, %v5148
        %v5150 = vpop.f32.mrb[0].mxu0
        %5151 = vmatprep.mubr.f32.mxu0 0.0
        %v5152 = vand.u32 %v4900, 4294901760
        %v5153 = vsub.f32 %v4900, %v5152
        %5154 = vmatmul.mubr.f32.gmra.mrb[0].mxu0 %v5153
        %v5155 = vpop.f32.mrb[0].mxu0
        %v5156 = vadd.f32 %v5073, %v5155
        %v5157 = vpop.f32.mrb[0].mxu0
        %5158 = vdwg.mxu0
        %5159 = vmatprep.subr.mxu0 0.0
        %v5160 = vand.u32 %v4891, 4294901760
        %5161 = vmatpush1.msra.mxu0 %v5160
        %5162 = vmatprep.subr.mxu0 0.0
        %v5163 = vand.u32 %v4893, 4294901760
        %5164 = vmatpush1.msra.mxu0 %v5163
        %5165 = vmatprep.subr.mxu0 0.0
        %5166 = vmatpush1.msra.mxu0 0.0
        %5167 = vmatprep.subr.mxu0 0.0
        %5168 = vmatpush1.msra.mxu0 0.0
        %5169 = vmatprep.subr.mxu0 0.0
        %5170 = vmatpush1.msra.mxu0 0.0
        %5171 = vmatprep.subr.mxu0 0.0
        %5172 = vmatpush1.msra.mxu0 0.0
        %5173 = vmatprep.subr.mxu0 0.0
        %5174 = vmatpush1.msra.mxu0 0.0
        %5175 = vmatprep.subr.mxu0 0.0
        %5176 = vmatpush1.msra.mxu0 0.0
        %5177 = vmatprep.subr.mxu0 0.0
        %5178 = vmatpush1.msra.mxu0 0.0
        %5179 = vmatprep.subr.mxu0 0.0
        %5180 = vmatpush1.msra.mxu0 0.0
        %5181 = vmatprep.subr.mxu0 0.0
        %5182 = vmatpush1.msra.mxu0 0.0
        %5183 = vmatprep.subr.mxu0 0.0
        %5184 = vmatpush1.msra.mxu0 0.0
        %5185 = vmatprep.subr.mxu0 0.0
        %5186 = vmatpush1.msra.mxu0 0.0
        %5187 = vmatprep.subr.mxu0 0.0
        %5188 = vmatpush1.msra.mxu0 0.0
        %5189 = vmatprep.subr.mxu0 0.0
        %5190 = vmatpush1.msra.mxu0 0.0
        %5191 = vmatprep.subr.mxu0 0.0
        %5192 = vmatpush1.msra.mxu0 0.0
        %5193 = vmatprep.subr.mxu0 0.0
        %5194 = vmatpush1.msra.mxu0 0.0
        %5195 = vmatprep.subr.mxu0 0.0
        %5196 = vmatpush1.msra.mxu0 0.0
        %5197 = vmatprep.subr.mxu0 0.0
        %5198 = vmatpush1.msra.mxu0 0.0
        %5199 = vmatprep.subr.mxu0 0.0
        %5200 = vmatpush1.msra.mxu0 0.0
        %5201 = vmatprep.subr.mxu0 0.0
        %5202 = vmatpush1.msra.mxu0 0.0
        %5203 = vmatprep.subr.mxu0 0.0
        %5204 = vmatpush1.msra.mxu0 0.0
        %5205 = vmatprep.subr.mxu0 0.0
        %5206 = vmatpush1.msra.mxu0 0.0
        %5207 = vmatprep.subr.mxu0 0.0
        %5208 = vmatpush1.msra.mxu0 0.0
        %5209 = vmatprep.subr.mxu0 0.0
        %5210 = vmatpush1.msra.mxu0 0.0
        %5211 = vmatprep.subr.mxu0 0.0
        %5212 = vmatpush1.msra.mxu0 0.0
        %5213 = vmatprep.subr.mxu0 0.0
        %5214 = vmatpush1.msra.mxu0 0.0
        %5215 = vmatprep.subr.mxu0 0.0
        %5216 = vmatpush1.msra.mxu0 0.0
        %5217 = vmatprep.subr.mxu0 0.0
        %5218 = vmatpush1.msra.mxu0 0.0
        %5219 = vmatprep.subr.mxu0 0.0
        %5220 = vmatpush1.msra.mxu0 0.0
        %5221 = vmatprep.subr.mxu0 0.0
        %5222 = vmatpush1.msra.mxu0 0.0
        %5223 = vmatprep.subr.mxu0 0.0
        %5224 = vmatpush1.msra.mxu0 0.0
        %5225 = vmatprep.mubr.f32.mxu0 0.0
        %v5226 = vand.u32 %v4897, 4294901760
        %v5227 = vsub.f32 %v4897, %v5226
        %v5228 = vand.u32 %v5227, 4294901760
        %5229 = vmatmul.mubr.f32.gmra.mrb[0].mxu0 %v5228
        %v5230 = vpop.f32.mrb[0].mxu0
        %v5231 = vadd.f32 %v5149, %v5230
        %v5232 = vpop.f32.mrb[0].mxu0
        %5233 = vmatprep.mubr.f32.mxu0 0.0
        %v5234 = vand.u32 %v4900, 4294901760
        %v5235 = vsub.f32 %v4900, %v5234
        %v5236 = vand.u32 %v5235, 4294901760
        %5237 = vmatmul.mubr.f32.gmra.mrb[0].mxu0 %v5236
        %v5238 = vpop.f32.mrb[0].mxu0
        %v5239 = vadd.f32 %v5156, %v5238
        %v5240 = vpop.f32.mrb[0].mxu0
        %5241 = vdwg.mxu0
        %5242 = vmatprep.subr.mxu0 0.0
        %v5243 = vand.u32 %v4891, 4294901760
        %v5244 = vsub.f32 %v4891, %v5243
        %v5245 = vand.u32 %v5244, 4294901760
        %5246 = vmatpush1.msra.mxu0 %v5245
        %5247 = vmatprep.subr.mxu0 0.0
        %v5248 = vand.u32 %v4893, 4294901760
        %v5249 = vsub.f32 %v4893, %v5248
        %v5250 = vand.u32 %v5249, 4294901760
        %5251 = vmatpush1.msra.mxu0 %v5250
        %5252 = vmatprep.subr.mxu0 0.0
        %5253 = vmatpush1.msra.mxu0 0.0
        %5254 = vmatprep.subr.mxu0 0.0
        %5255 = vmatpush1.msra.mxu0 0.0
        %5256 = vmatprep.subr.mxu0 0.0
        %5257 = vmatpush1.msra.mxu0 0.0
        %5258 = vmatprep.subr.mxu0 0.0
        %5259 = vmatpush1.msra.mxu0 0.0
        %5260 = vmatprep.subr.mxu0 0.0
        %5261 = vmatpush1.msra.mxu0 0.0
        %5262 = vmatprep.subr.mxu0 0.0
        %5263 = vmatpush1.msra.mxu0 0.0
        %5264 = vmatprep.subr.mxu0 0.0
        %5265 = vmatpush1.msra.mxu0 0.0
        %5266 = vmatprep.subr.mxu0 0.0
        %5267 = vmatpush1.msra.mxu0 0.0
        %5268 = vmatprep.subr.mxu0 0.0
        %5269 = vmatpush1.msra.mxu0 0.0
        %5270 = vmatprep.subr.mxu0 0.0
        %5271 = vmatpush1.msra.mxu0 0.0
        %5272 = vmatprep.subr.mxu0 0.0
        %5273 = vmatpush1.msra.mxu0 0.0
        %5274 = vmatprep.subr.mxu0 0.0
        %5275 = vmatpush1.msra.mxu0 0.0
        %5276 = vmatprep.subr.mxu0 0.0
        %5277 = vmatpush1.msra.mxu0 0.0
        %5278 = vmatprep.subr.mxu0 0.0
        %5279 = vmatpush1.msra.mxu0 0.0
        %5280 = vmatprep.subr.mxu0 0.0
        %5281 = vmatpush1.msra.mxu0 0.0
        %5282 = vmatprep.subr.mxu0 0.0
        %5283 = vmatpush1.msra.mxu0 0.0
        %5284 = vmatprep.subr.mxu0 0.0
        %5285 = vmatpush1.msra.mxu0 0.0
        %5286 = vmatprep.subr.mxu0 0.0
        %5287 = vmatpush1.msra.mxu0 0.0
        %5288 = vmatprep.subr.mxu0 0.0
        %5289 = vmatpush1.msra.mxu0 0.0
        %5290 = vmatprep.subr.mxu0 0.0
        %5291 = vmatpush1.msra.mxu0 0.0
        %5292 = vmatprep.subr.mxu0 0.0
        %5293 = vmatpush1.msra.mxu0 0.0
        %5294 = vmatprep.subr.mxu0 0.0
        %5295 = vmatpush1.msra.mxu0 0.0
        %5296 = vmatprep.subr.mxu0 0.0
        %5297 = vmatpush1.msra.mxu0 0.0
        %5298 = vmatprep.subr.mxu0 0.0
        %5299 = vmatpush1.msra.mxu0 0.0
        %5300 = vmatprep.subr.mxu0 0.0
        %5301 = vmatpush1.msra.mxu0 0.0
        %5302 = vmatprep.subr.mxu0 0.0
        %5303 = vmatpush1.msra.mxu0 0.0
        %5304 = vmatprep.subr.mxu0 0.0
        %5305 = vmatpush1.msra.mxu0 0.0
        %5306 = vmatprep.subr.mxu0 0.0
        %5307 = vmatpush1.msra.mxu0 0.0
        %5308 = vmatprep.subr.mxu0 0.0
        %5309 = vmatpush1.msra.mxu0 0.0
        %5310 = vmatprep.subr.mxu0 0.0
        %5311 = vmatpush1.msra.mxu0 0.0
        %5312 = vmatprep.mubr.f32.mxu0 0.0
        %v5313 = vand.u32 %v4897, 4294901760
        %5314 = vmatmul.mubr.f32.gmra.mrb[0].mxu0 %v5313
        %v5315 = vpop.f32.mrb[0].mxu0
        %v5316 = vadd.f32 %v5231, %v5315
        %v5317 = vpop.f32.mrb[0].mxu0
        %5318 = vmatprep.mubr.f32.mxu0 0.0
        %v5319 = vand.u32 %v4900, 4294901760
        %5320 = vmatmul.mubr.f32.gmra.mrb[0].mxu0 %v5319
        %v5321 = vpop.f32.mrb[0].mxu0
        %v5322 = vadd.f32 %v5239, %v5321
        %v5323 = vpop.f32.mrb[0].mxu0
        %5324 = vdwg.mxu0
        %5325 = vmatprep.subr.mxu0 0.0
        %v5326 = vand.u32 %v4891, 4294901760
        %5327 = vmatpush1.msra.mxu0 %v5326
        %5328 = vmatprep.subr.mxu0 0.0
        %v5329 = vand.u32 %v4893, 4294901760
        %5330 = vmatpush1.msra.mxu0 %v5329
        %5331 = vmatprep.subr.mxu0 0.0
        %5332 = vmatpush1.msra.mxu0 0.0
        %5333 = vmatprep.subr.mxu0 0.0
        %5334 = vmatpush1.msra.mxu0 0.0
        %5335 = vmatprep.subr.mxu0 0.0
        %5336 = vmatpush1.msra.mxu0 0.0
        %5337 = vmatprep.subr.mxu0 0.0
        %5338 = vmatpush1.msra.mxu0 0.0
        %5339 = vmatprep.subr.mxu0 0.0
        %5340 = vmatpush1.msra.mxu0 0.0
        %5341 = vmatprep.subr.mxu0 0.0
        %5342 = vmatpush1.msra.mxu0 0.0
        %5343 = vmatprep.subr.mxu0 0.0
        %5344 = vmatpush1.msra.mxu0 0.0
        %5345 = vmatprep.subr.mxu0 0.0
        %5346 = vmatpush1.msra.mxu0 0.0
        %5347 = vmatprep.subr.mxu0 0.0
        %5348 = vmatpush1.msra.mxu0 0.0
        %5349 = vmatprep.subr.mxu0 0.0
        %5350 = vmatpush1.msra.mxu0 0.0
        %5351 = vmatprep.subr.mxu0 0.0
        %5352 = vmatpush1.msra.mxu0 0.0
        %5353 = vmatprep.subr.mxu0 0.0
        %5354 = vmatpush1.msra.mxu0 0.0
        %5355 = vmatprep.subr.mxu0 0.0
        %5356 = vmatpush1.msra.mxu0 0.0
        %5357 = vmatprep.subr.mxu0 0.0
        %5358 = vmatpush1.msra.mxu0 0.0
        %5359 = vmatprep.subr.mxu0 0.0
        %5360 = vmatpush1.msra.mxu0 0.0
        %5361 = vmatprep.subr.mxu0 0.0
        %5362 = vmatpush1.msra.mxu0 0.0
        %5363 = vmatprep.subr.mxu0 0.0
        %5364 = vmatpush1.msra.mxu0 0.0
        %5365 = vmatprep.subr.mxu0 0.0
        %5366 = vmatpush1.msra.mxu0 0.0
        %5367 = vmatprep.subr.mxu0 0.0
        %5368 = vmatpush1.msra.mxu0 0.0
        %5369 = vmatprep.subr.mxu0 0.0
        %5370 = vmatpush1.msra.mxu0 0.0
        %5371 = vmatprep.subr.mxu0 0.0
        %5372 = vmatpush1.msra.mxu0 0.0
        %5373 = vmatprep.subr.mxu0 0.0
        %5374 = vmatpush1.msra.mxu0 0.0
        %5375 = vmatprep.subr.mxu0 0.0
        %5376 = vmatpush1.msra.mxu0 0.0
        %5377 = vmatprep.subr.mxu0 0.0
        %5378 = vmatpush1.msra.mxu0 0.0
        %5379 = vmatprep.subr.mxu0 0.0
        %5380 = vmatpush1.msra.mxu0 0.0
        %5381 = vmatprep.subr.mxu0 0.0
        %5382 = vmatpush1.msra.mxu0 0.0
        %5383 = vmatprep.subr.mxu0 0.0
        %5384 = vmatpush1.msra.mxu0 0.0
        %5385 = vmatprep.subr.mxu0 0.0
        %5386 = vmatpush1.msra.mxu0 0.0
        %5387 = vmatprep.subr.mxu0 0.0
        %5388 = vmatpush1.msra.mxu0 0.0
        %5389 = vmatprep.subr.mxu0 0.0
        %5390 = vmatpush1.msra.mxu0 0.0
        %5391 = vmatprep.mubr.f32.mxu0 0.0
        %v5392 = vand.u32 %v4897, 4294901760
        %5393 = vmatmul.mubr.f32.gmra.mrb[0].mxu0 %v5392
        %v5394 = vpop.f32.mrb[0].mxu0
        %v5395 = vadd.f32 %v5316, %v5394
        %v5396 = vpop.f32.mrb[0].mxu0
        %5397 = vmatprep.mubr.f32.mxu0 0.0
        %v5398 = vand.u32 %v4900, 4294901760
        %5399 = vmatmul.mubr.f32.gmra.mrb[0].mxu0 %v5398
        %v5400 = vpop.f32.mrb[0].mxu0
        %v5401 = vadd.f32 %v5322, %v5400
        %v5402 = vpop.f32.mrb[0].mxu0
        %5403 = vdwg.mxu0
        %v5404 = vmul.f32 %v5395, %v4888
        %v5405 = vmul.f32 %v5401, %v4889
        %5406 = vrot.lane.b32.xlu0 %v2198, 32
        %v5407 = vpop.permute.xlu0 %5406
        %5408 = vrot.lane.b32.xlu0 %v2199, 32
        %v5409 = vpop.permute.xlu0 %5408
        %5410 = vrot.lane.b32.xlu0 %v2222, 32
        %v5411 = vpop.permute.xlu0 %5410
        %5412 = vrot.lane.b32.xlu0 %v2223, 32
        %v5413 = vpop.permute.xlu0 %5412
        %v5414 = vsel %vm2233, %v5407, 0
        %v5416 = vsel %vm2233, %v5409, 0
        %v5418 = vsel %vm2233, %v5411, 0
        %v5420 = vsel %vm2233, %v5413, 0
        %5422 = vmatprep.subr.mxu0 0.0
        %v5423 = vand.u32 %v5418, 4294901760
        %5424 = vmatpush1.xpose.msra.mxu0 %v5423
        %5425 = vmatprep.subr.mxu0 0.0
        %v5426 = vand.u32 %v5420, 4294901760
        %5427 = vmatpush1.xpose.msra.mxu0 %v5426
        %5428 = vmatprep.subr.mxu0 0.0
        %5429 = vmatpush1.xpose.msra.mxu0 0.0
        %5430 = vmatprep.subr.mxu0 0.0
        %5431 = vmatpush1.xpose.msra.mxu0 0.0
        %5432 = vmatprep.subr.mxu0 0.0
        %5433 = vmatpush1.xpose.msra.mxu0 0.0
        %5434 = vmatprep.subr.mxu0 0.0
        %5435 = vmatpush1.xpose.msra.mxu0 0.0
        %5436 = vmatprep.subr.mxu0 0.0
        %5437 = vmatpush1.xpose.msra.mxu0 0.0
        %5438 = vmatprep.subr.mxu0 0.0
        %5439 = vmatpush1.xpose.msra.mxu0 0.0
        %5440 = vmatprep.subr.mxu0 0.0
        %5441 = vmatpush1.xpose.msra.mxu0 0.0
        %5442 = vmatprep.subr.mxu0 0.0
        %5443 = vmatpush1.xpose.msra.mxu0 0.0
        %5444 = vmatprep.subr.mxu0 0.0
        %5445 = vmatpush1.xpose.msra.mxu0 0.0
        %5446 = vmatprep.subr.mxu0 0.0
        %5447 = vmatpush1.xpose.msra.mxu0 0.0
        %5448 = vmatprep.subr.mxu0 0.0
        %5449 = vmatpush1.xpose.msra.mxu0 0.0
        %5450 = vmatprep.subr.mxu0 0.0
        %5451 = vmatpush1.xpose.msra.mxu0 0.0
        %5452 = vmatprep.subr.mxu0 0.0
        %5453 = vmatpush1.xpose.msra.mxu0 0.0
        %5454 = vmatprep.subr.mxu0 0.0
        %5455 = vmatpush1.xpose.msra.mxu0 0.0
        %5456 = vmatprep.subr.mxu0 0.0
        %5457 = vmatpush1.xpose.msra.mxu0 0.0
        %5458 = vmatprep.subr.mxu0 0.0
        %5459 = vmatpush1.xpose.msra.mxu0 0.0
        %5460 = vmatprep.subr.mxu0 0.0
        %5461 = vmatpush1.xpose.msra.mxu0 0.0
        %5462 = vmatprep.subr.mxu0 0.0
        %5463 = vmatpush1.xpose.msra.mxu0 0.0
        %5464 = vmatprep.subr.mxu0 0.0
        %5465 = vmatpush1.xpose.msra.mxu0 0.0
        %5466 = vmatprep.subr.mxu0 0.0
        %5467 = vmatpush1.xpose.msra.mxu0 0.0
        %5468 = vmatprep.subr.mxu0 0.0
        %5469 = vmatpush1.xpose.msra.mxu0 0.0
        %5470 = vmatprep.subr.mxu0 0.0
        %5471 = vmatpush1.xpose.msra.mxu0 0.0
        %5472 = vmatprep.subr.mxu0 0.0
        %5473 = vmatpush1.xpose.msra.mxu0 0.0
        %5474 = vmatprep.subr.mxu0 0.0
        %5475 = vmatpush1.xpose.msra.mxu0 0.0
        %5476 = vmatprep.subr.mxu0 0.0
        %5477 = vmatpush1.xpose.msra.mxu0 0.0
        %5478 = vmatprep.subr.mxu0 0.0
        %5479 = vmatpush1.xpose.msra.mxu0 0.0
        %5480 = vmatprep.subr.mxu0 0.0
        %5481 = vmatpush1.xpose.msra.mxu0 0.0
        %5482 = vmatprep.subr.mxu0 0.0
        %5483 = vmatpush1.xpose.msra.mxu0 0.0
        %5484 = vmatprep.subr.mxu0 0.0
        %5485 = vmatpush1.xpose.msra.mxu0 0.0
        %5486 = vmatprep.subr.mxu0 0.0
        %5487 = vmatpush1.xpose.msra.mxu0 0.0
        %5488 = vmatprep.mubr.f32.mxu0 0.0
        %v5489 = vand.u32 %v5414, 4294901760
        %v5490 = vsub.f32 %v5414, %v5489
        %v5491 = vand.u32 %v5490, 4294901760
        %v5492 = vsub.f32 %v5490, %v5491
        %v5493 = vand.u32 %v5492, 4294901760
        %5494 = vmatmul.mubr.f32.gmra.mrb[0].mxu0 %v5493
        %v5495 = vpop.f32.mrb[0].mxu0
        %v5496 = vadd.f32 %v2231, %v5495
        %v5497 = vpop.f32.mrb[0].mxu0
        %5498 = vmatprep.mubr.f32.mxu0 0.0
        %v5499 = vand.u32 %v5416, 4294901760
        %v5500 = vsub.f32 %v5416, %v5499
        %v5501 = vand.u32 %v5500, 4294901760
        %v5502 = vsub.f32 %v5500, %v5501
        %v5503 = vand.u32 %v5502, 4294901760
        %5504 = vmatmul.mubr.f32.gmra.mrb[0].mxu0 %v5503
        %v5505 = vpop.f32.mrb[0].mxu0
        %v5506 = vadd.f32 %v2232, %v5505
        %v5507 = vpop.f32.mrb[0].mxu0
        %5508 = vdwg.mxu0
        %5509 = vmatprep.subr.mxu0 0.0
        %v5510 = vand.u32 %v5418, 4294901760
        %v5511 = vsub.f32 %v5418, %v5510
        %v5512 = vand.u32 %v5511, 4294901760
        %v5513 = vsub.f32 %v5511, %v5512
        %v5514 = vand.u32 %v5513, 4294901760
        %5515 = vmatpush1.xpose.msra.mxu0 %v5514
        %5516 = vmatprep.subr.mxu0 0.0
        %v5517 = vand.u32 %v5420, 4294901760
        %v5518 = vsub.f32 %v5420, %v5517
        %v5519 = vand.u32 %v5518, 4294901760
        %v5520 = vsub.f32 %v5518, %v5519
        %v5521 = vand.u32 %v5520, 4294901760
        %5522 = vmatpush1.xpose.msra.mxu0 %v5521
        %5523 = vmatprep.subr.mxu0 0.0
        %5524 = vmatpush1.xpose.msra.mxu0 0.0
        %5525 = vmatprep.subr.mxu0 0.0
        %5526 = vmatpush1.xpose.msra.mxu0 0.0
        %5527 = vmatprep.subr.mxu0 0.0
        %5528 = vmatpush1.xpose.msra.mxu0 0.0
        %5529 = vmatprep.subr.mxu0 0.0
        %5530 = vmatpush1.xpose.msra.mxu0 0.0
        %5531 = vmatprep.subr.mxu0 0.0
        %5532 = vmatpush1.xpose.msra.mxu0 0.0
        %5533 = vmatprep.subr.mxu0 0.0
        %5534 = vmatpush1.xpose.msra.mxu0 0.0
        %5535 = vmatprep.subr.mxu0 0.0
        %5536 = vmatpush1.xpose.msra.mxu0 0.0
        %5537 = vmatprep.subr.mxu0 0.0
        %5538 = vmatpush1.xpose.msra.mxu0 0.0
        %5539 = vmatprep.subr.mxu0 0.0
        %5540 = vmatpush1.xpose.msra.mxu0 0.0
        %5541 = vmatprep.subr.mxu0 0.0
        %5542 = vmatpush1.xpose.msra.mxu0 0.0
        %5543 = vmatprep.subr.mxu0 0.0
        %5544 = vmatpush1.xpose.msra.mxu0 0.0
        %5545 = vmatprep.subr.mxu0 0.0
        %5546 = vmatpush1.xpose.msra.mxu0 0.0
        %5547 = vmatprep.subr.mxu0 0.0
        %5548 = vmatpush1.xpose.msra.mxu0 0.0
        %5549 = vmatprep.subr.mxu0 0.0
        %5550 = vmatpush1.xpose.msra.mxu0 0.0
        %5551 = vmatprep.subr.mxu0 0.0
        %5552 = vmatpush1.xpose.msra.mxu0 0.0
        %5553 = vmatprep.subr.mxu0 0.0
        %5554 = vmatpush1.xpose.msra.mxu0 0.0
        %5555 = vmatprep.subr.mxu0 0.0
        %5556 = vmatpush1.xpose.msra.mxu0 0.0
        %5557 = vmatprep.subr.mxu0 0.0
        %5558 = vmatpush1.xpose.msra.mxu0 0.0
        %5559 = vmatprep.subr.mxu0 0.0
        %5560 = vmatpush1.xpose.msra.mxu0 0.0
        %5561 = vmatprep.subr.mxu0 0.0
        %5562 = vmatpush1.xpose.msra.mxu0 0.0
        %5563 = vmatprep.subr.mxu0 0.0
        %5564 = vmatpush1.xpose.msra.mxu0 0.0
        %5565 = vmatprep.subr.mxu0 0.0
        %5566 = vmatpush1.xpose.msra.mxu0 0.0
        %5567 = vmatprep.subr.mxu0 0.0
        %5568 = vmatpush1.xpose.msra.mxu0 0.0
        %5569 = vmatprep.subr.mxu0 0.0
        %5570 = vmatpush1.xpose.msra.mxu0 0.0
        %5571 = vmatprep.subr.mxu0 0.0
        %5572 = vmatpush1.xpose.msra.mxu0 0.0
        %5573 = vmatprep.subr.mxu0 0.0
        %5574 = vmatpush1.xpose.msra.mxu0 0.0
        %5575 = vmatprep.subr.mxu0 0.0
        %5576 = vmatpush1.xpose.msra.mxu0 0.0
        %5577 = vmatprep.subr.mxu0 0.0
        %5578 = vmatpush1.xpose.msra.mxu0 0.0
        %5579 = vmatprep.subr.mxu0 0.0
        %5580 = vmatpush1.xpose.msra.mxu0 0.0
        %5581 = vmatprep.subr.mxu0 0.0
        %5582 = vmatpush1.xpose.msra.mxu0 0.0
        %5583 = vmatprep.mubr.f32.mxu0 0.0
        %v5584 = vand.u32 %v5414, 4294901760
        %5585 = vmatmul.mubr.f32.gmra.mrb[0].mxu0 %v5584
        %v5586 = vpop.f32.mrb[0].mxu0
        %v5587 = vadd.f32 %v5496, %v5586
        %v5588 = vpop.f32.mrb[0].mxu0
        %5589 = vmatprep.mubr.f32.mxu0 0.0
        %v5590 = vand.u32 %v5416, 4294901760
        %5591 = vmatmul.mubr.f32.gmra.mrb[0].mxu0 %v5590
        %v5592 = vpop.f32.mrb[0].mxu0
        %v5593 = vadd.f32 %v5506, %v5592
        %v5594 = vpop.f32.mrb[0].mxu0
        %5595 = vdwg.mxu0
        %5596 = vmatprep.subr.mxu0 0.0
        %v5597 = vand.u32 %v5418, 4294901760
        %v5598 = vsub.f32 %v5418, %v5597
        %5599 = vmatpush1.xpose.msra.mxu0 %v5598
        %5600 = vmatprep.subr.mxu0 0.0
        %v5601 = vand.u32 %v5420, 4294901760
        %v5602 = vsub.f32 %v5420, %v5601
        %5603 = vmatpush1.xpose.msra.mxu0 %v5602
        %5604 = vmatprep.subr.mxu0 0.0
        %5605 = vmatpush1.xpose.msra.mxu0 0.0
        %5606 = vmatprep.subr.mxu0 0.0
        %5607 = vmatpush1.xpose.msra.mxu0 0.0
        %5608 = vmatprep.subr.mxu0 0.0
        %5609 = vmatpush1.xpose.msra.mxu0 0.0
        %5610 = vmatprep.subr.mxu0 0.0
        %5611 = vmatpush1.xpose.msra.mxu0 0.0
        %5612 = vmatprep.subr.mxu0 0.0
        %5613 = vmatpush1.xpose.msra.mxu0 0.0
        %5614 = vmatprep.subr.mxu0 0.0
        %5615 = vmatpush1.xpose.msra.mxu0 0.0
        %5616 = vmatprep.subr.mxu0 0.0
        %5617 = vmatpush1.xpose.msra.mxu0 0.0
        %5618 = vmatprep.subr.mxu0 0.0
        %5619 = vmatpush1.xpose.msra.mxu0 0.0
        %5620 = vmatprep.subr.mxu0 0.0
        %5621 = vmatpush1.xpose.msra.mxu0 0.0
        %5622 = vmatprep.subr.mxu0 0.0
        %5623 = vmatpush1.xpose.msra.mxu0 0.0
        %5624 = vmatprep.subr.mxu0 0.0
        %5625 = vmatpush1.xpose.msra.mxu0 0.0
        %5626 = vmatprep.subr.mxu0 0.0
        %5627 = vmatpush1.xpose.msra.mxu0 0.0
        %5628 = vmatprep.subr.mxu0 0.0
        %5629 = vmatpush1.xpose.msra.mxu0 0.0
        %5630 = vmatprep.subr.mxu0 0.0
        %5631 = vmatpush1.xpose.msra.mxu0 0.0
        %5632 = vmatprep.subr.mxu0 0.0
        %5633 = vmatpush1.xpose.msra.mxu0 0.0
        %5634 = vmatprep.subr.mxu0 0.0
        %5635 = vmatpush1.xpose.msra.mxu0 0.0
        %5636 = vmatprep.subr.mxu0 0.0
        %5637 = vmatpush1.xpose.msra.mxu0 0.0
        %5638 = vmatprep.subr.mxu0 0.0
        %5639 = vmatpush1.xpose.msra.mxu0 0.0
        %5640 = vmatprep.subr.mxu0 0.0
        %5641 = vmatpush1.xpose.msra.mxu0 0.0
        %5642 = vmatprep.subr.mxu0 0.0
        %5643 = vmatpush1.xpose.msra.mxu0 0.0
        %5644 = vmatprep.subr.mxu0 0.0
        %5645 = vmatpush1.xpose.msra.mxu0 0.0
        %5646 = vmatprep.subr.mxu0 0.0
        %5647 = vmatpush1.xpose.msra.mxu0 0.0
        %5648 = vmatprep.subr.mxu0 0.0
        %5649 = vmatpush1.xpose.msra.mxu0 0.0
        %5650 = vmatprep.subr.mxu0 0.0
        %5651 = vmatpush1.xpose.msra.mxu0 0.0
        %5652 = vmatprep.subr.mxu0 0.0
        %5653 = vmatpush1.xpose.msra.mxu0 0.0
        %5654 = vmatprep.subr.mxu0 0.0
        %5655 = vmatpush1.xpose.msra.mxu0 0.0
        %5656 = vmatprep.subr.mxu0 0.0
        %5657 = vmatpush1.xpose.msra.mxu0 0.0
        %5658 = vmatprep.subr.mxu0 0.0
        %5659 = vmatpush1.xpose.msra.mxu0 0.0
        %5660 = vmatprep.subr.mxu0 0.0
        %5661 = vmatpush1.xpose.msra.mxu0 0.0
        %5662 = vmatprep.subr.mxu0 0.0
        %5663 = vmatpush1.xpose.msra.mxu0 0.0
        %5664 = vmatprep.mubr.f32.mxu0 0.0
        %v5665 = vand.u32 %v5414, 4294901760
        %v5666 = vsub.f32 %v5414, %v5665
        %5667 = vmatmul.mubr.f32.gmra.mrb[0].mxu0 %v5666
        %v5668 = vpop.f32.mrb[0].mxu0
        %v5669 = vadd.f32 %v5587, %v5668
        %v5670 = vpop.f32.mrb[0].mxu0
        %5671 = vmatprep.mubr.f32.mxu0 0.0
        %v5672 = vand.u32 %v5416, 4294901760
        %v5673 = vsub.f32 %v5416, %v5672
        %5674 = vmatmul.mubr.f32.gmra.mrb[0].mxu0 %v5673
        %v5675 = vpop.f32.mrb[0].mxu0
        %v5676 = vadd.f32 %v5593, %v5675
        %v5677 = vpop.f32.mrb[0].mxu0
        %5678 = vdwg.mxu0
        %5679 = vmatprep.subr.mxu0 0.0
        %v5680 = vand.u32 %v5418, 4294901760
        %5681 = vmatpush1.xpose.msra.mxu0 %v5680
        %5682 = vmatprep.subr.mxu0 0.0
        %v5683 = vand.u32 %v5420, 4294901760
        %5684 = vmatpush1.xpose.msra.mxu0 %v5683
        %5685 = vmatprep.subr.mxu0 0.0
        %5686 = vmatpush1.xpose.msra.mxu0 0.0
        %5687 = vmatprep.subr.mxu0 0.0
        %5688 = vmatpush1.xpose.msra.mxu0 0.0
        %5689 = vmatprep.subr.mxu0 0.0
        %5690 = vmatpush1.xpose.msra.mxu0 0.0
        %5691 = vmatprep.subr.mxu0 0.0
        %5692 = vmatpush1.xpose.msra.mxu0 0.0
        %5693 = vmatprep.subr.mxu0 0.0
        %5694 = vmatpush1.xpose.msra.mxu0 0.0
        %5695 = vmatprep.subr.mxu0 0.0
        %5696 = vmatpush1.xpose.msra.mxu0 0.0
        %5697 = vmatprep.subr.mxu0 0.0
        %5698 = vmatpush1.xpose.msra.mxu0 0.0
        %5699 = vmatprep.subr.mxu0 0.0
        %5700 = vmatpush1.xpose.msra.mxu0 0.0
        %5701 = vmatprep.subr.mxu0 0.0
        %5702 = vmatpush1.xpose.msra.mxu0 0.0
        %5703 = vmatprep.subr.mxu0 0.0
        %5704 = vmatpush1.xpose.msra.mxu0 0.0
        %5705 = vmatprep.subr.mxu0 0.0
        %5706 = vmatpush1.xpose.msra.mxu0 0.0
        %5707 = vmatprep.subr.mxu0 0.0
        %5708 = vmatpush1.xpose.msra.mxu0 0.0
        %5709 = vmatprep.subr.mxu0 0.0
        %5710 = vmatpush1.xpose.msra.mxu0 0.0
        %5711 = vmatprep.subr.mxu0 0.0
        %5712 = vmatpush1.xpose.msra.mxu0 0.0
        %5713 = vmatprep.subr.mxu0 0.0
        %5714 = vmatpush1.xpose.msra.mxu0 0.0
        %5715 = vmatprep.subr.mxu0 0.0
        %5716 = vmatpush1.xpose.msra.mxu0 0.0
        %5717 = vmatprep.subr.mxu0 0.0
        %5718 = vmatpush1.xpose.msra.mxu0 0.0
        %5719 = vmatprep.subr.mxu0 0.0
        %5720 = vmatpush1.xpose.msra.mxu0 0.0
        %5721 = vmatprep.subr.mxu0 0.0
        %5722 = vmatpush1.xpose.msra.mxu0 0.0
        %5723 = vmatprep.subr.mxu0 0.0
        %5724 = vmatpush1.xpose.msra.mxu0 0.0
        %5725 = vmatprep.subr.mxu0 0.0
        %5726 = vmatpush1.xpose.msra.mxu0 0.0
        %5727 = vmatprep.subr.mxu0 0.0
        %5728 = vmatpush1.xpose.msra.mxu0 0.0
        %5729 = vmatprep.subr.mxu0 0.0
        %5730 = vmatpush1.xpose.msra.mxu0 0.0
        %5731 = vmatprep.subr.mxu0 0.0
        %5732 = vmatpush1.xpose.msra.mxu0 0.0
        %5733 = vmatprep.subr.mxu0 0.0
        %5734 = vmatpush1.xpose.msra.mxu0 0.0
        %5735 = vmatprep.subr.mxu0 0.0
        %5736 = vmatpush1.xpose.msra.mxu0 0.0
        %5737 = vmatprep.subr.mxu0 0.0
        %5738 = vmatpush1.xpose.msra.mxu0 0.0
        %5739 = vmatprep.subr.mxu0 0.0
        %5740 = vmatpush1.xpose.msra.mxu0 0.0
        %5741 = vmatprep.subr.mxu0 0.0
        %5742 = vmatpush1.xpose.msra.mxu0 0.0
        %5743 = vmatprep.subr.mxu0 0.0
        %5744 = vmatpush1.xpose.msra.mxu0 0.0
        %5745 = vmatprep.mubr.f32.mxu0 0.0
        %v5746 = vand.u32 %v5414, 4294901760
        %v5747 = vsub.f32 %v5414, %v5746
        %v5748 = vand.u32 %v5747, 4294901760
        %5749 = vmatmul.mubr.f32.gmra.mrb[0].mxu0 %v5748
        %v5750 = vpop.f32.mrb[0].mxu0
        %v5751 = vadd.f32 %v5669, %v5750
        %v5752 = vpop.f32.mrb[0].mxu0
        %5753 = vmatprep.mubr.f32.mxu0 0.0
        %v5754 = vand.u32 %v5416, 4294901760
        %v5755 = vsub.f32 %v5416, %v5754
        %v5756 = vand.u32 %v5755, 4294901760
        %5757 = vmatmul.mubr.f32.gmra.mrb[0].mxu0 %v5756
        %v5758 = vpop.f32.mrb[0].mxu0
        %v5759 = vadd.f32 %v5676, %v5758
        %v5760 = vpop.f32.mrb[0].mxu0
        %5761 = vdwg.mxu0
        %5762 = vmatprep.subr.mxu0 0.0
        %v5763 = vand.u32 %v5418, 4294901760
        %v5764 = vsub.f32 %v5418, %v5763
        %v5765 = vand.u32 %v5764, 4294901760
        %5766 = vmatpush1.xpose.msra.mxu0 %v5765
        %5767 = vmatprep.subr.mxu0 0.0
        %v5768 = vand.u32 %v5420, 4294901760
        %v5769 = vsub.f32 %v5420, %v5768
        %v5770 = vand.u32 %v5769, 4294901760
        %5771 = vmatpush1.xpose.msra.mxu0 %v5770
        %5772 = vmatprep.subr.mxu0 0.0
        %5773 = vmatpush1.xpose.msra.mxu0 0.0
        %5774 = vmatprep.subr.mxu0 0.0
        %5775 = vmatpush1.xpose.msra.mxu0 0.0
        %5776 = vmatprep.subr.mxu0 0.0
        %5777 = vmatpush1.xpose.msra.mxu0 0.0
        %5778 = vmatprep.subr.mxu0 0.0
        %5779 = vmatpush1.xpose.msra.mxu0 0.0
        %5780 = vmatprep.subr.mxu0 0.0
        %5781 = vmatpush1.xpose.msra.mxu0 0.0
        %5782 = vmatprep.subr.mxu0 0.0
        %5783 = vmatpush1.xpose.msra.mxu0 0.0
        %5784 = vmatprep.subr.mxu0 0.0
        %5785 = vmatpush1.xpose.msra.mxu0 0.0
        %5786 = vmatprep.subr.mxu0 0.0
        %5787 = vmatpush1.xpose.msra.mxu0 0.0
        %5788 = vmatprep.subr.mxu0 0.0
        %5789 = vmatpush1.xpose.msra.mxu0 0.0
        %5790 = vmatprep.subr.mxu0 0.0
        %5791 = vmatpush1.xpose.msra.mxu0 0.0
        %5792 = vmatprep.subr.mxu0 0.0
        %5793 = vmatpush1.xpose.msra.mxu0 0.0
        %5794 = vmatprep.subr.mxu0 0.0
        %5795 = vmatpush1.xpose.msra.mxu0 0.0
        %5796 = vmatprep.subr.mxu0 0.0
        %5797 = vmatpush1.xpose.msra.mxu0 0.0
        %5798 = vmatprep.subr.mxu0 0.0
        %5799 = vmatpush1.xpose.msra.mxu0 0.0
        %5800 = vmatprep.subr.mxu0 0.0
        %5801 = vmatpush1.xpose.msra.mxu0 0.0
        %5802 = vmatprep.subr.mxu0 0.0
        %5803 = vmatpush1.xpose.msra.mxu0 0.0
        %5804 = vmatprep.subr.mxu0 0.0
        %5805 = vmatpush1.xpose.msra.mxu0 0.0
        %5806 = vmatprep.subr.mxu0 0.0
        %5807 = vmatpush1.xpose.msra.mxu0 0.0
        %5808 = vmatprep.subr.mxu0 0.0
        %5809 = vmatpush1.xpose.msra.mxu0 0.0
        %5810 = vmatprep.subr.mxu0 0.0
        %5811 = vmatpush1.xpose.msra.mxu0 0.0
        %5812 = vmatprep.subr.mxu0 0.0
        %5813 = vmatpush1.xpose.msra.mxu0 0.0
        %5814 = vmatprep.subr.mxu0 0.0
        %5815 = vmatpush1.xpose.msra.mxu0 0.0
        %5816 = vmatprep.subr.mxu0 0.0
        %5817 = vmatpush1.xpose.msra.mxu0 0.0
        %5818 = vmatprep.subr.mxu0 0.0
        %5819 = vmatpush1.xpose.msra.mxu0 0.0
        %5820 = vmatprep.subr.mxu0 0.0
        %5821 = vmatpush1.xpose.msra.mxu0 0.0
        %5822 = vmatprep.subr.mxu0 0.0
        %5823 = vmatpush1.xpose.msra.mxu0 0.0
        %5824 = vmatprep.subr.mxu0 0.0
        %5825 = vmatpush1.xpose.msra.mxu0 0.0
        %5826 = vmatprep.subr.mxu0 0.0
        %5827 = vmatpush1.xpose.msra.mxu0 0.0
        %5828 = vmatprep.subr.mxu0 0.0
        %5829 = vmatpush1.xpose.msra.mxu0 0.0
        %5830 = vmatprep.subr.mxu0 0.0
        %5831 = vmatpush1.xpose.msra.mxu0 0.0
        %5832 = vmatprep.mubr.f32.mxu0 0.0
        %v5833 = vand.u32 %v5414, 4294901760
        %5834 = vmatmul.mubr.f32.gmra.mrb[0].mxu0 %v5833
        %v5835 = vpop.f32.mrb[0].mxu0
        %v5836 = vadd.f32 %v5751, %v5835
        %v5837 = vpop.f32.mrb[0].mxu0
        %5838 = vmatprep.mubr.f32.mxu0 0.0
        %v5839 = vand.u32 %v5416, 4294901760
        %5840 = vmatmul.mubr.f32.gmra.mrb[0].mxu0 %v5839
        %v5841 = vpop.f32.mrb[0].mxu0
        %v5842 = vadd.f32 %v5759, %v5841
        %v5843 = vpop.f32.mrb[0].mxu0
        %5844 = vdwg.mxu0
        %5845 = vmatprep.subr.mxu0 0.0
        %v5846 = vand.u32 %v5418, 4294901760
        %5847 = vmatpush1.xpose.msra.mxu0 %v5846
        %5848 = vmatprep.subr.mxu0 0.0
        %v5849 = vand.u32 %v5420, 4294901760
        %5850 = vmatpush1.xpose.msra.mxu0 %v5849
        %5851 = vmatprep.subr.mxu0 0.0
        %5852 = vmatpush1.xpose.msra.mxu0 0.0
        %5853 = vmatprep.subr.mxu0 0.0
        %5854 = vmatpush1.xpose.msra.mxu0 0.0
        %5855 = vmatprep.subr.mxu0 0.0
        %5856 = vmatpush1.xpose.msra.mxu0 0.0
        %5857 = vmatprep.subr.mxu0 0.0
        %5858 = vmatpush1.xpose.msra.mxu0 0.0
        %5859 = vmatprep.subr.mxu0 0.0
        %5860 = vmatpush1.xpose.msra.mxu0 0.0
        %5861 = vmatprep.subr.mxu0 0.0
        %5862 = vmatpush1.xpose.msra.mxu0 0.0
        %5863 = vmatprep.subr.mxu0 0.0
        %5864 = vmatpush1.xpose.msra.mxu0 0.0
        %5865 = vmatprep.subr.mxu0 0.0
        %5866 = vmatpush1.xpose.msra.mxu0 0.0
        %5867 = vmatprep.subr.mxu0 0.0
        %5868 = vmatpush1.xpose.msra.mxu0 0.0
        %5869 = vmatprep.subr.mxu0 0.0
        %5870 = vmatpush1.xpose.msra.mxu0 0.0
        %5871 = vmatprep.subr.mxu0 0.0
        %5872 = vmatpush1.xpose.msra.mxu0 0.0
        %5873 = vmatprep.subr.mxu0 0.0
        %5874 = vmatpush1.xpose.msra.mxu0 0.0
        %5875 = vmatprep.subr.mxu0 0.0
        %5876 = vmatpush1.xpose.msra.mxu0 0.0
        %5877 = vmatprep.subr.mxu0 0.0
        %5878 = vmatpush1.xpose.msra.mxu0 0.0
        %5879 = vmatprep.subr.mxu0 0.0
        %5880 = vmatpush1.xpose.msra.mxu0 0.0
        %5881 = vmatprep.subr.mxu0 0.0
        %5882 = vmatpush1.xpose.msra.mxu0 0.0
        %5883 = vmatprep.subr.mxu0 0.0
        %5884 = vmatpush1.xpose.msra.mxu0 0.0
        %5885 = vmatprep.subr.mxu0 0.0
        %5886 = vmatpush1.xpose.msra.mxu0 0.0
        %5887 = vmatprep.subr.mxu0 0.0
        %5888 = vmatpush1.xpose.msra.mxu0 0.0
        %5889 = vmatprep.subr.mxu0 0.0
        %5890 = vmatpush1.xpose.msra.mxu0 0.0
        %5891 = vmatprep.subr.mxu0 0.0
        %5892 = vmatpush1.xpose.msra.mxu0 0.0
        %5893 = vmatprep.subr.mxu0 0.0
        %5894 = vmatpush1.xpose.msra.mxu0 0.0
        %5895 = vmatprep.subr.mxu0 0.0
        %5896 = vmatpush1.xpose.msra.mxu0 0.0
        %5897 = vmatprep.subr.mxu0 0.0
        %5898 = vmatpush1.xpose.msra.mxu0 0.0
        %5899 = vmatprep.subr.mxu0 0.0
        %5900 = vmatpush1.xpose.msra.mxu0 0.0
        %5901 = vmatprep.subr.mxu0 0.0
        %5902 = vmatpush1.xpose.msra.mxu0 0.0
        %5903 = vmatprep.subr.mxu0 0.0
        %5904 = vmatpush1.xpose.msra.mxu0 0.0
        %5905 = vmatprep.subr.mxu0 0.0
        %5906 = vmatpush1.xpose.msra.mxu0 0.0
        %5907 = vmatprep.subr.mxu0 0.0
        %5908 = vmatpush1.xpose.msra.mxu0 0.0
        %5909 = vmatprep.subr.mxu0 0.0
        %5910 = vmatpush1.xpose.msra.mxu0 0.0
        %5911 = vmatprep.mubr.f32.mxu0 0.0
        %v5912 = vand.u32 %v5414, 4294901760
        %5913 = vmatmul.mubr.f32.gmra.mrb[0].mxu0 %v5912
        %v5914 = vpop.f32.mrb[0].mxu0
        %v5915 = vadd.f32 %v5836, %v5914
        %v5916 = vpop.f32.mrb[0].mxu0
        %5917 = vmatprep.mubr.f32.mxu0 0.0
        %v5918 = vand.u32 %v5416, 4294901760
        %5919 = vmatmul.mubr.f32.gmra.mrb[0].mxu0 %v5918
        %v5920 = vpop.f32.mrb[0].mxu0
        %v5921 = vadd.f32 %v5842, %v5920
        %v5922 = vpop.f32.mrb[0].mxu0
        %5923 = vdwg.mxu0
        %v5924 = vsel %vm2195, %v5915, -inf
        %5925 = vmax.xlane.f32.xlu0 %v5924
        %v5926 = vpop.xlane.xlu0 %5925
        %v5927 = vsel %vm2195, %v5921, -inf
        %5928 = vmax.xlane.f32.xlu0 %v5927
        %v5929 = vpop.xlane.xlu0 %5928
        %v5930 = vsub.f32 %v5915, %v5926
        %v5931 = vsub.f32 %v5921, %v5929
        %v5932 = vmul.f32 %v5930, 1.442695
        %v5933 = vpow.pop %v5932
        %v5934 = vmul.f32 %v5931, 1.442695
        %v5935 = vpow.pop %v5934
        %v5936 = vsel %vm2195, %v5933, 0.0
        %5937 = vadd.xlane.f32.xlu0 %v5936
        %v5938 = vpop.xlane.xlu0 %5937
        %v5939 = vsel %vm2195, %v5935, 0.0
        %5940 = vadd.xlane.f32.xlu0 %v5939
        %v5941 = vpop.xlane.xlu0 %5940
        %v5942 = vrcp.pop %v5938
        %v5943 = vrcp.pop %v5941
        %v5944 = vmul.f32 %v5938, %v5942
        %v5945 = vmul.f32 %v5941, %v5943
        %v5946 = vsub.f32 2.0, %v5944
        %v5947 = vsub.f32 2.0, %v5945
        %v5948 = vmul.f32 %v5942, %v5946
        %v5949 = vmul.f32 %v5943, %v5947
        %5950 = vrot.lane.b32.xlu0 %v2160, 32
        %v5951 = vpop.permute.xlu0 %5950
        %5952 = vrot.lane.b32.xlu0 %v2166, 32
        %v5953 = vpop.permute.xlu0 %5952
        %v5957 = vsel %vm2195, %v5933, 0
        %v5960 = vsel %vm2195, %v5935, 0
        %5962 = vmatprep.subr.mxu0 0.0
        %v5963 = vand.u32 %v5951, 4294901760
        %5964 = vmatpush1.msra.mxu0 %v5963
        %5965 = vmatprep.subr.mxu0 0.0
        %v5966 = vand.u32 %v5953, 4294901760
        %5967 = vmatpush1.msra.mxu0 %v5966
        %5968 = vmatprep.subr.mxu0 0.0
        %5969 = vmatpush1.msra.mxu0 0.0
        %5970 = vmatprep.subr.mxu0 0.0
        %5971 = vmatpush1.msra.mxu0 0.0
        %5972 = vmatprep.subr.mxu0 0.0
        %5973 = vmatpush1.msra.mxu0 0.0
        %5974 = vmatprep.subr.mxu0 0.0
        %5975 = vmatpush1.msra.mxu0 0.0
        %5976 = vmatprep.subr.mxu0 0.0
        %5977 = vmatpush1.msra.mxu0 0.0
        %5978 = vmatprep.subr.mxu0 0.0
        %5979 = vmatpush1.msra.mxu0 0.0
        %5980 = vmatprep.subr.mxu0 0.0
        %5981 = vmatpush1.msra.mxu0 0.0
        %5982 = vmatprep.subr.mxu0 0.0
        %5983 = vmatpush1.msra.mxu0 0.0
        %5984 = vmatprep.subr.mxu0 0.0
        %5985 = vmatpush1.msra.mxu0 0.0
        %5986 = vmatprep.subr.mxu0 0.0
        %5987 = vmatpush1.msra.mxu0 0.0
        %5988 = vmatprep.subr.mxu0 0.0
        %5989 = vmatpush1.msra.mxu0 0.0
        %5990 = vmatprep.subr.mxu0 0.0
        %5991 = vmatpush1.msra.mxu0 0.0
        %5992 = vmatprep.subr.mxu0 0.0
        %5993 = vmatpush1.msra.mxu0 0.0
        %5994 = vmatprep.subr.mxu0 0.0
        %5995 = vmatpush1.msra.mxu0 0.0
        %5996 = vmatprep.subr.mxu0 0.0
        %5997 = vmatpush1.msra.mxu0 0.0
        %5998 = vmatprep.subr.mxu0 0.0
        %5999 = vmatpush1.msra.mxu0 0.0
        %6000 = vmatprep.subr.mxu0 0.0
        %6001 = vmatpush1.msra.mxu0 0.0
        %6002 = vmatprep.subr.mxu0 0.0
        %6003 = vmatpush1.msra.mxu0 0.0
        %6004 = vmatprep.subr.mxu0 0.0
        %6005 = vmatpush1.msra.mxu0 0.0
        %6006 = vmatprep.subr.mxu0 0.0
        %6007 = vmatpush1.msra.mxu0 0.0
        %6008 = vmatprep.subr.mxu0 0.0
        %6009 = vmatpush1.msra.mxu0 0.0
        %6010 = vmatprep.subr.mxu0 0.0
        %6011 = vmatpush1.msra.mxu0 0.0
        %6012 = vmatprep.subr.mxu0 0.0
        %6013 = vmatpush1.msra.mxu0 0.0
        %6014 = vmatprep.subr.mxu0 0.0
        %6015 = vmatpush1.msra.mxu0 0.0
        %6016 = vmatprep.subr.mxu0 0.0
        %6017 = vmatpush1.msra.mxu0 0.0
        %6018 = vmatprep.subr.mxu0 0.0
        %6019 = vmatpush1.msra.mxu0 0.0
        %6020 = vmatprep.subr.mxu0 0.0
        %6021 = vmatpush1.msra.mxu0 0.0
        %6022 = vmatprep.subr.mxu0 0.0
        %6023 = vmatpush1.msra.mxu0 0.0
        %6024 = vmatprep.subr.mxu0 0.0
        %6025 = vmatpush1.msra.mxu0 0.0
        %6026 = vmatprep.subr.mxu0 0.0
        %6027 = vmatpush1.msra.mxu0 0.0
        %6028 = vmatprep.mubr.f32.mxu0 0.0
        %v6029 = vand.u32 %v5957, 4294901760
        %v6030 = vsub.f32 %v5957, %v6029
        %v6031 = vand.u32 %v6030, 4294901760
        %v6032 = vsub.f32 %v6030, %v6031
        %v6033 = vand.u32 %v6032, 4294901760
        %6034 = vmatmul.mubr.f32.gmra.mrb[0].mxu0 %v6033
        %v6035 = vpop.f32.mrb[0].mxu0
        %v6036 = vadd.f32 0.0, %v6035
        %v6037 = vpop.f32.mrb[0].mxu0
        %6038 = vmatprep.mubr.f32.mxu0 0.0
        %v6039 = vand.u32 %v5960, 4294901760
        %v6040 = vsub.f32 %v5960, %v6039
        %v6041 = vand.u32 %v6040, 4294901760
        %v6042 = vsub.f32 %v6040, %v6041
        %v6043 = vand.u32 %v6042, 4294901760
        %6044 = vmatmul.mubr.f32.gmra.mrb[0].mxu0 %v6043
        %v6045 = vpop.f32.mrb[0].mxu0
        %v6046 = vadd.f32 0.0, %v6045
        %v6047 = vpop.f32.mrb[0].mxu0
        %6048 = vdwg.mxu0
        %6049 = vmatprep.subr.mxu0 0.0
        %v6050 = vand.u32 %v5951, 4294901760
        %v6051 = vsub.f32 %v5951, %v6050
        %v6052 = vand.u32 %v6051, 4294901760
        %v6053 = vsub.f32 %v6051, %v6052
        %v6054 = vand.u32 %v6053, 4294901760
        %6055 = vmatpush1.msra.mxu0 %v6054
        %6056 = vmatprep.subr.mxu0 0.0
        %v6057 = vand.u32 %v5953, 4294901760
        %v6058 = vsub.f32 %v5953, %v6057
        %v6059 = vand.u32 %v6058, 4294901760
        %v6060 = vsub.f32 %v6058, %v6059
        %v6061 = vand.u32 %v6060, 4294901760
        %6062 = vmatpush1.msra.mxu0 %v6061
        %6063 = vmatprep.subr.mxu0 0.0
        %6064 = vmatpush1.msra.mxu0 0.0
        %6065 = vmatprep.subr.mxu0 0.0
        %6066 = vmatpush1.msra.mxu0 0.0
        %6067 = vmatprep.subr.mxu0 0.0
        %6068 = vmatpush1.msra.mxu0 0.0
        %6069 = vmatprep.subr.mxu0 0.0
        %6070 = vmatpush1.msra.mxu0 0.0
        %6071 = vmatprep.subr.mxu0 0.0
        %6072 = vmatpush1.msra.mxu0 0.0
        %6073 = vmatprep.subr.mxu0 0.0
        %6074 = vmatpush1.msra.mxu0 0.0
        %6075 = vmatprep.subr.mxu0 0.0
        %6076 = vmatpush1.msra.mxu0 0.0
        %6077 = vmatprep.subr.mxu0 0.0
        %6078 = vmatpush1.msra.mxu0 0.0
        %6079 = vmatprep.subr.mxu0 0.0
        %6080 = vmatpush1.msra.mxu0 0.0
        %6081 = vmatprep.subr.mxu0 0.0
        %6082 = vmatpush1.msra.mxu0 0.0
        %6083 = vmatprep.subr.mxu0 0.0
        %6084 = vmatpush1.msra.mxu0 0.0
        %6085 = vmatprep.subr.mxu0 0.0
        %6086 = vmatpush1.msra.mxu0 0.0
        %6087 = vmatprep.subr.mxu0 0.0
        %6088 = vmatpush1.msra.mxu0 0.0
        %6089 = vmatprep.subr.mxu0 0.0
        %6090 = vmatpush1.msra.mxu0 0.0
        %6091 = vmatprep.subr.mxu0 0.0
        %6092 = vmatpush1.msra.mxu0 0.0
        %6093 = vmatprep.subr.mxu0 0.0
        %6094 = vmatpush1.msra.mxu0 0.0
        %6095 = vmatprep.subr.mxu0 0.0
        %6096 = vmatpush1.msra.mxu0 0.0
        %6097 = vmatprep.subr.mxu0 0.0
        %6098 = vmatpush1.msra.mxu0 0.0
        %6099 = vmatprep.subr.mxu0 0.0
        %6100 = vmatpush1.msra.mxu0 0.0
        %6101 = vmatprep.subr.mxu0 0.0
        %6102 = vmatpush1.msra.mxu0 0.0
        %6103 = vmatprep.subr.mxu0 0.0
        %6104 = vmatpush1.msra.mxu0 0.0
        %6105 = vmatprep.subr.mxu0 0.0
        %6106 = vmatpush1.msra.mxu0 0.0
        %6107 = vmatprep.subr.mxu0 0.0
        %6108 = vmatpush1.msra.mxu0 0.0
        %6109 = vmatprep.subr.mxu0 0.0
        %6110 = vmatpush1.msra.mxu0 0.0
        %6111 = vmatprep.subr.mxu0 0.0
        %6112 = vmatpush1.msra.mxu0 0.0
        %6113 = vmatprep.subr.mxu0 0.0
        %6114 = vmatpush1.msra.mxu0 0.0
        %6115 = vmatprep.subr.mxu0 0.0
        %6116 = vmatpush1.msra.mxu0 0.0
        %6117 = vmatprep.subr.mxu0 0.0
        %6118 = vmatpush1.msra.mxu0 0.0
        %6119 = vmatprep.subr.mxu0 0.0
        %6120 = vmatpush1.msra.mxu0 0.0
        %6121 = vmatprep.subr.mxu0 0.0
        %6122 = vmatpush1.msra.mxu0 0.0
        %6123 = vmatprep.mubr.f32.mxu0 0.0
        %v6124 = vand.u32 %v5957, 4294901760
        %6125 = vmatmul.mubr.f32.gmra.mrb[0].mxu0 %v6124
        %v6126 = vpop.f32.mrb[0].mxu0
        %v6127 = vadd.f32 %v6036, %v6126
        %v6128 = vpop.f32.mrb[0].mxu0
        %6129 = vmatprep.mubr.f32.mxu0 0.0
        %v6130 = vand.u32 %v5960, 4294901760
        %6131 = vmatmul.mubr.f32.gmra.mrb[0].mxu0 %v6130
        %v6132 = vpop.f32.mrb[0].mxu0
        %v6133 = vadd.f32 %v6046, %v6132
        %v6134 = vpop.f32.mrb[0].mxu0
        %6135 = vdwg.mxu0
        %6136 = vmatprep.subr.mxu0 0.0
        %v6137 = vand.u32 %v5951, 4294901760
        %v6138 = vsub.f32 %v5951, %v6137
        %6139 = vmatpush1.msra.mxu0 %v6138
        %6140 = vmatprep.subr.mxu0 0.0
        %v6141 = vand.u32 %v5953, 4294901760
        %v6142 = vsub.f32 %v5953, %v6141
        %6143 = vmatpush1.msra.mxu0 %v6142
        %6144 = vmatprep.subr.mxu0 0.0
        %6145 = vmatpush1.msra.mxu0 0.0
        %6146 = vmatprep.subr.mxu0 0.0
        %6147 = vmatpush1.msra.mxu0 0.0
        %6148 = vmatprep.subr.mxu0 0.0
        %6149 = vmatpush1.msra.mxu0 0.0
        %6150 = vmatprep.subr.mxu0 0.0
        %6151 = vmatpush1.msra.mxu0 0.0
        %6152 = vmatprep.subr.mxu0 0.0
        %6153 = vmatpush1.msra.mxu0 0.0
        %6154 = vmatprep.subr.mxu0 0.0
        %6155 = vmatpush1.msra.mxu0 0.0
        %6156 = vmatprep.subr.mxu0 0.0
        %6157 = vmatpush1.msra.mxu0 0.0
        %6158 = vmatprep.subr.mxu0 0.0
        %6159 = vmatpush1.msra.mxu0 0.0
        %6160 = vmatprep.subr.mxu0 0.0
        %6161 = vmatpush1.msra.mxu0 0.0
        %6162 = vmatprep.subr.mxu0 0.0
        %6163 = vmatpush1.msra.mxu0 0.0
        %6164 = vmatprep.subr.mxu0 0.0
        %6165 = vmatpush1.msra.mxu0 0.0
        %6166 = vmatprep.subr.mxu0 0.0
        %6167 = vmatpush1.msra.mxu0 0.0
        %6168 = vmatprep.subr.mxu0 0.0
        %6169 = vmatpush1.msra.mxu0 0.0
        %6170 = vmatprep.subr.mxu0 0.0
        %6171 = vmatpush1.msra.mxu0 0.0
        %6172 = vmatprep.subr.mxu0 0.0
        %6173 = vmatpush1.msra.mxu0 0.0
        %6174 = vmatprep.subr.mxu0 0.0
        %6175 = vmatpush1.msra.mxu0 0.0
        %6176 = vmatprep.subr.mxu0 0.0
        %6177 = vmatpush1.msra.mxu0 0.0
        %6178 = vmatprep.subr.mxu0 0.0
        %6179 = vmatpush1.msra.mxu0 0.0
        %6180 = vmatprep.subr.mxu0 0.0
        %6181 = vmatpush1.msra.mxu0 0.0
        %6182 = vmatprep.subr.mxu0 0.0
        %6183 = vmatpush1.msra.mxu0 0.0
        %6184 = vmatprep.subr.mxu0 0.0
        %6185 = vmatpush1.msra.mxu0 0.0
        %6186 = vmatprep.subr.mxu0 0.0
        %6187 = vmatpush1.msra.mxu0 0.0
        %6188 = vmatprep.subr.mxu0 0.0
        %6189 = vmatpush1.msra.mxu0 0.0
        %6190 = vmatprep.subr.mxu0 0.0
        %6191 = vmatpush1.msra.mxu0 0.0
        %6192 = vmatprep.subr.mxu0 0.0
        %6193 = vmatpush1.msra.mxu0 0.0
        %6194 = vmatprep.subr.mxu0 0.0
        %6195 = vmatpush1.msra.mxu0 0.0
        %6196 = vmatprep.subr.mxu0 0.0
        %6197 = vmatpush1.msra.mxu0 0.0
        %6198 = vmatprep.subr.mxu0 0.0
        %6199 = vmatpush1.msra.mxu0 0.0
        %6200 = vmatprep.subr.mxu0 0.0
        %6201 = vmatpush1.msra.mxu0 0.0
        %6202 = vmatprep.subr.mxu0 0.0
        %6203 = vmatpush1.msra.mxu0 0.0
        %6204 = vmatprep.mubr.f32.mxu0 0.0
        %v6205 = vand.u32 %v5957, 4294901760
        %v6206 = vsub.f32 %v5957, %v6205
        %6207 = vmatmul.mubr.f32.gmra.mrb[0].mxu0 %v6206
        %v6208 = vpop.f32.mrb[0].mxu0
        %v6209 = vadd.f32 %v6127, %v6208
        %v6210 = vpop.f32.mrb[0].mxu0
        %6211 = vmatprep.mubr.f32.mxu0 0.0
        %v6212 = vand.u32 %v5960, 4294901760
        %v6213 = vsub.f32 %v5960, %v6212
        %6214 = vmatmul.mubr.f32.gmra.mrb[0].mxu0 %v6213
        %v6215 = vpop.f32.mrb[0].mxu0
        %v6216 = vadd.f32 %v6133, %v6215
        %v6217 = vpop.f32.mrb[0].mxu0
        %6218 = vdwg.mxu0
        %6219 = vmatprep.subr.mxu0 0.0
        %v6220 = vand.u32 %v5951, 4294901760
        %6221 = vmatpush1.msra.mxu0 %v6220
        %6222 = vmatprep.subr.mxu0 0.0
        %v6223 = vand.u32 %v5953, 4294901760
        %6224 = vmatpush1.msra.mxu0 %v6223
        %6225 = vmatprep.subr.mxu0 0.0
        %6226 = vmatpush1.msra.mxu0 0.0
        %6227 = vmatprep.subr.mxu0 0.0
        %6228 = vmatpush1.msra.mxu0 0.0
        %6229 = vmatprep.subr.mxu0 0.0
        %6230 = vmatpush1.msra.mxu0 0.0
        %6231 = vmatprep.subr.mxu0 0.0
        %6232 = vmatpush1.msra.mxu0 0.0
        %6233 = vmatprep.subr.mxu0 0.0
        %6234 = vmatpush1.msra.mxu0 0.0
        %6235 = vmatprep.subr.mxu0 0.0
        %6236 = vmatpush1.msra.mxu0 0.0
        %6237 = vmatprep.subr.mxu0 0.0
        %6238 = vmatpush1.msra.mxu0 0.0
        %6239 = vmatprep.subr.mxu0 0.0
        %6240 = vmatpush1.msra.mxu0 0.0
        %6241 = vmatprep.subr.mxu0 0.0
        %6242 = vmatpush1.msra.mxu0 0.0
        %6243 = vmatprep.subr.mxu0 0.0
        %6244 = vmatpush1.msra.mxu0 0.0
        %6245 = vmatprep.subr.mxu0 0.0
        %6246 = vmatpush1.msra.mxu0 0.0
        %6247 = vmatprep.subr.mxu0 0.0
        %6248 = vmatpush1.msra.mxu0 0.0
        %6249 = vmatprep.subr.mxu0 0.0
        %6250 = vmatpush1.msra.mxu0 0.0
        %6251 = vmatprep.subr.mxu0 0.0
        %6252 = vmatpush1.msra.mxu0 0.0
        %6253 = vmatprep.subr.mxu0 0.0
        %6254 = vmatpush1.msra.mxu0 0.0
        %6255 = vmatprep.subr.mxu0 0.0
        %6256 = vmatpush1.msra.mxu0 0.0
        %6257 = vmatprep.subr.mxu0 0.0
        %6258 = vmatpush1.msra.mxu0 0.0
        %6259 = vmatprep.subr.mxu0 0.0
        %6260 = vmatpush1.msra.mxu0 0.0
        %6261 = vmatprep.subr.mxu0 0.0
        %6262 = vmatpush1.msra.mxu0 0.0
        %6263 = vmatprep.subr.mxu0 0.0
        %6264 = vmatpush1.msra.mxu0 0.0
        %6265 = vmatprep.subr.mxu0 0.0
        %6266 = vmatpush1.msra.mxu0 0.0
        %6267 = vmatprep.subr.mxu0 0.0
        %6268 = vmatpush1.msra.mxu0 0.0
        %6269 = vmatprep.subr.mxu0 0.0
        %6270 = vmatpush1.msra.mxu0 0.0
        %6271 = vmatprep.subr.mxu0 0.0
        %6272 = vmatpush1.msra.mxu0 0.0
        %6273 = vmatprep.subr.mxu0 0.0
        %6274 = vmatpush1.msra.mxu0 0.0
        %6275 = vmatprep.subr.mxu0 0.0
        %6276 = vmatpush1.msra.mxu0 0.0
        %6277 = vmatprep.subr.mxu0 0.0
        %6278 = vmatpush1.msra.mxu0 0.0
        %6279 = vmatprep.subr.mxu0 0.0
        %6280 = vmatpush1.msra.mxu0 0.0
        %6281 = vmatprep.subr.mxu0 0.0
        %6282 = vmatpush1.msra.mxu0 0.0
        %6283 = vmatprep.subr.mxu0 0.0
        %6284 = vmatpush1.msra.mxu0 0.0
        %6285 = vmatprep.mubr.f32.mxu0 0.0
        %v6286 = vand.u32 %v5957, 4294901760
        %v6287 = vsub.f32 %v5957, %v6286
        %v6288 = vand.u32 %v6287, 4294901760
        %6289 = vmatmul.mubr.f32.gmra.mrb[0].mxu0 %v6288
        %v6290 = vpop.f32.mrb[0].mxu0
        %v6291 = vadd.f32 %v6209, %v6290
        %v6292 = vpop.f32.mrb[0].mxu0
        %6293 = vmatprep.mubr.f32.mxu0 0.0
        %v6294 = vand.u32 %v5960, 4294901760
        %v6295 = vsub.f32 %v5960, %v6294
        %v6296 = vand.u32 %v6295, 4294901760
        %6297 = vmatmul.mubr.f32.gmra.mrb[0].mxu0 %v6296
        %v6298 = vpop.f32.mrb[0].mxu0
        %v6299 = vadd.f32 %v6216, %v6298
        %v6300 = vpop.f32.mrb[0].mxu0
        %6301 = vdwg.mxu0
        %6302 = vmatprep.subr.mxu0 0.0
        %v6303 = vand.u32 %v5951, 4294901760
        %v6304 = vsub.f32 %v5951, %v6303
        %v6305 = vand.u32 %v6304, 4294901760
        %6306 = vmatpush1.msra.mxu0 %v6305
        %6307 = vmatprep.subr.mxu0 0.0
        %v6308 = vand.u32 %v5953, 4294901760
        %v6309 = vsub.f32 %v5953, %v6308
        %v6310 = vand.u32 %v6309, 4294901760
        %6311 = vmatpush1.msra.mxu0 %v6310
        %6312 = vmatprep.subr.mxu0 0.0
        %6313 = vmatpush1.msra.mxu0 0.0
        %6314 = vmatprep.subr.mxu0 0.0
        %6315 = vmatpush1.msra.mxu0 0.0
        %6316 = vmatprep.subr.mxu0 0.0
        %6317 = vmatpush1.msra.mxu0 0.0
        %6318 = vmatprep.subr.mxu0 0.0
        %6319 = vmatpush1.msra.mxu0 0.0
        %6320 = vmatprep.subr.mxu0 0.0
        %6321 = vmatpush1.msra.mxu0 0.0
        %6322 = vmatprep.subr.mxu0 0.0
        %6323 = vmatpush1.msra.mxu0 0.0
        %6324 = vmatprep.subr.mxu0 0.0
        %6325 = vmatpush1.msra.mxu0 0.0
        %6326 = vmatprep.subr.mxu0 0.0
        %6327 = vmatpush1.msra.mxu0 0.0
        %6328 = vmatprep.subr.mxu0 0.0
        %6329 = vmatpush1.msra.mxu0 0.0
        %6330 = vmatprep.subr.mxu0 0.0
        %6331 = vmatpush1.msra.mxu0 0.0
        %6332 = vmatprep.subr.mxu0 0.0
        %6333 = vmatpush1.msra.mxu0 0.0
        %6334 = vmatprep.subr.mxu0 0.0
        %6335 = vmatpush1.msra.mxu0 0.0
        %6336 = vmatprep.subr.mxu0 0.0
        %6337 = vmatpush1.msra.mxu0 0.0
        %6338 = vmatprep.subr.mxu0 0.0
        %6339 = vmatpush1.msra.mxu0 0.0
        %6340 = vmatprep.subr.mxu0 0.0
        %6341 = vmatpush1.msra.mxu0 0.0
        %6342 = vmatprep.subr.mxu0 0.0
        %6343 = vmatpush1.msra.mxu0 0.0
        %6344 = vmatprep.subr.mxu0 0.0
        %6345 = vmatpush1.msra.mxu0 0.0
        %6346 = vmatprep.subr.mxu0 0.0
        %6347 = vmatpush1.msra.mxu0 0.0
        %6348 = vmatprep.subr.mxu0 0.0
        %6349 = vmatpush1.msra.mxu0 0.0
        %6350 = vmatprep.subr.mxu0 0.0
        %6351 = vmatpush1.msra.mxu0 0.0
        %6352 = vmatprep.subr.mxu0 0.0
        %6353 = vmatpush1.msra.mxu0 0.0
        %6354 = vmatprep.subr.mxu0 0.0
        %6355 = vmatpush1.msra.mxu0 0.0
        %6356 = vmatprep.subr.mxu0 0.0
        %6357 = vmatpush1.msra.mxu0 0.0
        %6358 = vmatprep.subr.mxu0 0.0
        %6359 = vmatpush1.msra.mxu0 0.0
        %6360 = vmatprep.subr.mxu0 0.0
        %6361 = vmatpush1.msra.mxu0 0.0
        %6362 = vmatprep.subr.mxu0 0.0
        %6363 = vmatpush1.msra.mxu0 0.0
        %6364 = vmatprep.subr.mxu0 0.0
        %6365 = vmatpush1.msra.mxu0 0.0
        %6366 = vmatprep.subr.mxu0 0.0
        %6367 = vmatpush1.msra.mxu0 0.0
        %6368 = vmatprep.subr.mxu0 0.0
        %6369 = vmatpush1.msra.mxu0 0.0
        %6370 = vmatprep.subr.mxu0 0.0
        %6371 = vmatpush1.msra.mxu0 0.0
        %6372 = vmatprep.mubr.f32.mxu0 0.0
        %v6373 = vand.u32 %v5957, 4294901760
        %6374 = vmatmul.mubr.f32.gmra.mrb[0].mxu0 %v6373
        %v6375 = vpop.f32.mrb[0].mxu0
        %v6376 = vadd.f32 %v6291, %v6375
        %v6377 = vpop.f32.mrb[0].mxu0
        %6378 = vmatprep.mubr.f32.mxu0 0.0
        %v6379 = vand.u32 %v5960, 4294901760
        %6380 = vmatmul.mubr.f32.gmra.mrb[0].mxu0 %v6379
        %v6381 = vpop.f32.mrb[0].mxu0
        %v6382 = vadd.f32 %v6299, %v6381
        %v6383 = vpop.f32.mrb[0].mxu0
        %6384 = vdwg.mxu0
        %6385 = vmatprep.subr.mxu0 0.0
        %v6386 = vand.u32 %v5951, 4294901760
        %6387 = vmatpush1.msra.mxu0 %v6386
        %6388 = vmatprep.subr.mxu0 0.0
        %v6389 = vand.u32 %v5953, 4294901760
        %6390 = vmatpush1.msra.mxu0 %v6389
        %6391 = vmatprep.subr.mxu0 0.0
        %6392 = vmatpush1.msra.mxu0 0.0
        %6393 = vmatprep.subr.mxu0 0.0
        %6394 = vmatpush1.msra.mxu0 0.0
        %6395 = vmatprep.subr.mxu0 0.0
        %6396 = vmatpush1.msra.mxu0 0.0
        %6397 = vmatprep.subr.mxu0 0.0
        %6398 = vmatpush1.msra.mxu0 0.0
        %6399 = vmatprep.subr.mxu0 0.0
        %6400 = vmatpush1.msra.mxu0 0.0
        %6401 = vmatprep.subr.mxu0 0.0
        %6402 = vmatpush1.msra.mxu0 0.0
        %6403 = vmatprep.subr.mxu0 0.0
        %6404 = vmatpush1.msra.mxu0 0.0
        %6405 = vmatprep.subr.mxu0 0.0
        %6406 = vmatpush1.msra.mxu0 0.0
        %6407 = vmatprep.subr.mxu0 0.0
        %6408 = vmatpush1.msra.mxu0 0.0
        %6409 = vmatprep.subr.mxu0 0.0
        %6410 = vmatpush1.msra.mxu0 0.0
        %6411 = vmatprep.subr.mxu0 0.0
        %6412 = vmatpush1.msra.mxu0 0.0
        %6413 = vmatprep.subr.mxu0 0.0
        %6414 = vmatpush1.msra.mxu0 0.0
        %6415 = vmatprep.subr.mxu0 0.0
        %6416 = vmatpush1.msra.mxu0 0.0
        %6417 = vmatprep.subr.mxu0 0.0
        %6418 = vmatpush1.msra.mxu0 0.0
        %6419 = vmatprep.subr.mxu0 0.0
        %6420 = vmatpush1.msra.mxu0 0.0
        %6421 = vmatprep.subr.mxu0 0.0
        %6422 = vmatpush1.msra.mxu0 0.0
        %6423 = vmatprep.subr.mxu0 0.0
        %6424 = vmatpush1.msra.mxu0 0.0
        %6425 = vmatprep.subr.mxu0 0.0
        %6426 = vmatpush1.msra.mxu0 0.0
        %6427 = vmatprep.subr.mxu0 0.0
        %6428 = vmatpush1.msra.mxu0 0.0
        %6429 = vmatprep.subr.mxu0 0.0
        %6430 = vmatpush1.msra.mxu0 0.0
        %6431 = vmatprep.subr.mxu0 0.0
        %6432 = vmatpush1.msra.mxu0 0.0
        %6433 = vmatprep.subr.mxu0 0.0
        %6434 = vmatpush1.msra.mxu0 0.0
        %6435 = vmatprep.subr.mxu0 0.0
        %6436 = vmatpush1.msra.mxu0 0.0
        %6437 = vmatprep.subr.mxu0 0.0
        %6438 = vmatpush1.msra.mxu0 0.0
        %6439 = vmatprep.subr.mxu0 0.0
        %6440 = vmatpush1.msra.mxu0 0.0
        %6441 = vmatprep.subr.mxu0 0.0
        %6442 = vmatpush1.msra.mxu0 0.0
        %6443 = vmatprep.subr.mxu0 0.0
        %6444 = vmatpush1.msra.mxu0 0.0
        %6445 = vmatprep.subr.mxu0 0.0
        %6446 = vmatpush1.msra.mxu0 0.0
        %6447 = vmatprep.subr.mxu0 0.0
        %6448 = vmatpush1.msra.mxu0 0.0
        %6449 = vmatprep.subr.mxu0 0.0
        %6450 = vmatpush1.msra.mxu0 0.0
        %6451 = vmatprep.mubr.f32.mxu0 0.0
        %v6452 = vand.u32 %v5957, 4294901760
        %6453 = vmatmul.mubr.f32.gmra.mrb[0].mxu0 %v6452
        %v6454 = vpop.f32.mrb[0].mxu0
        %v6455 = vadd.f32 %v6376, %v6454
        %v6456 = vpop.f32.mrb[0].mxu0
        %6457 = vmatprep.mubr.f32.mxu0 0.0
        %v6458 = vand.u32 %v5960, 4294901760
        %6459 = vmatmul.mubr.f32.gmra.mrb[0].mxu0 %v6458
        %v6460 = vpop.f32.mrb[0].mxu0
        %v6461 = vadd.f32 %v6382, %v6460
        %v6462 = vpop.f32.mrb[0].mxu0
        %6463 = vdwg.mxu0
        %v6464 = vmul.f32 %v6455, %v5948
        %v6465 = vmul.f32 %v6461, %v5949
        %6468 = vrot.lane.b32.xlu0 %v4344, 32
        %v6469 = vpop.permute.xlu0 %6468
        %6470 = vrot.lane.b32.xlu0 %v4345, 32
        %v6471 = vpop.permute.xlu0 %6470
        %6476 = vrot.lane.b32.xlu0 %v5404, 64
        %v6477 = vpop.permute.xlu0 %6476
        %6478 = vrot.lane.b32.xlu0 %v5405, 64
        %v6479 = vpop.permute.xlu0 %6478
        %6484 = vrot.lane.b32.xlu0 %v6464, 96
        %v6485 = vpop.permute.xlu0 %6484
        %6486 = vrot.lane.b32.xlu0 %v6465, 96
        %v6487 = vpop.permute.xlu0 %6486
        %v6490 = vsel %vm2233, %v3282, %v6469
        %v6491 = vsel %vm2233, %v3283, %v6471
        %vm6492 = vcmask 523264
        %v6493 = vsel %vm6492, %v6490, %v6477
        %v6494 = vsel %vm6492, %v6491, %v6479
        %vm6495 = vcmask 785408
        %v6496 = vsel %vm6495, %v6493, %v6485
        %v6497 = vsel %vm6495, %v6494, %v6487
        %v6498 = vld [vmem:[#allocation8] sm:$0xff]
        %v6499 = vld [vmem:[#allocation8 + $0x8] sm:$0xff]
        %v6500 = vld [vmem:[#allocation8 + $0x10] sm:$0xff]
        %v6501 = vld [vmem:[#allocation8 + $0x18] sm:$0xff]
        %v6502 = vld [vmem:[#allocation8 + $0x20] sm:$0xff]
        %v6503 = vld [vmem:[#allocation8 + $0x28] sm:$0xff]
        %v6504 = vld [vmem:[#allocation8 + $0x30] sm:$0xff]
        %v6505 = vld [vmem:[#allocation8 + $0x38] sm:$0xff]
        %v6506 = vld [vmem:[#allocation8 + $0x40] sm:$0xff]
        %v6507 = vld [vmem:[#allocation8 + $0x48] sm:$0xff]
        %v6508 = vld [vmem:[#allocation8 + $0x50] sm:$0xff]
        %v6509 = vld [vmem:[#allocation8 + $0x58] sm:$0xff]
        %v6510 = vld [vmem:[#allocation8 + $0x60] sm:$0xff]
        %v6511 = vld [vmem:[#allocation8 + $0x68] sm:$0xff]
        %v6512 = vld [vmem:[#allocation8 + $0x70] sm:$0xff]
        %v6513 = vld [vmem:[#allocation8 + $0x78] sm:$0xff]
        %6514 = vmatprep.subr.mxu0 0.0
        %v6515 = vand.u32 %v6498, 4294901760
        %6516 = vmatpush1.msra.mxu0 %v6515
        %6517 = vmatprep.subr.mxu0 0.0
        %v6518 = vand.u32 %v6499, 4294901760
        %6519 = vmatpush1.msra.mxu0 %v6518
        %6520 = vmatprep.subr.mxu0 0.0
        %v6521 = vand.u32 %v6500, 4294901760
        %6522 = vmatpush1.msra.mxu0 %v6521
        %6523 = vmatprep.subr.mxu0 0.0
        %v6524 = vand.u32 %v6501, 4294901760
        %6525 = vmatpush1.msra.mxu0 %v6524
        %6526 = vmatprep.subr.mxu0 0.0
        %v6527 = vand.u32 %v6502, 4294901760
        %6528 = vmatpush1.msra.mxu0 %v6527
        %6529 = vmatprep.subr.mxu0 0.0
        %v6530 = vand.u32 %v6503, 4294901760
        %6531 = vmatpush1.msra.mxu0 %v6530
        %6532 = vmatprep.subr.mxu0 0.0
        %v6533 = vand.u32 %v6504, 4294901760
        %6534 = vmatpush1.msra.mxu0 %v6533
        %6535 = vmatprep.subr.mxu0 0.0
        %v6536 = vand.u32 %v6505, 4294901760
        %6537 = vmatpush1.msra.mxu0 %v6536
        %6538 = vmatprep.subr.mxu0 0.0
        %v6539 = vand.u32 %v6506, 4294901760
        %6540 = vmatpush1.msra.mxu0 %v6539
        %6541 = vmatprep.subr.mxu0 0.0
        %v6542 = vand.u32 %v6507, 4294901760
        %6543 = vmatpush1.msra.mxu0 %v6542
        %6544 = vmatprep.subr.mxu0 0.0
        %v6545 = vand.u32 %v6508, 4294901760
        %6546 = vmatpush1.msra.mxu0 %v6545
        %6547 = vmatprep.subr.mxu0 0.0
        %v6548 = vand.u32 %v6509, 4294901760
        %6549 = vmatpush1.msra.mxu0 %v6548
        %6550 = vmatprep.subr.mxu0 0.0
        %v6551 = vand.u32 %v6510, 4294901760
        %6552 = vmatpush1.msra.mxu0 %v6551
        %6553 = vmatprep.subr.mxu0 0.0
        %v6554 = vand.u32 %v6511, 4294901760
        %6555 = vmatpush1.msra.mxu0 %v6554
        %6556 = vmatprep.subr.mxu0 0.0
        %v6557 = vand.u32 %v6512, 4294901760
        %6558 = vmatpush1.msra.mxu0 %v6557
        %6559 = vmatprep.subr.mxu0 0.0
        %v6560 = vand.u32 %v6513, 4294901760
        %6561 = vmatpush1.msra.mxu0 %v6560
        %6562 = vmatprep.subr.mxu0 0.0
        %6563 = vmatpush1.msra.mxu0 0.0
        %6564 = vmatprep.subr.mxu0 0.0
        %6565 = vmatpush1.msra.mxu0 0.0
        %6566 = vmatprep.subr.mxu0 0.0
        %6567 = vmatpush1.msra.mxu0 0.0
        %6568 = vmatprep.subr.mxu0 0.0
        %6569 = vmatpush1.msra.mxu0 0.0
        %6570 = vmatprep.subr.mxu0 0.0
        %6571 = vmatpush1.msra.mxu0 0.0
        %6572 = vmatprep.subr.mxu0 0.0
        %6573 = vmatpush1.msra.mxu0 0.0
        %6574 = vmatprep.subr.mxu0 0.0
        %6575 = vmatpush1.msra.mxu0 0.0
        %6576 = vmatprep.subr.mxu0 0.0
        %6577 = vmatpush1.msra.mxu0 0.0
        %6578 = vmatprep.subr.mxu0 0.0
        %6579 = vmatpush1.msra.mxu0 0.0
        %6580 = vmatprep.subr.mxu0 0.0
        %6581 = vmatpush1.msra.mxu0 0.0
        %6582 = vmatprep.subr.mxu0 0.0
        %6583 = vmatpush1.msra.mxu0 0.0
        %6584 = vmatprep.subr.mxu0 0.0
        %6585 = vmatpush1.msra.mxu0 0.0
        %6586 = vmatprep.subr.mxu0 0.0
        %6587 = vmatpush1.msra.mxu0 0.0
        %6588 = vmatprep.subr.mxu0 0.0
        %6589 = vmatpush1.msra.mxu0 0.0
        %6590 = vmatprep.subr.mxu0 0.0
        %6591 = vmatpush1.msra.mxu0 0.0
        %6592 = vmatprep.subr.mxu0 0.0
        %6593 = vmatpush1.msra.mxu0 0.0
        %6594 = vmatprep.mubr.f32.mxu0 0.0
        %v6595 = vand.u32 %v6496, 4294901760
        %v6596 = vsub.f32 %v6496, %v6595
        %v6597 = vand.u32 %v6596, 4294901760
        %v6598 = vsub.f32 %v6596, %v6597
        %v6599 = vand.u32 %v6598, 4294901760
        %6600 = vmatmul.mubr.f32.gmra.mrb[0].mxu0 %v6599
        %v6601 = vpop.f32.mrb[0].mxu0
        %v6602 = vadd.f32 0.0, %v6601
        %v6603 = vpop.f32.mrb[0].mxu0
        %6604 = vmatprep.mubr.f32.mxu0 0.0
        %v6605 = vand.u32 %v6497, 4294901760
        %v6606 = vsub.f32 %v6497, %v6605
        %v6607 = vand.u32 %v6606, 4294901760
        %v6608 = vsub.f32 %v6606, %v6607
        %v6609 = vand.u32 %v6608, 4294901760
        %6610 = vmatmul.mubr.f32.gmra.mrb[0].mxu0 %v6609
        %v6611 = vpop.f32.mrb[0].mxu0
        %v6612 = vadd.f32 0.0, %v6611
        %v6613 = vpop.f32.mrb[0].mxu0
        %6614 = vdwg.mxu0
        %6615 = vmatprep.subr.mxu0 0.0
        %v6616 = vand.u32 %v6498, 4294901760
        %v6617 = vsub.f32 %v6498, %v6616
        %v6618 = vand.u32 %v6617, 4294901760
        %v6619 = vsub.f32 %v6617, %v6618
        %v6620 = vand.u32 %v6619, 4294901760
        %6621 = vmatpush1.msra.mxu0 %v6620
        %6622 = vmatprep.subr.mxu0 0.0
        %v6623 = vand.u32 %v6499, 4294901760
        %v6624 = vsub.f32 %v6499, %v6623
        %v6625 = vand.u32 %v6624, 4294901760
        %v6626 = vsub.f32 %v6624, %v6625
        %v6627 = vand.u32 %v6626, 4294901760
        %6628 = vmatpush1.msra.mxu0 %v6627
        %6629 = vmatprep.subr.mxu0 0.0
        %v6630 = vand.u32 %v6500, 4294901760
        %v6631 = vsub.f32 %v6500, %v6630
        %v6632 = vand.u32 %v6631, 4294901760
        %v6633 = vsub.f32 %v6631, %v6632
        %v6634 = vand.u32 %v6633, 4294901760
        %6635 = vmatpush1.msra.mxu0 %v6634
        %6636 = vmatprep.subr.mxu0 0.0
        %v6637 = vand.u32 %v6501, 4294901760
        %v6638 = vsub.f32 %v6501, %v6637
        %v6639 = vand.u32 %v6638, 4294901760
        %v6640 = vsub.f32 %v6638, %v6639
        %v6641 = vand.u32 %v6640, 4294901760
        %6642 = vmatpush1.msra.mxu0 %v6641
        %6643 = vmatprep.subr.mxu0 0.0
        %v6644 = vand.u32 %v6502, 4294901760
        %v6645 = vsub.f32 %v6502, %v6644
        %v6646 = vand.u32 %v6645, 4294901760
        %v6647 = vsub.f32 %v6645, %v6646
        %v6648 = vand.u32 %v6647, 4294901760
        %6649 = vmatpush1.msra.mxu0 %v6648
        %6650 = vmatprep.subr.mxu0 0.0
        %v6651 = vand.u32 %v6503, 4294901760
        %v6652 = vsub.f32 %v6503, %v6651
        %v6653 = vand.u32 %v6652, 4294901760
        %v6654 = vsub.f32 %v6652, %v6653
        %v6655 = vand.u32 %v6654, 4294901760
        %6656 = vmatpush1.msra.mxu0 %v6655
        %6657 = vmatprep.subr.mxu0 0.0
        %v6658 = vand.u32 %v6504, 4294901760
        %v6659 = vsub.f32 %v6504, %v6658
        %v6660 = vand.u32 %v6659, 4294901760
        %v6661 = vsub.f32 %v6659, %v6660
        %v6662 = vand.u32 %v6661, 4294901760
        %6663 = vmatpush1.msra.mxu0 %v6662
        %6664 = vmatprep.subr.mxu0 0.0
        %v6665 = vand.u32 %v6505, 4294901760
        %v6666 = vsub.f32 %v6505, %v6665
        %v6667 = vand.u32 %v6666, 4294901760
        %v6668 = vsub.f32 %v6666, %v6667
        %v6669 = vand.u32 %v6668, 4294901760
        %6670 = vmatpush1.msra.mxu0 %v6669
        %6671 = vmatprep.subr.mxu0 0.0
        %v6672 = vand.u32 %v6506, 4294901760
        %v6673 = vsub.f32 %v6506, %v6672
        %v6674 = vand.u32 %v6673, 4294901760
        %v6675 = vsub.f32 %v6673, %v6674
        %v6676 = vand.u32 %v6675, 4294901760
        %6677 = vmatpush1.msra.mxu0 %v6676
        %6678 = vmatprep.subr.mxu0 0.0
        %v6679 = vand.u32 %v6507, 4294901760
        %v6680 = vsub.f32 %v6507, %v6679
        %v6681 = vand.u32 %v6680, 4294901760
        %v6682 = vsub.f32 %v6680, %v6681
        %v6683 = vand.u32 %v6682, 4294901760
        %6684 = vmatpush1.msra.mxu0 %v6683
        %6685 = vmatprep.subr.mxu0 0.0
        %v6686 = vand.u32 %v6508, 4294901760
        %v6687 = vsub.f32 %v6508, %v6686
        %v6688 = vand.u32 %v6687, 4294901760
        %v6689 = vsub.f32 %v6687, %v6688
        %v6690 = vand.u32 %v6689, 4294901760
        %6691 = vmatpush1.msra.mxu0 %v6690
        %6692 = vmatprep.subr.mxu0 0.0
        %v6693 = vand.u32 %v6509, 4294901760
        %v6694 = vsub.f32 %v6509, %v6693
        %v6695 = vand.u32 %v6694, 4294901760
        %v6696 = vsub.f32 %v6694, %v6695
        %v6697 = vand.u32 %v6696, 4294901760
        %6698 = vmatpush1.msra.mxu0 %v6697
        %6699 = vmatprep.subr.mxu0 0.0
        %v6700 = vand.u32 %v6510, 4294901760
        %v6701 = vsub.f32 %v6510, %v6700
        %v6702 = vand.u32 %v6701, 4294901760
        %v6703 = vsub.f32 %v6701, %v6702
        %v6704 = vand.u32 %v6703, 4294901760
        %6705 = vmatpush1.msra.mxu0 %v6704
        %6706 = vmatprep.subr.mxu0 0.0
        %v6707 = vand.u32 %v6511, 4294901760
        %v6708 = vsub.f32 %v6511, %v6707
        %v6709 = vand.u32 %v6708, 4294901760
        %v6710 = vsub.f32 %v6708, %v6709
        %v6711 = vand.u32 %v6710, 4294901760
        %6712 = vmatpush1.msra.mxu0 %v6711
        %6713 = vmatprep.subr.mxu0 0.0
        %v6714 = vand.u32 %v6512, 4294901760
        %v6715 = vsub.f32 %v6512, %v6714
        %v6716 = vand.u32 %v6715, 4294901760
        %v6717 = vsub.f32 %v6715, %v6716
        %v6718 = vand.u32 %v6717, 4294901760
        %6719 = vmatpush1.msra.mxu0 %v6718
        %6720 = vmatprep.subr.mxu0 0.0
        %v6721 = vand.u32 %v6513, 4294901760
        %v6722 = vsub.f32 %v6513, %v6721
        %v6723 = vand.u32 %v6722, 4294901760
        %v6724 = vsub.f32 %v6722, %v6723
        %v6725 = vand.u32 %v6724, 4294901760
        %6726 = vmatpush1.msra.mxu0 %v6725
        %6727 = vmatprep.subr.mxu0 0.0
        %6728 = vmatpush1.msra.mxu0 0.0
        %6729 = vmatprep.subr.mxu0 0.0
        %6730 = vmatpush1.msra.mxu0 0.0
        %6731 = vmatprep.subr.mxu0 0.0
        %6732 = vmatpush1.msra.mxu0 0.0
        %6733 = vmatprep.subr.mxu0 0.0
        %6734 = vmatpush1.msra.mxu0 0.0
        %6735 = vmatprep.subr.mxu0 0.0
        %6736 = vmatpush1.msra.mxu0 0.0
        %6737 = vmatprep.subr.mxu0 0.0
        %6738 = vmatpush1.msra.mxu0 0.0
        %6739 = vmatprep.subr.mxu0 0.0
        %6740 = vmatpush1.msra.mxu0 0.0
        %6741 = vmatprep.subr.mxu0 0.0
        %6742 = vmatpush1.msra.mxu0 0.0
        %6743 = vmatprep.subr.mxu0 0.0
        %6744 = vmatpush1.msra.mxu0 0.0
        %6745 = vmatprep.subr.mxu0 0.0
        %6746 = vmatpush1.msra.mxu0 0.0
        %6747 = vmatprep.subr.mxu0 0.0
        %6748 = vmatpush1.msra.mxu0 0.0
        %6749 = vmatprep.subr.mxu0 0.0
        %6750 = vmatpush1.msra.mxu0 0.0
        %6751 = vmatprep.subr.mxu0 0.0
        %6752 = vmatpush1.msra.mxu0 0.0
        %6753 = vmatprep.subr.mxu0 0.0
        %6754 = vmatpush1.msra.mxu0 0.0
        %6755 = vmatprep.subr.mxu0 0.0
        %6756 = vmatpush1.msra.mxu0 0.0
        %6757 = vmatprep.subr.mxu0 0.0
        %6758 = vmatpush1.msra.mxu0 0.0
        %6759 = vmatprep.mubr.f32.mxu0 0.0
        %v6760 = vand.u32 %v6496, 4294901760
        %6761 = vmatmul.mubr.f32.gmra.mrb[0].mxu0 %v6760
        %v6762 = vpop.f32.mrb[0].mxu0
        %v6763 = vadd.f32 %v6602, %v6762
        %v6764 = vpop.f32.mrb[0].mxu0
        %6765 = vmatprep.mubr.f32.mxu0 0.0
        %v6766 = vand.u32 %v6497, 4294901760
        %6767 = vmatmul.mubr.f32.gmra.mrb[0].mxu0 %v6766
        %v6768 = vpop.f32.mrb[0].mxu0
        %v6769 = vadd.f32 %v6612, %v6768
        %v6770 = vpop.f32.mrb[0].mxu0
        %6771 = vdwg.mxu0
        %6772 = vmatprep.subr.mxu0 0.0
        %v6773 = vand.u32 %v6498, 4294901760
        %v6774 = vsub.f32 %v6498, %v6773
        %6775 = vmatpush1.msra.mxu0 %v6774
        %6776 = vmatprep.subr.mxu0 0.0
        %v6777 = vand.u32 %v6499, 4294901760
        %v6778 = vsub.f32 %v6499, %v6777
        %6779 = vmatpush1.msra.mxu0 %v6778
        %6780 = vmatprep.subr.mxu0 0.0
        %v6781 = vand.u32 %v6500, 4294901760
        %v6782 = vsub.f32 %v6500, %v6781
        %6783 = vmatpush1.msra.mxu0 %v6782
        %6784 = vmatprep.subr.mxu0 0.0
        %v6785 = vand.u32 %v6501, 4294901760
        %v6786 = vsub.f32 %v6501, %v6785
        %6787 = vmatpush1.msra.mxu0 %v6786
        %6788 = vmatprep.subr.mxu0 0.0
        %v6789 = vand.u32 %v6502, 4294901760
        %v6790 = vsub.f32 %v6502, %v6789
        %6791 = vmatpush1.msra.mxu0 %v6790
        %6792 = vmatprep.subr.mxu0 0.0
        %v6793 = vand.u32 %v6503, 4294901760
        %v6794 = vsub.f32 %v6503, %v6793
        %6795 = vmatpush1.msra.mxu0 %v6794
        %6796 = vmatprep.subr.mxu0 0.0
        %v6797 = vand.u32 %v6504, 4294901760
        %v6798 = vsub.f32 %v6504, %v6797
        %6799 = vmatpush1.msra.mxu0 %v6798
        %6800 = vmatprep.subr.mxu0 0.0
        %v6801 = vand.u32 %v6505, 4294901760
        %v6802 = vsub.f32 %v6505, %v6801
        %6803 = vmatpush1.msra.mxu0 %v6802
        %6804 = vmatprep.subr.mxu0 0.0
        %v6805 = vand.u32 %v6506, 4294901760
        %v6806 = vsub.f32 %v6506, %v6805
        %6807 = vmatpush1.msra.mxu0 %v6806
        %6808 = vmatprep.subr.mxu0 0.0
        %v6809 = vand.u32 %v6507, 4294901760
        %v6810 = vsub.f32 %v6507, %v6809
        %6811 = vmatpush1.msra.mxu0 %v6810
        %6812 = vmatprep.subr.mxu0 0.0
        %v6813 = vand.u32 %v6508, 4294901760
        %v6814 = vsub.f32 %v6508, %v6813
        %6815 = vmatpush1.msra.mxu0 %v6814
        %6816 = vmatprep.subr.mxu0 0.0
        %v6817 = vand.u32 %v6509, 4294901760
        %v6818 = vsub.f32 %v6509, %v6817
        %6819 = vmatpush1.msra.mxu0 %v6818
        %6820 = vmatprep.subr.mxu0 0.0
        %v6821 = vand.u32 %v6510, 4294901760
        %v6822 = vsub.f32 %v6510, %v6821
        %6823 = vmatpush1.msra.mxu0 %v6822
        %6824 = vmatprep.subr.mxu0 0.0
        %v6825 = vand.u32 %v6511, 4294901760
        %v6826 = vsub.f32 %v6511, %v6825
        %6827 = vmatpush1.msra.mxu0 %v6826
        %6828 = vmatprep.subr.mxu0 0.0
        %v6829 = vand.u32 %v6512, 4294901760
        %v6830 = vsub.f32 %v6512, %v6829
        %6831 = vmatpush1.msra.mxu0 %v6830
        %6832 = vmatprep.subr.mxu0 0.0
        %v6833 = vand.u32 %v6513, 4294901760
        %v6834 = vsub.f32 %v6513, %v6833
        %6835 = vmatpush1.msra.mxu0 %v6834
        %6836 = vmatprep.subr.mxu0 0.0
        %6837 = vmatpush1.msra.mxu0 0.0
        %6838 = vmatprep.subr.mxu0 0.0
        %6839 = vmatpush1.msra.mxu0 0.0
        %6840 = vmatprep.subr.mxu0 0.0
        %6841 = vmatpush1.msra.mxu0 0.0
        %6842 = vmatprep.subr.mxu0 0.0
        %6843 = vmatpush1.msra.mxu0 0.0
        %6844 = vmatprep.subr.mxu0 0.0
        %6845 = vmatpush1.msra.mxu0 0.0
        %6846 = vmatprep.subr.mxu0 0.0
        %6847 = vmatpush1.msra.mxu0 0.0
        %6848 = vmatprep.subr.mxu0 0.0
        %6849 = vmatpush1.msra.mxu0 0.0
        %6850 = vmatprep.subr.mxu0 0.0
        %6851 = vmatpush1.msra.mxu0 0.0
        %6852 = vmatprep.subr.mxu0 0.0
        %6853 = vmatpush1.msra.mxu0 0.0
        %6854 = vmatprep.subr.mxu0 0.0
        %6855 = vmatpush1.msra.mxu0 0.0
        %6856 = vmatprep.subr.mxu0 0.0
        %6857 = vmatpush1.msra.mxu0 0.0
        %6858 = vmatprep.subr.mxu0 0.0
        %6859 = vmatpush1.msra.mxu0 0.0
        %6860 = vmatprep.subr.mxu0 0.0
        %6861 = vmatpush1.msra.mxu0 0.0
        %6862 = vmatprep.subr.mxu0 0.0
        %6863 = vmatpush1.msra.mxu0 0.0
        %6864 = vmatprep.subr.mxu0 0.0
        %6865 = vmatpush1.msra.mxu0 0.0
        %6866 = vmatprep.subr.mxu0 0.0
        %6867 = vmatpush1.msra.mxu0 0.0
        %6868 = vmatprep.mubr.f32.mxu0 0.0
        %v6869 = vand.u32 %v6496, 4294901760
        %v6870 = vsub.f32 %v6496, %v6869
        %6871 = vmatmul.mubr.f32.gmra.mrb[0].mxu0 %v6870
        %v6872 = vpop.f32.mrb[0].mxu0
        %v6873 = vadd.f32 %v6763, %v6872
        %v6874 = vpop.f32.mrb[0].mxu0
        %6875 = vmatprep.mubr.f32.mxu0 0.0
        %v6876 = vand.u32 %v6497, 4294901760
        %v6877 = vsub.f32 %v6497, %v6876
        %6878 = vmatmul.mubr.f32.gmra.mrb[0].mxu0 %v6877
        %v6879 = vpop.f32.mrb[0].mxu0
        %v6880 = vadd.f32 %v6769, %v6879
        %v6881 = vpop.f32.mrb[0].mxu0
        %6882 = vdwg.mxu0
        %6883 = vmatprep.subr.mxu0 0.0
        %v6884 = vand.u32 %v6498, 4294901760
        %6885 = vmatpush1.msra.mxu0 %v6884
        %6886 = vmatprep.subr.mxu0 0.0
        %v6887 = vand.u32 %v6499, 4294901760
        %6888 = vmatpush1.msra.mxu0 %v6887
        %6889 = vmatprep.subr.mxu0 0.0
        %v6890 = vand.u32 %v6500, 4294901760
        %6891 = vmatpush1.msra.mxu0 %v6890
        %6892 = vmatprep.subr.mxu0 0.0
        %v6893 = vand.u32 %v6501, 4294901760
        %6894 = vmatpush1.msra.mxu0 %v6893
        %6895 = vmatprep.subr.mxu0 0.0
        %v6896 = vand.u32 %v6502, 4294901760
        %6897 = vmatpush1.msra.mxu0 %v6896
        %6898 = vmatprep.subr.mxu0 0.0
        %v6899 = vand.u32 %v6503, 4294901760
        %6900 = vmatpush1.msra.mxu0 %v6899
        %6901 = vmatprep.subr.mxu0 0.0
        %v6902 = vand.u32 %v6504, 4294901760
        %6903 = vmatpush1.msra.mxu0 %v6902
        %6904 = vmatprep.subr.mxu0 0.0
        %v6905 = vand.u32 %v6505, 4294901760
        %6906 = vmatpush1.msra.mxu0 %v6905
        %6907 = vmatprep.subr.mxu0 0.0
        %v6908 = vand.u32 %v6506, 4294901760
        %6909 = vmatpush1.msra.mxu0 %v6908
        %6910 = vmatprep.subr.mxu0 0.0
        %v6911 = vand.u32 %v6507, 4294901760
        %6912 = vmatpush1.msra.mxu0 %v6911
        %6913 = vmatprep.subr.mxu0 0.0
        %v6914 = vand.u32 %v6508, 4294901760
        %6915 = vmatpush1.msra.mxu0 %v6914
        %6916 = vmatprep.subr.mxu0 0.0
        %v6917 = vand.u32 %v6509, 4294901760
        %6918 = vmatpush1.msra.mxu0 %v6917
        %6919 = vmatprep.subr.mxu0 0.0
        %v6920 = vand.u32 %v6510, 4294901760
        %6921 = vmatpush1.msra.mxu0 %v6920
        %6922 = vmatprep.subr.mxu0 0.0
        %v6923 = vand.u32 %v6511, 4294901760
        %6924 = vmatpush1.msra.mxu0 %v6923
        %6925 = vmatprep.subr.mxu0 0.0
        %v6926 = vand.u32 %v6512, 4294901760
        %6927 = vmatpush1.msra.mxu0 %v6926
        %6928 = vmatprep.subr.mxu0 0.0
        %v6929 = vand.u32 %v6513, 4294901760
        %6930 = vmatpush1.msra.mxu0 %v6929
        %6931 = vmatprep.subr.mxu0 0.0
        %6932 = vmatpush1.msra.mxu0 0.0
        %6933 = vmatprep.subr.mxu0 0.0
        %6934 = vmatpush1.msra.mxu0 0.0
        %6935 = vmatprep.subr.mxu0 0.0
        %6936 = vmatpush1.msra.mxu0 0.0
        %6937 = vmatprep.subr.mxu0 0.0
        %6938 = vmatpush1.msra.mxu0 0.0
        %6939 = vmatprep.subr.mxu0 0.0
        %6940 = vmatpush1.msra.mxu0 0.0
        %6941 = vmatprep.subr.mxu0 0.0
        %6942 = vmatpush1.msra.mxu0 0.0
        %6943 = vmatprep.subr.mxu0 0.0
        %6944 = vmatpush1.msra.mxu0 0.0
        %6945 = vmatprep.subr.mxu0 0.0
        %6946 = vmatpush1.msra.mxu0 0.0
        %6947 = vmatprep.subr.mxu0 0.0
        %6948 = vmatpush1.msra.mxu0 0.0
        %6949 = vmatprep.subr.mxu0 0.0
        %6950 = vmatpush1.msra.mxu0 0.0
        %6951 = vmatprep.subr.mxu0 0.0
        %6952 = vmatpush1.msra.mxu0 0.0
        %6953 = vmatprep.subr.mxu0 0.0
        %6954 = vmatpush1.msra.mxu0 0.0
        %6955 = vmatprep.subr.mxu0 0.0
        %6956 = vmatpush1.msra.mxu0 0.0
        %6957 = vmatprep.subr.mxu0 0.0
        %6958 = vmatpush1.msra.mxu0 0.0
        %6959 = vmatprep.subr.mxu0 0.0
        %6960 = vmatpush1.msra.mxu0 0.0
        %6961 = vmatprep.subr.mxu0 0.0
        %6962 = vmatpush1.msra.mxu0 0.0
        %6963 = vmatprep.mubr.f32.mxu0 0.0
        %v6964 = vand.u32 %v6496, 4294901760
        %v6965 = vsub.f32 %v6496, %v6964
        %v6966 = vand.u32 %v6965, 4294901760
        %6967 = vmatmul.mubr.f32.gmra.mrb[0].mxu0 %v6966
        %v6968 = vpop.f32.mrb[0].mxu0
        %v6969 = vadd.f32 %v6873, %v6968
        %v6970 = vpop.f32.mrb[0].mxu0
        %6971 = vmatprep.mubr.f32.mxu0 0.0
        %v6972 = vand.u32 %v6497, 4294901760
        %v6973 = vsub.f32 %v6497, %v6972
        %v6974 = vand.u32 %v6973, 4294901760
        %6975 = vmatmul.mubr.f32.gmra.mrb[0].mxu0 %v6974
        %v6976 = vpop.f32.mrb[0].mxu0
        %v6977 = vadd.f32 %v6880, %v6976
        %v6978 = vpop.f32.mrb[0].mxu0
        %6979 = vdwg.mxu0
        %6980 = vmatprep.subr.mxu0 0.0
        %v6981 = vand.u32 %v6498, 4294901760
        %v6982 = vsub.f32 %v6498, %v6981
        %v6983 = vand.u32 %v6982, 4294901760
        %6984 = vmatpush1.msra.mxu0 %v6983
        %6985 = vmatprep.subr.mxu0 0.0
        %v6986 = vand.u32 %v6499, 4294901760
        %v6987 = vsub.f32 %v6499, %v6986
        %v6988 = vand.u32 %v6987, 4294901760
        %6989 = vmatpush1.msra.mxu0 %v6988
        %6990 = vmatprep.subr.mxu0 0.0
        %v6991 = vand.u32 %v6500, 4294901760
        %v6992 = vsub.f32 %v6500, %v6991
        %v6993 = vand.u32 %v6992, 4294901760
        %6994 = vmatpush1.msra.mxu0 %v6993
        %6995 = vmatprep.subr.mxu0 0.0
        %v6996 = vand.u32 %v6501, 4294901760
        %v6997 = vsub.f32 %v6501, %v6996
        %v6998 = vand.u32 %v6997, 4294901760
        %6999 = vmatpush1.msra.mxu0 %v6998
        %7000 = vmatprep.subr.mxu0 0.0
        %v7001 = vand.u32 %v6502, 4294901760
        %v7002 = vsub.f32 %v6502, %v7001
        %v7003 = vand.u32 %v7002, 4294901760
        %7004 = vmatpush1.msra.mxu0 %v7003
        %7005 = vmatprep.subr.mxu0 0.0
        %v7006 = vand.u32 %v6503, 4294901760
        %v7007 = vsub.f32 %v6503, %v7006
        %v7008 = vand.u32 %v7007, 4294901760
        %7009 = vmatpush1.msra.mxu0 %v7008
        %7010 = vmatprep.subr.mxu0 0.0
        %v7011 = vand.u32 %v6504, 4294901760
        %v7012 = vsub.f32 %v6504, %v7011
        %v7013 = vand.u32 %v7012, 4294901760
        %7014 = vmatpush1.msra.mxu0 %v7013
        %7015 = vmatprep.subr.mxu0 0.0
        %v7016 = vand.u32 %v6505, 4294901760
        %v7017 = vsub.f32 %v6505, %v7016
        %v7018 = vand.u32 %v7017, 4294901760
        %7019 = vmatpush1.msra.mxu0 %v7018
        %7020 = vmatprep.subr.mxu0 0.0
        %v7021 = vand.u32 %v6506, 4294901760
        %v7022 = vsub.f32 %v6506, %v7021
        %v7023 = vand.u32 %v7022, 4294901760
        %7024 = vmatpush1.msra.mxu0 %v7023
        %7025 = vmatprep.subr.mxu0 0.0
        %v7026 = vand.u32 %v6507, 4294901760
        %v7027 = vsub.f32 %v6507, %v7026
        %v7028 = vand.u32 %v7027, 4294901760
        %7029 = vmatpush1.msra.mxu0 %v7028
        %7030 = vmatprep.subr.mxu0 0.0
        %v7031 = vand.u32 %v6508, 4294901760
        %v7032 = vsub.f32 %v6508, %v7031
        %v7033 = vand.u32 %v7032, 4294901760
        %7034 = vmatpush1.msra.mxu0 %v7033
        %7035 = vmatprep.subr.mxu0 0.0
        %v7036 = vand.u32 %v6509, 4294901760
        %v7037 = vsub.f32 %v6509, %v7036
        %v7038 = vand.u32 %v7037, 4294901760
        %7039 = vmatpush1.msra.mxu0 %v7038
        %7040 = vmatprep.subr.mxu0 0.0
        %v7041 = vand.u32 %v6510, 4294901760
        %v7042 = vsub.f32 %v6510, %v7041
        %v7043 = vand.u32 %v7042, 4294901760
        %7044 = vmatpush1.msra.mxu0 %v7043
        %7045 = vmatprep.subr.mxu0 0.0
        %v7046 = vand.u32 %v6511, 4294901760
        %v7047 = vsub.f32 %v6511, %v7046
        %v7048 = vand.u32 %v7047, 4294901760
        %7049 = vmatpush1.msra.mxu0 %v7048
        %7050 = vmatprep.subr.mxu0 0.0
        %v7051 = vand.u32 %v6512, 4294901760
        %v7052 = vsub.f32 %v6512, %v7051
        %v7053 = vand.u32 %v7052, 4294901760
        %7054 = vmatpush1.msra.mxu0 %v7053
        %7055 = vmatprep.subr.mxu0 0.0
        %v7056 = vand.u32 %v6513, 4294901760
        %v7057 = vsub.f32 %v6513, %v7056
        %v7058 = vand.u32 %v7057, 4294901760
        %7059 = vmatpush1.msra.mxu0 %v7058
        %7060 = vmatprep.subr.mxu0 0.0
        %7061 = vmatpush1.msra.mxu0 0.0
        %7062 = vmatprep.subr.mxu0 0.0
        %7063 = vmatpush1.msra.mxu0 0.0
        %7064 = vmatprep.subr.mxu0 0.0
        %7065 = vmatpush1.msra.mxu0 0.0
        %7066 = vmatprep.subr.mxu0 0.0
        %7067 = vmatpush1.msra.mxu0 0.0
        %7068 = vmatprep.subr.mxu0 0.0
        %7069 = vmatpush1.msra.mxu0 0.0
        %7070 = vmatprep.subr.mxu0 0.0
        %7071 = vmatpush1.msra.mxu0 0.0
        %7072 = vmatprep.subr.mxu0 0.0
        %7073 = vmatpush1.msra.mxu0 0.0
        %7074 = vmatprep.subr.mxu0 0.0
        %7075 = vmatpush1.msra.mxu0 0.0
        %7076 = vmatprep.subr.mxu0 0.0
        %7077 = vmatpush1.msra.mxu0 0.0
        %7078 = vmatprep.subr.mxu0 0.0
        %7079 = vmatpush1.msra.mxu0 0.0
        %7080 = vmatprep.subr.mxu0 0.0
        %7081 = vmatpush1.msra.mxu0 0.0
        %7082 = vmatprep.subr.mxu0 0.0
        %7083 = vmatpush1.msra.mxu0 0.0
        %7084 = vmatprep.subr.mxu0 0.0
        %7085 = vmatpush1.msra.mxu0 0.0
        %7086 = vmatprep.subr.mxu0 0.0
        %7087 = vmatpush1.msra.mxu0 0.0
        %7088 = vmatprep.subr.mxu0 0.0
        %7089 = vmatpush1.msra.mxu0 0.0
        %7090 = vmatprep.subr.mxu0 0.0
        %7091 = vmatpush1.msra.mxu0 0.0
        %7092 = vmatprep.mubr.f32.mxu0 0.0
        %v7093 = vand.u32 %v6496, 4294901760
        %7094 = vmatmul.mubr.f32.gmra.mrb[0].mxu0 %v7093
        %v7095 = vpop.f32.mrb[0].mxu0
        %v7096 = vadd.f32 %v6969, %v7095
        %v7097 = vpop.f32.mrb[0].mxu0
        %7098 = vmatprep.mubr.f32.mxu0 0.0
        %v7099 = vand.u32 %v6497, 4294901760
        %7100 = vmatmul.mubr.f32.gmra.mrb[0].mxu0 %v7099
        %v7101 = vpop.f32.mrb[0].mxu0
        %v7102 = vadd.f32 %v6977, %v7101
        %v7103 = vpop.f32.mrb[0].mxu0
        %7104 = vdwg.mxu0
        %7105 = vmatprep.subr.mxu0 0.0
        %v7106 = vand.u32 %v6498, 4294901760
        %7107 = vmatpush1.msra.mxu0 %v7106
        %7108 = vmatprep.subr.mxu0 0.0
        %v7109 = vand.u32 %v6499, 4294901760
        %7110 = vmatpush1.msra.mxu0 %v7109
        %7111 = vmatprep.subr.mxu0 0.0
        %v7112 = vand.u32 %v6500, 4294901760
        %7113 = vmatpush1.msra.mxu0 %v7112
        %7114 = vmatprep.subr.mxu0 0.0
        %v7115 = vand.u32 %v6501, 4294901760
        %7116 = vmatpush1.msra.mxu0 %v7115
        %7117 = vmatprep.subr.mxu0 0.0
        %v7118 = vand.u32 %v6502, 4294901760
        %7119 = vmatpush1.msra.mxu0 %v7118
        %7120 = vmatprep.subr.mxu0 0.0
        %v7121 = vand.u32 %v6503, 4294901760
        %7122 = vmatpush1.msra.mxu0 %v7121
        %7123 = vmatprep.subr.mxu0 0.0
        %v7124 = vand.u32 %v6504, 4294901760
        %7125 = vmatpush1.msra.mxu0 %v7124
        %7126 = vmatprep.subr.mxu0 0.0
        %v7127 = vand.u32 %v6505, 4294901760
        %7128 = vmatpush1.msra.mxu0 %v7127
        %7129 = vmatprep.subr.mxu0 0.0
        %v7130 = vand.u32 %v6506, 4294901760
        %7131 = vmatpush1.msra.mxu0 %v7130
        %7132 = vmatprep.subr.mxu0 0.0
        %v7133 = vand.u32 %v6507, 4294901760
        %7134 = vmatpush1.msra.mxu0 %v7133
        %7135 = vmatprep.subr.mxu0 0.0
        %v7136 = vand.u32 %v6508, 4294901760
        %7137 = vmatpush1.msra.mxu0 %v7136
        %7138 = vmatprep.subr.mxu0 0.0
        %v7139 = vand.u32 %v6509, 4294901760
        %7140 = vmatpush1.msra.mxu0 %v7139
        %7141 = vmatprep.subr.mxu0 0.0
        %v7142 = vand.u32 %v6510, 4294901760
        %7143 = vmatpush1.msra.mxu0 %v7142
        %7144 = vmatprep.subr.mxu0 0.0
        %v7145 = vand.u32 %v6511, 4294901760
        %7146 = vmatpush1.msra.mxu0 %v7145
        %7147 = vmatprep.subr.mxu0 0.0
        %v7148 = vand.u32 %v6512, 4294901760
        %7149 = vmatpush1.msra.mxu0 %v7148
        %7150 = vmatprep.subr.mxu0 0.0
        %v7151 = vand.u32 %v6513, 4294901760
        %7152 = vmatpush1.msra.mxu0 %v7151
        %7153 = vmatprep.subr.mxu0 0.0
        %7154 = vmatpush1.msra.mxu0 0.0
        %7155 = vmatprep.subr.mxu0 0.0
        %7156 = vmatpush1.msra.mxu0 0.0
        %7157 = vmatprep.subr.mxu0 0.0
        %7158 = vmatpush1.msra.mxu0 0.0
        %7159 = vmatprep.subr.mxu0 0.0
        %7160 = vmatpush1.msra.mxu0 0.0
        %7161 = vmatprep.subr.mxu0 0.0
        %7162 = vmatpush1.msra.mxu0 0.0
        %7163 = vmatprep.subr.mxu0 0.0
        %7164 = vmatpush1.msra.mxu0 0.0
        %7165 = vmatprep.subr.mxu0 0.0
        %7166 = vmatpush1.msra.mxu0 0.0
        %7167 = vmatprep.subr.mxu0 0.0
        %7168 = vmatpush1.msra.mxu0 0.0
        %7169 = vmatprep.subr.mxu0 0.0
        %7170 = vmatpush1.msra.mxu0 0.0
        %7171 = vmatprep.subr.mxu0 0.0
        %7172 = vmatpush1.msra.mxu0 0.0
        %7173 = vmatprep.subr.mxu0 0.0
        %7174 = vmatpush1.msra.mxu0 0.0
        %7175 = vmatprep.subr.mxu0 0.0
        %7176 = vmatpush1.msra.mxu0 0.0
        %7177 = vmatprep.subr.mxu0 0.0
        %7178 = vmatpush1.msra.mxu0 0.0
        %7179 = vmatprep.subr.mxu0 0.0
        %7180 = vmatpush1.msra.mxu0 0.0
        %7181 = vmatprep.subr.mxu0 0.0
        %7182 = vmatpush1.msra.mxu0 0.0
        %7183 = vmatprep.subr.mxu0 0.0
        %7184 = vmatpush1.msra.mxu0 0.0
        %7185 = vmatprep.mubr.f32.mxu0 0.0
        %v7186 = vand.u32 %v6496, 4294901760
        %7187 = vmatmul.mubr.f32.gmra.mrb[0].mxu0 %v7186
        %v7188 = vpop.f32.mrb[0].mxu0
        %v7189 = vadd.f32 %v7096, %v7188
        %v7190 = vpop.f32.mrb[0].mxu0
        %7191 = vmatprep.mubr.f32.mxu0 0.0
        %v7192 = vand.u32 %v6497, 4294901760
        %7193 = vmatmul.mubr.f32.gmra.mrb[0].mxu0 %v7192
        %v7194 = vpop.f32.mrb[0].mxu0
        %v7195 = vadd.f32 %v7102, %v7194
        %v7196 = vpop.f32.mrb[0].mxu0
        %7197 = vdwg.mxu0
        %v7198 = vadd.f32 %v490, %v7189
        %v7199 = vadd.f32 %v491, %v7195
        %v7200 = vmul.f32 %v7198, %v7198
        %v7201 = vmul.f32 %v7199, %v7199
        %7202 = vadd.xlane.f32.xlu0 %v7200
        %v7203 = vpop.xlane.xlu0 %7202
        %7204 = vadd.xlane.f32.xlu0 %v7201
        %v7205 = vpop.xlane.xlu0 %7204
        %v7206 = vmul.f32 %v7203, %v498
        %v7207 = vmul.f32 %v7205, %v498
        %v7208 = vadd.f32 %v7206, 1e-06
        %v7209 = vadd.f32 %v7207, 1e-06
        %v7210 = vrsqrt.pop %v7208
        %v7211 = vrsqrt.pop %v7209
        %v7212 = vmul.f32 %v7198, %v7210
        %v7213 = vmul.f32 %v7199, %v7211
        %v7214 = vld [vmem:[%s2] sm:$0x1]
        %v7216 = vlaneseq
        %v7217 = vshrl.u32 %v7216, 7
        %v7218 = vsub.s32 0, %v7217
        %v7219 = vrot.slane %v7214, %v7218
        %v7221 = vmul.f32 %v7212, %v7219
        %v7222 = vmul.f32 %v7213, %v7219
        %v7223 = vld [vmem:[#allocation10] sm:$0xff]
        %v7224 = vld [vmem:[#allocation10 + $0x8] sm:$0xff]
        %v7225 = vld [vmem:[#allocation10 + $0x10] sm:$0xff]
        %v7226 = vld [vmem:[#allocation10 + $0x18] sm:$0xff]
        %v7227 = vld [vmem:[#allocation10 + $0x20] sm:$0xff]
        %v7228 = vld [vmem:[#allocation10 + $0x28] sm:$0xff]
        %v7229 = vld [vmem:[#allocation10 + $0x30] sm:$0xff]
        %v7230 = vld [vmem:[#allocation10 + $0x38] sm:$0xff]
        %v7231 = vld [vmem:[#allocation10 + $0x40] sm:$0xff]
        %v7232 = vld [vmem:[#allocation10 + $0x48] sm:$0xff]
        %v7233 = vld [vmem:[#allocation10 + $0x50] sm:$0xff]
        %v7234 = vld [vmem:[#allocation10 + $0x58] sm:$0xff]
        %v7235 = vld [vmem:[#allocation10 + $0x60] sm:$0xff]
        %v7236 = vld [vmem:[#allocation10 + $0x68] sm:$0xff]
        %v7237 = vld [vmem:[#allocation10 + $0x70] sm:$0xff]
        %v7238 = vld [vmem:[#allocation10 + $0x78] sm:$0xff]
        %v7239 = vld [vmem:[#allocation10 + $0x80] sm:$0xff]
        %v7240 = vld [vmem:[#allocation10 + $0x88] sm:$0xff]
        %v7241 = vld [vmem:[#allocation10 + $0x90] sm:$0xff]
        %v7242 = vld [vmem:[#allocation10 + $0x98] sm:$0xff]
        %v7243 = vld [vmem:[#allocation10 + $0xa0] sm:$0xff]
        %v7244 = vld [vmem:[#allocation10 + $0xa8] sm:$0xff]
        %v7245 = vld [vmem:[#allocation10 + $0xb0] sm:$0xff]
        %v7246 = vld [vmem:[#allocation10 + $0xb8] sm:$0xff]
        %v7247 = vld [vmem:[#allocation10 + $0xc0] sm:$0xff]
        %v7248 = vld [vmem:[#allocation10 + $0xc8] sm:$0xff]
        %v7249 = vld [vmem:[#allocation10 + $0xd0] sm:$0xff]
        %v7250 = vld [vmem:[#allocation10 + $0xd8] sm:$0xff]
        %v7251 = vld [vmem:[#allocation10 + $0xe0] sm:$0xff]
        %v7252 = vld [vmem:[#allocation10 + $0xe8] sm:$0xff]
        %v7253 = vld [vmem:[#allocation10 + $0xf0] sm:$0xff]
        %v7254 = vld [vmem:[#allocation10 + $0xf8] sm:$0xff]
        %v7255 = vld [vmem:[#allocation10 + $0x100] sm:$0xff]
        %v7256 = vld [vmem:[#allocation10 + $0x108] sm:$0xff]
        %v7257 = vld [vmem:[#allocation10 + $0x110] sm:$0xff]
        %v7258 = vld [vmem:[#allocation10 + $0x118] sm:$0xff]
        %v7259 = vld [vmem:[#allocation10 + $0x120] sm:$0xff]
        %v7260 = vld [vmem:[#allocation10 + $0x128] sm:$0xff]
        %v7261 = vld [vmem:[#allocation10 + $0x130] sm:$0xff]
        %v7262 = vld [vmem:[#allocation10 + $0x138] sm:$0xff]
        %v7263 = vld [vmem:[#allocation10 + $0x140] sm:$0xff]
        %v7264 = vld [vmem:[#allocation10 + $0x148] sm:$0xff]
        %v7265 = vld [vmem:[#allocation10 + $0x150] sm:$0xff]
        %v7266 = vld [vmem:[#allocation10 + $0x158] sm:$0xff]
        %v7267 = vld [vmem:[#allocation10 + $0x160] sm:$0xff]
        %v7268 = vld [vmem:[#allocation10 + $0x168] sm:$0xff]
        %v7269 = vld [vmem:[#allocation10 + $0x170] sm:$0xff]
        %v7270 = vld [vmem:[#allocation10 + $0x178] sm:$0xff]
        %v7271 = vld [vmem:[#allocation10 + $0x180] sm:$0xff]
        %v7272 = vld [vmem:[#allocation10 + $0x188] sm:$0xff]
        %v7273 = vld [vmem:[#allocation10 + $0x190] sm:$0xff]
        %v7274 = vld [vmem:[#allocation10 + $0x198] sm:$0xff]
        %v7275 = vld [vmem:[#allocation10 + $0x1a0] sm:$0xff]
        %v7276 = vld [vmem:[#allocation10 + $0x1a8] sm:$0xff]
        %v7277 = vld [vmem:[#allocation10 + $0x1b0] sm:$0xff]
        %v7278 = vld [vmem:[#allocation10 + $0x1b8] sm:$0xff]
        %v7279 = vld [vmem:[#allocation10 + $0x1c0] sm:$0xff]
        %v7280 = vld [vmem:[#allocation10 + $0x1c8] sm:$0xff]
        %v7281 = vld [vmem:[#allocation10 + $0x1d0] sm:$0xff]
        %v7282 = vld [vmem:[#allocation10 + $0x1d8] sm:$0xff]
        %v7283 = vld [vmem:[#allocation10 + $0x1e0] sm:$0xff]
        %v7284 = vld [vmem:[#allocation10 + $0x1e8] sm:$0xff]
        %v7285 = vld [vmem:[#allocation10 + $0x1f0] sm:$0xff]
        %v7286 = vld [vmem:[#allocation10 + $0x1f8] sm:$0xff]
        %v7287 = vand.u32 %v7224, 4294901760
        %7288 = vmatprep.subr.mxu0 %v7287
        %v7289 = vand.u32 %v7223, 4294901760
        %7290 = vmatpush1.msra.mxu0 %v7289
        %v7291 = vand.u32 %v7228, 4294901760
        %7292 = vmatprep.subr.mxu0 %v7291
        %v7293 = vand.u32 %v7227, 4294901760
        %7294 = vmatpush1.msra.mxu0 %v7293
        %v7295 = vand.u32 %v7232, 4294901760
        %7296 = vmatprep.subr.mxu0 %v7295
        %v7297 = vand.u32 %v7231, 4294901760
        %7298 = vmatpush1.msra.mxu0 %v7297
        %v7299 = vand.u32 %v7236, 4294901760
        %7300 = vmatprep.subr.mxu0 %v7299
        %v7301 = vand.u32 %v7235, 4294901760
        %7302 = vmatpush1.msra.mxu0 %v7301
        %v7303 = vand.u32 %v7240, 4294901760
        %7304 = vmatprep.subr.mxu0 %v7303
        %v7305 = vand.u32 %v7239, 4294901760
        %7306 = vmatpush1.msra.mxu0 %v7305
        %v7307 = vand.u32 %v7244, 4294901760
        %7308 = vmatprep.subr.mxu0 %v7307
        %v7309 = vand.u32 %v7243, 4294901760
        %7310 = vmatpush1.msra.mxu0 %v7309
        %v7311 = vand.u32 %v7248, 4294901760
        %7312 = vmatprep.subr.mxu0 %v7311
        %v7313 = vand.u32 %v7247, 4294901760
        %7314 = vmatpush1.msra.mxu0 %v7313
        %v7315 = vand.u32 %v7252, 4294901760
        %7316 = vmatprep.subr.mxu0 %v7315
        %v7317 = vand.u32 %v7251, 4294901760
        %7318 = vmatpush1.msra.mxu0 %v7317
        %v7319 = vand.u32 %v7256, 4294901760
        %7320 = vmatprep.subr.mxu0 %v7319
        %v7321 = vand.u32 %v7255, 4294901760
        %7322 = vmatpush1.msra.mxu0 %v7321
        %v7323 = vand.u32 %v7260, 4294901760
        %7324 = vmatprep.subr.mxu0 %v7323
        %v7325 = vand.u32 %v7259, 4294901760
        %7326 = vmatpush1.msra.mxu0 %v7325
        %v7327 = vand.u32 %v7264, 4294901760
        %7328 = vmatprep.subr.mxu0 %v7327
        %v7329 = vand.u32 %v7263, 4294901760
        %7330 = vmatpush1.msra.mxu0 %v7329
        %v7331 = vand.u32 %v7268, 4294901760
        %7332 = vmatprep.subr.mxu0 %v7331
        %v7333 = vand.u32 %v7267, 4294901760
        %7334 = vmatpush1.msra.mxu0 %v7333
        %v7335 = vand.u32 %v7272, 4294901760
        %7336 = vmatprep.subr.mxu0 %v7335
        %v7337 = vand.u32 %v7271, 4294901760
        %7338 = vmatpush1.msra.mxu0 %v7337
        %v7339 = vand.u32 %v7276, 4294901760
        %7340 = vmatprep.subr.mxu0 %v7339
        %v7341 = vand.u32 %v7275, 4294901760
        %7342 = vmatpush1.msra.mxu0 %v7341
        %v7343 = vand.u32 %v7280, 4294901760
        %7344 = vmatprep.subr.mxu0 %v7343
        %v7345 = vand.u32 %v7279, 4294901760
        %7346 = vmatpush1.msra.mxu0 %v7345
        %v7347 = vand.u32 %v7284, 4294901760
        %7348 = vmatprep.subr.mxu0 %v7347
        %v7349 = vand.u32 %v7283, 4294901760
        %7350 = vmatpush1.msra.mxu0 %v7349
        %7351 = vmatprep.subr.mxu0 0.0
        %7352 = vmatpush1.msra.mxu0 0.0
        %7353 = vmatprep.subr.mxu0 0.0
        %7354 = vmatpush1.msra.mxu0 0.0
        %7355 = vmatprep.subr.mxu0 0.0
        %7356 = vmatpush1.msra.mxu0 0.0
        %7357 = vmatprep.subr.mxu0 0.0
        %7358 = vmatpush1.msra.mxu0 0.0
        %7359 = vmatprep.subr.mxu0 0.0
        %7360 = vmatpush1.msra.mxu0 0.0
        %7361 = vmatprep.subr.mxu0 0.0
        %7362 = vmatpush1.msra.mxu0 0.0
        %7363 = vmatprep.subr.mxu0 0.0
        %7364 = vmatpush1.msra.mxu0 0.0
        %7365 = vmatprep.subr.mxu0 0.0
        %7366 = vmatpush1.msra.mxu0 0.0
        %7367 = vmatprep.subr.mxu0 0.0
        %7368 = vmatpush1.msra.mxu0 0.0
        %7369 = vmatprep.subr.mxu0 0.0
        %7370 = vmatpush1.msra.mxu0 0.0
        %7371 = vmatprep.subr.mxu0 0.0
        %7372 = vmatpush1.msra.mxu0 0.0
        %7373 = vmatprep.subr.mxu0 0.0
        %7374 = vmatpush1.msra.mxu0 0.0
        %7375 = vmatprep.subr.mxu0 0.0
        %7376 = vmatpush1.msra.mxu0 0.0
        %7377 = vmatprep.subr.mxu0 0.0
        %7378 = vmatpush1.msra.mxu0 0.0
        %7379 = vmatprep.subr.mxu0 0.0
        %7380 = vmatpush1.msra.mxu0 0.0
        %7381 = vmatprep.subr.mxu0 0.0
        %7382 = vmatpush1.msra.mxu0 0.0
        %7383 = vmatprep.mubr.f32.mxu0 0.0
        %v7384 = vand.u32 %v7221, 4294901760
        %v7385 = vsub.f32 %v7221, %v7384
        %v7386 = vand.u32 %v7385, 4294901760
        %v7387 = vsub.f32 %v7385, %v7386
        %v7388 = vand.u32 %v7387, 4294901760
        %7389 = vmatmul.mubr.f32.gmra.mrb[0].mxu0 %v7388
        %v7390 = vpop.f32.mrb[0].mxu0
        %v7391 = vadd.f32 0.0, %v7390
        %v7392 = vpop.f32.mrb[0].mxu0
        %v7393 = vadd.f32 0.0, %v7392
        %7394 = vmatprep.mubr.f32.mxu0 0.0
        %v7395 = vand.u32 %v7222, 4294901760
        %v7396 = vsub.f32 %v7222, %v7395
        %v7397 = vand.u32 %v7396, 4294901760
        %v7398 = vsub.f32 %v7396, %v7397
        %v7399 = vand.u32 %v7398, 4294901760
        %7400 = vmatmul.mubr.f32.gmra.mrb[0].mxu0 %v7399
        %v7401 = vpop.f32.mrb[0].mxu0
        %v7402 = vadd.f32 0.0, %v7401
        %v7403 = vpop.f32.mrb[0].mxu0
        %v7404 = vadd.f32 0.0, %v7403
        %7405 = vdwg.mxu0
        %v7406 = vand.u32 %v7224, 4294901760
        %v7407 = vsub.f32 %v7224, %v7406
        %v7408 = vand.u32 %v7407, 4294901760
        %v7409 = vsub.f32 %v7407, %v7408
        %v7410 = vand.u32 %v7409, 4294901760
        %7411 = vmatprep.subr.mxu0 %v7410
        %v7412 = vand.u32 %v7223, 4294901760
        %v7413 = vsub.f32 %v7223, %v7412
        %v7414 = vand.u32 %v7413, 4294901760
        %v7415 = vsub.f32 %v7413, %v7414
        %v7416 = vand.u32 %v7415, 4294901760
        %7417 = vmatpush1.msra.mxu0 %v7416
        %v7418 = vand.u32 %v7228, 4294901760
        %v7419 = vsub.f32 %v7228, %v7418
        %v7420 = vand.u32 %v7419, 4294901760
        %v7421 = vsub.f32 %v7419, %v7420
        %v7422 = vand.u32 %v7421, 4294901760
        %7423 = vmatprep.subr.mxu0 %v7422
        %v7424 = vand.u32 %v7227, 4294901760
        %v7425 = vsub.f32 %v7227, %v7424
        %v7426 = vand.u32 %v7425, 4294901760
        %v7427 = vsub.f32 %v7425, %v7426
        %v7428 = vand.u32 %v7427, 4294901760
        %7429 = vmatpush1.msra.mxu0 %v7428
        %v7430 = vand.u32 %v7232, 4294901760
        %v7431 = vsub.f32 %v7232, %v7430
        %v7432 = vand.u32 %v7431, 4294901760
        %v7433 = vsub.f32 %v7431, %v7432
        %v7434 = vand.u32 %v7433, 4294901760
        %7435 = vmatprep.subr.mxu0 %v7434
        %v7436 = vand.u32 %v7231, 4294901760
        %v7437 = vsub.f32 %v7231, %v7436
        %v7438 = vand.u32 %v7437, 4294901760
        %v7439 = vsub.f32 %v7437, %v7438
        %v7440 = vand.u32 %v7439, 4294901760
        %7441 = vmatpush1.msra.mxu0 %v7440
        %v7442 = vand.u32 %v7236, 4294901760
        %v7443 = vsub.f32 %v7236, %v7442
        %v7444 = vand.u32 %v7443, 4294901760
        %v7445 = vsub.f32 %v7443, %v7444
        %v7446 = vand.u32 %v7445, 4294901760
        %7447 = vmatprep.subr.mxu0 %v7446
        %v7448 = vand.u32 %v7235, 4294901760
        %v7449 = vsub.f32 %v7235, %v7448
        %v7450 = vand.u32 %v7449, 4294901760
        %v7451 = vsub.f32 %v7449, %v7450
        %v7452 = vand.u32 %v7451, 4294901760
        %7453 = vmatpush1.msra.mxu0 %v7452
        %v7454 = vand.u32 %v7240, 4294901760
        %v7455 = vsub.f32 %v7240, %v7454
        %v7456 = vand.u32 %v7455, 4294901760
        %v7457 = vsub.f32 %v7455, %v7456
        %v7458 = vand.u32 %v7457, 4294901760
        %7459 = vmatprep.subr.mxu0 %v7458
        %v7460 = vand.u32 %v7239, 4294901760
        %v7461 = vsub.f32 %v7239, %v7460
        %v7462 = vand.u32 %v7461, 4294901760
        %v7463 = vsub.f32 %v7461, %v7462
        %v7464 = vand.u32 %v7463, 4294901760
        %7465 = vmatpush1.msra.mxu0 %v7464
        %v7466 = vand.u32 %v7244, 4294901760
        %v7467 = vsub.f32 %v7244, %v7466
        %v7468 = vand.u32 %v7467, 4294901760
        %v7469 = vsub.f32 %v7467, %v7468
        %v7470 = vand.u32 %v7469, 4294901760
        %7471 = vmatprep.subr.mxu0 %v7470
        %v7472 = vand.u32 %v7243, 4294901760
        %v7473 = vsub.f32 %v7243, %v7472
        %v7474 = vand.u32 %v7473, 4294901760
        %v7475 = vsub.f32 %v7473, %v7474
        %v7476 = vand.u32 %v7475, 4294901760
        %7477 = vmatpush1.msra.mxu0 %v7476
        %v7478 = vand.u32 %v7248, 4294901760
        %v7479 = vsub.f32 %v7248, %v7478
        %v7480 = vand.u32 %v7479, 4294901760
        %v7481 = vsub.f32 %v7479, %v7480
        %v7482 = vand.u32 %v7481, 4294901760
        %7483 = vmatprep.subr.mxu0 %v7482
        %v7484 = vand.u32 %v7247, 4294901760
        %v7485 = vsub.f32 %v7247, %v7484
        %v7486 = vand.u32 %v7485, 4294901760
        %v7487 = vsub.f32 %v7485, %v7486
        %v7488 = vand.u32 %v7487, 4294901760
        %7489 = vmatpush1.msra.mxu0 %v7488
        %v7490 = vand.u32 %v7252, 4294901760
        %v7491 = vsub.f32 %v7252, %v7490
        %v7492 = vand.u32 %v7491, 4294901760
        %v7493 = vsub.f32 %v7491, %v7492
        %v7494 = vand.u32 %v7493, 4294901760
        %7495 = vmatprep.subr.mxu0 %v7494
        %v7496 = vand.u32 %v7251, 4294901760
        %v7497 = vsub.f32 %v7251, %v7496
        %v7498 = vand.u32 %v7497, 4294901760
        %v7499 = vsub.f32 %v7497, %v7498
        %v7500 = vand.u32 %v7499, 4294901760
        %7501 = vmatpush1.msra.mxu0 %v7500
        %v7502 = vand.u32 %v7256, 4294901760
        %v7503 = vsub.f32 %v7256, %v7502
        %v7504 = vand.u32 %v7503, 4294901760
        %v7505 = vsub.f32 %v7503, %v7504
        %v7506 = vand.u32 %v7505, 4294901760
        %7507 = vmatprep.subr.mxu0 %v7506
        %v7508 = vand.u32 %v7255, 4294901760
        %v7509 = vsub.f32 %v7255, %v7508
        %v7510 = vand.u32 %v7509, 4294901760
        %v7511 = vsub.f32 %v7509, %v7510
        %v7512 = vand.u32 %v7511, 4294901760
        %7513 = vmatpush1.msra.mxu0 %v7512
        %v7514 = vand.u32 %v7260, 4294901760
        %v7515 = vsub.f32 %v7260, %v7514
        %v7516 = vand.u32 %v7515, 4294901760
        %v7517 = vsub.f32 %v7515, %v7516
        %v7518 = vand.u32 %v7517, 4294901760
        %7519 = vmatprep.subr.mxu0 %v7518
        %v7520 = vand.u32 %v7259, 4294901760
        %v7521 = vsub.f32 %v7259, %v7520
        %v7522 = vand.u32 %v7521, 4294901760
        %v7523 = vsub.f32 %v7521, %v7522
        %v7524 = vand.u32 %v7523, 4294901760
        %7525 = vmatpush1.msra.mxu0 %v7524
        %v7526 = vand.u32 %v7264, 4294901760
        %v7527 = vsub.f32 %v7264, %v7526
        %v7528 = vand.u32 %v7527, 4294901760
        %v7529 = vsub.f32 %v7527, %v7528
        %v7530 = vand.u32 %v7529, 4294901760
        %7531 = vmatprep.subr.mxu0 %v7530
        %v7532 = vand.u32 %v7263, 4294901760
        %v7533 = vsub.f32 %v7263, %v7532
        %v7534 = vand.u32 %v7533, 4294901760
        %v7535 = vsub.f32 %v7533, %v7534
        %v7536 = vand.u32 %v7535, 4294901760
        %7537 = vmatpush1.msra.mxu0 %v7536
        %v7538 = vand.u32 %v7268, 4294901760
        %v7539 = vsub.f32 %v7268, %v7538
        %v7540 = vand.u32 %v7539, 4294901760
        %v7541 = vsub.f32 %v7539, %v7540
        %v7542 = vand.u32 %v7541, 4294901760
        %7543 = vmatprep.subr.mxu0 %v7542
        %v7544 = vand.u32 %v7267, 4294901760
        %v7545 = vsub.f32 %v7267, %v7544
        %v7546 = vand.u32 %v7545, 4294901760
        %v7547 = vsub.f32 %v7545, %v7546
        %v7548 = vand.u32 %v7547, 4294901760
        %7549 = vmatpush1.msra.mxu0 %v7548
        %v7550 = vand.u32 %v7272, 4294901760
        %v7551 = vsub.f32 %v7272, %v7550
        %v7552 = vand.u32 %v7551, 4294901760
        %v7553 = vsub.f32 %v7551, %v7552
        %v7554 = vand.u32 %v7553, 4294901760
        %7555 = vmatprep.subr.mxu0 %v7554
        %v7556 = vand.u32 %v7271, 4294901760
        %v7557 = vsub.f32 %v7271, %v7556
        %v7558 = vand.u32 %v7557, 4294901760
        %v7559 = vsub.f32 %v7557, %v7558
        %v7560 = vand.u32 %v7559, 4294901760
        %7561 = vmatpush1.msra.mxu0 %v7560
        %v7562 = vand.u32 %v7276, 4294901760
        %v7563 = vsub.f32 %v7276, %v7562
        %v7564 = vand.u32 %v7563, 4294901760
        %v7565 = vsub.f32 %v7563, %v7564
        %v7566 = vand.u32 %v7565, 4294901760
        %7567 = vmatprep.subr.mxu0 %v7566
        %v7568 = vand.u32 %v7275, 4294901760
        %v7569 = vsub.f32 %v7275, %v7568
        %v7570 = vand.u32 %v7569, 4294901760
        %v7571 = vsub.f32 %v7569, %v7570
        %v7572 = vand.u32 %v7571, 4294901760
        %7573 = vmatpush1.msra.mxu0 %v7572
        %v7574 = vand.u32 %v7280, 4294901760
        %v7575 = vsub.f32 %v7280, %v7574
        %v7576 = vand.u32 %v7575, 4294901760
        %v7577 = vsub.f32 %v7575, %v7576
        %v7578 = vand.u32 %v7577, 4294901760
        %7579 = vmatprep.subr.mxu0 %v7578
        %v7580 = vand.u32 %v7279, 4294901760
        %v7581 = vsub.f32 %v7279, %v7580
        %v7582 = vand.u32 %v7581, 4294901760
        %v7583 = vsub.f32 %v7581, %v7582
        %v7584 = vand.u32 %v7583, 4294901760
        %7585 = vmatpush1.msra.mxu0 %v7584
        %v7586 = vand.u32 %v7284, 4294901760
        %v7587 = vsub.f32 %v7284, %v7586
        %v7588 = vand.u32 %v7587, 4294901760
        %v7589 = vsub.f32 %v7587, %v7588
        %v7590 = vand.u32 %v7589, 4294901760
        %7591 = vmatprep.subr.mxu0 %v7590
        %v7592 = vand.u32 %v7283, 4294901760
        %v7593 = vsub.f32 %v7283, %v7592
        %v7594 = vand.u32 %v7593, 4294901760
        %v7595 = vsub.f32 %v7593, %v7594
        %v7596 = vand.u32 %v7595, 4294901760
        %7597 = vmatpush1.msra.mxu0 %v7596
        %7598 = vmatprep.subr.mxu0 0.0
        %7599 = vmatpush1.msra.mxu0 0.0
        %7600 = vmatprep.subr.mxu0 0.0
        %7601 = vmatpush1.msra.mxu0 0.0
        %7602 = vmatprep.subr.mxu0 0.0
        %7603 = vmatpush1.msra.mxu0 0.0
        %7604 = vmatprep.subr.mxu0 0.0
        %7605 = vmatpush1.msra.mxu0 0.0
        %7606 = vmatprep.subr.mxu0 0.0
        %7607 = vmatpush1.msra.mxu0 0.0
        %7608 = vmatprep.subr.mxu0 0.0
        %7609 = vmatpush1.msra.mxu0 0.0
        %7610 = vmatprep.subr.mxu0 0.0
        %7611 = vmatpush1.msra.mxu0 0.0
        %7612 = vmatprep.subr.mxu0 0.0
        %7613 = vmatpush1.msra.mxu0 0.0
        %7614 = vmatprep.subr.mxu0 0.0
        %7615 = vmatpush1.msra.mxu0 0.0
        %7616 = vmatprep.subr.mxu0 0.0
        %7617 = vmatpush1.msra.mxu0 0.0
        %7618 = vmatprep.subr.mxu0 0.0
        %7619 = vmatpush1.msra.mxu0 0.0
        %7620 = vmatprep.subr.mxu0 0.0
        %7621 = vmatpush1.msra.mxu0 0.0
        %7622 = vmatprep.subr.mxu0 0.0
        %7623 = vmatpush1.msra.mxu0 0.0
        %7624 = vmatprep.subr.mxu0 0.0
        %7625 = vmatpush1.msra.mxu0 0.0
        %7626 = vmatprep.subr.mxu0 0.0
        %7627 = vmatpush1.msra.mxu0 0.0
        %7628 = vmatprep.subr.mxu0 0.0
        %7629 = vmatpush1.msra.mxu0 0.0
        %7630 = vmatprep.mubr.f32.mxu0 0.0
        %v7631 = vand.u32 %v7221, 4294901760
        %7632 = vmatmul.mubr.f32.gmra.mrb[0].mxu0 %v7631
        %v7633 = vpop.f32.mrb[0].mxu0
        %v7634 = vadd.f32 %v7391, %v7633
        %v7635 = vpop.f32.mrb[0].mxu0
        %v7636 = vadd.f32 %v7393, %v7635
        %7637 = vmatprep.mubr.f32.mxu0 0.0
        %v7638 = vand.u32 %v7222, 4294901760
        %7639 = vmatmul.mubr.f32.gmra.mrb[0].mxu0 %v7638
        %v7640 = vpop.f32.mrb[0].mxu0
        %v7641 = vadd.f32 %v7402, %v7640
        %v7642 = vpop.f32.mrb[0].mxu0
        %v7643 = vadd.f32 %v7404, %v7642
        %7644 = vdwg.mxu0
        %v7645 = vand.u32 %v7224, 4294901760
        %v7646 = vsub.f32 %v7224, %v7645
        %7647 = vmatprep.subr.mxu0 %v7646
        %v7648 = vand.u32 %v7223, 4294901760
        %v7649 = vsub.f32 %v7223, %v7648
        %7650 = vmatpush1.msra.mxu0 %v7649
        %v7651 = vand.u32 %v7228, 4294901760
        %v7652 = vsub.f32 %v7228, %v7651
        %7653 = vmatprep.subr.mxu0 %v7652
        %v7654 = vand.u32 %v7227, 4294901760
        %v7655 = vsub.f32 %v7227, %v7654
        %7656 = vmatpush1.msra.mxu0 %v7655
        %v7657 = vand.u32 %v7232, 4294901760
        %v7658 = vsub.f32 %v7232, %v7657
        %7659 = vmatprep.subr.mxu0 %v7658
        %v7660 = vand.u32 %v7231, 4294901760
        %v7661 = vsub.f32 %v7231, %v7660
        %7662 = vmatpush1.msra.mxu0 %v7661
        %v7663 = vand.u32 %v7236, 4294901760
        %v7664 = vsub.f32 %v7236, %v7663
        %7665 = vmatprep.subr.mxu0 %v7664
        %v7666 = vand.u32 %v7235, 4294901760
        %v7667 = vsub.f32 %v7235, %v7666
        %7668 = vmatpush1.msra.mxu0 %v7667
        %v7669 = vand.u32 %v7240, 4294901760
        %v7670 = vsub.f32 %v7240, %v7669
        %7671 = vmatprep.subr.mxu0 %v7670
        %v7672 = vand.u32 %v7239, 4294901760
        %v7673 = vsub.f32 %v7239, %v7672
        %7674 = vmatpush1.msra.mxu0 %v7673
        %v7675 = vand.u32 %v7244, 4294901760
        %v7676 = vsub.f32 %v7244, %v7675
        %7677 = vmatprep.subr.mxu0 %v7676
        %v7678 = vand.u32 %v7243, 4294901760
        %v7679 = vsub.f32 %v7243, %v7678
        %7680 = vmatpush1.msra.mxu0 %v7679
        %v7681 = vand.u32 %v7248, 4294901760
        %v7682 = vsub.f32 %v7248, %v7681
        %7683 = vmatprep.subr.mxu0 %v7682
        %v7684 = vand.u32 %v7247, 4294901760
        %v7685 = vsub.f32 %v7247, %v7684
        %7686 = vmatpush1.msra.mxu0 %v7685
        %v7687 = vand.u32 %v7252, 4294901760
        %v7688 = vsub.f32 %v7252, %v7687
        %7689 = vmatprep.subr.mxu0 %v7688
        %v7690 = vand.u32 %v7251, 4294901760
        %v7691 = vsub.f32 %v7251, %v7690
        %7692 = vmatpush1.msra.mxu0 %v7691
        %v7693 = vand.u32 %v7256, 4294901760
        %v7694 = vsub.f32 %v7256, %v7693
        %7695 = vmatprep.subr.mxu0 %v7694
        %v7696 = vand.u32 %v7255, 4294901760
        %v7697 = vsub.f32 %v7255, %v7696
        %7698 = vmatpush1.msra.mxu0 %v7697
        %v7699 = vand.u32 %v7260, 4294901760
        %v7700 = vsub.f32 %v7260, %v7699
        %7701 = vmatprep.subr.mxu0 %v7700
        %v7702 = vand.u32 %v7259, 4294901760
        %v7703 = vsub.f32 %v7259, %v7702
        %7704 = vmatpush1.msra.mxu0 %v7703
        %v7705 = vand.u32 %v7264, 4294901760
        %v7706 = vsub.f32 %v7264, %v7705
        %7707 = vmatprep.subr.mxu0 %v7706
        %v7708 = vand.u32 %v7263, 4294901760
        %v7709 = vsub.f32 %v7263, %v7708
        %7710 = vmatpush1.msra.mxu0 %v7709
        %v7711 = vand.u32 %v7268, 4294901760
        %v7712 = vsub.f32 %v7268, %v7711
        %7713 = vmatprep.subr.mxu0 %v7712
        %v7714 = vand.u32 %v7267, 4294901760
        %v7715 = vsub.f32 %v7267, %v7714
        %7716 = vmatpush1.msra.mxu0 %v7715
        %v7717 = vand.u32 %v7272, 4294901760
        %v7718 = vsub.f32 %v7272, %v7717
        %7719 = vmatprep.subr.mxu0 %v7718
        %v7720 = vand.u32 %v7271, 4294901760
        %v7721 = vsub.f32 %v7271, %v7720
        %7722 = vmatpush1.msra.mxu0 %v7721
        %v7723 = vand.u32 %v7276, 4294901760
        %v7724 = vsub.f32 %v7276, %v7723
        %7725 = vmatprep.subr.mxu0 %v7724
        %v7726 = vand.u32 %v7275, 4294901760
        %v7727 = vsub.f32 %v7275, %v7726
        %7728 = vmatpush1.msra.mxu0 %v7727
        %v7729 = vand.u32 %v7280, 4294901760
        %v7730 = vsub.f32 %v7280, %v7729
        %7731 = vmatprep.subr.mxu0 %v7730
        %v7732 = vand.u32 %v7279, 4294901760
        %v7733 = vsub.f32 %v7279, %v7732
        %7734 = vmatpush1.msra.mxu0 %v7733
        %v7735 = vand.u32 %v7284, 4294901760
        %v7736 = vsub.f32 %v7284, %v7735
        %7737 = vmatprep.subr.mxu0 %v7736
        %v7738 = vand.u32 %v7283, 4294901760
        %v7739 = vsub.f32 %v7283, %v7738
        %7740 = vmatpush1.msra.mxu0 %v7739
        %7741 = vmatprep.subr.mxu0 0.0
        %7742 = vmatpush1.msra.mxu0 0.0
        %7743 = vmatprep.subr.mxu0 0.0
        %7744 = vmatpush1.msra.mxu0 0.0
        %7745 = vmatprep.subr.mxu0 0.0
        %7746 = vmatpush1.msra.mxu0 0.0
        %7747 = vmatprep.subr.mxu0 0.0
        %7748 = vmatpush1.msra.mxu0 0.0
        %7749 = vmatprep.subr.mxu0 0.0
        %7750 = vmatpush1.msra.mxu0 0.0
        %7751 = vmatprep.subr.mxu0 0.0
        %7752 = vmatpush1.msra.mxu0 0.0
        %7753 = vmatprep.subr.mxu0 0.0
        %7754 = vmatpush1.msra.mxu0 0.0
        %7755 = vmatprep.subr.mxu0 0.0
        %7756 = vmatpush1.msra.mxu0 0.0
        %7757 = vmatprep.subr.mxu0 0.0
        %7758 = vmatpush1.msra.mxu0 0.0
        %7759 = vmatprep.subr.mxu0 0.0
        %7760 = vmatpush1.msra.mxu0 0.0
        %7761 = vmatprep.subr.mxu0 0.0
        %7762 = vmatpush1.msra.mxu0 0.0
        %7763 = vmatprep.subr.mxu0 0.0
        %7764 = vmatpush1.msra.mxu0 0.0
        %7765 = vmatprep.subr.mxu0 0.0
        %7766 = vmatpush1.msra.mxu0 0.0
        %7767 = vmatprep.subr.mxu0 0.0
        %7768 = vmatpush1.msra.mxu0 0.0
        %7769 = vmatprep.subr.mxu0 0.0
        %7770 = vmatpush1.msra.mxu0 0.0
        %7771 = vmatprep.subr.mxu0 0.0
        %7772 = vmatpush1.msra.mxu0 0.0
        %7773 = vmatprep.mubr.f32.mxu0 0.0
        %v7774 = vand.u32 %v7221, 4294901760
        %v7775 = vsub.f32 %v7221, %v7774
        %7776 = vmatmul.mubr.f32.gmra.mrb[0].mxu0 %v7775
        %v7777 = vpop.f32.mrb[0].mxu0
        %v7778 = vadd.f32 %v7634, %v7777
        %v7779 = vpop.f32.mrb[0].mxu0
        %v7780 = vadd.f32 %v7636, %v7779
        %7781 = vmatprep.mubr.f32.mxu0 0.0
        %v7782 = vand.u32 %v7222, 4294901760
        %v7783 = vsub.f32 %v7222, %v7782
        %7784 = vmatmul.mubr.f32.gmra.mrb[0].mxu0 %v7783
        %v7785 = vpop.f32.mrb[0].mxu0
        %v7786 = vadd.f32 %v7641, %v7785
        %v7787 = vpop.f32.mrb[0].mxu0
        %v7788 = vadd.f32 %v7643, %v7787
        %7789 = vdwg.mxu0
        %v7790 = vand.u32 %v7224, 4294901760
        %7791 = vmatprep.subr.mxu0 %v7790
        %v7792 = vand.u32 %v7223, 4294901760
        %7793 = vmatpush1.msra.mxu0 %v7792
        %v7794 = vand.u32 %v7228, 4294901760
        %7795 = vmatprep.subr.mxu0 %v7794
        %v7796 = vand.u32 %v7227, 4294901760
        %7797 = vmatpush1.msra.mxu0 %v7796
        %v7798 = vand.u32 %v7232, 4294901760
        %7799 = vmatprep.subr.mxu0 %v7798
        %v7800 = vand.u32 %v7231, 4294901760
        %7801 = vmatpush1.msra.mxu0 %v7800
        %v7802 = vand.u32 %v7236, 4294901760
        %7803 = vmatprep.subr.mxu0 %v7802
        %v7804 = vand.u32 %v7235, 4294901760
        %7805 = vmatpush1.msra.mxu0 %v7804
        %v7806 = vand.u32 %v7240, 4294901760
        %7807 = vmatprep.subr.mxu0 %v7806
        %v7808 = vand.u32 %v7239, 4294901760
        %7809 = vmatpush1.msra.mxu0 %v7808
        %v7810 = vand.u32 %v7244, 4294901760
        %7811 = vmatprep.subr.mxu0 %v7810
        %v7812 = vand.u32 %v7243, 4294901760
        %7813 = vmatpush1.msra.mxu0 %v7812
        %v7814 = vand.u32 %v7248, 4294901760
        %7815 = vmatprep.subr.mxu0 %v7814
        %v7816 = vand.u32 %v7247, 4294901760
        %7817 = vmatpush1.msra.mxu0 %v7816
        %v7818 = vand.u32 %v7252, 4294901760
        %7819 = vmatprep.subr.mxu0 %v7818
        %v7820 = vand.u32 %v7251, 4294901760
        %7821 = vmatpush1.msra.mxu0 %v7820
        %v7822 = vand.u32 %v7256, 4294901760
        %7823 = vmatprep.subr.mxu0 %v7822
        %v7824 = vand.u32 %v7255, 4294901760
        %7825 = vmatpush1.msra.mxu0 %v7824
        %v7826 = vand.u32 %v7260, 4294901760
        %7827 = vmatprep.subr.mxu0 %v7826
        %v7828 = vand.u32 %v7259, 4294901760
        %7829 = vmatpush1.msra.mxu0 %v7828
        %v7830 = vand.u32 %v7264, 4294901760
        %7831 = vmatprep.subr.mxu0 %v7830
        %v7832 = vand.u32 %v7263, 4294901760
        %7833 = vmatpush1.msra.mxu0 %v7832
        %v7834 = vand.u32 %v7268, 4294901760
        %7835 = vmatprep.subr.mxu0 %v7834
        %v7836 = vand.u32 %v7267, 4294901760
        %7837 = vmatpush1.msra.mxu0 %v7836
        %v7838 = vand.u32 %v7272, 4294901760
        %7839 = vmatprep.subr.mxu0 %v7838
        %v7840 = vand.u32 %v7271, 4294901760
        %7841 = vmatpush1.msra.mxu0 %v7840
        %v7842 = vand.u32 %v7276, 4294901760
        %7843 = vmatprep.subr.mxu0 %v7842
        %v7844 = vand.u32 %v7275, 4294901760
        %7845 = vmatpush1.msra.mxu0 %v7844
        %v7846 = vand.u32 %v7280, 4294901760
        %7847 = vmatprep.subr.mxu0 %v7846
        %v7848 = vand.u32 %v7279, 4294901760
        %7849 = vmatpush1.msra.mxu0 %v7848
        %v7850 = vand.u32 %v7284, 4294901760
        %7851 = vmatprep.subr.mxu0 %v7850
        %v7852 = vand.u32 %v7283, 4294901760
        %7853 = vmatpush1.msra.mxu0 %v7852
        %7854 = vmatprep.subr.mxu0 0.0
        %7855 = vmatpush1.msra.mxu0 0.0
        %7856 = vmatprep.subr.mxu0 0.0
        %7857 = vmatpush1.msra.mxu0 0.0
        %7858 = vmatprep.subr.mxu0 0.0
        %7859 = vmatpush1.msra.mxu0 0.0
        %7860 = vmatprep.subr.mxu0 0.0
        %7861 = vmatpush1.msra.mxu0 0.0
        %7862 = vmatprep.subr.mxu0 0.0
        %7863 = vmatpush1.msra.mxu0 0.0
        %7864 = vmatprep.subr.mxu0 0.0
        %7865 = vmatpush1.msra.mxu0 0.0
        %7866 = vmatprep.subr.mxu0 0.0
        %7867 = vmatpush1.msra.mxu0 0.0
        %7868 = vmatprep.subr.mxu0 0.0
        %7869 = vmatpush1.msra.mxu0 0.0
        %7870 = vmatprep.subr.mxu0 0.0
        %7871 = vmatpush1.msra.mxu0 0.0
        %7872 = vmatprep.subr.mxu0 0.0
        %7873 = vmatpush1.msra.mxu0 0.0
        %7874 = vmatprep.subr.mxu0 0.0
        %7875 = vmatpush1.msra.mxu0 0.0
        %7876 = vmatprep.subr.mxu0 0.0
        %7877 = vmatpush1.msra.mxu0 0.0
        %7878 = vmatprep.subr.mxu0 0.0
        %7879 = vmatpush1.msra.mxu0 0.0
        %7880 = vmatprep.subr.mxu0 0.0
        %7881 = vmatpush1.msra.mxu0 0.0
        %7882 = vmatprep.subr.mxu0 0.0
        %7883 = vmatpush1.msra.mxu0 0.0
        %7884 = vmatprep.subr.mxu0 0.0
        %7885 = vmatpush1.msra.mxu0 0.0
        %7886 = vmatprep.mubr.f32.mxu0 0.0
        %v7887 = vand.u32 %v7221, 4294901760
        %v7888 = vsub.f32 %v7221, %v7887
        %v7889 = vand.u32 %v7888, 4294901760
        %7890 = vmatmul.mubr.f32.gmra.mrb[0].mxu0 %v7889
        %v7891 = vpop.f32.mrb[0].mxu0
        %v7892 = vadd.f32 %v7778, %v7891
        %v7893 = vpop.f32.mrb[0].mxu0
        %v7894 = vadd.f32 %v7780, %v7893
        %7895 = vmatprep.mubr.f32.mxu0 0.0
        %v7896 = vand.u32 %v7222, 4294901760
        %v7897 = vsub.f32 %v7222, %v7896
        %v7898 = vand.u32 %v7897, 4294901760
        %7899 = vmatmul.mubr.f32.gmra.mrb[0].mxu0 %v7898
        %v7900 = vpop.f32.mrb[0].mxu0
        %v7901 = vadd.f32 %v7786, %v7900
        %v7902 = vpop.f32.mrb[0].mxu0
        %v7903 = vadd.f32 %v7788, %v7902
        %7904 = vdwg.mxu0
        %v7905 = vand.u32 %v7224, 4294901760
        %v7906 = vsub.f32 %v7224, %v7905
        %v7907 = vand.u32 %v7906, 4294901760
        %7908 = vmatprep.subr.mxu0 %v7907
        %v7909 = vand.u32 %v7223, 4294901760
        %v7910 = vsub.f32 %v7223, %v7909
        %v7911 = vand.u32 %v7910, 4294901760
        %7912 = vmatpush1.msra.mxu0 %v7911
        %v7913 = vand.u32 %v7228, 4294901760
        %v7914 = vsub.f32 %v7228, %v7913
        %v7915 = vand.u32 %v7914, 4294901760
        %7916 = vmatprep.subr.mxu0 %v7915
        %v7917 = vand.u32 %v7227, 4294901760
        %v7918 = vsub.f32 %v7227, %v7917
        %v7919 = vand.u32 %v7918, 4294901760
        %7920 = vmatpush1.msra.mxu0 %v7919
        %v7921 = vand.u32 %v7232, 4294901760
        %v7922 = vsub.f32 %v7232, %v7921
        %v7923 = vand.u32 %v7922, 4294901760
        %7924 = vmatprep.subr.mxu0 %v7923
        %v7925 = vand.u32 %v7231, 4294901760
        %v7926 = vsub.f32 %v7231, %v7925
        %v7927 = vand.u32 %v7926, 4294901760
        %7928 = vmatpush1.msra.mxu0 %v7927
        %v7929 = vand.u32 %v7236, 4294901760
        %v7930 = vsub.f32 %v7236, %v7929
        %v7931 = vand.u32 %v7930, 4294901760
        %7932 = vmatprep.subr.mxu0 %v7931
        %v7933 = vand.u32 %v7235, 4294901760
        %v7934 = vsub.f32 %v7235, %v7933
        %v7935 = vand.u32 %v7934, 4294901760
        %7936 = vmatpush1.msra.mxu0 %v7935
        %v7937 = vand.u32 %v7240, 4294901760
        %v7938 = vsub.f32 %v7240, %v7937
        %v7939 = vand.u32 %v7938, 4294901760
        %7940 = vmatprep.subr.mxu0 %v7939
        %v7941 = vand.u32 %v7239, 4294901760
        %v7942 = vsub.f32 %v7239, %v7941
        %v7943 = vand.u32 %v7942, 4294901760
        %7944 = vmatpush1.msra.mxu0 %v7943
        %v7945 = vand.u32 %v7244, 4294901760
        %v7946 = vsub.f32 %v7244, %v7945
        %v7947 = vand.u32 %v7946, 4294901760
        %7948 = vmatprep.subr.mxu0 %v7947
        %v7949 = vand.u32 %v7243, 4294901760
        %v7950 = vsub.f32 %v7243, %v7949
        %v7951 = vand.u32 %v7950, 4294901760
        %7952 = vmatpush1.msra.mxu0 %v7951
        %v7953 = vand.u32 %v7248, 4294901760
        %v7954 = vsub.f32 %v7248, %v7953
        %v7955 = vand.u32 %v7954, 4294901760
        %7956 = vmatprep.subr.mxu0 %v7955
        %v7957 = vand.u32 %v7247, 4294901760
        %v7958 = vsub.f32 %v7247, %v7957
        %v7959 = vand.u32 %v7958, 4294901760
        %7960 = vmatpush1.msra.mxu0 %v7959
        %v7961 = vand.u32 %v7252, 4294901760
        %v7962 = vsub.f32 %v7252, %v7961
        %v7963 = vand.u32 %v7962, 4294901760
        %7964 = vmatprep.subr.mxu0 %v7963
        %v7965 = vand.u32 %v7251, 4294901760
        %v7966 = vsub.f32 %v7251, %v7965
        %v7967 = vand.u32 %v7966, 4294901760
        %7968 = vmatpush1.msra.mxu0 %v7967
        %v7969 = vand.u32 %v7256, 4294901760
        %v7970 = vsub.f32 %v7256, %v7969
        %v7971 = vand.u32 %v7970, 4294901760
        %7972 = vmatprep.subr.mxu0 %v7971
        %v7973 = vand.u32 %v7255, 4294901760
        %v7974 = vsub.f32 %v7255, %v7973
        %v7975 = vand.u32 %v7974, 4294901760
        %7976 = vmatpush1.msra.mxu0 %v7975
        %v7977 = vand.u32 %v7260, 4294901760
        %v7978 = vsub.f32 %v7260, %v7977
        %v7979 = vand.u32 %v7978, 4294901760
        %7980 = vmatprep.subr.mxu0 %v7979
        %v7981 = vand.u32 %v7259, 4294901760
        %v7982 = vsub.f32 %v7259, %v7981
        %v7983 = vand.u32 %v7982, 4294901760
        %7984 = vmatpush1.msra.mxu0 %v7983
        %v7985 = vand.u32 %v7264, 4294901760
        %v7986 = vsub.f32 %v7264, %v7985
        %v7987 = vand.u32 %v7986, 4294901760
        %7988 = vmatprep.subr.mxu0 %v7987
        %v7989 = vand.u32 %v7263, 4294901760
        %v7990 = vsub.f32 %v7263, %v7989
        %v7991 = vand.u32 %v7990, 4294901760
        %7992 = vmatpush1.msra.mxu0 %v7991
        %v7993 = vand.u32 %v7268, 4294901760
        %v7994 = vsub.f32 %v7268, %v7993
        %v7995 = vand.u32 %v7994, 4294901760
        %7996 = vmatprep.subr.mxu0 %v7995
        %v7997 = vand.u32 %v7267, 4294901760
        %v7998 = vsub.f32 %v7267, %v7997
        %v7999 = vand.u32 %v7998, 4294901760
        %8000 = vmatpush1.msra.mxu0 %v7999
        %v8001 = vand.u32 %v7272, 4294901760
        %v8002 = vsub.f32 %v7272, %v8001
        %v8003 = vand.u32 %v8002, 4294901760
        %8004 = vmatprep.subr.mxu0 %v8003
        %v8005 = vand.u32 %v7271, 4294901760
        %v8006 = vsub.f32 %v7271, %v8005
        %v8007 = vand.u32 %v8006, 4294901760
        %8008 = vmatpush1.msra.mxu0 %v8007
        %v8009 = vand.u32 %v7276, 4294901760
        %v8010 = vsub.f32 %v7276, %v8009
        %v8011 = vand.u32 %v8010, 4294901760
        %8012 = vmatprep.subr.mxu0 %v8011
        %v8013 = vand.u32 %v7275, 4294901760
        %v8014 = vsub.f32 %v7275, %v8013
        %v8015 = vand.u32 %v8014, 4294901760
        %8016 = vmatpush1.msra.mxu0 %v8015
        %v8017 = vand.u32 %v7280, 4294901760
        %v8018 = vsub.f32 %v7280, %v8017
        %v8019 = vand.u32 %v8018, 4294901760
        %8020 = vmatprep.subr.mxu0 %v8019
        %v8021 = vand.u32 %v7279, 4294901760
        %v8022 = vsub.f32 %v7279, %v8021
        %v8023 = vand.u32 %v8022, 4294901760
        %8024 = vmatpush1.msra.mxu0 %v8023
        %v8025 = vand.u32 %v7284, 4294901760
        %v8026 = vsub.f32 %v7284, %v8025
        %v8027 = vand.u32 %v8026, 4294901760
        %8028 = vmatprep.subr.mxu0 %v8027
        %v8029 = vand.u32 %v7283, 4294901760
        %v8030 = vsub.f32 %v7283, %v8029
        %v8031 = vand.u32 %v8030, 4294901760
        %8032 = vmatpush1.msra.mxu0 %v8031
        %8033 = vmatprep.subr.mxu0 0.0
        %8034 = vmatpush1.msra.mxu0 0.0
        %8035 = vmatprep.subr.mxu0 0.0
        %8036 = vmatpush1.msra.mxu0 0.0
        %8037 = vmatprep.subr.mxu0 0.0
        %8038 = vmatpush1.msra.mxu0 0.0
        %8039 = vmatprep.subr.mxu0 0.0
        %8040 = vmatpush1.msra.mxu0 0.0
        %8041 = vmatprep.subr.mxu0 0.0
        %8042 = vmatpush1.msra.mxu0 0.0
        %8043 = vmatprep.subr.mxu0 0.0
        %8044 = vmatpush1.msra.mxu0 0.0
        %8045 = vmatprep.subr.mxu0 0.0
        %8046 = vmatpush1.msra.mxu0 0.0
        %8047 = vmatprep.subr.mxu0 0.0
        %8048 = vmatpush1.msra.mxu0 0.0
        %8049 = vmatprep.subr.mxu0 0.0
        %8050 = vmatpush1.msra.mxu0 0.0
        %8051 = vmatprep.subr.mxu0 0.0
        %8052 = vmatpush1.msra.mxu0 0.0
        %8053 = vmatprep.subr.mxu0 0.0
        %8054 = vmatpush1.msra.mxu0 0.0
        %8055 = vmatprep.subr.mxu0 0.0
        %8056 = vmatpush1.msra.mxu0 0.0
        %8057 = vmatprep.subr.mxu0 0.0
        %8058 = vmatpush1.msra.mxu0 0.0
        %8059 = vmatprep.subr.mxu0 0.0
        %8060 = vmatpush1.msra.mxu0 0.0
        %8061 = vmatprep.subr.mxu0 0.0
        %8062 = vmatpush1.msra.mxu0 0.0
        %8063 = vmatprep.subr.mxu0 0.0
        %8064 = vmatpush1.msra.mxu0 0.0
        %8065 = vmatprep.mubr.f32.mxu0 0.0
        %v8066 = vand.u32 %v7221, 4294901760
        %8067 = vmatmul.mubr.f32.gmra.mrb[0].mxu0 %v8066
        %v8068 = vpop.f32.mrb[0].mxu0
        %v8069 = vadd.f32 %v7892, %v8068
        %v8070 = vpop.f32.mrb[0].mxu0
        %v8071 = vadd.f32 %v7894, %v8070
        %8072 = vmatprep.mubr.f32.mxu0 0.0
        %v8073 = vand.u32 %v7222, 4294901760
        %8074 = vmatmul.mubr.f32.gmra.mrb[0].mxu0 %v8073
        %v8075 = vpop.f32.mrb[0].mxu0
        %v8076 = vadd.f32 %v7901, %v8075
        %v8077 = vpop.f32.mrb[0].mxu0
        %v8078 = vadd.f32 %v7903, %v8077
        %8079 = vdwg.mxu0
        %v8080 = vand.u32 %v7224, 4294901760
        %8081 = vmatprep.subr.mxu0 %v8080
        %v8082 = vand.u32 %v7223, 4294901760
        %8083 = vmatpush1.msra.mxu0 %v8082
        %v8084 = vand.u32 %v7228, 4294901760
        %8085 = vmatprep.subr.mxu0 %v8084
        %v8086 = vand.u32 %v7227, 4294901760
        %8087 = vmatpush1.msra.mxu0 %v8086
        %v8088 = vand.u32 %v7232, 4294901760
        %8089 = vmatprep.subr.mxu0 %v8088
        %v8090 = vand.u32 %v7231, 4294901760
        %8091 = vmatpush1.msra.mxu0 %v8090
        %v8092 = vand.u32 %v7236, 4294901760
        %8093 = vmatprep.subr.mxu0 %v8092
        %v8094 = vand.u32 %v7235, 4294901760
        %8095 = vmatpush1.msra.mxu0 %v8094
        %v8096 = vand.u32 %v7240, 4294901760
        %8097 = vmatprep.subr.mxu0 %v8096
        %v8098 = vand.u32 %v7239, 4294901760
        %8099 = vmatpush1.msra.mxu0 %v8098
        %v8100 = vand.u32 %v7244, 4294901760
        %8101 = vmatprep.subr.mxu0 %v8100
        %v8102 = vand.u32 %v7243, 4294901760
        %8103 = vmatpush1.msra.mxu0 %v8102
        %v8104 = vand.u32 %v7248, 4294901760
        %8105 = vmatprep.subr.mxu0 %v8104
        %v8106 = vand.u32 %v7247, 4294901760
        %8107 = vmatpush1.msra.mxu0 %v8106
        %v8108 = vand.u32 %v7252, 4294901760
        %8109 = vmatprep.subr.mxu0 %v8108
        %v8110 = vand.u32 %v7251, 4294901760
        %8111 = vmatpush1.msra.mxu0 %v8110
        %v8112 = vand.u32 %v7256, 4294901760
        %8113 = vmatprep.subr.mxu0 %v8112
        %v8114 = vand.u32 %v7255, 4294901760
        %8115 = vmatpush1.msra.mxu0 %v8114
        %v8116 = vand.u32 %v7260, 4294901760
        %8117 = vmatprep.subr.mxu0 %v8116
        %v8118 = vand.u32 %v7259, 4294901760
        %8119 = vmatpush1.msra.mxu0 %v8118
        %v8120 = vand.u32 %v7264, 4294901760
        %8121 = vmatprep.subr.mxu0 %v8120
        %v8122 = vand.u32 %v7263, 4294901760
        %8123 = vmatpush1.msra.mxu0 %v8122
        %v8124 = vand.u32 %v7268, 4294901760
        %8125 = vmatprep.subr.mxu0 %v8124
        %v8126 = vand.u32 %v7267, 4294901760
        %8127 = vmatpush1.msra.mxu0 %v8126
        %v8128 = vand.u32 %v7272, 4294901760
        %8129 = vmatprep.subr.mxu0 %v8128
        %v8130 = vand.u32 %v7271, 4294901760
        %8131 = vmatpush1.msra.mxu0 %v8130
        %v8132 = vand.u32 %v7276, 4294901760
        %8133 = vmatprep.subr.mxu0 %v8132
        %v8134 = vand.u32 %v7275, 4294901760
        %8135 = vmatpush1.msra.mxu0 %v8134
        %v8136 = vand.u32 %v7280, 4294901760
        %8137 = vmatprep.subr.mxu0 %v8136
        %v8138 = vand.u32 %v7279, 4294901760
        %8139 = vmatpush1.msra.mxu0 %v8138
        %v8140 = vand.u32 %v7284, 4294901760
        %8141 = vmatprep.subr.mxu0 %v8140
        %v8142 = vand.u32 %v7283, 4294901760
        %8143 = vmatpush1.msra.mxu0 %v8142
        %8144 = vmatprep.subr.mxu0 0.0
        %8145 = vmatpush1.msra.mxu0 0.0
        %8146 = vmatprep.subr.mxu0 0.0
        %8147 = vmatpush1.msra.mxu0 0.0
        %8148 = vmatprep.subr.mxu0 0.0
        %8149 = vmatpush1.msra.mxu0 0.0
        %8150 = vmatprep.subr.mxu0 0.0
        %8151 = vmatpush1.msra.mxu0 0.0
        %8152 = vmatprep.subr.mxu0 0.0
        %8153 = vmatpush1.msra.mxu0 0.0
        %8154 = vmatprep.subr.mxu0 0.0
        %8155 = vmatpush1.msra.mxu0 0.0
        %8156 = vmatprep.subr.mxu0 0.0
        %8157 = vmatpush1.msra.mxu0 0.0
        %8158 = vmatprep.subr.mxu0 0.0
        %8159 = vmatpush1.msra.mxu0 0.0
        %8160 = vmatprep.subr.mxu0 0.0
        %8161 = vmatpush1.msra.mxu0 0.0
        %8162 = vmatprep.subr.mxu0 0.0
        %8163 = vmatpush1.msra.mxu0 0.0
        %8164 = vmatprep.subr.mxu0 0.0
        %8165 = vmatpush1.msra.mxu0 0.0
        %8166 = vmatprep.subr.mxu0 0.0
        %8167 = vmatpush1.msra.mxu0 0.0
        %8168 = vmatprep.subr.mxu0 0.0
        %8169 = vmatpush1.msra.mxu0 0.0
        %8170 = vmatprep.subr.mxu0 0.0
        %8171 = vmatpush1.msra.mxu0 0.0
        %8172 = vmatprep.subr.mxu0 0.0
        %8173 = vmatpush1.msra.mxu0 0.0
        %8174 = vmatprep.subr.mxu0 0.0
        %8175 = vmatpush1.msra.mxu0 0.0
        %8176 = vmatprep.mubr.f32.mxu0 0.0
        %v8177 = vand.u32 %v7221, 4294901760
        %8178 = vmatmul.mubr.f32.gmra.mrb[0].mxu0 %v8177
        %v8179 = vpop.f32.mrb[0].mxu0
        %v8180 = vadd.f32 %v8069, %v8179
        %v8181 = vpop.f32.mrb[0].mxu0
        %v8182 = vadd.f32 %v8071, %v8181
        %8183 = vmatprep.mubr.f32.mxu0 0.0
        %v8184 = vand.u32 %v7222, 4294901760
        %8185 = vmatmul.mubr.f32.gmra.mrb[0].mxu0 %v8184
        %v8186 = vpop.f32.mrb[0].mxu0
        %v8187 = vadd.f32 %v8076, %v8186
        %v8188 = vpop.f32.mrb[0].mxu0
        %v8189 = vadd.f32 %v8078, %v8188
        %8190 = vdwg.mxu0
        %v8191 = vand.u32 %v7226, 4294901760
        %8192 = vmatprep.subr.mxu0 %v8191
        %v8193 = vand.u32 %v7225, 4294901760
        %8194 = vmatpush1.msra.mxu0 %v8193
        %v8195 = vand.u32 %v7230, 4294901760
        %8196 = vmatprep.subr.mxu0 %v8195
        %v8197 = vand.u32 %v7229, 4294901760
        %8198 = vmatpush1.msra.mxu0 %v8197
        %v8199 = vand.u32 %v7234, 4294901760
        %8200 = vmatprep.subr.mxu0 %v8199
        %v8201 = vand.u32 %v7233, 4294901760
        %8202 = vmatpush1.msra.mxu0 %v8201
        %v8203 = vand.u32 %v7238, 4294901760
        %8204 = vmatprep.subr.mxu0 %v8203
        %v8205 = vand.u32 %v7237, 4294901760
        %8206 = vmatpush1.msra.mxu0 %v8205
        %v8207 = vand.u32 %v7242, 4294901760
        %8208 = vmatprep.subr.mxu0 %v8207
        %v8209 = vand.u32 %v7241, 4294901760
        %8210 = vmatpush1.msra.mxu0 %v8209
        %v8211 = vand.u32 %v7246, 4294901760
        %8212 = vmatprep.subr.mxu0 %v8211
        %v8213 = vand.u32 %v7245, 4294901760
        %8214 = vmatpush1.msra.mxu0 %v8213
        %v8215 = vand.u32 %v7250, 4294901760
        %8216 = vmatprep.subr.mxu0 %v8215
        %v8217 = vand.u32 %v7249, 4294901760
        %8218 = vmatpush1.msra.mxu0 %v8217
        %v8219 = vand.u32 %v7254, 4294901760
        %8220 = vmatprep.subr.mxu0 %v8219
        %v8221 = vand.u32 %v7253, 4294901760
        %8222 = vmatpush1.msra.mxu0 %v8221
        %v8223 = vand.u32 %v7258, 4294901760
        %8224 = vmatprep.subr.mxu0 %v8223
        %v8225 = vand.u32 %v7257, 4294901760
        %8226 = vmatpush1.msra.mxu0 %v8225
        %v8227 = vand.u32 %v7262, 4294901760
        %8228 = vmatprep.subr.mxu0 %v8227
        %v8229 = vand.u32 %v7261, 4294901760
        %8230 = vmatpush1.msra.mxu0 %v8229
        %v8231 = vand.u32 %v7266, 4294901760
        %8232 = vmatprep.subr.mxu0 %v8231
        %v8233 = vand.u32 %v7265, 4294901760
        %8234 = vmatpush1.msra.mxu0 %v8233
        %v8235 = vand.u32 %v7270, 4294901760
        %8236 = vmatprep.subr.mxu0 %v8235
        %v8237 = vand.u32 %v7269, 4294901760
        %8238 = vmatpush1.msra.mxu0 %v8237
        %v8239 = vand.u32 %v7274, 4294901760
        %8240 = vmatprep.subr.mxu0 %v8239
        %v8241 = vand.u32 %v7273, 4294901760
        %8242 = vmatpush1.msra.mxu0 %v8241
        %v8243 = vand.u32 %v7278, 4294901760
        %8244 = vmatprep.subr.mxu0 %v8243
        %v8245 = vand.u32 %v7277, 4294901760
        %8246 = vmatpush1.msra.mxu0 %v8245
        %v8247 = vand.u32 %v7282, 4294901760
        %8248 = vmatprep.subr.mxu0 %v8247
        %v8249 = vand.u32 %v7281, 4294901760
        %8250 = vmatpush1.msra.mxu0 %v8249
        %v8251 = vand.u32 %v7286, 4294901760
        %8252 = vmatprep.subr.mxu0 %v8251
        %v8253 = vand.u32 %v7285, 4294901760
        %8254 = vmatpush1.msra.mxu0 %v8253
        %8255 = vmatprep.subr.mxu0 0.0
        %8256 = vmatpush1.msra.mxu0 0.0
        %8257 = vmatprep.subr.mxu0 0.0
        %8258 = vmatpush1.msra.mxu0 0.0
        %8259 = vmatprep.subr.mxu0 0.0
        %8260 = vmatpush1.msra.mxu0 0.0
        %8261 = vmatprep.subr.mxu0 0.0
        %8262 = vmatpush1.msra.mxu0 0.0
        %8263 = vmatprep.subr.mxu0 0.0
        %8264 = vmatpush1.msra.mxu0 0.0
        %8265 = vmatprep.subr.mxu0 0.0
        %8266 = vmatpush1.msra.mxu0 0.0
        %8267 = vmatprep.subr.mxu0 0.0
        %8268 = vmatpush1.msra.mxu0 0.0
        %8269 = vmatprep.subr.mxu0 0.0
        %8270 = vmatpush1.msra.mxu0 0.0
        %8271 = vmatprep.subr.mxu0 0.0
        %8272 = vmatpush1.msra.mxu0 0.0
        %8273 = vmatprep.subr.mxu0 0.0
        %8274 = vmatpush1.msra.mxu0 0.0
        %8275 = vmatprep.subr.mxu0 0.0
        %8276 = vmatpush1.msra.mxu0 0.0
        %8277 = vmatprep.subr.mxu0 0.0
        %8278 = vmatpush1.msra.mxu0 0.0
        %8279 = vmatprep.subr.mxu0 0.0
        %8280 = vmatpush1.msra.mxu0 0.0
        %8281 = vmatprep.subr.mxu0 0.0
        %8282 = vmatpush1.msra.mxu0 0.0
        %8283 = vmatprep.subr.mxu0 0.0
        %8284 = vmatpush1.msra.mxu0 0.0
        %8285 = vmatprep.subr.mxu0 0.0
        %8286 = vmatpush1.msra.mxu0 0.0
        %8287 = vmatprep.mubr.f32.mxu0 0.0
        %v8288 = vand.u32 %v7221, 4294901760
        %v8289 = vsub.f32 %v7221, %v8288
        %v8290 = vand.u32 %v8289, 4294901760
        %v8291 = vsub.f32 %v8289, %v8290
        %v8292 = vand.u32 %v8291, 4294901760
        %8293 = vmatmul.mubr.f32.gmra.mrb[0].mxu0 %v8292
        %v8294 = vpop.f32.mrb[0].mxu0
        %v8295 = vadd.f32 0.0, %v8294
        %v8296 = vpop.f32.mrb[0].mxu0
        %v8297 = vadd.f32 0.0, %v8296
        %8298 = vmatprep.mubr.f32.mxu0 0.0
        %v8299 = vand.u32 %v7222, 4294901760
        %v8300 = vsub.f32 %v7222, %v8299
        %v8301 = vand.u32 %v8300, 4294901760
        %v8302 = vsub.f32 %v8300, %v8301
        %v8303 = vand.u32 %v8302, 4294901760
        %8304 = vmatmul.mubr.f32.gmra.mrb[0].mxu0 %v8303
        %v8305 = vpop.f32.mrb[0].mxu0
        %v8306 = vadd.f32 0.0, %v8305
        %v8307 = vpop.f32.mrb[0].mxu0
        %v8308 = vadd.f32 0.0, %v8307
        %8309 = vdwg.mxu0
        %v8310 = vand.u32 %v7226, 4294901760
        %v8311 = vsub.f32 %v7226, %v8310
        %v8312 = vand.u32 %v8311, 4294901760
        %v8313 = vsub.f32 %v8311, %v8312
        %v8314 = vand.u32 %v8313, 4294901760
        %8315 = vmatprep.subr.mxu0 %v8314
        %v8316 = vand.u32 %v7225, 4294901760
        %v8317 = vsub.f32 %v7225, %v8316
        %v8318 = vand.u32 %v8317, 4294901760
        %v8319 = vsub.f32 %v8317, %v8318
        %v8320 = vand.u32 %v8319, 4294901760
        %8321 = vmatpush1.msra.mxu0 %v8320
        %v8322 = vand.u32 %v7230, 4294901760
        %v8323 = vsub.f32 %v7230, %v8322
        %v8324 = vand.u32 %v8323, 4294901760
        %v8325 = vsub.f32 %v8323, %v8324
        %v8326 = vand.u32 %v8325, 4294901760
        %8327 = vmatprep.subr.mxu0 %v8326
        %v8328 = vand.u32 %v7229, 4294901760
        %v8329 = vsub.f32 %v7229, %v8328
        %v8330 = vand.u32 %v8329, 4294901760
        %v8331 = vsub.f32 %v8329, %v8330
        %v8332 = vand.u32 %v8331, 4294901760
        %8333 = vmatpush1.msra.mxu0 %v8332
        %v8334 = vand.u32 %v7234, 4294901760
        %v8335 = vsub.f32 %v7234, %v8334
        %v8336 = vand.u32 %v8335, 4294901760
        %v8337 = vsub.f32 %v8335, %v8336
        %v8338 = vand.u32 %v8337, 4294901760
        %8339 = vmatprep.subr.mxu0 %v8338
        %v8340 = vand.u32 %v7233, 4294901760
        %v8341 = vsub.f32 %v7233, %v8340
        %v8342 = vand.u32 %v8341, 4294901760
        %v8343 = vsub.f32 %v8341, %v8342
        %v8344 = vand.u32 %v8343, 4294901760
        %8345 = vmatpush1.msra.mxu0 %v8344
        %v8346 = vand.u32 %v7238, 4294901760
        %v8347 = vsub.f32 %v7238, %v8346
        %v8348 = vand.u32 %v8347, 4294901760
        %v8349 = vsub.f32 %v8347, %v8348
        %v8350 = vand.u32 %v8349, 4294901760
        %8351 = vmatprep.subr.mxu0 %v8350
        %v8352 = vand.u32 %v7237, 4294901760
        %v8353 = vsub.f32 %v7237, %v8352
        %v8354 = vand.u32 %v8353, 4294901760
        %v8355 = vsub.f32 %v8353, %v8354
        %v8356 = vand.u32 %v8355, 4294901760
        %8357 = vmatpush1.msra.mxu0 %v8356
        %v8358 = vand.u32 %v7242, 4294901760
        %v8359 = vsub.f32 %v7242, %v8358
        %v8360 = vand.u32 %v8359, 4294901760
        %v8361 = vsub.f32 %v8359, %v8360
        %v8362 = vand.u32 %v8361, 4294901760
        %8363 = vmatprep.subr.mxu0 %v8362
        %v8364 = vand.u32 %v7241, 4294901760
        %v8365 = vsub.f32 %v7241, %v8364
        %v8366 = vand.u32 %v8365, 4294901760
        %v8367 = vsub.f32 %v8365, %v8366
        %v8368 = vand.u32 %v8367, 4294901760
        %8369 = vmatpush1.msra.mxu0 %v8368
        %v8370 = vand.u32 %v7246, 4294901760
        %v8371 = vsub.f32 %v7246, %v8370
        %v8372 = vand.u32 %v8371, 4294901760
        %v8373 = vsub.f32 %v8371, %v8372
        %v8374 = vand.u32 %v8373, 4294901760
        %8375 = vmatprep.subr.mxu0 %v8374
        %v8376 = vand.u32 %v7245, 4294901760
        %v8377 = vsub.f32 %v7245, %v8376
        %v8378 = vand.u32 %v8377, 4294901760
        %v8379 = vsub.f32 %v8377, %v8378
        %v8380 = vand.u32 %v8379, 4294901760
        %8381 = vmatpush1.msra.mxu0 %v8380
        %v8382 = vand.u32 %v7250, 4294901760
        %v8383 = vsub.f32 %v7250, %v8382
        %v8384 = vand.u32 %v8383, 4294901760
        %v8385 = vsub.f32 %v8383, %v8384
        %v8386 = vand.u32 %v8385, 4294901760
        %8387 = vmatprep.subr.mxu0 %v8386
        %v8388 = vand.u32 %v7249, 4294901760
        %v8389 = vsub.f32 %v7249, %v8388
        %v8390 = vand.u32 %v8389, 4294901760
        %v8391 = vsub.f32 %v8389, %v8390
        %v8392 = vand.u32 %v8391, 4294901760
        %8393 = vmatpush1.msra.mxu0 %v8392
        %v8394 = vand.u32 %v7254, 4294901760
        %v8395 = vsub.f32 %v7254, %v8394
        %v8396 = vand.u32 %v8395, 4294901760
        %v8397 = vsub.f32 %v8395, %v8396
        %v8398 = vand.u32 %v8397, 4294901760
        %8399 = vmatprep.subr.mxu0 %v8398
        %v8400 = vand.u32 %v7253, 4294901760
        %v8401 = vsub.f32 %v7253, %v8400
        %v8402 = vand.u32 %v8401, 4294901760
        %v8403 = vsub.f32 %v8401, %v8402
        %v8404 = vand.u32 %v8403, 4294901760
        %8405 = vmatpush1.msra.mxu0 %v8404
        %v8406 = vand.u32 %v7258, 4294901760
        %v8407 = vsub.f32 %v7258, %v8406
        %v8408 = vand.u32 %v8407, 4294901760
        %v8409 = vsub.f32 %v8407, %v8408
        %v8410 = vand.u32 %v8409, 4294901760
        %8411 = vmatprep.subr.mxu0 %v8410
        %v8412 = vand.u32 %v7257, 4294901760
        %v8413 = vsub.f32 %v7257, %v8412
        %v8414 = vand.u32 %v8413, 4294901760
        %v8415 = vsub.f32 %v8413, %v8414
        %v8416 = vand.u32 %v8415, 4294901760
        %8417 = vmatpush1.msra.mxu0 %v8416
        %v8418 = vand.u32 %v7262, 4294901760
        %v8419 = vsub.f32 %v7262, %v8418
        %v8420 = vand.u32 %v8419, 4294901760
        %v8421 = vsub.f32 %v8419, %v8420
        %v8422 = vand.u32 %v8421, 4294901760
        %8423 = vmatprep.subr.mxu0 %v8422
        %v8424 = vand.u32 %v7261, 4294901760
        %v8425 = vsub.f32 %v7261, %v8424
        %v8426 = vand.u32 %v8425, 4294901760
        %v8427 = vsub.f32 %v8425, %v8426
        %v8428 = vand.u32 %v8427, 4294901760
        %8429 = vmatpush1.msra.mxu0 %v8428
        %v8430 = vand.u32 %v7266, 4294901760
        %v8431 = vsub.f32 %v7266, %v8430
        %v8432 = vand.u32 %v8431, 4294901760
        %v8433 = vsub.f32 %v8431, %v8432
        %v8434 = vand.u32 %v8433, 4294901760
        %8435 = vmatprep.subr.mxu0 %v8434
        %v8436 = vand.u32 %v7265, 4294901760
        %v8437 = vsub.f32 %v7265, %v8436
        %v8438 = vand.u32 %v8437, 4294901760
        %v8439 = vsub.f32 %v8437, %v8438
        %v8440 = vand.u32 %v8439, 4294901760
        %8441 = vmatpush1.msra.mxu0 %v8440
        %v8442 = vand.u32 %v7270, 4294901760
        %v8443 = vsub.f32 %v7270, %v8442
        %v8444 = vand.u32 %v8443, 4294901760
        %v8445 = vsub.f32 %v8443, %v8444
        %v8446 = vand.u32 %v8445, 4294901760
        %8447 = vmatprep.subr.mxu0 %v8446
        %v8448 = vand.u32 %v7269, 4294901760
        %v8449 = vsub.f32 %v7269, %v8448
        %v8450 = vand.u32 %v8449, 4294901760
        %v8451 = vsub.f32 %v8449, %v8450
        %v8452 = vand.u32 %v8451, 4294901760
        %8453 = vmatpush1.msra.mxu0 %v8452
        %v8454 = vand.u32 %v7274, 4294901760
        %v8455 = vsub.f32 %v7274, %v8454
        %v8456 = vand.u32 %v8455, 4294901760
        %v8457 = vsub.f32 %v8455, %v8456
        %v8458 = vand.u32 %v8457, 4294901760
        %8459 = vmatprep.subr.mxu0 %v8458
        %v8460 = vand.u32 %v7273, 4294901760
        %v8461 = vsub.f32 %v7273, %v8460
        %v8462 = vand.u32 %v8461, 4294901760
        %v8463 = vsub.f32 %v8461, %v8462
        %v8464 = vand.u32 %v8463, 4294901760
        %8465 = vmatpush1.msra.mxu0 %v8464
        %v8466 = vand.u32 %v7278, 4294901760
        %v8467 = vsub.f32 %v7278, %v8466
        %v8468 = vand.u32 %v8467, 4294901760
        %v8469 = vsub.f32 %v8467, %v8468
        %v8470 = vand.u32 %v8469, 4294901760
        %8471 = vmatprep.subr.mxu0 %v8470
        %v8472 = vand.u32 %v7277, 4294901760
        %v8473 = vsub.f32 %v7277, %v8472
        %v8474 = vand.u32 %v8473, 4294901760
        %v8475 = vsub.f32 %v8473, %v8474
        %v8476 = vand.u32 %v8475, 4294901760
        %8477 = vmatpush1.msra.mxu0 %v8476
        %v8478 = vand.u32 %v7282, 4294901760
        %v8479 = vsub.f32 %v7282, %v8478
        %v8480 = vand.u32 %v8479, 4294901760
        %v8481 = vsub.f32 %v8479, %v8480
        %v8482 = vand.u32 %v8481, 4294901760
        %8483 = vmatprep.subr.mxu0 %v8482
        %v8484 = vand.u32 %v7281, 4294901760
        %v8485 = vsub.f32 %v7281, %v8484
        %v8486 = vand.u32 %v8485, 4294901760
        %v8487 = vsub.f32 %v8485, %v8486
        %v8488 = vand.u32 %v8487, 4294901760
        %8489 = vmatpush1.msra.mxu0 %v8488
        %v8490 = vand.u32 %v7286, 4294901760
        %v8491 = vsub.f32 %v7286, %v8490
        %v8492 = vand.u32 %v8491, 4294901760
        %v8493 = vsub.f32 %v8491, %v8492
        %v8494 = vand.u32 %v8493, 4294901760
        %8495 = vmatprep.subr.mxu0 %v8494
        %v8496 = vand.u32 %v7285, 4294901760
        %v8497 = vsub.f32 %v7285, %v8496
        %v8498 = vand.u32 %v8497, 4294901760
        %v8499 = vsub.f32 %v8497, %v8498
        %v8500 = vand.u32 %v8499, 4294901760
        %8501 = vmatpush1.msra.mxu0 %v8500
        %8502 = vmatprep.subr.mxu0 0.0
        %8503 = vmatpush1.msra.mxu0 0.0
        %8504 = vmatprep.subr.mxu0 0.0
        %8505 = vmatpush1.msra.mxu0 0.0
        %8506 = vmatprep.subr.mxu0 0.0
        %8507 = vmatpush1.msra.mxu0 0.0
        %8508 = vmatprep.subr.mxu0 0.0
        %8509 = vmatpush1.msra.mxu0 0.0
        %8510 = vmatprep.subr.mxu0 0.0
        %8511 = vmatpush1.msra.mxu0 0.0
        %8512 = vmatprep.subr.mxu0 0.0
        %8513 = vmatpush1.msra.mxu0 0.0
        %8514 = vmatprep.subr.mxu0 0.0
        %8515 = vmatpush1.msra.mxu0 0.0
        %8516 = vmatprep.subr.mxu0 0.0
        %8517 = vmatpush1.msra.mxu0 0.0
        %8518 = vmatprep.subr.mxu0 0.0
        %8519 = vmatpush1.msra.mxu0 0.0
        %8520 = vmatprep.subr.mxu0 0.0
        %8521 = vmatpush1.msra.mxu0 0.0
        %8522 = vmatprep.subr.mxu0 0.0
        %8523 = vmatpush1.msra.mxu0 0.0
        %8524 = vmatprep.subr.mxu0 0.0
        %8525 = vmatpush1.msra.mxu0 0.0
        %8526 = vmatprep.subr.mxu0 0.0
        %8527 = vmatpush1.msra.mxu0 0.0
        %8528 = vmatprep.subr.mxu0 0.0
        %8529 = vmatpush1.msra.mxu0 0.0
        %8530 = vmatprep.subr.mxu0 0.0
        %8531 = vmatpush1.msra.mxu0 0.0
        %8532 = vmatprep.subr.mxu0 0.0
        %8533 = vmatpush1.msra.mxu0 0.0
        %8534 = vmatprep.mubr.f32.mxu0 0.0
        %v8535 = vand.u32 %v7221, 4294901760
        %8536 = vmatmul.mubr.f32.gmra.mrb[0].mxu0 %v8535
        %v8537 = vpop.f32.mrb[0].mxu0
        %v8538 = vadd.f32 %v8295, %v8537
        %v8539 = vpop.f32.mrb[0].mxu0
        %v8540 = vadd.f32 %v8297, %v8539
        %8541 = vmatprep.mubr.f32.mxu0 0.0
        %v8542 = vand.u32 %v7222, 4294901760
        %8543 = vmatmul.mubr.f32.gmra.mrb[0].mxu0 %v8542
        %v8544 = vpop.f32.mrb[0].mxu0
        %v8545 = vadd.f32 %v8306, %v8544
        %v8546 = vpop.f32.mrb[0].mxu0
        %v8547 = vadd.f32 %v8308, %v8546
        %8548 = vdwg.mxu0
        %v8549 = vand.u32 %v7226, 4294901760
        %v8550 = vsub.f32 %v7226, %v8549
        %8551 = vmatprep.subr.mxu0 %v8550
        %v8552 = vand.u32 %v7225, 4294901760
        %v8553 = vsub.f32 %v7225, %v8552
        %8554 = vmatpush1.msra.mxu0 %v8553
        %v8555 = vand.u32 %v7230, 4294901760
        %v8556 = vsub.f32 %v7230, %v8555
        %8557 = vmatprep.subr.mxu0 %v8556
        %v8558 = vand.u32 %v7229, 4294901760
        %v8559 = vsub.f32 %v7229, %v8558
        %8560 = vmatpush1.msra.mxu0 %v8559
        %v8561 = vand.u32 %v7234, 4294901760
        %v8562 = vsub.f32 %v7234, %v8561
        %8563 = vmatprep.subr.mxu0 %v8562
        %v8564 = vand.u32 %v7233, 4294901760
        %v8565 = vsub.f32 %v7233, %v8564
        %8566 = vmatpush1.msra.mxu0 %v8565
        %v8567 = vand.u32 %v7238, 4294901760
        %v8568 = vsub.f32 %v7238, %v8567
        %8569 = vmatprep.subr.mxu0 %v8568
        %v8570 = vand.u32 %v7237, 4294901760
        %v8571 = vsub.f32 %v7237, %v8570
        %8572 = vmatpush1.msra.mxu0 %v8571
        %v8573 = vand.u32 %v7242, 4294901760
        %v8574 = vsub.f32 %v7242, %v8573
        %8575 = vmatprep.subr.mxu0 %v8574
        %v8576 = vand.u32 %v7241, 4294901760
        %v8577 = vsub.f32 %v7241, %v8576
        %8578 = vmatpush1.msra.mxu0 %v8577
        %v8579 = vand.u32 %v7246, 4294901760
        %v8580 = vsub.f32 %v7246, %v8579
        %8581 = vmatprep.subr.mxu0 %v8580
        %v8582 = vand.u32 %v7245, 4294901760
        %v8583 = vsub.f32 %v7245, %v8582
        %8584 = vmatpush1.msra.mxu0 %v8583
        %v8585 = vand.u32 %v7250, 4294901760
        %v8586 = vsub.f32 %v7250, %v8585
        %8587 = vmatprep.subr.mxu0 %v8586
        %v8588 = vand.u32 %v7249, 4294901760
        %v8589 = vsub.f32 %v7249, %v8588
        %8590 = vmatpush1.msra.mxu0 %v8589
        %v8591 = vand.u32 %v7254, 4294901760
        %v8592 = vsub.f32 %v7254, %v8591
        %8593 = vmatprep.subr.mxu0 %v8592
        %v8594 = vand.u32 %v7253, 4294901760
        %v8595 = vsub.f32 %v7253, %v8594
        %8596 = vmatpush1.msra.mxu0 %v8595
        %v8597 = vand.u32 %v7258, 4294901760
        %v8598 = vsub.f32 %v7258, %v8597
        %8599 = vmatprep.subr.mxu0 %v8598
        %v8600 = vand.u32 %v7257, 4294901760
        %v8601 = vsub.f32 %v7257, %v8600
        %8602 = vmatpush1.msra.mxu0 %v8601
        %v8603 = vand.u32 %v7262, 4294901760
        %v8604 = vsub.f32 %v7262, %v8603
        %8605 = vmatprep.subr.mxu0 %v8604
        %v8606 = vand.u32 %v7261, 4294901760
        %v8607 = vsub.f32 %v7261, %v8606
        %8608 = vmatpush1.msra.mxu0 %v8607
        %v8609 = vand.u32 %v7266, 4294901760
        %v8610 = vsub.f32 %v7266, %v8609
        %8611 = vmatprep.subr.mxu0 %v8610
        %v8612 = vand.u32 %v7265, 4294901760
        %v8613 = vsub.f32 %v7265, %v8612
        %8614 = vmatpush1.msra.mxu0 %v8613
        %v8615 = vand.u32 %v7270, 4294901760
        %v8616 = vsub.f32 %v7270, %v8615
        %8617 = vmatprep.subr.mxu0 %v8616
        %v8618 = vand.u32 %v7269, 4294901760
        %v8619 = vsub.f32 %v7269, %v8618
        %8620 = vmatpush1.msra.mxu0 %v8619
        %v8621 = vand.u32 %v7274, 4294901760
        %v8622 = vsub.f32 %v7274, %v8621
        %8623 = vmatprep.subr.mxu0 %v8622
        %v8624 = vand.u32 %v7273, 4294901760
        %v8625 = vsub.f32 %v7273, %v8624
        %8626 = vmatpush1.msra.mxu0 %v8625
        %v8627 = vand.u32 %v7278, 4294901760
        %v8628 = vsub.f32 %v7278, %v8627
        %8629 = vmatprep.subr.mxu0 %v8628
        %v8630 = vand.u32 %v7277, 4294901760
        %v8631 = vsub.f32 %v7277, %v8630
        %8632 = vmatpush1.msra.mxu0 %v8631
        %v8633 = vand.u32 %v7282, 4294901760
        %v8634 = vsub.f32 %v7282, %v8633
        %8635 = vmatprep.subr.mxu0 %v8634
        %v8636 = vand.u32 %v7281, 4294901760
        %v8637 = vsub.f32 %v7281, %v8636
        %8638 = vmatpush1.msra.mxu0 %v8637
        %v8639 = vand.u32 %v7286, 4294901760
        %v8640 = vsub.f32 %v7286, %v8639
        %8641 = vmatprep.subr.mxu0 %v8640
        %v8642 = vand.u32 %v7285, 4294901760
        %v8643 = vsub.f32 %v7285, %v8642
        %8644 = vmatpush1.msra.mxu0 %v8643
        %8645 = vmatprep.subr.mxu0 0.0
        %8646 = vmatpush1.msra.mxu0 0.0
        %8647 = vmatprep.subr.mxu0 0.0
        %8648 = vmatpush1.msra.mxu0 0.0
        %8649 = vmatprep.subr.mxu0 0.0
        %8650 = vmatpush1.msra.mxu0 0.0
        %8651 = vmatprep.subr.mxu0 0.0
        %8652 = vmatpush1.msra.mxu0 0.0
        %8653 = vmatprep.subr.mxu0 0.0
        %8654 = vmatpush1.msra.mxu0 0.0
        %8655 = vmatprep.subr.mxu0 0.0
        %8656 = vmatpush1.msra.mxu0 0.0
        %8657 = vmatprep.subr.mxu0 0.0
        %8658 = vmatpush1.msra.mxu0 0.0
        %8659 = vmatprep.subr.mxu0 0.0
        %8660 = vmatpush1.msra.mxu0 0.0
        %8661 = vmatprep.subr.mxu0 0.0
        %8662 = vmatpush1.msra.mxu0 0.0
        %8663 = vmatprep.subr.mxu0 0.0
        %8664 = vmatpush1.msra.mxu0 0.0
        %8665 = vmatprep.subr.mxu0 0.0
        %8666 = vmatpush1.msra.mxu0 0.0
        %8667 = vmatprep.subr.mxu0 0.0
        %8668 = vmatpush1.msra.mxu0 0.0
        %8669 = vmatprep.subr.mxu0 0.0
        %8670 = vmatpush1.msra.mxu0 0.0
        %8671 = vmatprep.subr.mxu0 0.0
        %8672 = vmatpush1.msra.mxu0 0.0
        %8673 = vmatprep.subr.mxu0 0.0
        %8674 = vmatpush1.msra.mxu0 0.0
        %8675 = vmatprep.subr.mxu0 0.0
        %8676 = vmatpush1.msra.mxu0 0.0
        %8677 = vmatprep.mubr.f32.mxu0 0.0
        %v8678 = vand.u32 %v7221, 4294901760
        %v8679 = vsub.f32 %v7221, %v8678
        %8680 = vmatmul.mubr.f32.gmra.mrb[0].mxu0 %v8679
        %v8681 = vpop.f32.mrb[0].mxu0
        %v8682 = vadd.f32 %v8538, %v8681
        %v8683 = vpop.f32.mrb[0].mxu0
        %v8684 = vadd.f32 %v8540, %v8683
        %8685 = vmatprep.mubr.f32.mxu0 0.0
        %v8686 = vand.u32 %v7222, 4294901760
        %v8687 = vsub.f32 %v7222, %v8686
        %8688 = vmatmul.mubr.f32.gmra.mrb[0].mxu0 %v8687
        %v8689 = vpop.f32.mrb[0].mxu0
        %v8690 = vadd.f32 %v8545, %v8689
        %v8691 = vpop.f32.mrb[0].mxu0
        %v8692 = vadd.f32 %v8547, %v8691
        %8693 = vdwg.mxu0
        %v8694 = vand.u32 %v7226, 4294901760
        %8695 = vmatprep.subr.mxu0 %v8694
        %v8696 = vand.u32 %v7225, 4294901760
        %8697 = vmatpush1.msra.mxu0 %v8696
        %v8698 = vand.u32 %v7230, 4294901760
        %8699 = vmatprep.subr.mxu0 %v8698
        %v8700 = vand.u32 %v7229, 4294901760
        %8701 = vmatpush1.msra.mxu0 %v8700
        %v8702 = vand.u32 %v7234, 4294901760
        %8703 = vmatprep.subr.mxu0 %v8702
        %v8704 = vand.u32 %v7233, 4294901760
        %8705 = vmatpush1.msra.mxu0 %v8704
        %v8706 = vand.u32 %v7238, 4294901760
        %8707 = vmatprep.subr.mxu0 %v8706
        %v8708 = vand.u32 %v7237, 4294901760
        %8709 = vmatpush1.msra.mxu0 %v8708
        %v8710 = vand.u32 %v7242, 4294901760
        %8711 = vmatprep.subr.mxu0 %v8710
        %v8712 = vand.u32 %v7241, 4294901760
        %8713 = vmatpush1.msra.mxu0 %v8712
        %v8714 = vand.u32 %v7246, 4294901760
        %8715 = vmatprep.subr.mxu0 %v8714
        %v8716 = vand.u32 %v7245, 4294901760
        %8717 = vmatpush1.msra.mxu0 %v8716
        %v8718 = vand.u32 %v7250, 4294901760
        %8719 = vmatprep.subr.mxu0 %v8718
        %v8720 = vand.u32 %v7249, 4294901760
        %8721 = vmatpush1.msra.mxu0 %v8720
        %v8722 = vand.u32 %v7254, 4294901760
        %8723 = vmatprep.subr.mxu0 %v8722
        %v8724 = vand.u32 %v7253, 4294901760
        %8725 = vmatpush1.msra.mxu0 %v8724
        %v8726 = vand.u32 %v7258, 4294901760
        %8727 = vmatprep.subr.mxu0 %v8726
        %v8728 = vand.u32 %v7257, 4294901760
        %8729 = vmatpush1.msra.mxu0 %v8728
        %v8730 = vand.u32 %v7262, 4294901760
        %8731 = vmatprep.subr.mxu0 %v8730
        %v8732 = vand.u32 %v7261, 4294901760
        %8733 = vmatpush1.msra.mxu0 %v8732
        %v8734 = vand.u32 %v7266, 4294901760
        %8735 = vmatprep.subr.mxu0 %v8734
        %v8736 = vand.u32 %v7265, 4294901760
        %8737 = vmatpush1.msra.mxu0 %v8736
        %v8738 = vand.u32 %v7270, 4294901760
        %8739 = vmatprep.subr.mxu0 %v8738
        %v8740 = vand.u32 %v7269, 4294901760
        %8741 = vmatpush1.msra.mxu0 %v8740
        %v8742 = vand.u32 %v7274, 4294901760
        %8743 = vmatprep.subr.mxu0 %v8742
        %v8744 = vand.u32 %v7273, 4294901760
        %8745 = vmatpush1.msra.mxu0 %v8744
        %v8746 = vand.u32 %v7278, 4294901760
        %8747 = vmatprep.subr.mxu0 %v8746
        %v8748 = vand.u32 %v7277, 4294901760
        %8749 = vmatpush1.msra.mxu0 %v8748
        %v8750 = vand.u32 %v7282, 4294901760
        %8751 = vmatprep.subr.mxu0 %v8750
        %v8752 = vand.u32 %v7281, 4294901760
        %8753 = vmatpush1.msra.mxu0 %v8752
        %v8754 = vand.u32 %v7286, 4294901760
        %8755 = vmatprep.subr.mxu0 %v8754
        %v8756 = vand.u32 %v7285, 4294901760
        %8757 = vmatpush1.msra.mxu0 %v8756
        %8758 = vmatprep.subr.mxu0 0.0
        %8759 = vmatpush1.msra.mxu0 0.0
        %8760 = vmatprep.subr.mxu0 0.0
        %8761 = vmatpush1.msra.mxu0 0.0
        %8762 = vmatprep.subr.mxu0 0.0
        %8763 = vmatpush1.msra.mxu0 0.0
        %8764 = vmatprep.subr.mxu0 0.0
        %8765 = vmatpush1.msra.mxu0 0.0
        %8766 = vmatprep.subr.mxu0 0.0
        %8767 = vmatpush1.msra.mxu0 0.0
        %8768 = vmatprep.subr.mxu0 0.0
        %8769 = vmatpush1.msra.mxu0 0.0
        %8770 = vmatprep.subr.mxu0 0.0
        %8771 = vmatpush1.msra.mxu0 0.0
        %8772 = vmatprep.subr.mxu0 0.0
        %8773 = vmatpush1.msra.mxu0 0.0
        %8774 = vmatprep.subr.mxu0 0.0
        %8775 = vmatpush1.msra.mxu0 0.0
        %8776 = vmatprep.subr.mxu0 0.0
        %8777 = vmatpush1.msra.mxu0 0.0
        %8778 = vmatprep.subr.mxu0 0.0
        %8779 = vmatpush1.msra.mxu0 0.0
        %8780 = vmatprep.subr.mxu0 0.0
        %8781 = vmatpush1.msra.mxu0 0.0
        %8782 = vmatprep.subr.mxu0 0.0
        %8783 = vmatpush1.msra.mxu0 0.0
        %8784 = vmatprep.subr.mxu0 0.0
        %8785 = vmatpush1.msra.mxu0 0.0
        %8786 = vmatprep.subr.mxu0 0.0
        %8787 = vmatpush1.msra.mxu0 0.0
        %8788 = vmatprep.subr.mxu0 0.0
        %8789 = vmatpush1.msra.mxu0 0.0
        %8790 = vmatprep.mubr.f32.mxu0 0.0
        %v8791 = vand.u32 %v7221, 4294901760
        %v8792 = vsub.f32 %v7221, %v8791
        %v8793 = vand.u32 %v8792, 4294901760
        %8794 = vmatmul.mubr.f32.gmra.mrb[0].mxu0 %v8793
        %v8795 = vpop.f32.mrb[0].mxu0
        %v8796 = vadd.f32 %v8682, %v8795
        %v8797 = vpop.f32.mrb[0].mxu0
        %v8798 = vadd.f32 %v8684, %v8797
        %8799 = vmatprep.mubr.f32.mxu0 0.0
        %v8800 = vand.u32 %v7222, 4294901760
        %v8801 = vsub.f32 %v7222, %v8800
        %v8802 = vand.u32 %v8801, 4294901760
        %8803 = vmatmul.mubr.f32.gmra.mrb[0].mxu0 %v8802
        %v8804 = vpop.f32.mrb[0].mxu0
        %v8805 = vadd.f32 %v8690, %v8804
        %v8806 = vpop.f32.mrb[0].mxu0
        %v8807 = vadd.f32 %v8692, %v8806
        %8808 = vdwg.mxu0
        %v8809 = vand.u32 %v7226, 4294901760
        %v8810 = vsub.f32 %v7226, %v8809
        %v8811 = vand.u32 %v8810, 4294901760
        %8812 = vmatprep.subr.mxu0 %v8811
        %v8813 = vand.u32 %v7225, 4294901760
        %v8814 = vsub.f32 %v7225, %v8813
        %v8815 = vand.u32 %v8814, 4294901760
        %8816 = vmatpush1.msra.mxu0 %v8815
        %v8817 = vand.u32 %v7230, 4294901760
        %v8818 = vsub.f32 %v7230, %v8817
        %v8819 = vand.u32 %v8818, 4294901760
        %8820 = vmatprep.subr.mxu0 %v8819
        %v8821 = vand.u32 %v7229, 4294901760
        %v8822 = vsub.f32 %v7229, %v8821
        %v8823 = vand.u32 %v8822, 4294901760
        %8824 = vmatpush1.msra.mxu0 %v8823
        %v8825 = vand.u32 %v7234, 4294901760
        %v8826 = vsub.f32 %v7234, %v8825
        %v8827 = vand.u32 %v8826, 4294901760
        %8828 = vmatprep.subr.mxu0 %v8827
        %v8829 = vand.u32 %v7233, 4294901760
        %v8830 = vsub.f32 %v7233, %v8829
        %v8831 = vand.u32 %v8830, 4294901760
        %8832 = vmatpush1.msra.mxu0 %v8831
        %v8833 = vand.u32 %v7238, 4294901760
        %v8834 = vsub.f32 %v7238, %v8833
        %v8835 = vand.u32 %v8834, 4294901760
        %8836 = vmatprep.subr.mxu0 %v8835
        %v8837 = vand.u32 %v7237, 4294901760
        %v8838 = vsub.f32 %v7237, %v8837
        %v8839 = vand.u32 %v8838, 4294901760
        %8840 = vmatpush1.msra.mxu0 %v8839
        %v8841 = vand.u32 %v7242, 4294901760
        %v8842 = vsub.f32 %v7242, %v8841
        %v8843 = vand.u32 %v8842, 4294901760
        %8844 = vmatprep.subr.mxu0 %v8843
        %v8845 = vand.u32 %v7241, 4294901760
        %v8846 = vsub.f32 %v7241, %v8845
        %v8847 = vand.u32 %v8846, 4294901760
        %8848 = vmatpush1.msra.mxu0 %v8847
        %v8849 = vand.u32 %v7246, 4294901760
        %v8850 = vsub.f32 %v7246, %v8849
        %v8851 = vand.u32 %v8850, 4294901760
        %8852 = vmatprep.subr.mxu0 %v8851
        %v8853 = vand.u32 %v7245, 4294901760
        %v8854 = vsub.f32 %v7245, %v8853
        %v8855 = vand.u32 %v8854, 4294901760
        %8856 = vmatpush1.msra.mxu0 %v8855
        %v8857 = vand.u32 %v7250, 4294901760
        %v8858 = vsub.f32 %v7250, %v8857
        %v8859 = vand.u32 %v8858, 4294901760
        %8860 = vmatprep.subr.mxu0 %v8859
        %v8861 = vand.u32 %v7249, 4294901760
        %v8862 = vsub.f32 %v7249, %v8861
        %v8863 = vand.u32 %v8862, 4294901760
        %8864 = vmatpush1.msra.mxu0 %v8863
        %v8865 = vand.u32 %v7254, 4294901760
        %v8866 = vsub.f32 %v7254, %v8865
        %v8867 = vand.u32 %v8866, 4294901760
        %8868 = vmatprep.subr.mxu0 %v8867
        %v8869 = vand.u32 %v7253, 4294901760
        %v8870 = vsub.f32 %v7253, %v8869
        %v8871 = vand.u32 %v8870, 4294901760
        %8872 = vmatpush1.msra.mxu0 %v8871
        %v8873 = vand.u32 %v7258, 4294901760
        %v8874 = vsub.f32 %v7258, %v8873
        %v8875 = vand.u32 %v8874, 4294901760
        %8876 = vmatprep.subr.mxu0 %v8875
        %v8877 = vand.u32 %v7257, 4294901760
        %v8878 = vsub.f32 %v7257, %v8877
        %v8879 = vand.u32 %v8878, 4294901760
        %8880 = vmatpush1.msra.mxu0 %v8879
        %v8881 = vand.u32 %v7262, 4294901760
        %v8882 = vsub.f32 %v7262, %v8881
        %v8883 = vand.u32 %v8882, 4294901760
        %8884 = vmatprep.subr.mxu0 %v8883
        %v8885 = vand.u32 %v7261, 4294901760
        %v8886 = vsub.f32 %v7261, %v8885
        %v8887 = vand.u32 %v8886, 4294901760
        %8888 = vmatpush1.msra.mxu0 %v8887
        %v8889 = vand.u32 %v7266, 4294901760
        %v8890 = vsub.f32 %v7266, %v8889
        %v8891 = vand.u32 %v8890, 4294901760
        %8892 = vmatprep.subr.mxu0 %v8891
        %v8893 = vand.u32 %v7265, 4294901760
        %v8894 = vsub.f32 %v7265, %v8893
        %v8895 = vand.u32 %v8894, 4294901760
        %8896 = vmatpush1.msra.mxu0 %v8895
        %v8897 = vand.u32 %v7270, 4294901760
        %v8898 = vsub.f32 %v7270, %v8897
        %v8899 = vand.u32 %v8898, 4294901760
        %8900 = vmatprep.subr.mxu0 %v8899
        %v8901 = vand.u32 %v7269, 4294901760
        %v8902 = vsub.f32 %v7269, %v8901
        %v8903 = vand.u32 %v8902, 4294901760
        %8904 = vmatpush1.msra.mxu0 %v8903
        %v8905 = vand.u32 %v7274, 4294901760
        %v8906 = vsub.f32 %v7274, %v8905
        %v8907 = vand.u32 %v8906, 4294901760
        %8908 = vmatprep.subr.mxu0 %v8907
        %v8909 = vand.u32 %v7273, 4294901760
        %v8910 = vsub.f32 %v7273, %v8909
        %v8911 = vand.u32 %v8910, 4294901760
        %8912 = vmatpush1.msra.mxu0 %v8911
        %v8913 = vand.u32 %v7278, 4294901760
        %v8914 = vsub.f32 %v7278, %v8913
        %v8915 = vand.u32 %v8914, 4294901760
        %8916 = vmatprep.subr.mxu0 %v8915
        %v8917 = vand.u32 %v7277, 4294901760
        %v8918 = vsub.f32 %v7277, %v8917
        %v8919 = vand.u32 %v8918, 4294901760
        %8920 = vmatpush1.msra.mxu0 %v8919
        %v8921 = vand.u32 %v7282, 4294901760
        %v8922 = vsub.f32 %v7282, %v8921
        %v8923 = vand.u32 %v8922, 4294901760
        %8924 = vmatprep.subr.mxu0 %v8923
        %v8925 = vand.u32 %v7281, 4294901760
        %v8926 = vsub.f32 %v7281, %v8925
        %v8927 = vand.u32 %v8926, 4294901760
        %8928 = vmatpush1.msra.mxu0 %v8927
        %v8929 = vand.u32 %v7286, 4294901760
        %v8930 = vsub.f32 %v7286, %v8929
        %v8931 = vand.u32 %v8930, 4294901760
        %8932 = vmatprep.subr.mxu0 %v8931
        %v8933 = vand.u32 %v7285, 4294901760
        %v8934 = vsub.f32 %v7285, %v8933
        %v8935 = vand.u32 %v8934, 4294901760
        %8936 = vmatpush1.msra.mxu0 %v8935
        %8937 = vmatprep.subr.mxu0 0.0
        %8938 = vmatpush1.msra.mxu0 0.0
        %8939 = vmatprep.subr.mxu0 0.0
        %8940 = vmatpush1.msra.mxu0 0.0
        %8941 = vmatprep.subr.mxu0 0.0
        %8942 = vmatpush1.msra.mxu0 0.0
        %8943 = vmatprep.subr.mxu0 0.0
        %8944 = vmatpush1.msra.mxu0 0.0
        %8945 = vmatprep.subr.mxu0 0.0
        %8946 = vmatpush1.msra.mxu0 0.0
        %8947 = vmatprep.subr.mxu0 0.0
        %8948 = vmatpush1.msra.mxu0 0.0
        %8949 = vmatprep.subr.mxu0 0.0
        %8950 = vmatpush1.msra.mxu0 0.0
        %8951 = vmatprep.subr.mxu0 0.0
        %8952 = vmatpush1.msra.mxu0 0.0
        %8953 = vmatprep.subr.mxu0 0.0
        %8954 = vmatpush1.msra.mxu0 0.0
        %8955 = vmatprep.subr.mxu0 0.0
        %8956 = vmatpush1.msra.mxu0 0.0
        %8957 = vmatprep.subr.mxu0 0.0
        %8958 = vmatpush1.msra.mxu0 0.0
        %8959 = vmatprep.subr.mxu0 0.0
        %8960 = vmatpush1.msra.mxu0 0.0
        %8961 = vmatprep.subr.mxu0 0.0
        %8962 = vmatpush1.msra.mxu0 0.0
        %8963 = vmatprep.subr.mxu0 0.0
        %8964 = vmatpush1.msra.mxu0 0.0
        %8965 = vmatprep.subr.mxu0 0.0
        %8966 = vmatpush1.msra.mxu0 0.0
        %8967 = vmatprep.subr.mxu0 0.0
        %8968 = vmatpush1.msra.mxu0 0.0
        %8969 = vmatprep.mubr.f32.mxu0 0.0
        %v8970 = vand.u32 %v7221, 4294901760
        %8971 = vmatmul.mubr.f32.gmra.mrb[0].mxu0 %v8970
        %v8972 = vpop.f32.mrb[0].mxu0
        %v8973 = vadd.f32 %v8796, %v8972
        %v8974 = vpop.f32.mrb[0].mxu0
        %v8975 = vadd.f32 %v8798, %v8974
        %8976 = vmatprep.mubr.f32.mxu0 0.0
        %v8977 = vand.u32 %v7222, 4294901760
        %8978 = vmatmul.mubr.f32.gmra.mrb[0].mxu0 %v8977
        %v8979 = vpop.f32.mrb[0].mxu0
        %v8980 = vadd.f32 %v8805, %v8979
        %v8981 = vpop.f32.mrb[0].mxu0
        %v8982 = vadd.f32 %v8807, %v8981
        %8983 = vdwg.mxu0
        %v8984 = vand.u32 %v7226, 4294901760
        %8985 = vmatprep.subr.mxu0 %v8984
        %v8986 = vand.u32 %v7225, 4294901760
        %8987 = vmatpush1.msra.mxu0 %v8986
        %v8988 = vand.u32 %v7230, 4294901760
        %8989 = vmatprep.subr.mxu0 %v8988
        %v8990 = vand.u32 %v7229, 4294901760
        %8991 = vmatpush1.msra.mxu0 %v8990
        %v8992 = vand.u32 %v7234, 4294901760
        %8993 = vmatprep.subr.mxu0 %v8992
        %v8994 = vand.u32 %v7233, 4294901760
        %8995 = vmatpush1.msra.mxu0 %v8994
        %v8996 = vand.u32 %v7238, 4294901760
        %8997 = vmatprep.subr.mxu0 %v8996
        %v8998 = vand.u32 %v7237, 4294901760
        %8999 = vmatpush1.msra.mxu0 %v8998
        %v9000 = vand.u32 %v7242, 4294901760
        %9001 = vmatprep.subr.mxu0 %v9000
        %v9002 = vand.u32 %v7241, 4294901760
        %9003 = vmatpush1.msra.mxu0 %v9002
        %v9004 = vand.u32 %v7246, 4294901760
        %9005 = vmatprep.subr.mxu0 %v9004
        %v9006 = vand.u32 %v7245, 4294901760
        %9007 = vmatpush1.msra.mxu0 %v9006
        %v9008 = vand.u32 %v7250, 4294901760
        %9009 = vmatprep.subr.mxu0 %v9008
        %v9010 = vand.u32 %v7249, 4294901760
        %9011 = vmatpush1.msra.mxu0 %v9010
        %v9012 = vand.u32 %v7254, 4294901760
        %9013 = vmatprep.subr.mxu0 %v9012
        %v9014 = vand.u32 %v7253, 4294901760
        %9015 = vmatpush1.msra.mxu0 %v9014
        %v9016 = vand.u32 %v7258, 4294901760
        %9017 = vmatprep.subr.mxu0 %v9016
        %v9018 = vand.u32 %v7257, 4294901760
        %9019 = vmatpush1.msra.mxu0 %v9018
        %v9020 = vand.u32 %v7262, 4294901760
        %9021 = vmatprep.subr.mxu0 %v9020
        %v9022 = vand.u32 %v7261, 4294901760
        %9023 = vmatpush1.msra.mxu0 %v9022
        %v9024 = vand.u32 %v7266, 4294901760
        %9025 = vmatprep.subr.mxu0 %v9024
        %v9026 = vand.u32 %v7265, 4294901760
        %9027 = vmatpush1.msra.mxu0 %v9026
        %v9028 = vand.u32 %v7270, 4294901760
        %9029 = vmatprep.subr.mxu0 %v9028
        %v9030 = vand.u32 %v7269, 4294901760
        %9031 = vmatpush1.msra.mxu0 %v9030
        %v9032 = vand.u32 %v7274, 4294901760
        %9033 = vmatprep.subr.mxu0 %v9032
        %v9034 = vand.u32 %v7273, 4294901760
        %9035 = vmatpush1.msra.mxu0 %v9034
        %v9036 = vand.u32 %v7278, 4294901760
        %9037 = vmatprep.subr.mxu0 %v9036
        %v9038 = vand.u32 %v7277, 4294901760
        %9039 = vmatpush1.msra.mxu0 %v9038
        %v9040 = vand.u32 %v7282, 4294901760
        %9041 = vmatprep.subr.mxu0 %v9040
        %v9042 = vand.u32 %v7281, 4294901760
        %9043 = vmatpush1.msra.mxu0 %v9042
        %v9044 = vand.u32 %v7286, 4294901760
        %9045 = vmatprep.subr.mxu0 %v9044
        %v9046 = vand.u32 %v7285, 4294901760
        %9047 = vmatpush1.msra.mxu0 %v9046
        %9048 = vmatprep.subr.mxu0 0.0
        %9049 = vmatpush1.msra.mxu0 0.0
        %9050 = vmatprep.subr.mxu0 0.0
        %9051 = vmatpush1.msra.mxu0 0.0
        %9052 = vmatprep.subr.mxu0 0.0
        %9053 = vmatpush1.msra.mxu0 0.0
        %9054 = vmatprep.subr.mxu0 0.0
        %9055 = vmatpush1.msra.mxu0 0.0
        %9056 = vmatprep.subr.mxu0 0.0
        %9057 = vmatpush1.msra.mxu0 0.0
        %9058 = vmatprep.subr.mxu0 0.0
        %9059 = vmatpush1.msra.mxu0 0.0
        %9060 = vmatprep.subr.mxu0 0.0
        %9061 = vmatpush1.msra.mxu0 0.0
        %9062 = vmatprep.subr.mxu0 0.0
        %9063 = vmatpush1.msra.mxu0 0.0
        %9064 = vmatprep.subr.mxu0 0.0
        %9065 = vmatpush1.msra.mxu0 0.0
        %9066 = vmatprep.subr.mxu0 0.0
        %9067 = vmatpush1.msra.mxu0 0.0
        %9068 = vmatprep.subr.mxu0 0.0
        %9069 = vmatpush1.msra.mxu0 0.0
        %9070 = vmatprep.subr.mxu0 0.0
        %9071 = vmatpush1.msra.mxu0 0.0
        %9072 = vmatprep.subr.mxu0 0.0
        %9073 = vmatpush1.msra.mxu0 0.0
        %9074 = vmatprep.subr.mxu0 0.0
        %9075 = vmatpush1.msra.mxu0 0.0
        %9076 = vmatprep.subr.mxu0 0.0
        %9077 = vmatpush1.msra.mxu0 0.0
        %9078 = vmatprep.subr.mxu0 0.0
        %9079 = vmatpush1.msra.mxu0 0.0
        %9080 = vmatprep.mubr.f32.mxu0 0.0
        %v9081 = vand.u32 %v7221, 4294901760
        %9082 = vmatmul.mubr.f32.gmra.mrb[0].mxu0 %v9081
        %v9083 = vpop.f32.mrb[0].mxu0
        %v9084 = vadd.f32 %v8973, %v9083
        %v9085 = vpop.f32.mrb[0].mxu0
        %v9086 = vadd.f32 %v8975, %v9085
        %9087 = vmatprep.mubr.f32.mxu0 0.0
        %v9088 = vand.u32 %v7222, 4294901760
        %9089 = vmatmul.mubr.f32.gmra.mrb[0].mxu0 %v9088
        %v9090 = vpop.f32.mrb[0].mxu0
        %v9091 = vadd.f32 %v8980, %v9090
        %v9092 = vpop.f32.mrb[0].mxu0
        %v9093 = vadd.f32 %v8982, %v9092
        %9094 = vdwg.mxu0
        %v9095 = vsub.f32 0.0, %v8180
        %v9096 = vsub.f32 0.0, %v8182
        %v9097 = vsub.f32 0.0, %v8187
        %v9098 = vsub.f32 0.0, %v8189
        %v9099 = vmul.f32 %v9095, 1.442695
        %v9100 = vpow.pop %v9099
        %v9101 = vmul.f32 %v9096, 1.442695
        %v9102 = vpow.pop %v9101
        %v9103 = vmul.f32 %v9097, 1.442695
        %v9104 = vpow.pop %v9103
        %v9105 = vmul.f32 %v9098, 1.442695
        %v9106 = vpow.pop %v9105
        %v9107 = vadd.f32 %v9100, 1.0
        %v9108 = vadd.f32 %v9102, 1.0
        %v9109 = vadd.f32 %v9104, 1.0
        %v9110 = vadd.f32 %v9106, 1.0
        %v9111 = vrcp.pop %v9107
        %v9112 = vmul.f32 1.0, %v9111
        %v9113 = vrcp.pop %v9108
        %v9114 = vmul.f32 1.0, %v9113
        %v9115 = vrcp.pop %v9109
        %v9116 = vmul.f32 1.0, %v9115
        %v9117 = vrcp.pop %v9110
        %v9118 = vmul.f32 1.0, %v9117
        %v9119 = vmul.f32 %v8180, %v9112
        %v9120 = vmul.f32 %v8182, %v9114
        %v9121 = vmul.f32 %v8187, %v9116
        %v9122 = vmul.f32 %v8189, %v9118
        %v9123 = vmul.f32 %v9119, %v9084
        %v9124 = vmul.f32 %v9120, %v9086
        %v9125 = vmul.f32 %v9121, %v9091
        %v9126 = vmul.f32 %v9122, %v9093
        %v9127 = vld [vmem:[#allocation11] sm:$0xff]
        %v9128 = vld [vmem:[#allocation11 + $0x8] sm:$0xff]
        %v9129 = vld [vmem:[#allocation11 + $0x10] sm:$0xff]
        %v9130 = vld [vmem:[#allocation11 + $0x18] sm:$0xff]
        %v9131 = vld [vmem:[#allocation11 + $0x20] sm:$0xff]
        %v9132 = vld [vmem:[#allocation11 + $0x28] sm:$0xff]
        %v9133 = vld [vmem:[#allocation11 + $0x30] sm:$0xff]
        %v9134 = vld [vmem:[#allocation11 + $0x38] sm:$0xff]
        %v9135 = vld [vmem:[#allocation11 + $0x40] sm:$0xff]
        %v9136 = vld [vmem:[#allocation11 + $0x48] sm:$0xff]
        %v9137 = vld [vmem:[#allocation11 + $0x50] sm:$0xff]
        %v9138 = vld [vmem:[#allocation11 + $0x58] sm:$0xff]
        %v9139 = vld [vmem:[#allocation11 + $0x60] sm:$0xff]
        %v9140 = vld [vmem:[#allocation11 + $0x68] sm:$0xff]
        %v9141 = vld [vmem:[#allocation11 + $0x70] sm:$0xff]
        %v9142 = vld [vmem:[#allocation11 + $0x78] sm:$0xff]
        %v9143 = vld [vmem:[#allocation11 + $0x80] sm:$0xff]
        %v9144 = vld [vmem:[#allocation11 + $0x88] sm:$0xff]
        %v9145 = vld [vmem:[#allocation11 + $0x90] sm:$0xff]
        %v9146 = vld [vmem:[#allocation11 + $0x98] sm:$0xff]
        %v9147 = vld [vmem:[#allocation11 + $0xa0] sm:$0xff]
        %v9148 = vld [vmem:[#allocation11 + $0xa8] sm:$0xff]
        %v9149 = vld [vmem:[#allocation11 + $0xb0] sm:$0xff]
        %v9150 = vld [vmem:[#allocation11 + $0xb8] sm:$0xff]
        %v9151 = vld [vmem:[#allocation11 + $0xc0] sm:$0xff]
        %v9152 = vld [vmem:[#allocation11 + $0xc8] sm:$0xff]
        %v9153 = vld [vmem:[#allocation11 + $0xd0] sm:$0xff]
        %v9154 = vld [vmem:[#allocation11 + $0xd8] sm:$0xff]
        %v9155 = vld [vmem:[#allocation11 + $0xe0] sm:$0xff]
        %v9156 = vld [vmem:[#allocation11 + $0xe8] sm:$0xff]
        %v9157 = vld [vmem:[#allocation11 + $0xf0] sm:$0xff]
        %v9158 = vld [vmem:[#allocation11 + $0xf8] sm:$0xff]
        %9159 = vmatprep.subr.mxu0 0.0
        %v9160 = vand.u32 %v9127, 4294901760
        %9161 = vmatpush1.msra.mxu0 %v9160
        %9162 = vmatprep.subr.mxu0 0.0
        %v9163 = vand.u32 %v9128, 4294901760
        %9164 = vmatpush1.msra.mxu0 %v9163
        %9165 = vmatprep.subr.mxu0 0.0
        %v9166 = vand.u32 %v9129, 4294901760
        %9167 = vmatpush1.msra.mxu0 %v9166
        %9168 = vmatprep.subr.mxu0 0.0
        %v9169 = vand.u32 %v9130, 4294901760
        %9170 = vmatpush1.msra.mxu0 %v9169
        %9171 = vmatprep.subr.mxu0 0.0
        %v9172 = vand.u32 %v9131, 4294901760
        %9173 = vmatpush1.msra.mxu0 %v9172
        %9174 = vmatprep.subr.mxu0 0.0
        %v9175 = vand.u32 %v9132, 4294901760
        %9176 = vmatpush1.msra.mxu0 %v9175
        %9177 = vmatprep.subr.mxu0 0.0
        %v9178 = vand.u32 %v9133, 4294901760
        %9179 = vmatpush1.msra.mxu0 %v9178
        %9180 = vmatprep.subr.mxu0 0.0
        %v9181 = vand.u32 %v9134, 4294901760
        %9182 = vmatpush1.msra.mxu0 %v9181
        %9183 = vmatprep.subr.mxu0 0.0
        %v9184 = vand.u32 %v9135, 4294901760
        %9185 = vmatpush1.msra.mxu0 %v9184
        %9186 = vmatprep.subr.mxu0 0.0
        %v9187 = vand.u32 %v9136, 4294901760
        %9188 = vmatpush1.msra.mxu0 %v9187
        %9189 = vmatprep.subr.mxu0 0.0
        %v9190 = vand.u32 %v9137, 4294901760
        %9191 = vmatpush1.msra.mxu0 %v9190
        %9192 = vmatprep.subr.mxu0 0.0
        %v9193 = vand.u32 %v9138, 4294901760
        %9194 = vmatpush1.msra.mxu0 %v9193
        %9195 = vmatprep.subr.mxu0 0.0
        %v9196 = vand.u32 %v9139, 4294901760
        %9197 = vmatpush1.msra.mxu0 %v9196
        %9198 = vmatprep.subr.mxu0 0.0
        %v9199 = vand.u32 %v9140, 4294901760
        %9200 = vmatpush1.msra.mxu0 %v9199
        %9201 = vmatprep.subr.mxu0 0.0
        %v9202 = vand.u32 %v9141, 4294901760
        %9203 = vmatpush1.msra.mxu0 %v9202
        %9204 = vmatprep.subr.mxu0 0.0
        %v9205 = vand.u32 %v9142, 4294901760
        %9206 = vmatpush1.msra.mxu0 %v9205
        %9207 = vmatprep.subr.mxu0 0.0
        %v9208 = vand.u32 %v9143, 4294901760
        %9209 = vmatpush1.msra.mxu0 %v9208
        %9210 = vmatprep.subr.mxu0 0.0
        %v9211 = vand.u32 %v9144, 4294901760
        %9212 = vmatpush1.msra.mxu0 %v9211
        %9213 = vmatprep.subr.mxu0 0.0
        %v9214 = vand.u32 %v9145, 4294901760
        %9215 = vmatpush1.msra.mxu0 %v9214
        %9216 = vmatprep.subr.mxu0 0.0
        %v9217 = vand.u32 %v9146, 4294901760
        %9218 = vmatpush1.msra.mxu0 %v9217
        %9219 = vmatprep.subr.mxu0 0.0
        %v9220 = vand.u32 %v9147, 4294901760
        %9221 = vmatpush1.msra.mxu0 %v9220
        %9222 = vmatprep.subr.mxu0 0.0
        %v9223 = vand.u32 %v9148, 4294901760
        %9224 = vmatpush1.msra.mxu0 %v9223
        %9225 = vmatprep.subr.mxu0 0.0
        %v9226 = vand.u32 %v9149, 4294901760
        %9227 = vmatpush1.msra.mxu0 %v9226
        %9228 = vmatprep.subr.mxu0 0.0
        %v9229 = vand.u32 %v9150, 4294901760
        %9230 = vmatpush1.msra.mxu0 %v9229
        %9231 = vmatprep.subr.mxu0 0.0
        %v9232 = vand.u32 %v9151, 4294901760
        %9233 = vmatpush1.msra.mxu0 %v9232
        %9234 = vmatprep.subr.mxu0 0.0
        %v9235 = vand.u32 %v9152, 4294901760
        %9236 = vmatpush1.msra.mxu0 %v9235
        %9237 = vmatprep.subr.mxu0 0.0
        %v9238 = vand.u32 %v9153, 4294901760
        %9239 = vmatpush1.msra.mxu0 %v9238
        %9240 = vmatprep.subr.mxu0 0.0
        %v9241 = vand.u32 %v9154, 4294901760
        %9242 = vmatpush1.msra.mxu0 %v9241
        %9243 = vmatprep.subr.mxu0 0.0
        %v9244 = vand.u32 %v9155, 4294901760
        %9245 = vmatpush1.msra.mxu0 %v9244
        %9246 = vmatprep.subr.mxu0 0.0
        %v9247 = vand.u32 %v9156, 4294901760
        %9248 = vmatpush1.msra.mxu0 %v9247
        %9249 = vmatprep.subr.mxu0 0.0
        %v9250 = vand.u32 %v9157, 4294901760
        %9251 = vmatpush1.msra.mxu0 %v9250
        %9252 = vmatprep.subr.mxu0 0.0
        %v9253 = vand.u32 %v9158, 4294901760
        %9254 = vmatpush1.msra.mxu0 %v9253
        %v9255 = vand.u32 %v9124, 4294901760
        %v9256 = vsub.f32 %v9124, %v9255
        %v9257 = vand.u32 %v9256, 4294901760
        %v9258 = vsub.f32 %v9256, %v9257
        %v9259 = vand.u32 %v9258, 4294901760
        %9260 = vmatprep.mubr.f32.mxu0 %v9259
        %v9261 = vand.u32 %v9123, 4294901760
        %v9262 = vsub.f32 %v9123, %v9261
        %v9263 = vand.u32 %v9262, 4294901760
        %v9264 = vsub.f32 %v9262, %v9263
        %v9265 = vand.u32 %v9264, 4294901760
        %9266 = vmatmul.mubr.f32.gmra.mrb[0].mxu0 %v9265
        %v9267 = vpop.f32.mrb[0].mxu0
        %v9268 = vadd.f32 0.0, %v9267
        %v9269 = vpop.f32.mrb[0].mxu0
        %v9270 = vand.u32 %v9126, 4294901760
        %v9271 = vsub.f32 %v9126, %v9270
        %v9272 = vand.u32 %v9271, 4294901760
        %v9273 = vsub.f32 %v9271, %v9272
        %v9274 = vand.u32 %v9273, 4294901760
        %9275 = vmatprep.mubr.f32.mxu0 %v9274
        %v9276 = vand.u32 %v9125, 4294901760
        %v9277 = vsub.f32 %v9125, %v9276
        %v9278 = vand.u32 %v9277, 4294901760
        %v9279 = vsub.f32 %v9277, %v9278
        %v9280 = vand.u32 %v9279, 4294901760
        %9281 = vmatmul.mubr.f32.gmra.mrb[0].mxu0 %v9280
        %v9282 = vpop.f32.mrb[0].mxu0
        %v9283 = vadd.f32 0.0, %v9282
        %v9284 = vpop.f32.mrb[0].mxu0
        %9285 = vdwg.mxu0
        %9286 = vmatprep.subr.mxu0 0.0
        %v9287 = vand.u32 %v9127, 4294901760
        %v9288 = vsub.f32 %v9127, %v9287
        %v9289 = vand.u32 %v9288, 4294901760
        %v9290 = vsub.f32 %v9288, %v9289
        %v9291 = vand.u32 %v9290, 4294901760
        %9292 = vmatpush1.msra.mxu0 %v9291
        %9293 = vmatprep.subr.mxu0 0.0
        %v9294 = vand.u32 %v9128, 4294901760
        %v9295 = vsub.f32 %v9128, %v9294
        %v9296 = vand.u32 %v9295, 4294901760
        %v9297 = vsub.f32 %v9295, %v9296
        %v9298 = vand.u32 %v9297, 4294901760
        %9299 = vmatpush1.msra.mxu0 %v9298
        %9300 = vmatprep.subr.mxu0 0.0
        %v9301 = vand.u32 %v9129, 4294901760
        %v9302 = vsub.f32 %v9129, %v9301
        %v9303 = vand.u32 %v9302, 4294901760
        %v9304 = vsub.f32 %v9302, %v9303
        %v9305 = vand.u32 %v9304, 4294901760
        %9306 = vmatpush1.msra.mxu0 %v9305
        %9307 = vmatprep.subr.mxu0 0.0
        %v9308 = vand.u32 %v9130, 4294901760
        %v9309 = vsub.f32 %v9130, %v9308
        %v9310 = vand.u32 %v9309, 4294901760
        %v9311 = vsub.f32 %v9309, %v9310
        %v9312 = vand.u32 %v9311, 4294901760
        %9313 = vmatpush1.msra.mxu0 %v9312
        %9314 = vmatprep.subr.mxu0 0.0
        %v9315 = vand.u32 %v9131, 4294901760
        %v9316 = vsub.f32 %v9131, %v9315
        %v9317 = vand.u32 %v9316, 4294901760
        %v9318 = vsub.f32 %v9316, %v9317
        %v9319 = vand.u32 %v9318, 4294901760
        %9320 = vmatpush1.msra.mxu0 %v9319
        %9321 = vmatprep.subr.mxu0 0.0
        %v9322 = vand.u32 %v9132, 4294901760
        %v9323 = vsub.f32 %v9132, %v9322
        %v9324 = vand.u32 %v9323, 4294901760
        %v9325 = vsub.f32 %v9323, %v9324
        %v9326 = vand.u32 %v9325, 4294901760
        %9327 = vmatpush1.msra.mxu0 %v9326
        %9328 = vmatprep.subr.mxu0 0.0
        %v9329 = vand.u32 %v9133, 4294901760
        %v9330 = vsub.f32 %v9133, %v9329
        %v9331 = vand.u32 %v9330, 4294901760
        %v9332 = vsub.f32 %v9330, %v9331
        %v9333 = vand.u32 %v9332, 4294901760
        %9334 = vmatpush1.msra.mxu0 %v9333
        %9335 = vmatprep.subr.mxu0 0.0
        %v9336 = vand.u32 %v9134, 4294901760
        %v9337 = vsub.f32 %v9134, %v9336
        %v9338 = vand.u32 %v9337, 4294901760
        %v9339 = vsub.f32 %v9337, %v9338
        %v9340 = vand.u32 %v9339, 4294901760
        %9341 = vmatpush1.msra.mxu0 %v9340
        %9342 = vmatprep.subr.mxu0 0.0
        %v9343 = vand.u32 %v9135, 4294901760
        %v9344 = vsub.f32 %v9135, %v9343
        %v9345 = vand.u32 %v9344, 4294901760
        %v9346 = vsub.f32 %v9344, %v9345
        %v9347 = vand.u32 %v9346, 4294901760
        %9348 = vmatpush1.msra.mxu0 %v9347
        %9349 = vmatprep.subr.mxu0 0.0
        %v9350 = vand.u32 %v9136, 4294901760
        %v9351 = vsub.f32 %v9136, %v9350
        %v9352 = vand.u32 %v9351, 4294901760
        %v9353 = vsub.f32 %v9351, %v9352
        %v9354 = vand.u32 %v9353, 4294901760
        %9355 = vmatpush1.msra.mxu0 %v9354
        %9356 = vmatprep.subr.mxu0 0.0
        %v9357 = vand.u32 %v9137, 4294901760
        %v9358 = vsub.f32 %v9137, %v9357
        %v9359 = vand.u32 %v9358, 4294901760
        %v9360 = vsub.f32 %v9358, %v9359
        %v9361 = vand.u32 %v9360, 4294901760
        %9362 = vmatpush1.msra.mxu0 %v9361
        %9363 = vmatprep.subr.mxu0 0.0
        %v9364 = vand.u32 %v9138, 4294901760
        %v9365 = vsub.f32 %v9138, %v9364
        %v9366 = vand.u32 %v9365, 4294901760
        %v9367 = vsub.f32 %v9365, %v9366
        %v9368 = vand.u32 %v9367, 4294901760
        %9369 = vmatpush1.msra.mxu0 %v9368
        %9370 = vmatprep.subr.mxu0 0.0
        %v9371 = vand.u32 %v9139, 4294901760
        %v9372 = vsub.f32 %v9139, %v9371
        %v9373 = vand.u32 %v9372, 4294901760
        %v9374 = vsub.f32 %v9372, %v9373
        %v9375 = vand.u32 %v9374, 4294901760
        %9376 = vmatpush1.msra.mxu0 %v9375
        %9377 = vmatprep.subr.mxu0 0.0
        %v9378 = vand.u32 %v9140, 4294901760
        %v9379 = vsub.f32 %v9140, %v9378
        %v9380 = vand.u32 %v9379, 4294901760
        %v9381 = vsub.f32 %v9379, %v9380
        %v9382 = vand.u32 %v9381, 4294901760
        %9383 = vmatpush1.msra.mxu0 %v9382
        %9384 = vmatprep.subr.mxu0 0.0
        %v9385 = vand.u32 %v9141, 4294901760
        %v9386 = vsub.f32 %v9141, %v9385
        %v9387 = vand.u32 %v9386, 4294901760
        %v9388 = vsub.f32 %v9386, %v9387
        %v9389 = vand.u32 %v9388, 4294901760
        %9390 = vmatpush1.msra.mxu0 %v9389
        %9391 = vmatprep.subr.mxu0 0.0
        %v9392 = vand.u32 %v9142, 4294901760
        %v9393 = vsub.f32 %v9142, %v9392
        %v9394 = vand.u32 %v9393, 4294901760
        %v9395 = vsub.f32 %v9393, %v9394
        %v9396 = vand.u32 %v9395, 4294901760
        %9397 = vmatpush1.msra.mxu0 %v9396
        %9398 = vmatprep.subr.mxu0 0.0
        %v9399 = vand.u32 %v9143, 4294901760
        %v9400 = vsub.f32 %v9143, %v9399
        %v9401 = vand.u32 %v9400, 4294901760
        %v9402 = vsub.f32 %v9400, %v9401
        %v9403 = vand.u32 %v9402, 4294901760
        %9404 = vmatpush1.msra.mxu0 %v9403
        %9405 = vmatprep.subr.mxu0 0.0
        %v9406 = vand.u32 %v9144, 4294901760
        %v9407 = vsub.f32 %v9144, %v9406
        %v9408 = vand.u32 %v9407, 4294901760
        %v9409 = vsub.f32 %v9407, %v9408
        %v9410 = vand.u32 %v9409, 4294901760
        %9411 = vmatpush1.msra.mxu0 %v9410
        %9412 = vmatprep.subr.mxu0 0.0
        %v9413 = vand.u32 %v9145, 4294901760
        %v9414 = vsub.f32 %v9145, %v9413
        %v9415 = vand.u32 %v9414, 4294901760
        %v9416 = vsub.f32 %v9414, %v9415
        %v9417 = vand.u32 %v9416, 4294901760
        %9418 = vmatpush1.msra.mxu0 %v9417
        %9419 = vmatprep.subr.mxu0 0.0
        %v9420 = vand.u32 %v9146, 4294901760
        %v9421 = vsub.f32 %v9146, %v9420
        %v9422 = vand.u32 %v9421, 4294901760
        %v9423 = vsub.f32 %v9421, %v9422
        %v9424 = vand.u32 %v9423, 4294901760
        %9425 = vmatpush1.msra.mxu0 %v9424
        %9426 = vmatprep.subr.mxu0 0.0
        %v9427 = vand.u32 %v9147, 4294901760
        %v9428 = vsub.f32 %v9147, %v9427
        %v9429 = vand.u32 %v9428, 4294901760
        %v9430 = vsub.f32 %v9428, %v9429
        %v9431 = vand.u32 %v9430, 4294901760
        %9432 = vmatpush1.msra.mxu0 %v9431
        %9433 = vmatprep.subr.mxu0 0.0
        %v9434 = vand.u32 %v9148, 4294901760
        %v9435 = vsub.f32 %v9148, %v9434
        %v9436 = vand.u32 %v9435, 4294901760
        %v9437 = vsub.f32 %v9435, %v9436
        %v9438 = vand.u32 %v9437, 4294901760
        %9439 = vmatpush1.msra.mxu0 %v9438
        %9440 = vmatprep.subr.mxu0 0.0
        %v9441 = vand.u32 %v9149, 4294901760
        %v9442 = vsub.f32 %v9149, %v9441
        %v9443 = vand.u32 %v9442, 4294901760
        %v9444 = vsub.f32 %v9442, %v9443
        %v9445 = vand.u32 %v9444, 4294901760
        %9446 = vmatpush1.msra.mxu0 %v9445
        %9447 = vmatprep.subr.mxu0 0.0
        %v9448 = vand.u32 %v9150, 4294901760
        %v9449 = vsub.f32 %v9150, %v9448
        %v9450 = vand.u32 %v9449, 4294901760
        %v9451 = vsub.f32 %v9449, %v9450
        %v9452 = vand.u32 %v9451, 4294901760
        %9453 = vmatpush1.msra.mxu0 %v9452
        %9454 = vmatprep.subr.mxu0 0.0
        %v9455 = vand.u32 %v9151, 4294901760
        %v9456 = vsub.f32 %v9151, %v9455
        %v9457 = vand.u32 %v9456, 4294901760
        %v9458 = vsub.f32 %v9456, %v9457
        %v9459 = vand.u32 %v9458, 4294901760
        %9460 = vmatpush1.msra.mxu0 %v9459
        %9461 = vmatprep.subr.mxu0 0.0
        %v9462 = vand.u32 %v9152, 4294901760
        %v9463 = vsub.f32 %v9152, %v9462
        %v9464 = vand.u32 %v9463, 4294901760
        %v9465 = vsub.f32 %v9463, %v9464
        %v9466 = vand.u32 %v9465, 4294901760
        %9467 = vmatpush1.msra.mxu0 %v9466
        %9468 = vmatprep.subr.mxu0 0.0
        %v9469 = vand.u32 %v9153, 4294901760
        %v9470 = vsub.f32 %v9153, %v9469
        %v9471 = vand.u32 %v9470, 4294901760
        %v9472 = vsub.f32 %v9470, %v9471
        %v9473 = vand.u32 %v9472, 4294901760
        %9474 = vmatpush1.msra.mxu0 %v9473
        %9475 = vmatprep.subr.mxu0 0.0
        %v9476 = vand.u32 %v9154, 4294901760
        %v9477 = vsub.f32 %v9154, %v9476
        %v9478 = vand.u32 %v9477, 4294901760
        %v9479 = vsub.f32 %v9477, %v9478
        %v9480 = vand.u32 %v9479, 4294901760
        %9481 = vmatpush1.msra.mxu0 %v9480
        %9482 = vmatprep.subr.mxu0 0.0
        %v9483 = vand.u32 %v9155, 4294901760
        %v9484 = vsub.f32 %v9155, %v9483
        %v9485 = vand.u32 %v9484, 4294901760
        %v9486 = vsub.f32 %v9484, %v9485
        %v9487 = vand.u32 %v9486, 4294901760
        %9488 = vmatpush1.msra.mxu0 %v9487
        %9489 = vmatprep.subr.mxu0 0.0
        %v9490 = vand.u32 %v9156, 4294901760
        %v9491 = vsub.f32 %v9156, %v9490
        %v9492 = vand.u32 %v9491, 4294901760
        %v9493 = vsub.f32 %v9491, %v9492
        %v9494 = vand.u32 %v9493, 4294901760
        %9495 = vmatpush1.msra.mxu0 %v9494
        %9496 = vmatprep.subr.mxu0 0.0
        %v9497 = vand.u32 %v9157, 4294901760
        %v9498 = vsub.f32 %v9157, %v9497
        %v9499 = vand.u32 %v9498, 4294901760
        %v9500 = vsub.f32 %v9498, %v9499
        %v9501 = vand.u32 %v9500, 4294901760
        %9502 = vmatpush1.msra.mxu0 %v9501
        %9503 = vmatprep.subr.mxu0 0.0
        %v9504 = vand.u32 %v9158, 4294901760
        %v9505 = vsub.f32 %v9158, %v9504
        %v9506 = vand.u32 %v9505, 4294901760
        %v9507 = vsub.f32 %v9505, %v9506
        %v9508 = vand.u32 %v9507, 4294901760
        %9509 = vmatpush1.msra.mxu0 %v9508
        %v9510 = vand.u32 %v9124, 4294901760
        %9511 = vmatprep.mubr.f32.mxu0 %v9510
        %v9512 = vand.u32 %v9123, 4294901760
        %9513 = vmatmul.mubr.f32.gmra.mrb[0].mxu0 %v9512
        %v9514 = vpop.f32.mrb[0].mxu0
        %v9515 = vadd.f32 %v9268, %v9514
        %v9516 = vpop.f32.mrb[0].mxu0
        %v9517 = vand.u32 %v9126, 4294901760
        %9518 = vmatprep.mubr.f32.mxu0 %v9517
        %v9519 = vand.u32 %v9125, 4294901760
        %9520 = vmatmul.mubr.f32.gmra.mrb[0].mxu0 %v9519
        %v9521 = vpop.f32.mrb[0].mxu0
        %v9522 = vadd.f32 %v9283, %v9521
        %v9523 = vpop.f32.mrb[0].mxu0
        %9524 = vdwg.mxu0
        %9525 = vmatprep.subr.mxu0 0.0
        %v9526 = vand.u32 %v9127, 4294901760
        %v9527 = vsub.f32 %v9127, %v9526
        %9528 = vmatpush1.msra.mxu0 %v9527
        %9529 = vmatprep.subr.mxu0 0.0
        %v9530 = vand.u32 %v9128, 4294901760
        %v9531 = vsub.f32 %v9128, %v9530
        %9532 = vmatpush1.msra.mxu0 %v9531
        %9533 = vmatprep.subr.mxu0 0.0
        %v9534 = vand.u32 %v9129, 4294901760
        %v9535 = vsub.f32 %v9129, %v9534
        %9536 = vmatpush1.msra.mxu0 %v9535
        %9537 = vmatprep.subr.mxu0 0.0
        %v9538 = vand.u32 %v9130, 4294901760
        %v9539 = vsub.f32 %v9130, %v9538
        %9540 = vmatpush1.msra.mxu0 %v9539
        %9541 = vmatprep.subr.mxu0 0.0
        %v9542 = vand.u32 %v9131, 4294901760
        %v9543 = vsub.f32 %v9131, %v9542
        %9544 = vmatpush1.msra.mxu0 %v9543
        %9545 = vmatprep.subr.mxu0 0.0
        %v9546 = vand.u32 %v9132, 4294901760
        %v9547 = vsub.f32 %v9132, %v9546
        %9548 = vmatpush1.msra.mxu0 %v9547
        %9549 = vmatprep.subr.mxu0 0.0
        %v9550 = vand.u32 %v9133, 4294901760
        %v9551 = vsub.f32 %v9133, %v9550
        %9552 = vmatpush1.msra.mxu0 %v9551
        %9553 = vmatprep.subr.mxu0 0.0
        %v9554 = vand.u32 %v9134, 4294901760
        %v9555 = vsub.f32 %v9134, %v9554
        %9556 = vmatpush1.msra.mxu0 %v9555
        %9557 = vmatprep.subr.mxu0 0.0
        %v9558 = vand.u32 %v9135, 4294901760
        %v9559 = vsub.f32 %v9135, %v9558
        %9560 = vmatpush1.msra.mxu0 %v9559
        %9561 = vmatprep.subr.mxu0 0.0
        %v9562 = vand.u32 %v9136, 4294901760
        %v9563 = vsub.f32 %v9136, %v9562
        %9564 = vmatpush1.msra.mxu0 %v9563
        %9565 = vmatprep.subr.mxu0 0.0
        %v9566 = vand.u32 %v9137, 4294901760
        %v9567 = vsub.f32 %v9137, %v9566
        %9568 = vmatpush1.msra.mxu0 %v9567
        %9569 = vmatprep.subr.mxu0 0.0
        %v9570 = vand.u32 %v9138, 4294901760
        %v9571 = vsub.f32 %v9138, %v9570
        %9572 = vmatpush1.msra.mxu0 %v9571
        %9573 = vmatprep.subr.mxu0 0.0
        %v9574 = vand.u32 %v9139, 4294901760
        %v9575 = vsub.f32 %v9139, %v9574
        %9576 = vmatpush1.msra.mxu0 %v9575
        %9577 = vmatprep.subr.mxu0 0.0
        %v9578 = vand.u32 %v9140, 4294901760
        %v9579 = vsub.f32 %v9140, %v9578
        %9580 = vmatpush1.msra.mxu0 %v9579
        %9581 = vmatprep.subr.mxu0 0.0
        %v9582 = vand.u32 %v9141, 4294901760
        %v9583 = vsub.f32 %v9141, %v9582
        %9584 = vmatpush1.msra.mxu0 %v9583
        %9585 = vmatprep.subr.mxu0 0.0
        %v9586 = vand.u32 %v9142, 4294901760
        %v9587 = vsub.f32 %v9142, %v9586
        %9588 = vmatpush1.msra.mxu0 %v9587
        %9589 = vmatprep.subr.mxu0 0.0
        %v9590 = vand.u32 %v9143, 4294901760
        %v9591 = vsub.f32 %v9143, %v9590
        %9592 = vmatpush1.msra.mxu0 %v9591
        %9593 = vmatprep.subr.mxu0 0.0
        %v9594 = vand.u32 %v9144, 4294901760
        %v9595 = vsub.f32 %v9144, %v9594
        %9596 = vmatpush1.msra.mxu0 %v9595
        %9597 = vmatprep.subr.mxu0 0.0
        %v9598 = vand.u32 %v9145, 4294901760
        %v9599 = vsub.f32 %v9145, %v9598
        %9600 = vmatpush1.msra.mxu0 %v9599
        %9601 = vmatprep.subr.mxu0 0.0
        %v9602 = vand.u32 %v9146, 4294901760
        %v9603 = vsub.f32 %v9146, %v9602
        %9604 = vmatpush1.msra.mxu0 %v9603
        %9605 = vmatprep.subr.mxu0 0.0
        %v9606 = vand.u32 %v9147, 4294901760
        %v9607 = vsub.f32 %v9147, %v9606
        %9608 = vmatpush1.msra.mxu0 %v9607
        %9609 = vmatprep.subr.mxu0 0.0
        %v9610 = vand.u32 %v9148, 4294901760
        %v9611 = vsub.f32 %v9148, %v9610
        %9612 = vmatpush1.msra.mxu0 %v9611
        %9613 = vmatprep.subr.mxu0 0.0
        %v9614 = vand.u32 %v9149, 4294901760
        %v9615 = vsub.f32 %v9149, %v9614
        %9616 = vmatpush1.msra.mxu0 %v9615
        %9617 = vmatprep.subr.mxu0 0.0
        %v9618 = vand.u32 %v9150, 4294901760
        %v9619 = vsub.f32 %v9150, %v9618
        %9620 = vmatpush1.msra.mxu0 %v9619
        %9621 = vmatprep.subr.mxu0 0.0
        %v9622 = vand.u32 %v9151, 4294901760
        %v9623 = vsub.f32 %v9151, %v9622
        %9624 = vmatpush1.msra.mxu0 %v9623
        %9625 = vmatprep.subr.mxu0 0.0
        %v9626 = vand.u32 %v9152, 4294901760
        %v9627 = vsub.f32 %v9152, %v9626
        %9628 = vmatpush1.msra.mxu0 %v9627
        %9629 = vmatprep.subr.mxu0 0.0
        %v9630 = vand.u32 %v9153, 4294901760
        %v9631 = vsub.f32 %v9153, %v9630
        %9632 = vmatpush1.msra.mxu0 %v9631
        %9633 = vmatprep.subr.mxu0 0.0
        %v9634 = vand.u32 %v9154, 4294901760
        %v9635 = vsub.f32 %v9154, %v9634
        %9636 = vmatpush1.msra.mxu0 %v9635
        %9637 = vmatprep.subr.mxu0 0.0
        %v9638 = vand.u32 %v9155, 4294901760
        %v9639 = vsub.f32 %v9155, %v9638
        %9640 = vmatpush1.msra.mxu0 %v9639
        %9641 = vmatprep.subr.mxu0 0.0
        %v9642 = vand.u32 %v9156, 4294901760
        %v9643 = vsub.f32 %v9156, %v9642
        %9644 = vmatpush1.msra.mxu0 %v9643
        %9645 = vmatprep.subr.mxu0 0.0
        %v9646 = vand.u32 %v9157, 4294901760
        %v9647 = vsub.f32 %v9157, %v9646
        %9648 = vmatpush1.msra.mxu0 %v9647
        %9649 = vmatprep.subr.mxu0 0.0
        %v9650 = vand.u32 %v9158, 4294901760
        %v9651 = vsub.f32 %v9158, %v9650
        %9652 = vmatpush1.msra.mxu0 %v9651
        %v9653 = vand.u32 %v9124, 4294901760
        %v9654 = vsub.f32 %v9124, %v9653
        %9655 = vmatprep.mubr.f32.mxu0 %v9654
        %v9656 = vand.u32 %v9123, 4294901760
        %v9657 = vsub.f32 %v9123, %v9656
        %9658 = vmatmul.mubr.f32.gmra.mrb[0].mxu0 %v9657
        %v9659 = vpop.f32.mrb[0].mxu0
        %v9660 = vadd.f32 %v9515, %v9659
        %v9661 = vpop.f32.mrb[0].mxu0
        %v9662 = vand.u32 %v9126, 4294901760
        %v9663 = vsub.f32 %v9126, %v9662
        %9664 = vmatprep.mubr.f32.mxu0 %v9663
        %v9665 = vand.u32 %v9125, 4294901760
        %v9666 = vsub.f32 %v9125, %v9665
        %9667 = vmatmul.mubr.f32.gmra.mrb[0].mxu0 %v9666
        %v9668 = vpop.f32.mrb[0].mxu0
        %v9669 = vadd.f32 %v9522, %v9668
        %v9670 = vpop.f32.mrb[0].mxu0
        %9671 = vdwg.mxu0
        %9672 = vmatprep.subr.mxu0 0.0
        %v9673 = vand.u32 %v9127, 4294901760
        %9674 = vmatpush1.msra.mxu0 %v9673
        %9675 = vmatprep.subr.mxu0 0.0
        %v9676 = vand.u32 %v9128, 4294901760
        %9677 = vmatpush1.msra.mxu0 %v9676
        %9678 = vmatprep.subr.mxu0 0.0
        %v9679 = vand.u32 %v9129, 4294901760
        %9680 = vmatpush1.msra.mxu0 %v9679
        %9681 = vmatprep.subr.mxu0 0.0
        %v9682 = vand.u32 %v9130, 4294901760
        %9683 = vmatpush1.msra.mxu0 %v9682
        %9684 = vmatprep.subr.mxu0 0.0
        %v9685 = vand.u32 %v9131, 4294901760
        %9686 = vmatpush1.msra.mxu0 %v9685
        %9687 = vmatprep.subr.mxu0 0.0
        %v9688 = vand.u32 %v9132, 4294901760
        %9689 = vmatpush1.msra.mxu0 %v9688
        %9690 = vmatprep.subr.mxu0 0.0
        %v9691 = vand.u32 %v9133, 4294901760
        %9692 = vmatpush1.msra.mxu0 %v9691
        %9693 = vmatprep.subr.mxu0 0.0
        %v9694 = vand.u32 %v9134, 4294901760
        %9695 = vmatpush1.msra.mxu0 %v9694
        %9696 = vmatprep.subr.mxu0 0.0
        %v9697 = vand.u32 %v9135, 4294901760
        %9698 = vmatpush1.msra.mxu0 %v9697
        %9699 = vmatprep.subr.mxu0 0.0
        %v9700 = vand.u32 %v9136, 4294901760
        %9701 = vmatpush1.msra.mxu0 %v9700
        %9702 = vmatprep.subr.mxu0 0.0
        %v9703 = vand.u32 %v9137, 4294901760
        %9704 = vmatpush1.msra.mxu0 %v9703
        %9705 = vmatprep.subr.mxu0 0.0
        %v9706 = vand.u32 %v9138, 4294901760
        %9707 = vmatpush1.msra.mxu0 %v9706
        %9708 = vmatprep.subr.mxu0 0.0
        %v9709 = vand.u32 %v9139, 4294901760
        %9710 = vmatpush1.msra.mxu0 %v9709
        %9711 = vmatprep.subr.mxu0 0.0
        %v9712 = vand.u32 %v9140, 4294901760
        %9713 = vmatpush1.msra.mxu0 %v9712
        %9714 = vmatprep.subr.mxu0 0.0
        %v9715 = vand.u32 %v9141, 4294901760
        %9716 = vmatpush1.msra.mxu0 %v9715
        %9717 = vmatprep.subr.mxu0 0.0
        %v9718 = vand.u32 %v9142, 4294901760
        %9719 = vmatpush1.msra.mxu0 %v9718
        %9720 = vmatprep.subr.mxu0 0.0
        %v9721 = vand.u32 %v9143, 4294901760
        %9722 = vmatpush1.msra.mxu0 %v9721
        %9723 = vmatprep.subr.mxu0 0.0
        %v9724 = vand.u32 %v9144, 4294901760
        %9725 = vmatpush1.msra.mxu0 %v9724
        %9726 = vmatprep.subr.mxu0 0.0
        %v9727 = vand.u32 %v9145, 4294901760
        %9728 = vmatpush1.msra.mxu0 %v9727
        %9729 = vmatprep.subr.mxu0 0.0
        %v9730 = vand.u32 %v9146, 4294901760
        %9731 = vmatpush1.msra.mxu0 %v9730
        %9732 = vmatprep.subr.mxu0 0.0
        %v9733 = vand.u32 %v9147, 4294901760
        %9734 = vmatpush1.msra.mxu0 %v9733
        %9735 = vmatprep.subr.mxu0 0.0
        %v9736 = vand.u32 %v9148, 4294901760
        %9737 = vmatpush1.msra.mxu0 %v9736
        %9738 = vmatprep.subr.mxu0 0.0
        %v9739 = vand.u32 %v9149, 4294901760
        %9740 = vmatpush1.msra.mxu0 %v9739
        %9741 = vmatprep.subr.mxu0 0.0
        %v9742 = vand.u32 %v9150, 4294901760
        %9743 = vmatpush1.msra.mxu0 %v9742
        %9744 = vmatprep.subr.mxu0 0.0
        %v9745 = vand.u32 %v9151, 4294901760
        %9746 = vmatpush1.msra.mxu0 %v9745
        %9747 = vmatprep.subr.mxu0 0.0
        %v9748 = vand.u32 %v9152, 4294901760
        %9749 = vmatpush1.msra.mxu0 %v9748
        %9750 = vmatprep.subr.mxu0 0.0
        %v9751 = vand.u32 %v9153, 4294901760
        %9752 = vmatpush1.msra.mxu0 %v9751
        %9753 = vmatprep.subr.mxu0 0.0
        %v9754 = vand.u32 %v9154, 4294901760
        %9755 = vmatpush1.msra.mxu0 %v9754
        %9756 = vmatprep.subr.mxu0 0.0
        %v9757 = vand.u32 %v9155, 4294901760
        %9758 = vmatpush1.msra.mxu0 %v9757
        %9759 = vmatprep.subr.mxu0 0.0
        %v9760 = vand.u32 %v9156, 4294901760
        %9761 = vmatpush1.msra.mxu0 %v9760
        %9762 = vmatprep.subr.mxu0 0.0
        %v9763 = vand.u32 %v9157, 4294901760
        %9764 = vmatpush1.msra.mxu0 %v9763
        %9765 = vmatprep.subr.mxu0 0.0
        %v9766 = vand.u32 %v9158, 4294901760
        %9767 = vmatpush1.msra.mxu0 %v9766
        %v9768 = vand.u32 %v9124, 4294901760
        %v9769 = vsub.f32 %v9124, %v9768
        %v9770 = vand.u32 %v9769, 4294901760
        %9771 = vmatprep.mubr.f32.mxu0 %v9770
        %v9772 = vand.u32 %v9123, 4294901760
        %v9773 = vsub.f32 %v9123, %v9772
        %v9774 = vand.u32 %v9773, 4294901760
        %9775 = vmatmul.mubr.f32.gmra.mrb[0].mxu0 %v9774
        %v9776 = vpop.f32.mrb[0].mxu0
        %v9777 = vadd.f32 %v9660, %v9776
        %v9778 = vpop.f32.mrb[0].mxu0
        %v9779 = vand.u32 %v9126, 4294901760
        %v9780 = vsub.f32 %v9126, %v9779
        %v9781 = vand.u32 %v9780, 4294901760
        %9782 = vmatprep.mubr.f32.mxu0 %v9781
        %v9783 = vand.u32 %v9125, 4294901760
        %v9784 = vsub.f32 %v9125, %v9783
        %v9785 = vand.u32 %v9784, 4294901760
        %9786 = vmatmul.mubr.f32.gmra.mrb[0].mxu0 %v9785
        %v9787 = vpop.f32.mrb[0].mxu0
        %v9788 = vadd.f32 %v9669, %v9787
        %v9789 = vpop.f32.mrb[0].mxu0
        %9790 = vdwg.mxu0
        %9791 = vmatprep.subr.mxu0 0.0
        %v9792 = vand.u32 %v9127, 4294901760
        %v9793 = vsub.f32 %v9127, %v9792
        %v9794 = vand.u32 %v9793, 4294901760
        %9795 = vmatpush1.msra.mxu0 %v9794
        %9796 = vmatprep.subr.mxu0 0.0
        %v9797 = vand.u32 %v9128, 4294901760
        %v9798 = vsub.f32 %v9128, %v9797
        %v9799 = vand.u32 %v9798, 4294901760
        %9800 = vmatpush1.msra.mxu0 %v9799
        %9801 = vmatprep.subr.mxu0 0.0
        %v9802 = vand.u32 %v9129, 4294901760
        %v9803 = vsub.f32 %v9129, %v9802
        %v9804 = vand.u32 %v9803, 4294901760
        %9805 = vmatpush1.msra.mxu0 %v9804
        %9806 = vmatprep.subr.mxu0 0.0
        %v9807 = vand.u32 %v9130, 4294901760
        %v9808 = vsub.f32 %v9130, %v9807
        %v9809 = vand.u32 %v9808, 4294901760
        %9810 = vmatpush1.msra.mxu0 %v9809
        %9811 = vmatprep.subr.mxu0 0.0
        %v9812 = vand.u32 %v9131, 4294901760
        %v9813 = vsub.f32 %v9131, %v9812
        %v9814 = vand.u32 %v9813, 4294901760
        %9815 = vmatpush1.msra.mxu0 %v9814
        %9816 = vmatprep.subr.mxu0 0.0
        %v9817 = vand.u32 %v9132, 4294901760
        %v9818 = vsub.f32 %v9132, %v9817
        %v9819 = vand.u32 %v9818, 4294901760
        %9820 = vmatpush1.msra.mxu0 %v9819
        %9821 = vmatprep.subr.mxu0 0.0
        %v9822 = vand.u32 %v9133, 4294901760
        %v9823 = vsub.f32 %v9133, %v9822
        %v9824 = vand.u32 %v9823, 4294901760
        %9825 = vmatpush1.msra.mxu0 %v9824
        %9826 = vmatprep.subr.mxu0 0.0
        %v9827 = vand.u32 %v9134, 4294901760
        %v9828 = vsub.f32 %v9134, %v9827
        %v9829 = vand.u32 %v9828, 4294901760
        %9830 = vmatpush1.msra.mxu0 %v9829
        %9831 = vmatprep.subr.mxu0 0.0
        %v9832 = vand.u32 %v9135, 4294901760
        %v9833 = vsub.f32 %v9135, %v9832
        %v9834 = vand.u32 %v9833, 4294901760
        %9835 = vmatpush1.msra.mxu0 %v9834
        %9836 = vmatprep.subr.mxu0 0.0
        %v9837 = vand.u32 %v9136, 4294901760
        %v9838 = vsub.f32 %v9136, %v9837
        %v9839 = vand.u32 %v9838, 4294901760
        %9840 = vmatpush1.msra.mxu0 %v9839
        %9841 = vmatprep.subr.mxu0 0.0
        %v9842 = vand.u32 %v9137, 4294901760
        %v9843 = vsub.f32 %v9137, %v9842
        %v9844 = vand.u32 %v9843, 4294901760
        %9845 = vmatpush1.msra.mxu0 %v9844
        %9846 = vmatprep.subr.mxu0 0.0
        %v9847 = vand.u32 %v9138, 4294901760
        %v9848 = vsub.f32 %v9138, %v9847
        %v9849 = vand.u32 %v9848, 4294901760
        %9850 = vmatpush1.msra.mxu0 %v9849
        %9851 = vmatprep.subr.mxu0 0.0
        %v9852 = vand.u32 %v9139, 4294901760
        %v9853 = vsub.f32 %v9139, %v9852
        %v9854 = vand.u32 %v9853, 4294901760
        %9855 = vmatpush1.msra.mxu0 %v9854
        %9856 = vmatprep.subr.mxu0 0.0
        %v9857 = vand.u32 %v9140, 4294901760
        %v9858 = vsub.f32 %v9140, %v9857
        %v9859 = vand.u32 %v9858, 4294901760
        %9860 = vmatpush1.msra.mxu0 %v9859
        %9861 = vmatprep.subr.mxu0 0.0
        %v9862 = vand.u32 %v9141, 4294901760
        %v9863 = vsub.f32 %v9141, %v9862
        %v9864 = vand.u32 %v9863, 4294901760
        %9865 = vmatpush1.msra.mxu0 %v9864
        %9866 = vmatprep.subr.mxu0 0.0
        %v9867 = vand.u32 %v9142, 4294901760
        %v9868 = vsub.f32 %v9142, %v9867
        %v9869 = vand.u32 %v9868, 4294901760
        %9870 = vmatpush1.msra.mxu0 %v9869
        %9871 = vmatprep.subr.mxu0 0.0
        %v9872 = vand.u32 %v9143, 4294901760
        %v9873 = vsub.f32 %v9143, %v9872
        %v9874 = vand.u32 %v9873, 4294901760
        %9875 = vmatpush1.msra.mxu0 %v9874
        %9876 = vmatprep.subr.mxu0 0.0
        %v9877 = vand.u32 %v9144, 4294901760
        %v9878 = vsub.f32 %v9144, %v9877
        %v9879 = vand.u32 %v9878, 4294901760
        %9880 = vmatpush1.msra.mxu0 %v9879
        %9881 = vmatprep.subr.mxu0 0.0
        %v9882 = vand.u32 %v9145, 4294901760
        %v9883 = vsub.f32 %v9145, %v9882
        %v9884 = vand.u32 %v9883, 4294901760
        %9885 = vmatpush1.msra.mxu0 %v9884
        %9886 = vmatprep.subr.mxu0 0.0
        %v9887 = vand.u32 %v9146, 4294901760
        %v9888 = vsub.f32 %v9146, %v9887
        %v9889 = vand.u32 %v9888, 4294901760
        %9890 = vmatpush1.msra.mxu0 %v9889
        %9891 = vmatprep.subr.mxu0 0.0
        %v9892 = vand.u32 %v9147, 4294901760
        %v9893 = vsub.f32 %v9147, %v9892
        %v9894 = vand.u32 %v9893, 4294901760
        %9895 = vmatpush1.msra.mxu0 %v9894
        %9896 = vmatprep.subr.mxu0 0.0
        %v9897 = vand.u32 %v9148, 4294901760
        %v9898 = vsub.f32 %v9148, %v9897
        %v9899 = vand.u32 %v9898, 4294901760
        %9900 = vmatpush1.msra.mxu0 %v9899
        %9901 = vmatprep.subr.mxu0 0.0
        %v9902 = vand.u32 %v9149, 4294901760
        %v9903 = vsub.f32 %v9149, %v9902
        %v9904 = vand.u32 %v9903, 4294901760
        %9905 = vmatpush1.msra.mxu0 %v9904
        %9906 = vmatprep.subr.mxu0 0.0
        %v9907 = vand.u32 %v9150, 4294901760
        %v9908 = vsub.f32 %v9150, %v9907
        %v9909 = vand.u32 %v9908, 4294901760
        %9910 = vmatpush1.msra.mxu0 %v9909
        %9911 = vmatprep.subr.mxu0 0.0
        %v9912 = vand.u32 %v9151, 4294901760
        %v9913 = vsub.f32 %v9151, %v9912
        %v9914 = vand.u32 %v9913, 4294901760
        %9915 = vmatpush1.msra.mxu0 %v9914
        %9916 = vmatprep.subr.mxu0 0.0
        %v9917 = vand.u32 %v9152, 4294901760
        %v9918 = vsub.f32 %v9152, %v9917
        %v9919 = vand.u32 %v9918, 4294901760
        %9920 = vmatpush1.msra.mxu0 %v9919
        %9921 = vmatprep.subr.mxu0 0.0
        %v9922 = vand.u32 %v9153, 4294901760
        %v9923 = vsub.f32 %v9153, %v9922
        %v9924 = vand.u32 %v9923, 4294901760
        %9925 = vmatpush1.msra.mxu0 %v9924
        %9926 = vmatprep.subr.mxu0 0.0
        %v9927 = vand.u32 %v9154, 4294901760
        %v9928 = vsub.f32 %v9154, %v9927
        %v9929 = vand.u32 %v9928, 4294901760
        %9930 = vmatpush1.msra.mxu0 %v9929
        %9931 = vmatprep.subr.mxu0 0.0
        %v9932 = vand.u32 %v9155, 4294901760
        %v9933 = vsub.f32 %v9155, %v9932
        %v9934 = vand.u32 %v9933, 4294901760
        %9935 = vmatpush1.msra.mxu0 %v9934
        %9936 = vmatprep.subr.mxu0 0.0
        %v9937 = vand.u32 %v9156, 4294901760
        %v9938 = vsub.f32 %v9156, %v9937
        %v9939 = vand.u32 %v9938, 4294901760
        %9940 = vmatpush1.msra.mxu0 %v9939
        %9941 = vmatprep.subr.mxu0 0.0
        %v9942 = vand.u32 %v9157, 4294901760
        %v9943 = vsub.f32 %v9157, %v9942
        %v9944 = vand.u32 %v9943, 4294901760
        %9945 = vmatpush1.msra.mxu0 %v9944
        %9946 = vmatprep.subr.mxu0 0.0
        %v9947 = vand.u32 %v9158, 4294901760
        %v9948 = vsub.f32 %v9158, %v9947
        %v9949 = vand.u32 %v9948, 4294901760
        %9950 = vmatpush1.msra.mxu0 %v9949
        %v9951 = vand.u32 %v9124, 4294901760
        %9952 = vmatprep.mubr.f32.mxu0 %v9951
        %v9953 = vand.u32 %v9123, 4294901760
        %9954 = vmatmul.mubr.f32.gmra.mrb[0].mxu0 %v9953
        %v9955 = vpop.f32.mrb[0].mxu0
        %v9956 = vadd.f32 %v9777, %v9955
        %v9957 = vpop.f32.mrb[0].mxu0
        %v9958 = vand.u32 %v9126, 4294901760
        %9959 = vmatprep.mubr.f32.mxu0 %v9958
        %v9960 = vand.u32 %v9125, 4294901760
        %9961 = vmatmul.mubr.f32.gmra.mrb[0].mxu0 %v9960
        %v9962 = vpop.f32.mrb[0].mxu0
        %v9963 = vadd.f32 %v9788, %v9962
        %v9964 = vpop.f32.mrb[0].mxu0
        %9965 = vdwg.mxu0
        %9966 = vmatprep.subr.mxu0 0.0
        %v9967 = vand.u32 %v9127, 4294901760
        %9968 = vmatpush1.msra.mxu0 %v9967
        %9969 = vmatprep.subr.mxu0 0.0
        %v9970 = vand.u32 %v9128, 4294901760
        %9971 = vmatpush1.msra.mxu0 %v9970
        %9972 = vmatprep.subr.mxu0 0.0
        %v9973 = vand.u32 %v9129, 4294901760
        %9974 = vmatpush1.msra.mxu0 %v9973
        %9975 = vmatprep.subr.mxu0 0.0
        %v9976 = vand.u32 %v9130, 4294901760
        %9977 = vmatpush1.msra.mxu0 %v9976
        %9978 = vmatprep.subr.mxu0 0.0
        %v9979 = vand.u32 %v9131, 4294901760
        %9980 = vmatpush1.msra.mxu0 %v9979
        %9981 = vmatprep.subr.mxu0 0.0
        %v9982 = vand.u32 %v9132, 4294901760
        %9983 = vmatpush1.msra.mxu0 %v9982
        %9984 = vmatprep.subr.mxu0 0.0
        %v9985 = vand.u32 %v9133, 4294901760
        %9986 = vmatpush1.msra.mxu0 %v9985
        %9987 = vmatprep.subr.mxu0 0.0
        %v9988 = vand.u32 %v9134, 4294901760
        %9989 = vmatpush1.msra.mxu0 %v9988
        %9990 = vmatprep.subr.mxu0 0.0
        %v9991 = vand.u32 %v9135, 4294901760
        %9992 = vmatpush1.msra.mxu0 %v9991
        %9993 = vmatprep.subr.mxu0 0.0
        %v9994 = vand.u32 %v9136, 4294901760
        %9995 = vmatpush1.msra.mxu0 %v9994
        %9996 = vmatprep.subr.mxu0 0.0
        %v9997 = vand.u32 %v9137, 4294901760
        %9998 = vmatpush1.msra.mxu0 %v9997
        %9999 = vmatprep.subr.mxu0 0.0
        %v10000 = vand.u32 %v9138, 4294901760
        %10001 = vmatpush1.msra.mxu0 %v10000
        %10002 = vmatprep.subr.mxu0 0.0
        %v10003 = vand.u32 %v9139, 4294901760
        %10004 = vmatpush1.msra.mxu0 %v10003
        %10005 = vmatprep.subr.mxu0 0.0
        %v10006 = vand.u32 %v9140, 4294901760
        %10007 = vmatpush1.msra.mxu0 %v10006
        %10008 = vmatprep.subr.mxu0 0.0
        %v10009 = vand.u32 %v9141, 4294901760
        %10010 = vmatpush1.msra.mxu0 %v10009
        %10011 = vmatprep.subr.mxu0 0.0
        %v10012 = vand.u32 %v9142, 4294901760
        %10013 = vmatpush1.msra.mxu0 %v10012
        %10014 = vmatprep.subr.mxu0 0.0
        %v10015 = vand.u32 %v9143, 4294901760
        %10016 = vmatpush1.msra.mxu0 %v10015
        %10017 = vmatprep.subr.mxu0 0.0
        %v10018 = vand.u32 %v9144, 4294901760
        %10019 = vmatpush1.msra.mxu0 %v10018
        %10020 = vmatprep.subr.mxu0 0.0
        %v10021 = vand.u32 %v9145, 4294901760
        %10022 = vmatpush1.msra.mxu0 %v10021
        %10023 = vmatprep.subr.mxu0 0.0
        %v10024 = vand.u32 %v9146, 4294901760
        %10025 = vmatpush1.msra.mxu0 %v10024
        %10026 = vmatprep.subr.mxu0 0.0
        %v10027 = vand.u32 %v9147, 4294901760
        %10028 = vmatpush1.msra.mxu0 %v10027
        %10029 = vmatprep.subr.mxu0 0.0
        %v10030 = vand.u32 %v9148, 4294901760
        %10031 = vmatpush1.msra.mxu0 %v10030
        %10032 = vmatprep.subr.mxu0 0.0
        %v10033 = vand.u32 %v9149, 4294901760
        %10034 = vmatpush1.msra.mxu0 %v10033
        %10035 = vmatprep.subr.mxu0 0.0
        %v10036 = vand.u32 %v9150, 4294901760
        %10037 = vmatpush1.msra.mxu0 %v10036
        %10038 = vmatprep.subr.mxu0 0.0
        %v10039 = vand.u32 %v9151, 4294901760
        %10040 = vmatpush1.msra.mxu0 %v10039
        %10041 = vmatprep.subr.mxu0 0.0
        %v10042 = vand.u32 %v9152, 4294901760
        %10043 = vmatpush1.msra.mxu0 %v10042
        %10044 = vmatprep.subr.mxu0 0.0
        %v10045 = vand.u32 %v9153, 4294901760
        %10046 = vmatpush1.msra.mxu0 %v10045
        %10047 = vmatprep.subr.mxu0 0.0
        %v10048 = vand.u32 %v9154, 4294901760
        %10049 = vmatpush1.msra.mxu0 %v10048
        %10050 = vmatprep.subr.mxu0 0.0
        %v10051 = vand.u32 %v9155, 4294901760
        %10052 = vmatpush1.msra.mxu0 %v10051
        %10053 = vmatprep.subr.mxu0 0.0
        %v10054 = vand.u32 %v9156, 4294901760
        %10055 = vmatpush1.msra.mxu0 %v10054
        %10056 = vmatprep.subr.mxu0 0.0
        %v10057 = vand.u32 %v9157, 4294901760
        %10058 = vmatpush1.msra.mxu0 %v10057
        %10059 = vmatprep.subr.mxu0 0.0
        %v10060 = vand.u32 %v9158, 4294901760
        %10061 = vmatpush1.msra.mxu0 %v10060
        %v10062 = vand.u32 %v9124, 4294901760
        %10063 = vmatprep.mubr.f32.mxu0 %v10062
        %v10064 = vand.u32 %v9123, 4294901760
        %10065 = vmatmul.mubr.f32.gmra.mrb[0].mxu0 %v10064
        %v10066 = vpop.f32.mrb[0].mxu0
        %v10067 = vadd.f32 %v9956, %v10066
        %v10068 = vpop.f32.mrb[0].mxu0
        %v10069 = vand.u32 %v9126, 4294901760
        %10070 = vmatprep.mubr.f32.mxu0 %v10069
        %v10071 = vand.u32 %v9125, 4294901760
        %10072 = vmatmul.mubr.f32.gmra.mrb[0].mxu0 %v10071
        %v10073 = vpop.f32.mrb[0].mxu0
        %v10074 = vadd.f32 %v9963, %v10073
        %v10075 = vpop.f32.mrb[0].mxu0
        %10076 = vdwg.mxu0
        %v10077 = vadd.f32 %v7198, %v10067
        %v10078 = vadd.f32 %v7199, %v10074
        %10079 = vst [vmem:[%s489] sm:$0xff] %v10077
        %10080 = vst [vmem:[%s489 + $0x8] sm:$0xff] %v10078
        %s10081 = sand.u32 %s275, 1
        %s10082 = scalar_lea.sflag [#allocation4], %s10081
        %s10083 = sand.u32 %s275, 1
        %s10084 = smul.addr %s10083, 16
        %s10085 = scalar_lea.vmem [#allocation14], %s10084
        // Predicated region
        $region93: #{tpu_custom_call.1} parent=63 // pred_check
          %p10086 = pneg %p285
        $region94: #{tpu_custom_call.1} parent=63 // pred_check_branch
          %10088 = sbr.rel (%p10086) target = $region96
        $region95: #{tpu_custom_call.1} parent=63 // pred_region
          %s10090 = ssub.s32 256, 256
          %10091 = vsyncadd %s10082, %s10090
          %s10092 = smul.addr %s31, 2
          %s10093 = smul.addr %s10092, 128
          %s10094 = scalar_lea.hbm %s11, %s10093
          %s10095 = sshll.u32 %s10085, 4
          %s10096 = int_to_ptr.vmem [resolvable:$true] %s10095
          %10101 = dma.vmem_to_hbm [thread:$0]  %s10096, 256, %s10094, %s10082, 128, 128, 8
        $region96: #{tpu_custom_call.1} parent=63 // pred_fallthru
          _
      $region64: #{tpu_custom_call.1} parent=5 // pred_fallthru
        _
      %p10102 = scmp.le.s32.totalorder 2, %s26
      // Predicated region
      $region97: #{tpu_custom_call.1} parent=5 // pred_check
        %p10103 = pneg %p10102
      $region98: #{tpu_custom_call.1} parent=5 // pred_check_branch
        %10105 = sbr.rel (%p10103) target = $region100
      $region99: #{tpu_custom_call.1} parent=5 // pred_region
        %s10106 = ssub.s32 %s26, 2
        // Predicated region
        $region101: #{tpu_custom_call.1} parent=99 // pred_check
          %p10107 = pneg %p291
        $region102: #{tpu_custom_call.1} parent=99 // pred_check_branch
          %10109 = sbr.rel (%p10107) target = $region104
        $region103: #{tpu_custom_call.1} parent=99 // pred_region
          %s10110 = sand.u32 %s276, 1
          %s10111 = scalar_lea.sflag [#allocation4], %s10110
          %s10112 = sand.u32 %s276, 1
          %s10113 = smul.addr %s10112, 16
          %s10114 = scalar_lea.vmem [#allocation14], %s10113
          %10115 = dma.done %s10111, 256
        $region104: #{tpu_custom_call.1} parent=99 // pred_fallthru
          _
      $region100: #{tpu_custom_call.1} parent=5 // pred_fallthru
        _
    $region6: #{tpu_custom_call.1} parent=1 // loop_footer
      %s30 = sadd.s32 1, %s26
    $region7: #{tpu_custom_call.1} parent=1 // loop_footer_branch
      %25 = sbr.rel target = $region3
    $region8: #{tpu_custom_call.1} parent=1 // loop_exit
      _
    %10116 = vsyncpa [#allocation3], 1
    %s10117 = scalar_lea.sflag [#allocation3], 1
    %10118 = vsyncpa %s10117, 1
    %10119 = vsyncpa [#allocation6], 1
    %10120 = vsyncpa [#allocation9], 1
    %10121 = vsyncpa [#allocation12], 1
    %10122 = vsyncpa [#allocation4], 1
    %s10123 = scalar_lea.sflag [#allocation4], 1
    %10124 = vsyncpa %s10123, 1

</llo_original>
